<compile_context>
chip_gen: v5e
topology: v5e:2x2
jax: 0.10.0
libtpu: 0.0.40
codegen_flags: <defaults>
</compile_context>

<pallas_src>
import functools
import math

import jax
import jax.numpy as jnp
import numpy as np
from jax.experimental import pallas as pl
from jax.experimental.pallas import tpu as pltpu

_VMEM_LIMIT = 48 * 1024 * 1024      # <= v7x physical VMEM (64 MiB), fine on v5e/v6e
_TILE_BUDGET = 6 * 1024 * 1024      # target bytes per streaming block


def _cp(sem):
    return pltpu.CompilerParams(dimension_semantics=sem,
                                vmem_limit_bytes=_VMEM_LIMIT)


def _pick_th(H, W, C, itemsize, budget=_TILE_BUDGET):
    """Largest divisor of H whose (th, W, C) block fits the budget."""
    best = 1
    for d in range(1, H + 1):
        if H % d == 0 and d * W * C * itemsize <= budget:
            best = d
    return best


def _pick_tm(M, row_bytes, budget):
    """Largest multiple-of-8 divisor of M under budget (else the full M)."""
    best = None
    for d in range(8, M + 1, 8):
        if M % d == 0 and d * row_bytes <= budget:
            best = d
    return best if best is not None else M


def _pick_ro(H):
    for d in (4, 3, 2):
        if H % d == 0:
            return d
    return 1


# ---------------------------------------------------------------------------
# Fused 3x3 conv (im2col-free): bf16 MXU taps + f32 accumulate + bias + act
# ---------------------------------------------------------------------------
def _conv3x3_kernel(*args, ro, ns, W, act):
    x_refs = args[:ns]                       # ns row-shifted views of padded x
    w_ref, b_ref, o_ref = args[ns], args[ns + 1], args[ns + 2]
    bias = b_ref[...]                        # (1, Nt) f32
    for r in range(ro):
        acc = None
        for dy in range(3):
            rr = r + dy
            row = x_refs[rr // ro][0, rr % ro]          # (W+2, Cin) bf16
            for dx in range(3):
                a = row[dx:dx + W, :]                   # (W, Cin)
                p = jnp.dot(a, w_ref[dy * 3 + dx],
                            preferred_element_type=jnp.float32)
                acc = p if acc is None else acc + p
        res = acc + bias
        if act == "relu":
            res = jnp.maximum(res, 0.0)
        elif act == "sigmoid":
            res = jax.nn.sigmoid(res)
        o_ref[0, r] = res.astype(o_ref.dtype)


@functools.lru_cache(maxsize=None)
def _conv3x3_call(B, H, W, Cin, Cout, Nt, ro, ns, act):
    kernel = functools.partial(_conv3x3_kernel, ro=ro, ns=ns, W=W, act=act)
    x_specs = [pl.BlockSpec((1, ro, W + 2, Cin),
                            (lambda b, n, h, s=s: (b, h + s, 0, 0)))
               for s in range(ns)]
    call = pl.pallas_call(
        kernel,
        out_shape=jax.ShapeDtypeStruct((B, H, W, Cout), jnp.bfloat16),
        grid_spec=pltpu.PrefetchScalarGridSpec(
            num_scalar_prefetch=0,
            # Cout tile is OUTER so the (9, Cin, Nt) weight block stays
            # VMEM-resident across the whole row sweep (no re-streaming).
            grid=(B, Cout // Nt, H // ro),
            in_specs=x_specs + [
                pl.BlockSpec((9, Cin, Nt), lambda b, n, h: (0, 0, n)),
                pl.BlockSpec((1, Nt), lambda b, n, h: (0, n))],
            out_specs=pl.BlockSpec((1, ro, W, Nt), lambda b, n, h: (b, h, 0, n))),
        compiler_params=_cp(("parallel", "parallel", "parallel")))
    return jax.jit(call)


def conv3x3(x, p, act="relu"):
    B, H, W, Cin = x.shape
    w = p["w"]
    Cout = w.shape[2]
    if Cin < 8:                                  # pad tiny channel counts
        x = jnp.pad(x, ((0, 0), (0, 0), (0, 0), (0, 8 - Cin)))
        w = jnp.pad(w, ((0, 0), (0, 8 - Cin), (0, 0)))
        Cin = 8
    ro = _pick_ro(H)
    ns = 2 if ro >= 2 else 3                     # row-shifted views for the halo
    xp = jnp.pad(x.astype(jnp.bfloat16),
                 ((0, 0), (1, ro * (ns - 1) - 1), (1, 1), (0, 0)))
    Nt = Cout if Cout <= 256 else 256
    call = _conv3x3_call(B, H, W, Cin, Cout, Nt, ro, ns, act)
    args = [xp] * ns + [w, p["b"].reshape(1, Cout)]
    return call(*args)


def conv_block(x, plist):
    for p in plist:
        x = conv3x3(x, p, "relu")
    return x


# ---------------------------------------------------------------------------
# 2x2 maxpool
# ---------------------------------------------------------------------------
def _max4_kernel(a_ref, b_ref, c_ref, d_ref, o_ref):
    o_ref[...] = jnp.maximum(jnp.maximum(a_ref[...], b_ref[...]),
                             jnp.maximum(c_ref[...], d_ref[...]))


@functools.lru_cache(maxsize=None)
def _max4_call(B, Ho, Wo, C, th):
    spec = pl.BlockSpec((1, th, Wo, C), lambda b, h: (b, h, 0, 0))
    call = pl.pallas_call(
        _max4_kernel,
        out_shape=jax.ShapeDtypeStruct((B, Ho, Wo, C), jnp.bfloat16),
        grid_spec=pltpu.PrefetchScalarGridSpec(
            num_scalar_prefetch=0, grid=(B, Ho // th),
            in_specs=[spec, spec, spec, spec], out_specs=spec),
        compiler_params=_cp(("parallel", "parallel")))
    return jax.jit(call)


def maxpool2x2(x):
    # TODO(synk): could read x once via strided in-kernel loads; the 4 shifted
    #             bf16 views are kept for lowering safety (half the old bytes).
    B, H, W, C = x.shape
    Ho, Wo = H // 2, W // 2
    x = x[:, :Ho * 2, :Wo * 2, :]
    a = x[:, 0::2, 0::2, :]
    b = x[:, 0::2, 1::2, :]
    c = x[:, 1::2, 0::2, :]
    d = x[:, 1::2, 1::2, :]
    th = _pick_th(Ho, Wo, C, 2)
    return _max4_call(B, Ho, Wo, C, th)(a, b, c, d)


# ---------------------------------------------------------------------------
# Channel attention
# ---------------------------------------------------------------------------
def _smm_kernel(x_ref, mean_ref, max_ref, *, inv_hw):
    h = pl.program_id(1)
    x = x_ref[0].astype(jnp.float32)                         # (th, W, C)
    s = jnp.sum(jnp.sum(x, axis=0), axis=0, keepdims=True)   # (1, C)
    m = jnp.max(jnp.max(x, axis=0), axis=0, keepdims=True)   # (1, C)

    @pl.when(h == 0)
    def _():
        mean_ref[0] = s
        max_ref[0] = m

    @pl.when(h > 0)
    def _():
        mean_ref[0] = mean_ref[0] + s
        max_ref[0] = jnp.maximum(max_ref[0], m)

    @pl.when(h == pl.num_programs(1) - 1)
    def _():
        mean_ref[0] = mean_ref[0] * inv_hw


@functools.lru_cache(maxsize=None)
def _smm_call(B, H, W, C, th):
    kernel = functools.partial(_smm_kernel, inv_hw=1.0 / (H * W))
    xspec = pl.BlockSpec((1, th, W, C), lambda b, h: (b, h, 0, 0))
    ospec = pl.BlockSpec((1, 1, C), lambda b, h: (b, 0, 0))
    call = pl.pallas_call(
        kernel,
        out_shape=(jax.ShapeDtypeStruct((B, 1, C), jnp.float32),
                   jax.ShapeDtypeStruct((B, 1, C), jnp.float32)),
        grid_spec=pltpu.PrefetchScalarGridSpec(
            num_scalar_prefetch=0, grid=(B, H // th),
            in_specs=[xspec], out_specs=(ospec, ospec)),
        compiler_params=_cp(("parallel", "arbitrary")))
    return jax.jit(call)


def _ca_mlp_kernel(a_ref, w1_ref, b1_ref, w2_ref, b2_ref, o_ref):
    h = jnp.dot(a_ref[...], w1_ref[...], preferred_element_type=jnp.float32)
    h = jnp.maximum(h + b1_ref[...], 0.0)
    o_ref[...] = jnp.dot(h, w2_ref[...],
                         preferred_element_type=jnp.float32) + b2_ref[...]


@functools.lru_cache(maxsize=None)
def _ca_mlp_call(M, C, Ch):
    call = pl.pallas_call(
        _ca_mlp_kernel,
        out_shape=jax.ShapeDtypeStruct((M, C), jnp.float32),
        grid_spec=pltpu.PrefetchScalarGridSpec(
            num_scalar_prefetch=0, grid=(1,),
            in_specs=[pl.BlockSpec((M, C), lambda i: (0, 0)),
                      pl.BlockSpec((C, Ch), lambda i: (0, 0)),
                      pl.BlockSpec((1, Ch), lambda i: (0, 0)),
                      pl.BlockSpec((Ch, C), lambda i: (0, 0)),
                      pl.BlockSpec((1, C), lambda i: (0, 0))],
            out_specs=pl.BlockSpec((M, C), lambda i: (0, 0))),
        compiler_params=_cp(("arbitrary",)))
    return jax.jit(call)


def _ca_apply_kernel(x_ref, a_ref, m_ref, o_ref):
    att = jax.nn.sigmoid(a_ref[0] + m_ref[0])                # (1, C) f32
    o_ref[0] = (x_ref[0].astype(jnp.float32) * att[None]).astype(o_ref.dtype)


@functools.lru_cache(maxsize=None)
def _ca_apply_call(B, H, W, C, th):
    xspec = pl.BlockSpec((1, th, W, C), lambda b, h: (b, h, 0, 0))
    aspec = pl.BlockSpec((1, 1, C), lambda b, h: (b, 0, 0))
    call = pl.pallas_call(
        _ca_apply_kernel,
        out_shape=jax.ShapeDtypeStruct((B, H, W, C), jnp.bfloat16),
        grid_spec=pltpu.PrefetchScalarGridSpec(
            num_scalar_prefetch=0, grid=(B, H // th),
            in_specs=[xspec, aspec, aspec], out_specs=xspec),
        compiler_params=_cp(("parallel", "parallel")))
    return jax.jit(call)


def channel_attention(x, p):
    B, H, W, C = x.shape
    th = _pick_th(H, W, C, 2)
    mean, mx = _smm_call(B, H, W, C, th)(x)                  # (B,1,C) f32 each
    stacked = jnp.concatenate([mean[:, 0, :], mx[:, 0, :]], axis=0)   # (2B, C)
    att = _ca_mlp_call(2 * B, C, p["w1"].shape[1])(
        stacked, p["w1"], p["b1"].reshape(1, -1), p["w2"], p["b2"].reshape(1, -1))
    avg_att = att[:B].reshape(B, 1, C)
    max_att = att[B:].reshape(B, 1, C)
    return _ca_apply_call(B, H, W, C, th)(x, avg_att, max_att)


# ---------------------------------------------------------------------------
# Spatial attention (channel mean/max -> 7x7 conv -> sigmoid -> scale)
# ---------------------------------------------------------------------------
def _cmm_kernel(x_ref, o_ref, *, inv_c):
    x = x_ref[0].astype(jnp.float32)                         # (th, W, C)
    mean = jnp.sum(x, axis=-1, keepdims=True) * inv_c
    mx = jnp.max(x, axis=-1, keepdims=True)
    o_ref[0] = jnp.concatenate([mean, mx], axis=-1)          # (th, W, 2)


@functools.lru_cache(maxsize=None)
def _cmm_call(B, H, W, C, th):
    kernel = functools.partial(_cmm_kernel, inv_c=1.0 / C)
    xspec = pl.BlockSpec((1, th, W, C), lambda b, h: (b, h, 0, 0))
    ospec = pl.BlockSpec((1, th, W, 2), lambda b, h: (b, h, 0, 0))
    call = pl.pallas_call(
        kernel,
        out_shape=jax.ShapeDtypeStruct((B, H, W, 2), jnp.float32),
        grid_spec=pltpu.PrefetchScalarGridSpec(
            num_scalar_prefetch=0, grid=(B, H // th),
            in_specs=[xspec], out_specs=ospec),
        compiler_params=_cp(("parallel", "parallel")))
    return jax.jit(call)


def _sa_fused_kernel(p_ref, w_ref, x_ref, o_ref):
    # 7x7 conv as one lane-dense matmul (N padded to 128, only col 0 real),
    # then sigmoid and per-pixel scale of x, all in one pass.
    att = jnp.dot(p_ref[...], w_ref[...], preferred_element_type=jnp.float32)
    att = jax.nn.sigmoid(att[:, 0:1])                        # (tm, 1)
    o_ref[...] = (x_ref[...].astype(jnp.float32) * att).astype(o_ref.dtype)


@functools.lru_cache(maxsize=None)
def _sa_fused_call(M, C, tm):
    call = pl.pallas_call(
        _sa_fused_kernel,
        out_shape=jax.ShapeDtypeStruct((M, C), jnp.bfloat16),
        grid_spec=pltpu.PrefetchScalarGridSpec(
            num_scalar_prefetch=0, grid=(M // tm,),
            in_specs=[pl.BlockSpec((tm, 98), lambda i: (i, 0)),
                      pl.BlockSpec((98, 128), lambda i: (0, 0)),
                      pl.BlockSpec((tm, C), lambda i: (i, 0))],
            out_specs=pl.BlockSpec((tm, C), lambda i: (i, 0))),
        compiler_params=_cp(("parallel",)))
    return jax.jit(call)


def spatial_attention(x, p):
    B, H, W, C = x.shape
    th = _pick_th(H, W, C, 2)
    mm = _cmm_call(B, H, W, C, th)(x)                        # (B,H,W,2) f32
    # tiny 2-channel im2col in glue (<=12 MB even at 244x244)
    mmp = jnp.pad(mm.astype(jnp.bfloat16), ((0, 0), (3, 3), (3, 3), (0, 0)))
    cols = [mmp[:, dy:dy + H, dx:dx + W, :]
            for dy in range(7) for dx in range(7)]
    patches = jnp.concatenate(cols, axis=-1).reshape(B * H * W, 98)
    w98 = jnp.pad(p["w"].astype(jnp.bfloat16), ((0, 0), (0, 127)))   # (98,128)
    xf = x.reshape(B * H * W, C)
    tm = _pick_tm(B * H * W, (98 + 2 * C) * 2, 2 * 1024 * 1024)
    out = _sa_fused_call(B * H * W, C, tm)(patches, w98, xf)
    return out.reshape(B, H, W, C)


# ---------------------------------------------------------------------------
# DS heads: 1x1 conv to one channel + sigmoid as a VPU multiply + lane-reduce
# ---------------------------------------------------------------------------
def _ds_kernel(x_ref, w_ref, b_ref, o_ref):
    xf = x_ref[...].astype(jnp.float32)
    s = jnp.sum(xf * w_ref[...], axis=1, keepdims=True) + b_ref[...]
    o_ref[...] = jax.nn.sigmoid(s)


@functools.lru_cache(maxsize=None)
def _ds_call(M, C, tm):
    call = pl.pallas_call(
        _ds_kernel,
        out_shape=jax.ShapeDtypeStruct((M, 1), jnp.float32),
        grid_spec=pltpu.PrefetchScalarGridSpec(
            num_scalar_prefetch=0, grid=(M // tm,),
            in_specs=[pl.BlockSpec((tm, C), lambda i: (i, 0)),
                      pl.BlockSpec((1, C), lambda i: (0, 0)),
                      pl.BlockSpec((1, 1), lambda i: (0, 0))],
            out_specs=pl.BlockSpec((tm, 1), lambda i: (i, 0))),
        compiler_params=_cp(("parallel",)))
    return jax.jit(call)


def ds_head(x, p):
    B, H, W, C = x.shape
    xf = x.reshape(B * H * W, C)
    tm = _pick_tm(B * H * W, C * 2 + 8, 4 * 1024 * 1024)
    out = _ds_call(B * H * W, C, tm)(xf, p["w"].reshape(1, C),
                                     p["b"].reshape(1, 1))
    return out.reshape(B, H, W, 1)


# ---------------------------------------------------------------------------
# Bilinear upsample (align_corners=True): per-output-row kernel; rows gathered
# via scalar-prefetched indices, column interpolation done as a matmul.
# ---------------------------------------------------------------------------
def _upsample_kernel(iy0_ref, iy1_ref, x0_ref, x1_ref, mx_ref, o_ref, *, scale):
    y = pl.program_id(1)
    fy = y.astype(jnp.float32) * scale - iy0_ref[y].astype(jnp.float32)
    r0 = x0_ref[0, 0].astype(jnp.float32)                    # (W, C)
    r1 = x1_ref[0, 0].astype(jnp.float32)
    row = r0 * (1.0 - fy) + r1 * fy
    out = jnp.dot(mx_ref[...], row, preferred_element_type=jnp.float32)
    o_ref[0, 0] = out.astype(o_ref.dtype)


@functools.lru_cache(maxsize=None)
def _upsample_call(B, H, W, C, Ho, Wo, scale):
    kernel = functools.partial(_upsample_kernel, scale=scale)
    x0 = pl.BlockSpec((1, 1, W, C), lambda b, y, iy0, iy1: (b, iy0[y], 0, 0))
    x1 = pl.BlockSpec((1, 1, W, C), lambda b, y, iy0, iy1: (b, iy1[y], 0, 0))
    mxs = pl.BlockSpec((Wo, W), lambda b, y, iy0, iy1: (0, 0))
    osp = pl.BlockSpec((1, 1, Wo, C), lambda b, y, iy0, iy1: (b, y, 0, 0))
    call = pl.pallas_call(
        kernel,
        out_shape=jax.ShapeDtypeStruct((B, Ho, Wo, C), jnp.bfloat16),
        grid_spec=pltpu.PrefetchScalarGridSpec(
            num_scalar_prefetch=2, grid=(B, Ho),
            in_specs=[x0, x1, mxs], out_specs=osp),
        compiler_params=_cp(("parallel", "arbitrary")))
    return jax.jit(call)


def bilinear_upsample(x, out_hw):
    B, H, W, C = x.shape
    Ho, Wo = out_hw

    def grid1d(n_in, n_out):
        if n_out == 1:
            return (np.zeros(1, np.int32), np.zeros(1, np.int32),
                    np.zeros(1, np.float64), 0.0)
        scale = (n_in - 1) / (n_out - 1)
        src = np.arange(n_out, dtype=np.float64) * scale
        i0 = np.clip(np.floor(src).astype(np.int32), 0, max(n_in - 2, 0))
        frac = src - i0
        return i0, np.minimum(i0 + 1, n_in - 1).astype(np.int32), frac, scale

    iy0, iy1, _, sy = grid1d(H, Ho)
    ix0, ix1, fx, _ = grid1d(W, Wo)
    mx = np.zeros((Wo, W), np.float32)
    mx[np.arange(Wo), ix0] += (1.0 - fx)
    mx[np.arange(Wo), ix1] += fx
    call = _upsample_call(B, H, W, C, Ho, Wo, float(sy))
    xb = x.astype(jnp.bfloat16)
    return call(jnp.asarray(iy0), jnp.asarray(iy1), xb, xb, jnp.asarray(mx))


# ---------------------------------------------------------------------------
# Parameters (deterministic synthetic He init)
# ---------------------------------------------------------------------------
def init_params(key):
    keys = iter(jax.random.split(key, 64))

    def conv_p(cin, cout):
        w = (jax.random.normal(next(keys), (9, cin, cout), jnp.float32)
             * math.sqrt(2.0 / (9 * cin)))
        return {"w": w.astype(jnp.bfloat16), "b": jnp.zeros((cout,), jnp.float32)}

    vgg_cfg = [(3, 64), (64, 64), (64, 128), (128, 128), (128, 256), (256, 256),
               (256, 256), (256, 512), (512, 512), (512, 512), (512, 512),
               (512, 512), (512, 512)]
    params = {"vgg": [conv_p(ci, co) for ci, co in vgg_cfg]}
    params["conv1"] = [conv_p(1024, 512), conv_p(512, 512), conv_p(512, 512)]
    params["conv2"] = [conv_p(1536, 1024), conv_p(1024, 512), conv_p(512, 256)]
    params["conv3"] = [conv_p(768, 512), conv_p(512, 256), conv_p(256, 128)]
    params["conv4"] = [conv_p(384, 256), conv_p(256, 128), conv_p(128, 64)]
    params["conv5"] = [conv_p(192, 128), conv_p(128, 64), conv_p(64, 32)]

    def ds_p(c):
        w = jax.random.normal(next(keys), (c,), jnp.float32) * math.sqrt(2.0 / c)
        return {"w": w, "b": jnp.zeros((1,), jnp.float32)}

    params["ds"] = [ds_p(c) for c in (512, 256, 128, 64, 32)]

    def ca_p(c, r=16):
        h = c // r
        return {"w1": jax.random.normal(next(keys), (c, h), jnp.float32) * math.sqrt(2.0 / c),
                "b1": jnp.zeros((h,), jnp.float32),
                "w2": jax.random.normal(next(keys), (h, c), jnp.float32) * math.sqrt(2.0 / h),
                "b2": jnp.zeros((c,), jnp.float32)}

    params["ca"] = [ca_p(c) for c in (1536, 768, 384, 192)]
    params["sa"] = [{"w": jax.random.normal(next(keys), (98, 1), jnp.float32)
                     * math.sqrt(2.0 / 98)} for _ in range(5)]
    return params


# ---------------------------------------------------------------------------
# DSIFN forward
# ---------------------------------------------------------------------------
def vgg_features(x, P):
    x = conv3x3(x, P[0]); x = conv3x3(x, P[1]); f4 = x
    x = maxpool2x2(x)
    x = conv3x3(x, P[2]); x = conv3x3(x, P[3]); f9 = x
    x = maxpool2x2(x)
    x = conv3x3(x, P[4]); x = conv3x3(x, P[5]); x = conv3x3(x, P[6]); f16 = x
    x = maxpool2x2(x)
    x = conv3x3(x, P[7]); x = conv3x3(x, P[8]); x = conv3x3(x, P[9]); f23 = x
    x = maxpool2x2(x)
    x = conv3x3(x, P[10]); x = conv3x3(x, P[11]); x = conv3x3(x, P[12]); f30 = x
    return f4, f9, f16, f23, f30


def dsifn_forward(x1, x2, params):
    # inputs NCHW (PyTorch convention) -> NHWC bf16 internally
    x1 = jnp.transpose(x1, (0, 2, 3, 1)).astype(jnp.bfloat16)
    x2 = jnp.transpose(x2, (0, 2, 3, 1)).astype(jnp.bfloat16)

    x1_f4, x1_f9, x1_f16, x1_f23, x1_f30 = vgg_features(x1, params["vgg"])
    x2_f4, x2_f9, x2_f16, x2_f23, x2_f30 = vgg_features(x2, params["vgg"])

    # stage 1
    concat_1 = jnp.concatenate([x1_f30, x2_f30], axis=-1)
    idf_1 = conv_block(concat_1, params["conv1"])
    idf_1 = spatial_attention(idf_1, params["sa"][0])
    ds_1 = ds_head(idf_1, params["ds"][0])

    # stage 2
    up = bilinear_upsample(idf_1, (idf_1.shape[1] * 2, idf_1.shape[2] * 2))
    concat_2 = jnp.concatenate([up, x1_f23, x2_f23], axis=-1)
    idf_2 = channel_attention(concat_2, params["ca"][0])
    idf_2 = conv_block(idf_2, params["conv2"])
    idf_2 = spatial_attention(idf_2, params["sa"][1])
    ds_2 = ds_head(idf_2, params["ds"][1])

    # stage 3 (fixed (61, 61) bilinear upsample, as in the PyTorch module)
    up = bilinear_upsample(idf_2, (61, 61))
    concat_3 = jnp.concatenate([up, x1_f16, x2_f16], axis=-1)
    idf_3 = channel_attention(concat_3, params["ca"][1])
    idf_3 = conv_block(idf_3, params["conv3"])
    idf_3 = spatial_attention(idf_3, params["sa"][2])
    ds_3 = ds_head(idf_3, params["ds"][2])

    # stage 4
    up = bilinear_upsample(idf_3, (idf_3.shape[1] * 2, idf_3.shape[2] * 2))
    concat_4 = jnp.concatenate([up, x1_f9, x2_f9], axis=-1)
    idf_4 = channel_attention(concat_4, params["ca"][2])
    idf_4 = conv_block(idf_4, params["conv4"])
    idf_4 = spatial_attention(idf_4, params["sa"][3])
    ds_4 = ds_head(idf_4, params["ds"][3])

    # stage 5
    up = bilinear_upsample(idf_4, (idf_4.shape[1] * 2, idf_4.shape[2] * 2))
    concat_5 = jnp.concatenate([up, x1_f4, x2_f4], axis=-1)
    idf_5 = channel_attention(concat_5, params["ca"][3])
    idf_5 = conv_block(idf_5, params["conv5"])
    idf_5 = spatial_attention(idf_5, params["sa"][4])
    ds_5 = ds_head(idf_5, params["ds"][4])

    to_nchw = lambda t: jnp.transpose(t, (0, 3, 1, 2))
    return tuple(to_nchw(t) for t in (ds_1, ds_2, ds_3, ds_4, ds_5))


# ---------------------------------------------------------------------------
if __name__ == "__main__":
    # The hard-coded nn.Upsample(size=(61, 61)) + VGG pooling pyramid force the
    # input spatial size to be exactly 244x244; batch kept at 1 to stay small.
    B, H, W = 1, 244, 244
    key = jax.random.PRNGKey(0)
    k1, k2 = jax.random.split(key)
    x1 = jax.random.normal(k1, (B, 3, H, W), jnp.float32)
    x2 = jax.random.normal(k2, (B, 3, H, W), jnp.float32)

    params = init_params(jax.random.PRNGKey(1))

    outs = dsifn_forward(x1, x2, params)
    outs = jax.block_until_ready(outs)

    expected = [(B, 1, 15, 15), (B, 1, 30, 30), (B, 1, 61, 61),
                (B, 1, 122, 122), (B, 1, 244, 244)]
    assert [tuple(o.shape) for o in outs] == expected, \
        [tuple(o.shape) for o in outs]
    assert all(bool(jnp.all(jnp.isfinite(o))) for o in outs)
    print("KERNEL_OK")
</pallas_src>

<mosaic_0001>
module attributes {stable_mosaic.version = 11 : i64} {
  func.func @_conv3x3_kernel(%arg0: i32, %arg1: i32, %arg2: i32, %arg3: memref<1x4x246x8xbf16, #tpu.memory_space<vmem>>, %arg4: memref<1x4x246x8xbf16, #tpu.memory_space<vmem>>, %arg5: memref<9x8x64xbf16, #tpu.memory_space<vmem>>, %arg6: memref<1x64xf32, #tpu.memory_space<vmem>>, %arg7: memref<1x4x244x64xbf16, #tpu.memory_space<vmem>>) attributes {dimension_semantics = [#tpu.dimension_semantics<parallel>, #tpu.dimension_semantics<parallel>, #tpu.dimension_semantics<parallel>], iteration_bounds = array<i64: 1, 1, 61>, scalar_prefetch = 0 : i64, scratch_operands = 0 : i64, tpu.core_type = #tpu.core_type<tc>, window_params = [{transform_indices = @transform_0, window_bounds = array<i64: 1, 4, 246, 8>}, {transform_indices = @transform_1, window_bounds = array<i64: 1, 4, 246, 8>}, {transform_indices = @transform_2, window_bounds = array<i64: 9, 8, 64>}, {transform_indices = @transform_3, window_bounds = array<i64: 1, 64>}, {transform_indices = @transform_4, window_bounds = array<i64: 1, 4, 244, 64>}]} {
    %c0 = arith.constant 0 : index
    %c0_0 = arith.constant 0 : index
    %0 = vector.load %arg6[%c0, %c0_0] : memref<1x64xf32, #tpu.memory_space<vmem>>, vector<1x64xf32>
    %c0_1 = arith.constant 0 : index
    %c0_2 = arith.constant 0 : index
    %c0_3 = arith.constant 0 : index
    %c0_4 = arith.constant 0 : index
    %1 = vector.load %arg3[%c0_1, %c0_2, %c0_3, %c0_4] : memref<1x4x246x8xbf16, #tpu.memory_space<vmem>>, vector<1x1x246x8xbf16>
    %2 = vector.shape_cast %1 : vector<1x1x246x8xbf16> to vector<246x8xbf16>
    %3 = vector.extract_strided_slice %2 {offsets = [0, 0], sizes = [244, 8], strides = [1, 1]} : vector<246x8xbf16> to vector<244x8xbf16>
    %c0_5 = arith.constant 0 : index
    %c0_6 = arith.constant 0 : index
    %c0_7 = arith.constant 0 : index
    %4 = vector.load %arg5[%c0_5, %c0_6, %c0_7] : memref<9x8x64xbf16, #tpu.memory_space<vmem>>, vector<1x8x64xbf16>
    %5 = vector.shape_cast %4 : vector<1x8x64xbf16> to vector<8x64xbf16>
    %cst = arith.constant dense<0.000000e+00> : vector<244x64xf32>
    %6 = tpu.matmul %3, %5, %cst {dimension_numbers = #tpu.dot_dimension_numbers<[1], [0], [0], [1], [0, 0, 1, 1], [], []>} : vector<244x8xbf16>, vector<8x64xbf16>, vector<244x64xf32> -> vector<244x64xf32>
    %7 = vector.extract_strided_slice %2 {offsets = [1, 0], sizes = [244, 8], strides = [1, 1]} : vector<246x8xbf16> to vector<244x8xbf16>
    %c1 = arith.constant 1 : index
    %c0_8 = arith.constant 0 : index
    %c0_9 = arith.constant 0 : index
    %8 = vector.load %arg5[%c1, %c0_8, %c0_9] : memref<9x8x64xbf16, #tpu.memory_space<vmem>>, vector<1x8x64xbf16>
    %9 = vector.shape_cast %8 : vector<1x8x64xbf16> to vector<8x64xbf16>
    %cst_10 = arith.constant dense<0.000000e+00> : vector<244x64xf32>
    %10 = tpu.matmul %7, %9, %cst_10 {dimension_numbers = #tpu.dot_dimension_numbers<[1], [0], [0], [1], [0, 0, 1, 1], [], []>} : vector<244x8xbf16>, vector<8x64xbf16>, vector<244x64xf32> -> vector<244x64xf32>
    %11 = arith.addf %6, %10 : vector<244x64xf32>
    %12 = vector.extract_strided_slice %2 {offsets = [2, 0], sizes = [244, 8], strides = [1, 1]} : vector<246x8xbf16> to vector<244x8xbf16>
    %c2 = arith.constant 2 : index
    %c0_11 = arith.constant 0 : index
    %c0_12 = arith.constant 0 : index
    %13 = vector.load %arg5[%c2, %c0_11, %c0_12] : memref<9x8x64xbf16, #tpu.memory_space<vmem>>, vector<1x8x64xbf16>
    %14 = vector.shape_cast %13 : vector<1x8x64xbf16> to vector<8x64xbf16>
    %cst_13 = arith.constant dense<0.000000e+00> : vector<244x64xf32>
    %15 = tpu.matmul %12, %14, %cst_13 {dimension_numbers = #tpu.dot_dimension_numbers<[1], [0], [0], [1], [0, 0, 1, 1], [], []>} : vector<244x8xbf16>, vector<8x64xbf16>, vector<244x64xf32> -> vector<244x64xf32>
    %16 = arith.addf %11, %15 : vector<244x64xf32>
    %c0_14 = arith.constant 0 : index
    %c1_15 = arith.constant 1 : index
    %c0_16 = arith.constant 0 : index
    %c0_17 = arith.constant 0 : index
    %17 = vector.load %arg3[%c0_14, %c1_15, %c0_16, %c0_17] : memref<1x4x246x8xbf16, #tpu.memory_space<vmem>>, vector<1x1x246x8xbf16>
    %18 = vector.shape_cast %17 : vector<1x1x246x8xbf16> to vector<246x8xbf16>
    %19 = vector.extract_strided_slice %18 {offsets = [0, 0], sizes = [244, 8], strides = [1, 1]} : vector<246x8xbf16> to vector<244x8xbf16>
    %c3 = arith.constant 3 : index
    %c0_18 = arith.constant 0 : index
    %c0_19 = arith.constant 0 : index
    %20 = vector.load %arg5[%c3, %c0_18, %c0_19] : memref<9x8x64xbf16, #tpu.memory_space<vmem>>, vector<1x8x64xbf16>
    %21 = vector.shape_cast %20 : vector<1x8x64xbf16> to vector<8x64xbf16>
    %cst_20 = arith.constant dense<0.000000e+00> : vector<244x64xf32>
    %22 = tpu.matmul %19, %21, %cst_20 {dimension_numbers = #tpu.dot_dimension_numbers<[1], [0], [0], [1], [0, 0, 1, 1], [], []>} : vector<244x8xbf16>, vector<8x64xbf16>, vector<244x64xf32> -> vector<244x64xf32>
    %23 = arith.addf %16, %22 : vector<244x64xf32>
    %24 = vector.extract_strided_slice %18 {offsets = [1, 0], sizes = [244, 8], strides = [1, 1]} : vector<246x8xbf16> to vector<244x8xbf16>
    %c4 = arith.constant 4 : index
    %c0_21 = arith.constant 0 : index
    %c0_22 = arith.constant 0 : index
    %25 = vector.load %arg5[%c4, %c0_21, %c0_22] : memref<9x8x64xbf16, #tpu.memory_space<vmem>>, vector<1x8x64xbf16>
    %26 = vector.shape_cast %25 : vector<1x8x64xbf16> to vector<8x64xbf16>
    %cst_23 = arith.constant dense<0.000000e+00> : vector<244x64xf32>
    %27 = tpu.matmul %24, %26, %cst_23 {dimension_numbers = #tpu.dot_dimension_numbers<[1], [0], [0], [1], [0, 0, 1, 1], [], []>} : vector<244x8xbf16>, vector<8x64xbf16>, vector<244x64xf32> -> vector<244x64xf32>
    %28 = arith.addf %23, %27 : vector<244x64xf32>
    %29 = vector.extract_strided_slice %18 {offsets = [2, 0], sizes = [244, 8], strides = [1, 1]} : vector<246x8xbf16> to vector<244x8xbf16>
    %c5 = arith.constant 5 : index
    %c0_24 = arith.constant 0 : index
    %c0_25 = arith.constant 0 : index
    %30 = vector.load %arg5[%c5, %c0_24, %c0_25] : memref<9x8x64xbf16, #tpu.memory_space<vmem>>, vector<1x8x64xbf16>
    %31 = vector.shape_cast %30 : vector<1x8x64xbf16> to vector<8x64xbf16>
    %cst_26 = arith.constant dense<0.000000e+00> : vector<244x64xf32>
    %32 = tpu.matmul %29, %31, %cst_26 {dimension_numbers = #tpu.dot_dimension_numbers<[1], [0], [0], [1], [0, 0, 1, 1], [], []>} : vector<244x8xbf16>, vector<8x64xbf16>, vector<244x64xf32> -> vector<244x64xf32>
    %33 = arith.addf %28, %32 : vector<244x64xf32>
    %c0_27 = arith.constant 0 : index
    %c2_28 = arith.constant 2 : index
    %c0_29 = arith.constant 0 : index
    %c0_30 = arith.constant 0 : index
    %34 = vector.load %arg3[%c0_27, %c2_28, %c0_29, %c0_30] : memref<1x4x246x8xbf16, #tpu.memory_space<vmem>>, vector<1x1x246x8xbf16>
    %35 = vector.shape_cast %34 : vector<1x1x246x8xbf16> to vector<246x8xbf16>
    %36 = vector.extract_strided_slice %35 {offsets = [0, 0], sizes = [244, 8], strides = [1, 1]} : vector<246x8xbf16> to vector<244x8xbf16>
    %c6 = arith.constant 6 : index
    %c0_31 = arith.constant 0 : index
    %c0_32 = arith.constant 0 : index
    %37 = vector.load %arg5[%c6, %c0_31, %c0_32] : memref<9x8x64xbf16, #tpu.memory_space<vmem>>, vector<1x8x64xbf16>
    %38 = vector.shape_cast %37 : vector<1x8x64xbf16> to vector<8x64xbf16>
    %cst_33 = arith.constant dense<0.000000e+00> : vector<244x64xf32>
    %39 = tpu.matmul %36, %38, %cst_33 {dimension_numbers = #tpu.dot_dimension_numbers<[1], [0], [0], [1], [0, 0, 1, 1], [], []>} : vector<244x8xbf16>, vector<8x64xbf16>, vector<244x64xf32> -> vector<244x64xf32>
    %40 = arith.addf %33, %39 : vector<244x64xf32>
    %41 = vector.extract_strided_slice %35 {offsets = [1, 0], sizes = [244, 8], strides = [1, 1]} : vector<246x8xbf16> to vector<244x8xbf16>
    %c7 = arith.constant 7 : index
    %c0_34 = arith.constant 0 : index
    %c0_35 = arith.constant 0 : index
    %42 = vector.load %arg5[%c7, %c0_34, %c0_35] : memref<9x8x64xbf16, #tpu.memory_space<vmem>>, vector<1x8x64xbf16>
    %43 = vector.shape_cast %42 : vector<1x8x64xbf16> to vector<8x64xbf16>
    %cst_36 = arith.constant dense<0.000000e+00> : vector<244x64xf32>
    %44 = tpu.matmul %41, %43, %cst_36 {dimension_numbers = #tpu.dot_dimension_numbers<[1], [0], [0], [1], [0, 0, 1, 1], [], []>} : vector<244x8xbf16>, vector<8x64xbf16>, vector<244x64xf32> -> vector<244x64xf32>
    %45 = arith.addf %40, %44 : vector<244x64xf32>
    %46 = vector.extract_strided_slice %35 {offsets = [2, 0], sizes = [244, 8], strides = [1, 1]} : vector<246x8xbf16> to vector<244x8xbf16>
    %c8 = arith.constant 8 : index
    %c0_37 = arith.constant 0 : index
    %c0_38 = arith.constant 0 : index
    %47 = vector.load %arg5[%c8, %c0_37, %c0_38] : memref<9x8x64xbf16, #tpu.memory_space<vmem>>, vector<1x8x64xbf16>
    %48 = vector.shape_cast %47 : vector<1x8x64xbf16> to vector<8x64xbf16>
    %cst_39 = arith.constant dense<0.000000e+00> : vector<244x64xf32>
    %49 = tpu.matmul %46, %48, %cst_39 {dimension_numbers = #tpu.dot_dimension_numbers<[1], [0], [0], [1], [0, 0, 1, 1], [], []>} : vector<244x8xbf16>, vector<8x64xbf16>, vector<244x64xf32> -> vector<244x64xf32>
    %50 = arith.addf %45, %49 : vector<244x64xf32>
    %51 = vector.broadcast %0 : vector<1x64xf32> to vector<244x64xf32>
    %52 = arith.addf %50, %51 : vector<244x64xf32>
    %cst_40 = arith.constant 0.000000e+00 : f32
    %53 = vector.broadcast %cst_40 : f32 to vector<244x64xf32>
    %54 = arith.maximumf %52, %53 : vector<244x64xf32>
    %55 = arith.truncf %54 : vector<244x64xf32> to vector<244x64xbf16>
    %c0_41 = arith.constant 0 : index
    %c0_42 = arith.constant 0 : index
    %c0_43 = arith.constant 0 : index
    %c0_44 = arith.constant 0 : index
    %56 = vector.load %arg7[%c0_41, %c0_42, %c0_43, %c0_44] : memref<1x4x244x64xbf16, #tpu.memory_space<vmem>>, vector<1x1x244x64xbf16>
    %57 = vector.shape_cast %56 : vector<1x1x244x64xbf16> to vector<244x64xbf16>
    %58 = vector.shape_cast %55 : vector<244x64xbf16> to vector<1x1x244x64xbf16>
    tpu.vector_store %arg7[%c0_41, %c0_42, %c0_43, %c0_44], %58 {strides = array<i32>} : memref<1x4x244x64xbf16, #tpu.memory_space<vmem>>, vector<1x1x244x64xbf16>,
    %c0_45 = arith.constant 0 : index
    %c1_46 = arith.constant 1 : index
    %c0_47 = arith.constant 0 : index
    %c0_48 = arith.constant 0 : index
    %59 = vector.load %arg3[%c0_45, %c1_46, %c0_47, %c0_48] : memref<1x4x246x8xbf16, #tpu.memory_space<vmem>>, vector<1x1x246x8xbf16>
    %60 = vector.shape_cast %59 : vector<1x1x246x8xbf16> to vector<246x8xbf16>
    %61 = vector.extract_strided_slice %60 {offsets = [0, 0], sizes = [244, 8], strides = [1, 1]} : vector<246x8xbf16> to vector<244x8xbf16>
    %c0_49 = arith.constant 0 : index
    %c0_50 = arith.constant 0 : index
    %c0_51 = arith.constant 0 : index
    %62 = vector.load %arg5[%c0_49, %c0_50, %c0_51] : memref<9x8x64xbf16, #tpu.memory_space<vmem>>, vector<1x8x64xbf16>
    %63 = vector.shape_cast %62 : vector<1x8x64xbf16> to vector<8x64xbf16>
    %cst_52 = arith.constant dense<0.000000e+00> : vector<244x64xf32>
    %64 = tpu.matmul %61, %63, %cst_52 {dimension_numbers = #tpu.dot_dimension_numbers<[1], [0], [0], [1], [0, 0, 1, 1], [], []>} : vector<244x8xbf16>, vector<8x64xbf16>, vector<244x64xf32> -> vector<244x64xf32>
    %65 = vector.extract_strided_slice %60 {offsets = [1, 0], sizes = [244, 8], strides = [1, 1]} : vector<246x8xbf16> to vector<244x8xbf16>
    %c1_53 = arith.constant 1 : index
    %c0_54 = arith.constant 0 : index
    %c0_55 = arith.constant 0 : index
    %66 = vector.load %arg5[%c1_53, %c0_54, %c0_55] : memref<9x8x64xbf16, #tpu.memory_space<vmem>>, vector<1x8x64xbf16>
    %67 = vector.shape_cast %66 : vector<1x8x64xbf16> to vector<8x64xbf16>
    %cst_56 = arith.constant dense<0.000000e+00> : vector<244x64xf32>
    %68 = tpu.matmul %65, %67, %cst_56 {dimension_numbers = #tpu.dot_dimension_numbers<[1], [0], [0], [1], [0, 0, 1, 1], [], []>} : vector<244x8xbf16>, vector<8x64xbf16>, vector<244x64xf32> -> vector<244x64xf32>
    %69 = arith.addf %64, %68 : vector<244x64xf32>
    %70 = vector.extract_strided_slice %60 {offsets = [2, 0], sizes = [244, 8], strides = [1, 1]} : vector<246x8xbf16> to vector<244x8xbf16>
    %c2_57 = arith.constant 2 : index
    %c0_58 = arith.constant 0 : index
    %c0_59 = arith.constant 0 : index
    %71 = vector.load %arg5[%c2_57, %c0_58, %c0_59] : memref<9x8x64xbf16, #tpu.memory_space<vmem>>, vector<1x8x64xbf16>
    %72 = vector.shape_cast %71 : vector<1x8x64xbf16> to vector<8x64xbf16>
    %cst_60 = arith.constant dense<0.000000e+00> : vector<244x64xf32>
    %73 = tpu.matmul %70, %72, %cst_60 {dimension_numbers = #tpu.dot_dimension_numbers<[1], [0], [0], [1], [0, 0, 1, 1], [], []>} : vector<244x8xbf16>, vector<8x64xbf16>, vector<244x64xf32> -> vector<244x64xf32>
    %74 = arith.addf %69, %73 : vector<244x64xf32>
    %c0_61 = arith.constant 0 : index
    %c2_62 = arith.constant 2 : index
    %c0_63 = arith.constant 0 : index
    %c0_64 = arith.constant 0 : index
    %75 = vector.load %arg3[%c0_61, %c2_62, %c0_63, %c0_64] : memref<1x4x246x8xbf16, #tpu.memory_space<vmem>>, vector<1x1x246x8xbf16>
    %76 = vector.shape_cast %75 : vector<1x1x246x8xbf16> to vector<246x8xbf16>
    %77 = vector.extract_strided_slice %76 {offsets = [0, 0], sizes = [244, 8], strides = [1, 1]} : vector<246x8xbf16> to vector<244x8xbf16>
    %c3_65 = arith.constant 3 : index
    %c0_66 = arith.constant 0 : index
    %c0_67 = arith.constant 0 : index
    %78 = vector.load %arg5[%c3_65, %c0_66, %c0_67] : memref<9x8x64xbf16, #tpu.memory_space<vmem>>, vector<1x8x64xbf16>
    %79 = vector.shape_cast %78 : vector<1x8x64xbf16> to vector<8x64xbf16>
    %cst_68 = arith.constant dense<0.000000e+00> : vector<244x64xf32>
    %80 = tpu.matmul %77, %79, %cst_68 {dimension_numbers = #tpu.dot_dimension_numbers<[1], [0], [0], [1], [0, 0, 1, 1], [], []>} : vector<244x8xbf16>, vector<8x64xbf16>, vector<244x64xf32> -> vector<244x64xf32>
    %81 = arith.addf %74, %80 : vector<244x64xf32>
    %82 = vector.extract_strided_slice %76 {offsets = [1, 0], sizes = [244, 8], strides = [1, 1]} : vector<246x8xbf16> to vector<244x8xbf16>
    %c4_69 = arith.constant 4 : index
    %c0_70 = arith.constant 0 : index
    %c0_71 = arith.constant 0 : index
    %83 = vector.load %arg5[%c4_69, %c0_70, %c0_71] : memref<9x8x64xbf16, #tpu.memory_space<vmem>>, vector<1x8x64xbf16>
    %84 = vector.shape_cast %83 : vector<1x8x64xbf16> to vector<8x64xbf16>
    %cst_72 = arith.constant dense<0.000000e+00> : vector<244x64xf32>
    %85 = tpu.matmul %82, %84, %cst_72 {dimension_numbers = #tpu.dot_dimension_numbers<[1], [0], [0], [1], [0, 0, 1, 1], [], []>} : vector<244x8xbf16>, vector<8x64xbf16>, vector<244x64xf32> -> vector<244x64xf32>
    %86 = arith.addf %81, %85 : vector<244x64xf32>
    %87 = vector.extract_strided_slice %76 {offsets = [2, 0], sizes = [244, 8], strides = [1, 1]} : vector<246x8xbf16> to vector<244x8xbf16>
    %c5_73 = arith.constant 5 : index
    %c0_74 = arith.constant 0 : index
    %c0_75 = arith.constant 0 : index
    %88 = vector.load %arg5[%c5_73, %c0_74, %c0_75] : memref<9x8x64xbf16, #tpu.memory_space<vmem>>, vector<1x8x64xbf16>
    %89 = vector.shape_cast %88 : vector<1x8x64xbf16> to vector<8x64xbf16>
    %cst_76 = arith.constant dense<0.000000e+00> : vector<244x64xf32>
    %90 = tpu.matmul %87, %89, %cst_76 {dimension_numbers = #tpu.dot_dimension_numbers<[1], [0], [0], [1], [0, 0, 1, 1], [], []>} : vector<244x8xbf16>, vector<8x64xbf16>, vector<244x64xf32> -> vector<244x64xf32>
    %91 = arith.addf %86, %90 : vector<244x64xf32>
    %c0_77 = arith.constant 0 : index
    %c3_78 = arith.constant 3 : index
    %c0_79 = arith.constant 0 : index
    %c0_80 = arith.constant 0 : index
    %92 = vector.load %arg3[%c0_77, %c3_78, %c0_79, %c0_80] : memref<1x4x246x8xbf16, #tpu.memory_space<vmem>>, vector<1x1x246x8xbf16>
    %93 = vector.shape_cast %92 : vector<1x1x246x8xbf16> to vector<246x8xbf16>
    %94 = vector.extract_strided_slice %93 {offsets = [0, 0], sizes = [244, 8], strides = [1, 1]} : vector<246x8xbf16> to vector<244x8xbf16>
    %c6_81 = arith.constant 6 : index
    %c0_82 = arith.constant 0 : index
    %c0_83 = arith.constant 0 : index
    %95 = vector.load %arg5[%c6_81, %c0_82, %c0_83] : memref<9x8x64xbf16, #tpu.memory_space<vmem>>, vector<1x8x64xbf16>
    %96 = vector.shape_cast %95 : vector<1x8x64xbf16> to vector<8x64xbf16>
    %cst_84 = arith.constant dense<0.000000e+00> : vector<244x64xf32>
    %97 = tpu.matmul %94, %96, %cst_84 {dimension_numbers = #tpu.dot_dimension_numbers<[1], [0], [0], [1], [0, 0, 1, 1], [], []>} : vector<244x8xbf16>, vector<8x64xbf16>, vector<244x64xf32> -> vector<244x64xf32>
    %98 = arith.addf %91, %97 : vector<244x64xf32>
    %99 = vector.extract_strided_slice %93 {offsets = [1, 0], sizes = [244, 8], strides = [1, 1]} : vector<246x8xbf16> to vector<244x8xbf16>
    %c7_85 = arith.constant 7 : index
    %c0_86 = arith.constant 0 : index
    %c0_87 = arith.constant 0 : index
    %100 = vector.load %arg5[%c7_85, %c0_86, %c0_87] : memref<9x8x64xbf16, #tpu.memory_space<vmem>>, vector<1x8x64xbf16>
    %101 = vector.shape_cast %100 : vector<1x8x64xbf16> to vector<8x64xbf16>
    %cst_88 = arith.constant dense<0.000000e+00> : vector<244x64xf32>
    %102 = tpu.matmul %99, %101, %cst_88 {dimension_numbers = #tpu.dot_dimension_numbers<[1], [0], [0], [1], [0, 0, 1, 1], [], []>} : vector<244x8xbf16>, vector<8x64xbf16>, vector<244x64xf32> -> vector<244x64xf32>
    %103 = arith.addf %98, %102 : vector<244x64xf32>
    %104 = vector.extract_strided_slice %93 {offsets = [2, 0], sizes = [244, 8], strides = [1, 1]} : vector<246x8xbf16> to vector<244x8xbf16>
    %c8_89 = arith.constant 8 : index
    %c0_90 = arith.constant 0 : index
    %c0_91 = arith.constant 0 : index
    %105 = vector.load %arg5[%c8_89, %c0_90, %c0_91] : memref<9x8x64xbf16, #tpu.memory_space<vmem>>, vector<1x8x64xbf16>
    %106 = vector.shape_cast %105 : vector<1x8x64xbf16> to vector<8x64xbf16>
    %cst_92 = arith.constant dense<0.000000e+00> : vector<244x64xf32>
    %107 = tpu.matmul %104, %106, %cst_92 {dimension_numbers = #tpu.dot_dimension_numbers<[1], [0], [0], [1], [0, 0, 1, 1], [], []>} : vector<244x8xbf16>, vector<8x64xbf16>, vector<244x64xf32> -> vector<244x64xf32>
    %108 = arith.addf %103, %107 : vector<244x64xf32>
    %109 = vector.broadcast %0 : vector<1x64xf32> to vector<244x64xf32>
    %110 = arith.addf %108, %109 : vector<244x64xf32>
    %cst_93 = arith.constant 0.000000e+00 : f32
    %111 = vector.broadcast %cst_93 : f32 to vector<244x64xf32>
    %112 = arith.maximumf %110, %111 : vector<244x64xf32>
    %113 = arith.truncf %112 : vector<244x64xf32> to vector<244x64xbf16>
    %c0_94 = arith.constant 0 : index
    %c1_95 = arith.constant 1 : index
    %c0_96 = arith.constant 0 : index
    %c0_97 = arith.constant 0 : index
    %114 = vector.load %arg7[%c0_94, %c1_95, %c0_96, %c0_97] : memref<1x4x244x64xbf16, #tpu.memory_space<vmem>>, vector<1x1x244x64xbf16>
    %115 = vector.shape_cast %114 : vector<1x1x244x64xbf16> to vector<244x64xbf16>
    %116 = vector.shape_cast %113 : vector<244x64xbf16> to vector<1x1x244x64xbf16>
    tpu.vector_store %arg7[%c0_94, %c1_95, %c0_96, %c0_97], %116 {strides = array<i32>} : memref<1x4x244x64xbf16, #tpu.memory_space<vmem>>, vector<1x1x244x64xbf16>,
    %c0_98 = arith.constant 0 : index
    %c2_99 = arith.constant 2 : index
    %c0_100 = arith.constant 0 : index
    %c0_101 = arith.constant 0 : index
    %117 = vector.load %arg3[%c0_98, %c2_99, %c0_100, %c0_101] : memref<1x4x246x8xbf16, #tpu.memory_space<vmem>>, vector<1x1x246x8xbf16>
    %118 = vector.shape_cast %117 : vector<1x1x246x8xbf16> to vector<246x8xbf16>
    %119 = vector.extract_strided_slice %118 {offsets = [0, 0], sizes = [244, 8], strides = [1, 1]} : vector<246x8xbf16> to vector<244x8xbf16>
    %c0_102 = arith.constant 0 : index
    %c0_103 = arith.constant 0 : index
    %c0_104 = arith.constant 0 : index
    %120 = vector.load %arg5[%c0_102, %c0_103, %c0_104] : memref<9x8x64xbf16, #tpu.memory_space<vmem>>, vector<1x8x64xbf16>
    %121 = vector.shape_cast %120 : vector<1x8x64xbf16> to vector<8x64xbf16>
    %cst_105 = arith.constant dense<0.000000e+00> : vector<244x64xf32>
    %122 = tpu.matmul %119, %121, %cst_105 {dimension_numbers = #tpu.dot_dimension_numbers<[1], [0], [0], [1], [0, 0, 1, 1], [], []>} : vector<244x8xbf16>, vector<8x64xbf16>, vector<244x64xf32> -> vector<244x64xf32>
    %123 = vector.extract_strided_slice %118 {offsets = [1, 0], sizes = [244, 8], strides = [1, 1]} : vector<246x8xbf16> to vector<244x8xbf16>
    %c1_106 = arith.constant 1 : index
    %c0_107 = arith.constant 0 : index
    %c0_108 = arith.constant 0 : index
    %124 = vector.load %arg5[%c1_106, %c0_107, %c0_108] : memref<9x8x64xbf16, #tpu.memory_space<vmem>>, vector<1x8x64xbf16>
    %125 = vector.shape_cast %124 : vector<1x8x64xbf16> to vector<8x64xbf16>
    %cst_109 = arith.constant dense<0.000000e+00> : vector<244x64xf32>
    %126 = tpu.matmul %123, %125, %cst_109 {dimension_numbers = #tpu.dot_dimension_numbers<[1], [0], [0], [1], [0, 0, 1, 1], [], []>} : vector<244x8xbf16>, vector<8x64xbf16>, vector<244x64xf32> -> vector<244x64xf32>
    %127 = arith.addf %122, %126 : vector<244x64xf32>
    %128 = vector.extract_strided_slice %118 {offsets = [2, 0], sizes = [244, 8], strides = [1, 1]} : vector<246x8xbf16> to vector<244x8xbf16>
    %c2_110 = arith.constant 2 : index
    %c0_111 = arith.constant 0 : index
    %c0_112 = arith.constant 0 : index
    %129 = vector.load %arg5[%c2_110, %c0_111, %c0_112] : memref<9x8x64xbf16, #tpu.memory_space<vmem>>, vector<1x8x64xbf16>
    %130 = vector.shape_cast %129 : vector<1x8x64xbf16> to vector<8x64xbf16>
    %cst_113 = arith.constant dense<0.000000e+00> : vector<244x64xf32>
    %131 = tpu.matmul %128, %130, %cst_113 {dimension_numbers = #tpu.dot_dimension_numbers<[1], [0], [0], [1], [0, 0, 1, 1], [], []>} : vector<244x8xbf16>, vector<8x64xbf16>, vector<244x64xf32> -> vector<244x64xf32>
    %132 = arith.addf %127, %131 : vector<244x64xf32>
    %c0_114 = arith.constant 0 : index
    %c3_115 = arith.constant 3 : index
    %c0_116 = arith.constant 0 : index
    %c0_117 = arith.constant 0 : index
    %133 = vector.load %arg3[%c0_114, %c3_115, %c0_116, %c0_117] : memref<1x4x246x8xbf16, #tpu.memory_space<vmem>>, vector<1x1x246x8xbf16>
    %134 = vector.shape_cast %133 : vector<1x1x246x8xbf16> to vector<246x8xbf16>
    %135 = vector.extract_strided_slice %134 {offsets = [0, 0], sizes = [244, 8], strides = [1, 1]} : vector<246x8xbf16> to vector<244x8xbf16>
    %c3_118 = arith.constant 3 : index
    %c0_119 = arith.constant 0 : index
    %c0_120 = arith.constant 0 : index
    %136 = vector.load %arg5[%c3_118, %c0_119, %c0_120] : memref<9x8x64xbf16, #tpu.memory_space<vmem>>, vector<1x8x64xbf16>
    %137 = vector.shape_cast %136 : vector<1x8x64xbf16> to vector<8x64xbf16>
    %cst_121 = arith.constant dense<0.000000e+00> : vector<244x64xf32>
    %138 = tpu.matmul %135, %137, %cst_121 {dimension_numbers = #tpu.dot_dimension_numbers<[1], [0], [0], [1], [0, 0, 1, 1], [], []>} : vector<244x8xbf16>, vector<8x64xbf16>, vector<244x64xf32> -> vector<244x64xf32>
    %139 = arith.addf %132, %138 : vector<244x64xf32>
    %140 = vector.extract_strided_slice %134 {offsets = [1, 0], sizes = [244, 8], strides = [1, 1]} : vector<246x8xbf16> to vector<244x8xbf16>
    %c4_122 = arith.constant 4 : index
    %c0_123 = arith.constant 0 : index
    %c0_124 = arith.constant 0 : index
    %141 = vector.load %arg5[%c4_122, %c0_123, %c0_124] : memref<9x8x64xbf16, #tpu.memory_space<vmem>>, vector<1x8x64xbf16>
    %142 = vector.shape_cast %141 : vector<1x8x64xbf16> to vector<8x64xbf16>
    %cst_125 = arith.constant dense<0.000000e+00> : vector<244x64xf32>
    %143 = tpu.matmul %140, %142, %cst_125 {dimension_numbers = #tpu.dot_dimension_numbers<[1], [0], [0], [1], [0, 0, 1, 1], [], []>} : vector<244x8xbf16>, vector<8x64xbf16>, vector<244x64xf32> -> vector<244x64xf32>
    %144 = arith.addf %139, %143 : vector<244x64xf32>
    %145 = vector.extract_strided_slice %134 {offsets = [2, 0], sizes = [244, 8], strides = [1, 1]} : vector<246x8xbf16> to vector<244x8xbf16>
    %c5_126 = arith.constant 5 : index
    %c0_127 = arith.constant 0 : index
    %c0_128 = arith.constant 0 : index
    %146 = vector.load %arg5[%c5_126, %c0_127, %c0_128] : memref<9x8x64xbf16, #tpu.memory_space<vmem>>, vector<1x8x64xbf16>
    %147 = vector.shape_cast %146 : vector<1x8x64xbf16> to vector<8x64xbf16>
    %cst_129 = arith.constant dense<0.000000e+00> : vector<244x64xf32>
    %148 = tpu.matmul %145, %147, %cst_129 {dimension_numbers = #tpu.dot_dimension_numbers<[1], [0], [0], [1], [0, 0, 1, 1], [], []>} : vector<244x8xbf16>, vector<8x64xbf16>, vector<244x64xf32> -> vector<244x64xf32>
    %149 = arith.addf %144, %148 : vector<244x64xf32>
    %c0_130 = arith.constant 0 : index
    %c0_131 = arith.constant 0 : index
    %c0_132 = arith.constant 0 : index
    %c0_133 = arith.constant 0 : index
    %150 = vector.load %arg4[%c0_130, %c0_131, %c0_132, %c0_133] : memref<1x4x246x8xbf16, #tpu.memory_space<vmem>>, vector<1x1x246x8xbf16>
    %151 = vector.shape_cast %150 : vector<1x1x246x8xbf16> to vector<246x8xbf16>
    %152 = vector.extract_strided_slice %151 {offsets = [0, 0], sizes = [244, 8], strides = [1, 1]} : vector<246x8xbf16> to vector<244x8xbf16>
    %c6_134 = arith.constant 6 : index
    %c0_135 = arith.constant 0 : index
    %c0_136 = arith.constant 0 : index
    %153 = vector.load %arg5[%c6_134, %c0_135, %c0_136] : memref<9x8x64xbf16, #tpu.memory_space<vmem>>, vector<1x8x64xbf16>
    %154 = vector.shape_cast %153 : vector<1x8x64xbf16> to vector<8x64xbf16>
    %cst_137 = arith.constant dense<0.000000e+00> : vector<244x64xf32>
    %155 = tpu.matmul %152, %154, %cst_137 {dimension_numbers = #tpu.dot_dimension_numbers<[1], [0], [0], [1], [0, 0, 1, 1], [], []>} : vector<244x8xbf16>, vector<8x64xbf16>, vector<244x64xf32> -> vector<244x64xf32>
    %156 = arith.addf %149, %155 : vector<244x64xf32>
    %157 = vector.extract_strided_slice %151 {offsets = [1, 0], sizes = [244, 8], strides = [1, 1]} : vector<246x8xbf16> to vector<244x8xbf16>
    %c7_138 = arith.constant 7 : index
    %c0_139 = arith.constant 0 : index
    %c0_140 = arith.constant 0 : index
    %158 = vector.load %arg5[%c7_138, %c0_139, %c0_140] : memref<9x8x64xbf16, #tpu.memory_space<vmem>>, vector<1x8x64xbf16>
    %159 = vector.shape_cast %158 : vector<1x8x64xbf16> to vector<8x64xbf16>
    %cst_141 = arith.constant dense<0.000000e+00> : vector<244x64xf32>
    %160 = tpu.matmul %157, %159, %cst_141 {dimension_numbers = #tpu.dot_dimension_numbers<[1], [0], [0], [1], [0, 0, 1, 1], [], []>} : vector<244x8xbf16>, vector<8x64xbf16>, vector<244x64xf32> -> vector<244x64xf32>
    %161 = arith.addf %156, %160 : vector<244x64xf32>
    %162 = vector.extract_strided_slice %151 {offsets = [2, 0], sizes = [244, 8], strides = [1, 1]} : vector<246x8xbf16> to vector<244x8xbf16>
    %c8_142 = arith.constant 8 : index
    %c0_143 = arith.constant 0 : index
    %c0_144 = arith.constant 0 : index
    %163 = vector.load %arg5[%c8_142, %c0_143, %c0_144] : memref<9x8x64xbf16, #tpu.memory_space<vmem>>, vector<1x8x64xbf16>
    %164 = vector.shape_cast %163 : vector<1x8x64xbf16> to vector<8x64xbf16>
    %cst_145 = arith.constant dense<0.000000e+00> : vector<244x64xf32>
    %165 = tpu.matmul %162, %164, %cst_145 {dimension_numbers = #tpu.dot_dimension_numbers<[1], [0], [0], [1], [0, 0, 1, 1], [], []>} : vector<244x8xbf16>, vector<8x64xbf16>, vector<244x64xf32> -> vector<244x64xf32>
    %166 = arith.addf %161, %165 : vector<244x64xf32>
    %167 = vector.broadcast %0 : vector<1x64xf32> to vector<244x64xf32>
    %168 = arith.addf %166, %167 : vector<244x64xf32>
    %cst_146 = arith.constant 0.000000e+00 : f32
    %169 = vector.broadcast %cst_146 : f32 to vector<244x64xf32>
    %170 = arith.maximumf %168, %169 : vector<244x64xf32>
    %171 = arith.truncf %170 : vector<244x64xf32> to vector<244x64xbf16>
    %c0_147 = arith.constant 0 : index
    %c2_148 = arith.constant 2 : index
    %c0_149 = arith.constant 0 : index
    %c0_150 = arith.constant 0 : index
    %172 = vector.load %arg7[%c0_147, %c2_148, %c0_149, %c0_150] : memref<1x4x244x64xbf16, #tpu.memory_space<vmem>>, vector<1x1x244x64xbf16>
    %173 = vector.shape_cast %172 : vector<1x1x244x64xbf16> to vector<244x64xbf16>
    %174 = vector.shape_cast %171 : vector<244x64xbf16> to vector<1x1x244x64xbf16>
    tpu.vector_store %arg7[%c0_147, %c2_148, %c0_149, %c0_150], %174 {strides = array<i32>} : memref<1x4x244x64xbf16, #tpu.memory_space<vmem>>, vector<1x1x244x64xbf16>,
    %c0_151 = arith.constant 0 : index
    %c3_152 = arith.constant 3 : index
    %c0_153 = arith.constant 0 : index
    %c0_154 = arith.constant 0 : index
    %175 = vector.load %arg3[%c0_151, %c3_152, %c0_153, %c0_154] : memref<1x4x246x8xbf16, #tpu.memory_space<vmem>>, vector<1x1x246x8xbf16>
    %176 = vector.shape_cast %175 : vector<1x1x246x8xbf16> to vector<246x8xbf16>
    %177 = vector.extract_strided_slice %176 {offsets = [0, 0], sizes = [244, 8], strides = [1, 1]} : vector<246x8xbf16> to vector<244x8xbf16>
    %c0_155 = arith.constant 0 : index
    %c0_156 = arith.constant 0 : index
    %c0_157 = arith.constant 0 : index
    %178 = vector.load %arg5[%c0_155, %c0_156, %c0_157] : memref<9x8x64xbf16, #tpu.memory_space<vmem>>, vector<1x8x64xbf16>
    %179 = vector.shape_cast %178 : vector<1x8x64xbf16> to vector<8x64xbf16>
    %cst_158 = arith.constant dense<0.000000e+00> : vector<244x64xf32>
    %180 = tpu.matmul %177, %179, %cst_158 {dimension_numbers = #tpu.dot_dimension_numbers<[1], [0], [0], [1], [0, 0, 1, 1], [], []>} : vector<244x8xbf16>, vector<8x64xbf16>, vector<244x64xf32> -> vector<244x64xf32>
    %181 = vector.extract_strided_slice %176 {offsets = [1, 0], sizes = [244, 8], strides = [1, 1]} : vector<246x8xbf16> to vector<244x8xbf16>
    %c1_159 = arith.constant 1 : index
    %c0_160 = arith.constant 0 : index
    %c0_161 = arith.constant 0 : index
    %182 = vector.load %arg5[%c1_159, %c0_160, %c0_161] : memref<9x8x64xbf16, #tpu.memory_space<vmem>>, vector<1x8x64xbf16>
    %183 = vector.shape_cast %182 : vector<1x8x64xbf16> to vector<8x64xbf16>
    %cst_162 = arith.constant dense<0.000000e+00> : vector<244x64xf32>
    %184 = tpu.matmul %181, %183, %cst_162 {dimension_numbers = #tpu.dot_dimension_numbers<[1], [0], [0], [1], [0, 0, 1, 1], [], []>} : vector<244x8xbf16>, vector<8x64xbf16>, vector<244x64xf32> -> vector<244x64xf32>
    %185 = arith.addf %180, %184 : vector<244x64xf32>
    %186 = vector.extract_strided_slice %176 {offsets = [2, 0], sizes = [244, 8], strides = [1, 1]} : vector<246x8xbf16> to vector<244x8xbf16>
    %c2_163 = arith.constant 2 : index
    %c0_164 = arith.constant 0 : index
    %c0_165 = arith.constant 0 : index
    %187 = vector.load %arg5[%c2_163, %c0_164, %c0_165] : memref<9x8x64xbf16, #tpu.memory_space<vmem>>, vector<1x8x64xbf16>
    %188 = vector.shape_cast %187 : vector<1x8x64xbf16> to vector<8x64xbf16>
    %cst_166 = arith.constant dense<0.000000e+00> : vector<244x64xf32>
    %189 = tpu.matmul %186, %188, %cst_166 {dimension_numbers = #tpu.dot_dimension_numbers<[1], [0], [0], [1], [0, 0, 1, 1], [], []>} : vector<244x8xbf16>, vector<8x64xbf16>, vector<244x64xf32> -> vector<244x64xf32>
    %190 = arith.addf %185, %189 : vector<244x64xf32>
    %c0_167 = arith.constant 0 : index
    %c0_168 = arith.constant 0 : index
    %c0_169 = arith.constant 0 : index
    %c0_170 = arith.constant 0 : index
    %191 = vector.load %arg4[%c0_167, %c0_168, %c0_169, %c0_170] : memref<1x4x246x8xbf16, #tpu.memory_space<vmem>>, vector<1x1x246x8xbf16>
    %192 = vector.shape_cast %191 : vector<1x1x246x8xbf16> to vector<246x8xbf16>
    %193 = vector.extract_strided_slice %192 {offsets = [0, 0], sizes = [244, 8], strides = [1, 1]} : vector<246x8xbf16> to vector<244x8xbf16>
    %c3_171 = arith.constant 3 : index
    %c0_172 = arith.constant 0 : index
    %c0_173 = arith.constant 0 : index
    %194 = vector.load %arg5[%c3_171, %c0_172, %c0_173] : memref<9x8x64xbf16, #tpu.memory_space<vmem>>, vector<1x8x64xbf16>
    %195 = vector.shape_cast %194 : vector<1x8x64xbf16> to vector<8x64xbf16>
    %cst_174 = arith.constant dense<0.000000e+00> : vector<244x64xf32>
    %196 = tpu.matmul %193, %195, %cst_174 {dimension_numbers = #tpu.dot_dimension_numbers<[1], [0], [0], [1], [0, 0, 1, 1], [], []>} : vector<244x8xbf16>, vector<8x64xbf16>, vector<244x64xf32> -> vector<244x64xf32>
    %197 = arith.addf %190, %196 : vector<244x64xf32>
    %198 = vector.extract_strided_slice %192 {offsets = [1, 0], sizes = [244, 8], strides = [1, 1]} : vector<246x8xbf16> to vector<244x8xbf16>
    %c4_175 = arith.constant 4 : index
    %c0_176 = arith.constant 0 : index
    %c0_177 = arith.constant 0 : index
    %199 = vector.load %arg5[%c4_175, %c0_176, %c0_177] : memref<9x8x64xbf16, #tpu.memory_space<vmem>>, vector<1x8x64xbf16>
    %200 = vector.shape_cast %199 : vector<1x8x64xbf16> to vector<8x64xbf16>
    %cst_178 = arith.constant dense<0.000000e+00> : vector<244x64xf32>
    %201 = tpu.matmul %198, %200, %cst_178 {dimension_numbers = #tpu.dot_dimension_numbers<[1], [0], [0], [1], [0, 0, 1, 1], [], []>} : vector<244x8xbf16>, vector<8x64xbf16>, vector<244x64xf32> -> vector<244x64xf32>
    %202 = arith.addf %197, %201 : vector<244x64xf32>
    %203 = vector.extract_strided_slice %192 {offsets = [2, 0], sizes = [244, 8], strides = [1, 1]} : vector<246x8xbf16> to vector<244x8xbf16>
    %c5_179 = arith.constant 5 : index
    %c0_180 = arith.constant 0 : index
    %c0_181 = arith.constant 0 : index
    %204 = vector.load %arg5[%c5_179, %c0_180, %c0_181] : memref<9x8x64xbf16, #tpu.memory_space<vmem>>, vector<1x8x64xbf16>
    %205 = vector.shape_cast %204 : vector<1x8x64xbf16> to vector<8x64xbf16>
    %cst_182 = arith.constant dense<0.000000e+00> : vector<244x64xf32>
    %206 = tpu.matmul %203, %205, %cst_182 {dimension_numbers = #tpu.dot_dimension_numbers<[1], [0], [0], [1], [0, 0, 1, 1], [], []>} : vector<244x8xbf16>, vector<8x64xbf16>, vector<244x64xf32> -> vector<244x64xf32>
    %207 = arith.addf %202, %206 : vector<244x64xf32>
    %c0_183 = arith.constant 0 : index
    %c1_184 = arith.constant 1 : index
    %c0_185 = arith.constant 0 : index
    %c0_186 = arith.constant 0 : index
    %208 = vector.load %arg4[%c0_183, %c1_184, %c0_185, %c0_186] : memref<1x4x246x8xbf16, #tpu.memory_space<vmem>>, vector<1x1x246x8xbf16>
    %209 = vector.shape_cast %208 : vector<1x1x246x8xbf16> to vector<246x8xbf16>
    %210 = vector.extract_strided_slice %209 {offsets = [0, 0], sizes = [244, 8], strides = [1, 1]} : vector<246x8xbf16> to vector<244x8xbf16>
    %c6_187 = arith.constant 6 : index
    %c0_188 = arith.constant 0 : index
    %c0_189 = arith.constant 0 : index
    %211 = vector.load %arg5[%c6_187, %c0_188, %c0_189] : memref<9x8x64xbf16, #tpu.memory_space<vmem>>, vector<1x8x64xbf16>
    %212 = vector.shape_cast %211 : vector<1x8x64xbf16> to vector<8x64xbf16>
    %cst_190 = arith.constant dense<0.000000e+00> : vector<244x64xf32>
    %213 = tpu.matmul %210, %212, %cst_190 {dimension_numbers = #tpu.dot_dimension_numbers<[1], [0], [0], [1], [0, 0, 1, 1], [], []>} : vector<244x8xbf16>, vector<8x64xbf16>, vector<244x64xf32> -> vector<244x64xf32>
    %214 = arith.addf %207, %213 : vector<244x64xf32>
    %215 = vector.extract_strided_slice %209 {offsets = [1, 0], sizes = [244, 8], strides = [1, 1]} : vector<246x8xbf16> to vector<244x8xbf16>
    %c7_191 = arith.constant 7 : index
    %c0_192 = arith.constant 0 : index
    %c0_193 = arith.constant 0 : index
    %216 = vector.load %arg5[%c7_191, %c0_192, %c0_193] : memref<9x8x64xbf16, #tpu.memory_space<vmem>>, vector<1x8x64xbf16>
    %217 = vector.shape_cast %216 : vector<1x8x64xbf16> to vector<8x64xbf16>
    %cst_194 = arith.constant dense<0.000000e+00> : vector<244x64xf32>
    %218 = tpu.matmul %215, %217, %cst_194 {dimension_numbers = #tpu.dot_dimension_numbers<[1], [0], [0], [1], [0, 0, 1, 1], [], []>} : vector<244x8xbf16>, vector<8x64xbf16>, vector<244x64xf32> -> vector<244x64xf32>
    %219 = arith.addf %214, %218 : vector<244x64xf32>
    %220 = vector.extract_strided_slice %209 {offsets = [2, 0], sizes = [244, 8], strides = [1, 1]} : vector<246x8xbf16> to vector<244x8xbf16>
    %c8_195 = arith.constant 8 : index
    %c0_196 = arith.constant 0 : index
    %c0_197 = arith.constant 0 : index
    %221 = vector.load %arg5[%c8_195, %c0_196, %c0_197] : memref<9x8x64xbf16, #tpu.memory_space<vmem>>, vector<1x8x64xbf16>
    %222 = vector.shape_cast %221 : vector<1x8x64xbf16> to vector<8x64xbf16>
    %cst_198 = arith.constant dense<0.000000e+00> : vector<244x64xf32>
    %223 = tpu.matmul %220, %222, %cst_198 {dimension_numbers = #tpu.dot_dimension_numbers<[1], [0], [0], [1], [0, 0, 1, 1], [], []>} : vector<244x8xbf16>, vector<8x64xbf16>, vector<244x64xf32> -> vector<244x64xf32>
    %224 = arith.addf %219, %223 : vector<244x64xf32>
    %225 = vector.broadcast %0 : vector<1x64xf32> to vector<244x64xf32>
    %226 = arith.addf %224, %225 : vector<244x64xf32>
    %cst_199 = arith.constant 0.000000e+00 : f32
    %227 = vector.broadcast %cst_199 : f32 to vector<244x64xf32>
    %228 = arith.maximumf %226, %227 : vector<244x64xf32>
    %229 = arith.truncf %228 : vector<244x64xf32> to vector<244x64xbf16>
    %c0_200 = arith.constant 0 : index
    %c3_201 = arith.constant 3 : index
    %c0_202 = arith.constant 0 : index
    %c0_203 = arith.constant 0 : index
    %230 = vector.load %arg7[%c0_200, %c3_201, %c0_202, %c0_203] : memref<1x4x244x64xbf16, #tpu.memory_space<vmem>>, vector<1x1x244x64xbf16>
    %231 = vector.shape_cast %230 : vector<1x1x244x64xbf16> to vector<244x64xbf16>
    %232 = vector.shape_cast %229 : vector<244x64xbf16> to vector<1x1x244x64xbf16>
    tpu.vector_store %arg7[%c0_200, %c3_201, %c0_202, %c0_203], %232 {strides = array<i32>} : memref<1x4x244x64xbf16, #tpu.memory_space<vmem>>, vector<1x1x244x64xbf16>,
    return
  }
  func.func @transform_0(%arg0: i32, %arg1: i32, %arg2: i32) -> (i32, i32, i32, i32) {
    %c0_i32 = arith.constant 0 : i32
    %0 = arith.addi %arg2, %c0_i32 : i32
    %c0_i32_0 = arith.constant 0 : i32
    %c0_i32_1 = arith.constant 0 : i32
    %c0_i32_2 = arith.constant 0 : i32
    return %arg0, %0, %c0_i32_0, %c0_i32_1 : i32, i32, i32, i32
  }
  func.func @transform_1(%arg0: i32, %arg1: i32, %arg2: i32) -> (i32, i32, i32, i32) {
    %c1_i32 = arith.constant 1 : i32
    %0 = arith.addi %arg2, %c1_i32 : i32
    %c0_i32 = arith.constant 0 : i32
    %c0_i32_0 = arith.constant 0 : i32
    %c0_i32_1 = arith.constant 0 : i32
    return %arg0, %0, %c0_i32, %c0_i32_0 : i32, i32, i32, i32
  }
  func.func @transform_2(%arg0: i32, %arg1: i32, %arg2: i32) -> (i32, i32, i32) {
    %c0_i32 = arith.constant 0 : i32
    %c0_i32_0 = arith.constant 0 : i32
    %c0_i32_1 = arith.constant 0 : i32
    return %c0_i32, %c0_i32_0, %arg1 : i32, i32, i32
  }
  func.func @transform_3(%arg0: i32, %arg1: i32, %arg2: i32) -> (i32, i32) {
    %c0_i32 = arith.constant 0 : i32
    %c0_i32_0 = arith.constant 0 : i32
    return %c0_i32, %arg1 : i32, i32
  }
  func.func @transform_4(%arg0: i32, %arg1: i32, %arg2: i32) -> (i32, i32, i32, i32) {
    %c0_i32 = arith.constant 0 : i32
    %c0_i32_0 = arith.constant 0 : i32
    return %arg0, %arg2, %c0_i32, %arg1 : i32, i32, i32, i32
  }
}

</mosaic_0001>

<llo_original>
// kernel: tpu_custom_call.1
$region0: #{tpu_custom_call.1}
  #allocation0 [shape = 'u32[]', space=smem, size = 0x4, offset = 0x4, fixed_abs, tag = 'smem constant byte address 0x4 - core index']
  #allocation1 [shape = 'u32[72,128]{1,0:T(1,128)}', space=vmem, size = 0x9000, scoped, tag = 'internal scratch']
  %s0 = inlined_call_operand.vmem [shape: bf16[1,248,246,8], index: 0, kind: input, shape index: {}]
  %s1 = inlined_call_operand.vmem [shape: bf16[1,248,246,8], index: 1, kind: input, shape index: {}]
  %s2 = inlined_call_operand.vmem [shape: bf16[9,8,64], index: 2, kind: input, shape index: {}]
  %s3 = inlined_call_operand.vmem [shape: f32[1,64], index: 3, kind: input, shape index: {}]
  %s4 = inlined_call_operand.vmem [shape: bf16[1,244,244,64], index: 4, kind: output, shape index: {}]
  %s5 = sld [smem:[#allocation0]]
  $region49: #{tpu_custom_call.1} parent=0
    _
  %s7 = ssub.s32 1, %s5
  %s8 = scalar_select 0, %s7, %s5
  loop: start=0, step=1, limit=63
  $region2: #{tpu_custom_call.1} parent=0 // loop_pre_header
    _
  $region3: #{tpu_custom_call.1} parent=0 // loop_header
    %s10 = sphi 0, %s14
    %p11 = scmp.ge.s32.totalorder %s10, 63
    %s17 = sphi 0, %s36
    %s18 = sphi 0, %s32
    %s19 = sphi 0, %s28
    %s20 = sphi 0, %s17
    %s21 = sphi 0, %s18
    %s22 = sphi 0, %s19
    %s23 = sphi 0, %s20
    %s24 = sphi 0, %s21
    %s25 = sphi 0, %s22
    %s41 = sphi 0, %s43
    %s44 = sphi 0, %s41
    %s45 = sphi 0, %s44
    %s61 = sphi 0, %s45
    %s71 = sphi 0, %s73
    %s74 = sphi 0, %s71
    %s75 = sphi 0, %s74
    %s91 = sphi 0, %s75
    %s97 = sphi 0, %s99
    %s100 = sphi 0, %s97
    %s101 = sphi 0, %s100
    %s117 = sphi 0, %s101
    %s123 = sphi 0, %s125
    %s126 = sphi 0, %s123
    %s127 = sphi 0, %s126
    %s143 = sphi 0, %s127
    %s153 = sphi 0, %s155
    %s156 = sphi 0, %s153
    %s157 = sphi 0, %s156
    %s173 = sphi 0, %s157
  $region4: #{tpu_custom_call.1} parent=0 // loop_header_branch
    %13 = sbr.rel (%p11) target = $region8
  $region5: #{tpu_custom_call.1} parent=0 // loop_body
    %s15 = ssub.s32 %s10, 1
    %s16 = ssub.s32 %s10, 2
    %s26 = sadd.s32 1, %s19
    %p27 = scmp.ge.s32.totalorder %s26, 61
    %s28 = scalar_select %p27, 0, %s26
    %s29 = sadd.s32 1, %s18
    %s30 = scalar_select %p27, %s29, %s18
    %p31 = scmp.ge.s32.totalorder %s30, 1
    %s32 = scalar_select %p31, 0, %s30
    %s33 = sadd.s32 1, %s17
    %s34 = scalar_select %p31, %s33, %s17
    %p35 = scmp.ge.s32.totalorder %s34, 1
    %s36 = scalar_select %p35, 0, %s34
    %s37 = ssub.s32 %s17, %s36
    %s38 = ssub.s32 %s19, %s28
    %s39 = sor.u32 %s37, %s38
    %p40 = scmp.eq.s32.totalorder %s39, 0
    %s42 = sadd.s32 %s41, 1
    %s43 = scalar_select %p40, %s41, %s42
    %p46 = pneg %p40
    %p47 = scmp.eq.s32.totalorder %s10, 60
    %p48 = por %p46, %p47
    %p49 = scmp.ne.s32.totalorder %s41, %s44
    %p50 = scmp.eq.s32.totalorder %s10, 0
    %p51 = por %p49, %p50
    %p52 = scmp.ne.s32.totalorder %s41, %s44
    %p53 = scmp.eq.s32.totalorder %s15, 60
    %p54 = por %p52, %p53
    %p55 = scmp.ne.s32.totalorder %s44, %s45
    %p56 = scmp.eq.s32.totalorder %s15, 0
    %p57 = por %p55, %p56
    %p58 = scmp.ne.s32.totalorder %s44, %s45
    %p59 = scmp.eq.s32.totalorder %s16, 60
    %p60 = por %p58, %p59
    %p62 = scmp.ne.s32.totalorder %s45, %s61
    %p63 = scmp.eq.s32.totalorder %s16, 0
    %p64 = por %p62, %p63
    %s65 = sadd.s32 %s19, 1
    %s66 = sadd.s32 %s28, 1
    %s67 = ssub.s32 %s17, %s36
    %s68 = ssub.s32 %s65, %s66
    %s69 = sor.u32 %s67, %s68
    %p70 = scmp.eq.s32.totalorder %s69, 0
    %s72 = sadd.s32 %s71, 1
    %s73 = scalar_select %p70, %s71, %s72
    %p76 = pneg %p70
    %p77 = scmp.eq.s32.totalorder %s10, 60
    %p78 = por %p76, %p77
    %p79 = scmp.ne.s32.totalorder %s71, %s74
    %p80 = scmp.eq.s32.totalorder %s10, 0
    %p81 = por %p79, %p80
    %p82 = scmp.ne.s32.totalorder %s71, %s74
    %p83 = scmp.eq.s32.totalorder %s15, 60
    %p84 = por %p82, %p83
    %p85 = scmp.ne.s32.totalorder %s74, %s75
    %p86 = scmp.eq.s32.totalorder %s15, 0
    %p87 = por %p85, %p86
    %p88 = scmp.ne.s32.totalorder %s74, %s75
    %p89 = scmp.eq.s32.totalorder %s16, 60
    %p90 = por %p88, %p89
    %p92 = scmp.ne.s32.totalorder %s75, %s91
    %p93 = scmp.eq.s32.totalorder %s16, 0
    %p94 = por %p92, %p93
    %s95 = ssub.s32 %s18, %s32
    %p96 = scmp.eq.s32.totalorder %s95, 0
    %s98 = sadd.s32 %s97, 1
    %s99 = scalar_select %p96, %s97, %s98
    %p102 = pneg %p96
    %p103 = scmp.eq.s32.totalorder %s10, 60
    %p104 = por %p102, %p103
    %p105 = scmp.ne.s32.totalorder %s97, %s100
    %p106 = scmp.eq.s32.totalorder %s10, 0
    %p107 = por %p105, %p106
    %p108 = scmp.ne.s32.totalorder %s97, %s100
    %p109 = scmp.eq.s32.totalorder %s15, 60
    %p110 = por %p108, %p109
    %p111 = scmp.ne.s32.totalorder %s100, %s101
    %p112 = scmp.eq.s32.totalorder %s15, 0
    %p113 = por %p111, %p112
    %p114 = scmp.ne.s32.totalorder %s100, %s101
    %p115 = scmp.eq.s32.totalorder %s16, 60
    %p116 = por %p114, %p115
    %p118 = scmp.ne.s32.totalorder %s101, %s117
    %p119 = scmp.eq.s32.totalorder %s16, 0
    %p120 = por %p118, %p119
    %s121 = ssub.s32 %s18, %s32
    %p122 = scmp.eq.s32.totalorder %s121, 0
    %s124 = sadd.s32 %s123, 1
    %s125 = scalar_select %p122, %s123, %s124
    %p128 = pneg %p122
    %p129 = scmp.eq.s32.totalorder %s10, 60
    %p130 = por %p128, %p129
    %p131 = scmp.ne.s32.totalorder %s123, %s126
    %p132 = scmp.eq.s32.totalorder %s10, 0
    %p133 = por %p131, %p132
    %p134 = scmp.ne.s32.totalorder %s123, %s126
    %p135 = scmp.eq.s32.totalorder %s15, 60
    %p136 = por %p134, %p135
    %p137 = scmp.ne.s32.totalorder %s126, %s127
    %p138 = scmp.eq.s32.totalorder %s15, 0
    %p139 = por %p137, %p138
    %p140 = scmp.ne.s32.totalorder %s126, %s127
    %p141 = scmp.eq.s32.totalorder %s16, 60
    %p142 = por %p140, %p141
    %p144 = scmp.ne.s32.totalorder %s127, %s143
    %p145 = scmp.eq.s32.totalorder %s16, 0
    %p146 = por %p144, %p145
    %s147 = ssub.s32 %s17, %s36
    %s148 = ssub.s32 %s19, %s28
    %s149 = sor.u32 %s147, %s148
    %s150 = ssub.s32 %s18, %s32
    %s151 = sor.u32 %s149, %s150
    %p152 = scmp.eq.s32.totalorder %s151, 0
    %s154 = sadd.s32 %s153, 1
    %s155 = scalar_select %p152, %s153, %s154
    %p158 = pneg %p152
    %p159 = scmp.eq.s32.totalorder %s10, 60
    %p160 = por %p158, %p159
    %p161 = scmp.ne.s32.totalorder %s153, %s156
    %p162 = scmp.eq.s32.totalorder %s10, 0
    %p163 = por %p161, %p162
    %p164 = scmp.ne.s32.totalorder %s153, %s156
    %p165 = scmp.eq.s32.totalorder %s15, 60
    %p166 = por %p164, %p165
    %p167 = scmp.ne.s32.totalorder %s156, %s157
    %p168 = scmp.eq.s32.totalorder %s15, 0
    %p169 = por %p167, %p168
    %p170 = scmp.ne.s32.totalorder %s156, %s157
    %p171 = scmp.eq.s32.totalorder %s16, 60
    %p172 = por %p170, %p171
    %p174 = scmp.ne.s32.totalorder %s157, %s173
    %p175 = scmp.eq.s32.totalorder %s16, 0
    %p176 = por %p174, %p175
    %p177 = scmp.le.s32.totalorder 1, %s10
    %p178 = scmp.lt.s32.totalorder %s10, 62
    %p179 = pnand %p177, %p178
    %p180 = pneg %p179
    // Predicated region
    $region9: #{tpu_custom_call.1} parent=5 // pred_check
      _
    $region10: #{tpu_custom_call.1} parent=5 // pred_check_branch
      %182 = sbr.rel (%p179) target = $region12
    $region11: #{tpu_custom_call.1} parent=5 // pred_region
      %s183 = ssub.s32 %s10, 1
      // Predicated region
      $region13: #{tpu_custom_call.1} parent=11 // pred_check
        %p184 = pneg %p113
      $region14: #{tpu_custom_call.1} parent=11 // pred_check_branch
        %186 = sbr.rel (%p184) target = $region16
      $region15: #{tpu_custom_call.1} parent=11 // pred_region
        %p187 = scmp.lt.s32.totalorder %s21, 0
        %s188 = scalar_select %p187, %s21, 0
        %s189 = smul.addr %s188, 4
        %s190 = scalar_lea.vmem %s2, %s189
      $region16: #{tpu_custom_call.1} parent=11 // pred_fallthru
        _
      // Predicated region
      $region17: #{tpu_custom_call.1} parent=11 // pred_check
        %p191 = pneg %p139
      $region18: #{tpu_custom_call.1} parent=11 // pred_check_branch
        %193 = sbr.rel (%p191) target = $region20
      $region19: #{tpu_custom_call.1} parent=11 // pred_region
        %p194 = scmp.lt.s32.totalorder %s21, 0
        %s195 = scalar_select %p194, %s21, 0
        %s196 = scalar_lea.vmem %s3, %s195
      $region20: #{tpu_custom_call.1} parent=11 // pred_fallthru
        _
    $region12: #{tpu_custom_call.1} parent=5 // pred_fallthru
      _
    %p197 = scmp.lt.s32.totalorder %s10, 61
    // Predicated region
    $region21: #{tpu_custom_call.1} parent=5 // pred_check
      %p198 = pneg %p197
    $region22: #{tpu_custom_call.1} parent=5 // pred_check_branch
      %200 = sbr.rel (%p198) target = $region24
    $region23: #{tpu_custom_call.1} parent=5 // pred_region
      // Predicated region
      $region25: #{tpu_custom_call.1} parent=23 // pred_check
        %p201 = pneg %p51
      $region26: #{tpu_custom_call.1} parent=23 // pred_check_branch
        %203 = sbr.rel (%p201) target = $region28
      $region27: #{tpu_custom_call.1} parent=23 // pred_region
        %s204 = smul.u32 4, %s19
        %p205 = scmp.lt.s32.totalorder %s17, 0
        %s206 = scalar_select %p205, %s17, 0
        %p207 = scmp.lt.s32.totalorder %s204, 247
        %s208 = scalar_select %p207, %s204, 247
        %s209 = smul.addr %s208, 31
        %s210 = smul.addr %s206, 7688
        %s211 = sadd.s32 %s209, %s210
        %s212 = smul.addr %s211, 4
        %s213 = scalar_lea.vmem %s0, %s212
        %s214 = smul.u32 4, %s19
      $region28: #{tpu_custom_call.1} parent=23 // pred_fallthru
        _
      // Predicated region
      $region29: #{tpu_custom_call.1} parent=23 // pred_check
        %p215 = pneg %p81
      $region30: #{tpu_custom_call.1} parent=23 // pred_check_branch
        %217 = sbr.rel (%p215) target = $region32
      $region31: #{tpu_custom_call.1} parent=23 // pred_region
        %s218 = sadd.s32 %s19, 1
        %s219 = smul.u32 4, %s218
        %p220 = scmp.lt.s32.totalorder %s17, 0
        %s221 = scalar_select %p220, %s17, 0
        %p222 = scmp.lt.s32.totalorder %s219, 247
        %s223 = scalar_select %p222, %s219, 247
        %s224 = smul.addr %s223, 31
        %s225 = smul.addr %s221, 7688
        %s226 = sadd.s32 %s224, %s225
        %s227 = smul.addr %s226, 4
        %s228 = scalar_lea.vmem %s1, %s227
        %s229 = sadd.s32 %s19, 1
        %s230 = smul.u32 4, %s229
      $region32: #{tpu_custom_call.1} parent=23 // pred_fallthru
        _
    $region24: #{tpu_custom_call.1} parent=5 // pred_fallthru
      _
    %p231 = scmp.le.s32.totalorder 1, %s10
    %p232 = scmp.lt.s32.totalorder %s10, 62
    %p233 = pnand %p231, %p232
    %p234 = pneg %p233
    // Predicated region
    $region33: #{tpu_custom_call.1} parent=5 // pred_check
      _
    $region34: #{tpu_custom_call.1} parent=5 // pred_check_branch
      %236 = sbr.rel (%p233) target = $region36
    $region35: #{tpu_custom_call.1} parent=5 // pred_region
      %s237 = ssub.s32 %s10, 1
      %s238 = smul.u32 4, %s22
      %p239 = scmp.lt.s32.totalorder %s20, 0
      %s240 = scalar_select %p239, %s20, 0
      %p241 = scmp.lt.s32.totalorder %s238, 247
      %s242 = scalar_select %p241, %s238, 247
      %s243 = smul.addr %s242, 31
      %s244 = smul.addr %s240, 7688
      %s245 = sadd.s32 %s243, %s244
      %s246 = smul.addr %s245, 4
      %s247 = scalar_lea.vmem %s0, %s246
      %p248 = pneg %p57
      %p249 = pneg %p54
      %s250 = sadd.s32 %s22, 1
      %s251 = smul.u32 4, %s250
      %p252 = scmp.lt.s32.totalorder %s20, 0
      %s253 = scalar_select %p252, %s20, 0
      %p254 = scmp.lt.s32.totalorder %s251, 247
      %s255 = scalar_select %p254, %s251, 247
      %s256 = smul.addr %s255, 31
      %s257 = smul.addr %s253, 7688
      %s258 = sadd.s32 %s256, %s257
      %s259 = smul.addr %s258, 4
      %s260 = scalar_lea.vmem %s1, %s259
      %p261 = pneg %p87
      %p262 = pneg %p84
      %p263 = scmp.lt.s32.totalorder %s21, 0
      %s264 = scalar_select %p263, %s21, 0
      %s265 = smul.addr %s264, 4
      %s266 = scalar_lea.vmem %s2, %s265
      %p267 = pneg %p113
      %p268 = pneg %p110
      %p269 = scmp.lt.s32.totalorder %s21, 0
      %s270 = scalar_select %p269, %s21, 0
      %s271 = scalar_lea.vmem %s3, %s270
      %p272 = pneg %p139
      %p273 = pneg %p136
      %p274 = pneg %p169
      %p275 = pneg %p166
      %s276 = smul.u32 4, %s22
      %p277 = scmp.lt.s32.totalorder %s20, 0
      %s278 = scalar_select %p277, %s20, 0
      %p279 = scmp.lt.s32.totalorder %s276, 243
      %s280 = scalar_select %p279, %s276, 243
      %p281 = scmp.lt.s32.totalorder %s21, 0
      %s282 = scalar_select %p281, %s21, 0
      %s283 = smul.addr %s280, 31
      %s284 = sadd.s32 %s282, %s283
      %s285 = smul.addr %s278, 7564
      %s286 = sadd.s32 %s284, %s285
      %s287 = smul.addr %s286, 4
      %s288 = scalar_lea.vmem %s4, %s287
      %s289 = smul.u32 4, %s22
      %p290 = scmp.lt.s32.totalorder %s20, 0
      %s291 = scalar_select %p290, %s20, 0
      %p292 = scmp.lt.s32.totalorder %s289, 247
      %s293 = scalar_select %p292, %s289, 247
      %s294 = smul.addr %s293, 31
      %s295 = smul.addr %s291, 7688
      %s296 = sadd.s32 %s294, %s295
      %s297 = smul.addr %s296, 4
      %s298 = scalar_lea.vmem %s0, %s297
      %s299 = smul.u32 4, %s22
      %s300 = sadd.s32 %s22, 1
      %s301 = smul.u32 4, %s300
      %p302 = scmp.lt.s32.totalorder %s20, 0
      %s303 = scalar_select %p302, %s20, 0
      %p304 = scmp.lt.s32.totalorder %s301, 247
      %s305 = scalar_select %p304, %s301, 247
      %s306 = smul.addr %s305, 31
      %s307 = smul.addr %s303, 7688
      %s308 = sadd.s32 %s306, %s307
      %s309 = smul.addr %s308, 4
      %s310 = scalar_lea.vmem %s1, %s309
      %s311 = sadd.s32 %s22, 1
      %s312 = smul.u32 4, %s311
      %p313 = scmp.lt.s32.totalorder %s21, 0
      %s314 = scalar_select %p313, %s21, 0
      %s315 = smul.addr %s314, 4
      %s316 = scalar_lea.vmem %s2, %s315
      %p317 = scmp.lt.s32.totalorder %s21, 0
      %s318 = scalar_select %p317, %s21, 0
      %s319 = scalar_lea.vmem %s3, %s318
      %s320 = smul.u32 4, %s22
      %p321 = scmp.lt.s32.totalorder %s20, 0
      %s322 = scalar_select %p321, %s20, 0
      %p323 = scmp.lt.s32.totalorder %s320, 243
      %s324 = scalar_select %p323, %s320, 243
      %p325 = scmp.lt.s32.totalorder %s21, 0
      %s326 = scalar_select %p325, %s21, 0
      %s327 = smul.addr %s324, 31
      %s328 = sadd.s32 %s326, %s327
      %s329 = smul.addr %s322, 7564
      %s330 = sadd.s32 %s328, %s329
      %s331 = smul.addr %s330, 4
      %s332 = scalar_lea.vmem %s4, %s331
      %s333 = smul.u32 4, %s22
      %v335 = vld [vmem:[%s319] sm:$0x1]
      %v336 = vld [vmem:[%s298] sm:$0xf]
      %v337 = vld [vmem:[%s298 + $0x4] sm:$0xf]
      %v338 = vld [vmem:[%s298 + $0x8] sm:$0xf]
      %v339 = vld [vmem:[%s298 + $0xc] sm:$0xf]
      %v340 = vld [vmem:[%s298 + $0x10] sm:$0xf]
      %v341 = vld [vmem:[%s298 + $0x14] sm:$0xf]
      %v342 = vld [vmem:[%s298 + $0x18] sm:$0xf]
      %v343 = vld [vmem:[%s298 + $0x1c] sm:$0xf]
      %v344 = vld [vmem:[%s298 + $0x20] sm:$0xf]
      %v345 = vld [vmem:[%s298 + $0x24] sm:$0xf]
      %v346 = vld [vmem:[%s298 + $0x28] sm:$0xf]
      %v347 = vld [vmem:[%s298 + $0x2c] sm:$0xf]
      %v348 = vld [vmem:[%s298 + $0x30] sm:$0xf]
      %v349 = vld [vmem:[%s298 + $0x34] sm:$0xf]
      %v350 = vld [vmem:[%s298 + $0x38] sm:$0xf]
      %v351 = vld [vmem:[%s298 + $0x3c] sm:$0xf]
      %v352 = vld [vmem:[%s298 + $0x40] sm:$0xf]
      %v353 = vld [vmem:[%s298 + $0x44] sm:$0xf]
      %v354 = vld [vmem:[%s298 + $0x48] sm:$0xf]
      %v355 = vld [vmem:[%s298 + $0x4c] sm:$0xf]
      %v356 = vld [vmem:[%s298 + $0x50] sm:$0xf]
      %v357 = vld [vmem:[%s298 + $0x54] sm:$0xf]
      %v358 = vld [vmem:[%s298 + $0x58] sm:$0xf]
      %v359 = vld [vmem:[%s298 + $0x5c] sm:$0xf]
      %v360 = vld [vmem:[%s298 + $0x60] sm:$0xf]
      %v361 = vld [vmem:[%s298 + $0x64] sm:$0xf]
      %v362 = vld [vmem:[%s298 + $0x68] sm:$0xf]
      %v363 = vld [vmem:[%s298 + $0x6c] sm:$0xf]
      %v364 = vld [vmem:[%s298 + $0x70] sm:$0xf]
      %v365 = vld [vmem:[%s298 + $0x74] sm:$0xf]
      %v366 = vld [vmem:[%s298 + $0x78] sm:$0x7]
      %v367 = vld [vmem:[%s316] sm:$0xf]
      %s368 = scalar_lea.vmem %s316, 4
      %v369 = vld [vmem:[%s368] sm:$0xf]
      %v401 = vunpack.c.l.b16 %v336
      %v402 = vunpack.c.l.b16 %v337
      %v403 = vunpack.c.l.b16 %v338
      %v404 = vunpack.c.l.b16 %v339
      %v405 = vunpack.c.l.b16 %v340
      %v406 = vunpack.c.l.b16 %v341
      %v407 = vunpack.c.l.b16 %v342
      %v408 = vunpack.c.l.b16 %v343
      %v409 = vunpack.c.l.b16 %v344
      %v410 = vunpack.c.l.b16 %v345
      %v411 = vunpack.c.l.b16 %v346
      %v412 = vunpack.c.l.b16 %v347
      %v413 = vunpack.c.l.b16 %v348
      %v414 = vunpack.c.l.b16 %v349
      %v415 = vunpack.c.l.b16 %v350
      %v416 = vunpack.c.l.b16 %v351
      %v417 = vunpack.c.l.b16 %v352
      %v418 = vunpack.c.l.b16 %v353
      %v419 = vunpack.c.l.b16 %v354
      %v420 = vunpack.c.l.b16 %v355
      %v421 = vunpack.c.l.b16 %v356
      %v422 = vunpack.c.l.b16 %v357
      %v423 = vunpack.c.l.b16 %v358
      %v424 = vunpack.c.l.b16 %v359
      %v425 = vunpack.c.l.b16 %v360
      %v426 = vunpack.c.l.b16 %v361
      %v427 = vunpack.c.l.b16 %v362
      %v428 = vunpack.c.l.b16 %v363
      %v429 = vunpack.c.l.b16 %v364
      %v430 = vunpack.c.l.b16 %v365
      %v431 = vunpack.c.l.b16 %v366
      %v432 = vpack.c.b16 %v402, %v401
      %v433 = vpack.c.b16 %v404, %v403
      %v434 = vpack.c.b16 %v406, %v405
      %v435 = vpack.c.b16 %v408, %v407
      %v436 = vpack.c.b16 %v410, %v409
      %v437 = vpack.c.b16 %v412, %v411
      %v438 = vpack.c.b16 %v414, %v413
      %v439 = vpack.c.b16 %v416, %v415
      %v440 = vpack.c.b16 %v418, %v417
      %v441 = vpack.c.b16 %v420, %v419
      %v442 = vpack.c.b16 %v422, %v421
      %v443 = vpack.c.b16 %v424, %v423
      %v444 = vpack.c.b16 %v426, %v425
      %v445 = vpack.c.b16 %v428, %v427
      %v446 = vpack.c.b16 %v430, %v429
      %v447 = vpack.c.b16 %v431, %v431
      %vm448 = vsmask.f32 7424
      %v450 = vshrl.u32 %v432, 16
      %v452 = vshll.u32 %v432, 16
      %v454 = vrot.slane %v452, 1
      %v455 = vor.u32 %v450, %v454
      %v457 = vshll.u32 %v433, 16
      %v459 = vrot.slane %v457, 1
      %v460 = vsel %vm448, %v455, %v459
      %v461 = vshrl.u32 %v433, 16
      %v463 = vor.u32 %v461, %v459
      %v465 = vshll.u32 %v434, 16
      %v467 = vrot.slane %v465, 1
      %v468 = vsel %vm448, %v463, %v467
      %v469 = vshrl.u32 %v434, 16
      %v471 = vor.u32 %v469, %v467
      %v473 = vshll.u32 %v435, 16
      %v475 = vrot.slane %v473, 1
      %v476 = vsel %vm448, %v471, %v475
      %v477 = vshrl.u32 %v435, 16
      %v479 = vor.u32 %v477, %v475
      %v481 = vshll.u32 %v436, 16
      %v483 = vrot.slane %v481, 1
      %v484 = vsel %vm448, %v479, %v483
      %v485 = vshrl.u32 %v436, 16
      %v487 = vor.u32 %v485, %v483
      %v489 = vshll.u32 %v437, 16
      %v491 = vrot.slane %v489, 1
      %v492 = vsel %vm448, %v487, %v491
      %v493 = vshrl.u32 %v437, 16
      %v495 = vor.u32 %v493, %v491
      %v497 = vshll.u32 %v438, 16
      %v499 = vrot.slane %v497, 1
      %v500 = vsel %vm448, %v495, %v499
      %v501 = vshrl.u32 %v438, 16
      %v503 = vor.u32 %v501, %v499
      %v505 = vshll.u32 %v439, 16
      %v507 = vrot.slane %v505, 1
      %v508 = vsel %vm448, %v503, %v507
      %v509 = vshrl.u32 %v439, 16
      %v511 = vor.u32 %v509, %v507
      %v513 = vshll.u32 %v440, 16
      %v515 = vrot.slane %v513, 1
      %v516 = vsel %vm448, %v511, %v515
      %v517 = vshrl.u32 %v440, 16
      %v519 = vor.u32 %v517, %v515
      %v521 = vshll.u32 %v441, 16
      %v523 = vrot.slane %v521, 1
      %v524 = vsel %vm448, %v519, %v523
      %v525 = vshrl.u32 %v441, 16
      %v527 = vor.u32 %v525, %v523
      %v529 = vshll.u32 %v442, 16
      %v531 = vrot.slane %v529, 1
      %v532 = vsel %vm448, %v527, %v531
      %v533 = vshrl.u32 %v442, 16
      %v535 = vor.u32 %v533, %v531
      %v537 = vshll.u32 %v443, 16
      %v539 = vrot.slane %v537, 1
      %v540 = vsel %vm448, %v535, %v539
      %v541 = vshrl.u32 %v443, 16
      %v543 = vor.u32 %v541, %v539
      %v545 = vshll.u32 %v444, 16
      %v547 = vrot.slane %v545, 1
      %v548 = vsel %vm448, %v543, %v547
      %v549 = vshrl.u32 %v444, 16
      %v551 = vor.u32 %v549, %v547
      %v553 = vshll.u32 %v445, 16
      %v555 = vrot.slane %v553, 1
      %v556 = vsel %vm448, %v551, %v555
      %v557 = vshrl.u32 %v445, 16
      %v559 = vor.u32 %v557, %v555
      %v561 = vshll.u32 %v446, 16
      %v563 = vrot.slane %v561, 1
      %v564 = vsel %vm448, %v559, %v563
      %v565 = vshrl.u32 %v446, 16
      %v567 = vor.u32 %v565, %v563
      %v569 = vshll.u32 %v447, 16
      %v571 = vrot.slane %v569, 1
      %v572 = vsel %vm448, %v567, %v571
      %v573 = vshrl.u32 %v447, 16
      %v575 = vor.u32 %v573, %v571
      %vm576 = vcmask 64512
      %v578 = vsel %vm576, %v460, 0
      %v581 = vsel %vm576, %v468, 0
      %v584 = vsel %vm576, %v476, 0
      %v587 = vsel %vm576, %v484, 0
      %v590 = vsel %vm576, %v492, 0
      %v593 = vsel %vm576, %v500, 0
      %v596 = vsel %vm576, %v508, 0
      %v599 = vsel %vm576, %v516, 0
      %v602 = vsel %vm576, %v524, 0
      %v605 = vsel %vm576, %v532, 0
      %v608 = vsel %vm576, %v540, 0
      %v611 = vsel %vm576, %v548, 0
      %v614 = vsel %vm576, %v556, 0
      %v617 = vsel %vm576, %v564, 0
      %v620 = vsel %vm576, %v572, 0
      %v623 = vsel %vm576, %v575, 0
      %vm625 = vcmask 1043456
      %v627 = vsel %vm625, %v369, 0
      %629 = vmatpush.bf16.msra.mxu0 0
      %630 = vmatpush.bf16.msra.mxu0 0
      %631 = vmatpush.bf16.msra.mxu0 0
      %632 = vmatpush.bf16.msra.mxu0 0
      %633 = vmatpush.bf16.msra.mxu0 0
      %634 = vmatpush.bf16.msra.mxu0 0
      %635 = vmatpush.bf16.msra.mxu0 0
      %636 = vmatpush.bf16.msra.mxu0 %v627
      %637 = vmatmul.bf16.gmra.mxu0 %v578
      %v638 = vpop.f32.mrf.mxu0
      %v639 = vadd.f32 0.0, %v638
      %v640 = vpop.f32.mrf.mxu0
      %v641 = vadd.f32 0.0, %v640
      %642 = vmatmul.bf16.gmra.mxu0 %v581
      %v643 = vpop.f32.mrf.mxu0
      %v644 = vadd.f32 0.0, %v643
      %v645 = vpop.f32.mrf.mxu0
      %v646 = vadd.f32 0.0, %v645
      %647 = vmatmul.bf16.gmra.mxu0 %v584
      %v648 = vpop.f32.mrf.mxu0
      %v649 = vadd.f32 0.0, %v648
      %v650 = vpop.f32.mrf.mxu0
      %v651 = vadd.f32 0.0, %v650
      %652 = vmatmul.bf16.gmra.mxu0 %v587
      %v653 = vpop.f32.mrf.mxu0
      %v654 = vadd.f32 0.0, %v653
      %v655 = vpop.f32.mrf.mxu0
      %v656 = vadd.f32 0.0, %v655
      %657 = vmatmul.bf16.gmra.mxu0 %v590
      %v658 = vpop.f32.mrf.mxu0
      %v659 = vadd.f32 0.0, %v658
      %v660 = vpop.f32.mrf.mxu0
      %v661 = vadd.f32 0.0, %v660
      %662 = vmatmul.bf16.gmra.mxu0 %v593
      %v663 = vpop.f32.mrf.mxu0
      %v664 = vadd.f32 0.0, %v663
      %v665 = vpop.f32.mrf.mxu0
      %v666 = vadd.f32 0.0, %v665
      %667 = vmatmul.bf16.gmra.mxu0 %v596
      %v668 = vpop.f32.mrf.mxu0
      %v669 = vadd.f32 0.0, %v668
      %v670 = vpop.f32.mrf.mxu0
      %v671 = vadd.f32 0.0, %v670
      %672 = vmatmul.bf16.gmra.mxu0 %v599
      %v673 = vpop.f32.mrf.mxu0
      %v674 = vadd.f32 0.0, %v673
      %v675 = vpop.f32.mrf.mxu0
      %v676 = vadd.f32 0.0, %v675
      %677 = vmatmul.bf16.gmra.mxu0 %v602
      %v678 = vpop.f32.mrf.mxu0
      %v679 = vadd.f32 0.0, %v678
      %v680 = vpop.f32.mrf.mxu0
      %v681 = vadd.f32 0.0, %v680
      %682 = vmatmul.bf16.gmra.mxu0 %v605
      %v683 = vpop.f32.mrf.mxu0
      %v684 = vadd.f32 0.0, %v683
      %v685 = vpop.f32.mrf.mxu0
      %v686 = vadd.f32 0.0, %v685
      %687 = vmatmul.bf16.gmra.mxu0 %v608
      %v688 = vpop.f32.mrf.mxu0
      %v689 = vadd.f32 0.0, %v688
      %v690 = vpop.f32.mrf.mxu0
      %v691 = vadd.f32 0.0, %v690
      %692 = vmatmul.bf16.gmra.mxu0 %v611
      %v693 = vpop.f32.mrf.mxu0
      %v694 = vadd.f32 0.0, %v693
      %v695 = vpop.f32.mrf.mxu0
      %v696 = vadd.f32 0.0, %v695
      %697 = vmatmul.bf16.gmra.mxu0 %v614
      %v698 = vpop.f32.mrf.mxu0
      %v699 = vadd.f32 0.0, %v698
      %v700 = vpop.f32.mrf.mxu0
      %v701 = vadd.f32 0.0, %v700
      %702 = vmatmul.bf16.gmra.mxu0 %v617
      %v703 = vpop.f32.mrf.mxu0
      %v704 = vadd.f32 0.0, %v703
      %v705 = vpop.f32.mrf.mxu0
      %v706 = vadd.f32 0.0, %v705
      %707 = vmatmul.bf16.gmra.mxu0 %v620
      %v708 = vpop.f32.mrf.mxu0
      %v709 = vadd.f32 0.0, %v708
      %v710 = vpop.f32.mrf.mxu0
      %v711 = vadd.f32 0.0, %v710
      %712 = vmatmul.bf16.gmra.mxu0 %v623
      %v713 = vpop.f32.mrf.mxu0
      %v714 = vadd.f32 0.0, %v713
      %v715 = vpop.f32.mrf.mxu0
      %716 = vdwg.mxu0
      %v717 = vsel %vm576, %v432, 0
      %v719 = vsel %vm576, %v433, 0
      %v721 = vsel %vm576, %v434, 0
      %v723 = vsel %vm576, %v435, 0
      %v725 = vsel %vm576, %v436, 0
      %v727 = vsel %vm576, %v437, 0
      %v729 = vsel %vm576, %v438, 0
      %v731 = vsel %vm576, %v439, 0
      %v733 = vsel %vm576, %v440, 0
      %v735 = vsel %vm576, %v441, 0
      %v737 = vsel %vm576, %v442, 0
      %v739 = vsel %vm576, %v443, 0
      %v741 = vsel %vm576, %v444, 0
      %v743 = vsel %vm576, %v445, 0
      %v745 = vsel %vm576, %v446, 0
      %v747 = vsel %vm576, %v447, 0
      %v750 = vsel %vm625, %v367, 0
      %752 = vmatpush.bf16.msra.mxu0 0
      %753 = vmatpush.bf16.msra.mxu0 0
      %754 = vmatpush.bf16.msra.mxu0 0
      %755 = vmatpush.bf16.msra.mxu0 0
      %756 = vmatpush.bf16.msra.mxu0 0
      %757 = vmatpush.bf16.msra.mxu0 0
      %758 = vmatpush.bf16.msra.mxu0 0
      %759 = vmatpush.bf16.msra.mxu0 %v750
      %760 = vmatmul.bf16.gmra.mxu0 %v717
      %v761 = vpop.f32.mrf.mxu0
      %v762 = vadd.f32 %v639, %v761
      %v763 = vpop.f32.mrf.mxu0
      %v764 = vadd.f32 %v641, %v763
      %765 = vmatmul.bf16.gmra.mxu0 %v719
      %v766 = vpop.f32.mrf.mxu0
      %v767 = vadd.f32 %v644, %v766
      %v768 = vpop.f32.mrf.mxu0
      %v769 = vadd.f32 %v646, %v768
      %770 = vmatmul.bf16.gmra.mxu0 %v721
      %v771 = vpop.f32.mrf.mxu0
      %v772 = vadd.f32 %v649, %v771
      %v773 = vpop.f32.mrf.mxu0
      %v774 = vadd.f32 %v651, %v773
      %775 = vmatmul.bf16.gmra.mxu0 %v723
      %v776 = vpop.f32.mrf.mxu0
      %v777 = vadd.f32 %v654, %v776
      %v778 = vpop.f32.mrf.mxu0
      %v779 = vadd.f32 %v656, %v778
      %780 = vmatmul.bf16.gmra.mxu0 %v725
      %v781 = vpop.f32.mrf.mxu0
      %v782 = vadd.f32 %v659, %v781
      %v783 = vpop.f32.mrf.mxu0
      %v784 = vadd.f32 %v661, %v783
      %785 = vmatmul.bf16.gmra.mxu0 %v727
      %v786 = vpop.f32.mrf.mxu0
      %v787 = vadd.f32 %v664, %v786
      %v788 = vpop.f32.mrf.mxu0
      %v789 = vadd.f32 %v666, %v788
      %790 = vmatmul.bf16.gmra.mxu0 %v729
      %v791 = vpop.f32.mrf.mxu0
      %v792 = vadd.f32 %v669, %v791
      %v793 = vpop.f32.mrf.mxu0
      %v794 = vadd.f32 %v671, %v793
      %795 = vmatmul.bf16.gmra.mxu0 %v731
      %v796 = vpop.f32.mrf.mxu0
      %v797 = vadd.f32 %v674, %v796
      %v798 = vpop.f32.mrf.mxu0
      %v799 = vadd.f32 %v676, %v798
      %800 = vmatmul.bf16.gmra.mxu0 %v733
      %v801 = vpop.f32.mrf.mxu0
      %v802 = vadd.f32 %v679, %v801
      %v803 = vpop.f32.mrf.mxu0
      %v804 = vadd.f32 %v681, %v803
      %805 = vmatmul.bf16.gmra.mxu0 %v735
      %v806 = vpop.f32.mrf.mxu0
      %v807 = vadd.f32 %v684, %v806
      %v808 = vpop.f32.mrf.mxu0
      %v809 = vadd.f32 %v686, %v808
      %810 = vmatmul.bf16.gmra.mxu0 %v737
      %v811 = vpop.f32.mrf.mxu0
      %v812 = vadd.f32 %v689, %v811
      %v813 = vpop.f32.mrf.mxu0
      %v814 = vadd.f32 %v691, %v813
      %815 = vmatmul.bf16.gmra.mxu0 %v739
      %v816 = vpop.f32.mrf.mxu0
      %v817 = vadd.f32 %v694, %v816
      %v818 = vpop.f32.mrf.mxu0
      %v819 = vadd.f32 %v696, %v818
      %820 = vmatmul.bf16.gmra.mxu0 %v741
      %v821 = vpop.f32.mrf.mxu0
      %v822 = vadd.f32 %v699, %v821
      %v823 = vpop.f32.mrf.mxu0
      %v824 = vadd.f32 %v701, %v823
      %825 = vmatmul.bf16.gmra.mxu0 %v743
      %v826 = vpop.f32.mrf.mxu0
      %v827 = vadd.f32 %v704, %v826
      %v828 = vpop.f32.mrf.mxu0
      %v829 = vadd.f32 %v706, %v828
      %830 = vmatmul.bf16.gmra.mxu0 %v745
      %v831 = vpop.f32.mrf.mxu0
      %v832 = vadd.f32 %v709, %v831
      %v833 = vpop.f32.mrf.mxu0
      %v834 = vadd.f32 %v711, %v833
      %835 = vmatmul.bf16.gmra.mxu0 %v747
      %v836 = vpop.f32.mrf.mxu0
      %v837 = vadd.f32 %v714, %v836
      %v838 = vpop.f32.mrf.mxu0
      %839 = vdwg.mxu0
      %s840 = scalar_lea.vmem %s316, 8
      %v841 = vld [vmem:[%s840] sm:$0xf]
      %vm842 = vcmask 1046528
      %v843 = vrot.slane %v432, 1
      %v844 = vrot.slane %v433, 1
      %v845 = vsel %vm842, %v843, %v844
      %v846 = vrot.slane %v434, 1
      %v847 = vsel %vm842, %v844, %v846
      %v848 = vrot.slane %v435, 1
      %v849 = vsel %vm842, %v846, %v848
      %v850 = vrot.slane %v436, 1
      %v851 = vsel %vm842, %v848, %v850
      %v852 = vrot.slane %v437, 1
      %v853 = vsel %vm842, %v850, %v852
      %v854 = vrot.slane %v438, 1
      %v855 = vsel %vm842, %v852, %v854
      %v856 = vrot.slane %v439, 1
      %v857 = vsel %vm842, %v854, %v856
      %v858 = vrot.slane %v440, 1
      %v859 = vsel %vm842, %v856, %v858
      %v860 = vrot.slane %v441, 1
      %v861 = vsel %vm842, %v858, %v860
      %v862 = vrot.slane %v442, 1
      %v863 = vsel %vm842, %v860, %v862
      %v864 = vrot.slane %v443, 1
      %v865 = vsel %vm842, %v862, %v864
      %v866 = vrot.slane %v444, 1
      %v867 = vsel %vm842, %v864, %v866
      %v868 = vrot.slane %v445, 1
      %v869 = vsel %vm842, %v866, %v868
      %v870 = vrot.slane %v446, 1
      %v871 = vsel %vm842, %v868, %v870
      %v872 = vrot.slane %v447, 1
      %v873 = vsel %vm842, %v870, %v872
      %v875 = vsel %vm576, %v845, 0
      %v878 = vsel %vm576, %v847, 0
      %v881 = vsel %vm576, %v849, 0
      %v884 = vsel %vm576, %v851, 0
      %v887 = vsel %vm576, %v853, 0
      %v890 = vsel %vm576, %v855, 0
      %v893 = vsel %vm576, %v857, 0
      %v896 = vsel %vm576, %v859, 0
      %v899 = vsel %vm576, %v861, 0
      %v902 = vsel %vm576, %v863, 0
      %v905 = vsel %vm576, %v865, 0
      %v908 = vsel %vm576, %v867, 0
      %v911 = vsel %vm576, %v869, 0
      %v914 = vsel %vm576, %v871, 0
      %v917 = vsel %vm576, %v873, 0
      %v920 = vsel %vm576, %v872, 0
      %v923 = vsel %vm625, %v841, 0
      %925 = vmatpush.bf16.msra.mxu0 0
      %926 = vmatpush.bf16.msra.mxu0 0
      %927 = vmatpush.bf16.msra.mxu0 0
      %928 = vmatpush.bf16.msra.mxu0 0
      %929 = vmatpush.bf16.msra.mxu0 0
      %930 = vmatpush.bf16.msra.mxu0 0
      %931 = vmatpush.bf16.msra.mxu0 0
      %932 = vmatpush.bf16.msra.mxu0 %v923
      %933 = vmatmul.bf16.gmra.mxu0 %v875
      %v934 = vpop.f32.mrf.mxu0
      %v935 = vadd.f32 0.0, %v934
      %v936 = vpop.f32.mrf.mxu0
      %v937 = vadd.f32 0.0, %v936
      %938 = vmatmul.bf16.gmra.mxu0 %v878
      %v939 = vpop.f32.mrf.mxu0
      %v940 = vadd.f32 0.0, %v939
      %v941 = vpop.f32.mrf.mxu0
      %v942 = vadd.f32 0.0, %v941
      %943 = vmatmul.bf16.gmra.mxu0 %v881
      %v944 = vpop.f32.mrf.mxu0
      %v945 = vadd.f32 0.0, %v944
      %v946 = vpop.f32.mrf.mxu0
      %v947 = vadd.f32 0.0, %v946
      %948 = vmatmul.bf16.gmra.mxu0 %v884
      %v949 = vpop.f32.mrf.mxu0
      %v950 = vadd.f32 0.0, %v949
      %v951 = vpop.f32.mrf.mxu0
      %v952 = vadd.f32 0.0, %v951
      %953 = vmatmul.bf16.gmra.mxu0 %v887
      %v954 = vpop.f32.mrf.mxu0
      %v955 = vadd.f32 0.0, %v954
      %v956 = vpop.f32.mrf.mxu0
      %v957 = vadd.f32 0.0, %v956
      %958 = vmatmul.bf16.gmra.mxu0 %v890
      %v959 = vpop.f32.mrf.mxu0
      %v960 = vadd.f32 0.0, %v959
      %v961 = vpop.f32.mrf.mxu0
      %v962 = vadd.f32 0.0, %v961
      %963 = vmatmul.bf16.gmra.mxu0 %v893
      %v964 = vpop.f32.mrf.mxu0
      %v965 = vadd.f32 0.0, %v964
      %v966 = vpop.f32.mrf.mxu0
      %v967 = vadd.f32 0.0, %v966
      %968 = vmatmul.bf16.gmra.mxu0 %v896
      %v969 = vpop.f32.mrf.mxu0
      %v970 = vadd.f32 0.0, %v969
      %v971 = vpop.f32.mrf.mxu0
      %v972 = vadd.f32 0.0, %v971
      %973 = vmatmul.bf16.gmra.mxu0 %v899
      %v974 = vpop.f32.mrf.mxu0
      %v975 = vadd.f32 0.0, %v974
      %v976 = vpop.f32.mrf.mxu0
      %v977 = vadd.f32 0.0, %v976
      %978 = vmatmul.bf16.gmra.mxu0 %v902
      %v979 = vpop.f32.mrf.mxu0
      %v980 = vadd.f32 0.0, %v979
      %v981 = vpop.f32.mrf.mxu0
      %v982 = vadd.f32 0.0, %v981
      %983 = vmatmul.bf16.gmra.mxu0 %v905
      %v984 = vpop.f32.mrf.mxu0
      %v985 = vadd.f32 0.0, %v984
      %v986 = vpop.f32.mrf.mxu0
      %v987 = vadd.f32 0.0, %v986
      %988 = vmatmul.bf16.gmra.mxu0 %v908
      %v989 = vpop.f32.mrf.mxu0
      %v990 = vadd.f32 0.0, %v989
      %v991 = vpop.f32.mrf.mxu0
      %v992 = vadd.f32 0.0, %v991
      %993 = vmatmul.bf16.gmra.mxu0 %v911
      %v994 = vpop.f32.mrf.mxu0
      %v995 = vadd.f32 0.0, %v994
      %v996 = vpop.f32.mrf.mxu0
      %v997 = vadd.f32 0.0, %v996
      %998 = vmatmul.bf16.gmra.mxu0 %v914
      %v999 = vpop.f32.mrf.mxu0
      %v1000 = vadd.f32 0.0, %v999
      %v1001 = vpop.f32.mrf.mxu0
      %v1002 = vadd.f32 0.0, %v1001
      %1003 = vmatmul.bf16.gmra.mxu0 %v917
      %v1004 = vpop.f32.mrf.mxu0
      %v1005 = vadd.f32 0.0, %v1004
      %v1006 = vpop.f32.mrf.mxu0
      %v1007 = vadd.f32 0.0, %v1006
      %1008 = vmatmul.bf16.gmra.mxu0 %v920
      %v1009 = vpop.f32.mrf.mxu0
      %v1010 = vadd.f32 0.0, %v1009
      %v1011 = vpop.f32.mrf.mxu0
      %1012 = vdwg.mxu0
      %v1013 = vadd.f32 %v762, %v935
      %v1014 = vadd.f32 %v764, %v937
      %v1015 = vadd.f32 %v767, %v940
      %v1016 = vadd.f32 %v769, %v942
      %v1017 = vadd.f32 %v772, %v945
      %v1018 = vadd.f32 %v774, %v947
      %v1019 = vadd.f32 %v777, %v950
      %v1020 = vadd.f32 %v779, %v952
      %v1021 = vadd.f32 %v782, %v955
      %v1022 = vadd.f32 %v784, %v957
      %v1023 = vadd.f32 %v787, %v960
      %v1024 = vadd.f32 %v789, %v962
      %v1025 = vadd.f32 %v792, %v965
      %v1026 = vadd.f32 %v794, %v967
      %v1027 = vadd.f32 %v797, %v970
      %v1028 = vadd.f32 %v799, %v972
      %v1029 = vadd.f32 %v802, %v975
      %v1030 = vadd.f32 %v804, %v977
      %v1031 = vadd.f32 %v807, %v980
      %v1032 = vadd.f32 %v809, %v982
      %v1033 = vadd.f32 %v812, %v985
      %v1034 = vadd.f32 %v814, %v987
      %v1035 = vadd.f32 %v817, %v990
      %v1036 = vadd.f32 %v819, %v992
      %v1037 = vadd.f32 %v822, %v995
      %v1038 = vadd.f32 %v824, %v997
      %v1039 = vadd.f32 %v827, %v1000
      %v1040 = vadd.f32 %v829, %v1002
      %v1041 = vadd.f32 %v832, %v1005
      %v1042 = vadd.f32 %v834, %v1007
      %v1043 = vadd.f32 %v837, %v1010
      %s1044 = scalar_lea.vmem %s298, 124
      %v1045 = vld [vmem:[%s1044] sm:$0xf]
      %v1046 = vld [vmem:[%s1044 + $0x4] sm:$0xf]
      %v1047 = vld [vmem:[%s1044 + $0x8] sm:$0xf]
      %v1048 = vld [vmem:[%s1044 + $0xc] sm:$0xf]
      %v1049 = vld [vmem:[%s1044 + $0x10] sm:$0xf]
      %v1050 = vld [vmem:[%s1044 + $0x14] sm:$0xf]
      %v1051 = vld [vmem:[%s1044 + $0x18] sm:$0xf]
      %v1052 = vld [vmem:[%s1044 + $0x1c] sm:$0xf]
      %v1053 = vld [vmem:[%s1044 + $0x20] sm:$0xf]
      %v1054 = vld [vmem:[%s1044 + $0x24] sm:$0xf]
      %v1055 = vld [vmem:[%s1044 + $0x28] sm:$0xf]
      %v1056 = vld [vmem:[%s1044 + $0x2c] sm:$0xf]
      %v1057 = vld [vmem:[%s1044 + $0x30] sm:$0xf]
      %v1058 = vld [vmem:[%s1044 + $0x34] sm:$0xf]
      %v1059 = vld [vmem:[%s1044 + $0x38] sm:$0xf]
      %v1060 = vld [vmem:[%s1044 + $0x3c] sm:$0xf]
      %v1061 = vld [vmem:[%s1044 + $0x40] sm:$0xf]
      %v1062 = vld [vmem:[%s1044 + $0x44] sm:$0xf]
      %v1063 = vld [vmem:[%s1044 + $0x48] sm:$0xf]
      %v1064 = vld [vmem:[%s1044 + $0x4c] sm:$0xf]
      %v1065 = vld [vmem:[%s1044 + $0x50] sm:$0xf]
      %v1066 = vld [vmem:[%s1044 + $0x54] sm:$0xf]
      %v1067 = vld [vmem:[%s1044 + $0x58] sm:$0xf]
      %v1068 = vld [vmem:[%s1044 + $0x5c] sm:$0xf]
      %v1069 = vld [vmem:[%s1044 + $0x60] sm:$0xf]
      %v1070 = vld [vmem:[%s1044 + $0x64] sm:$0xf]
      %v1071 = vld [vmem:[%s1044 + $0x68] sm:$0xf]
      %v1072 = vld [vmem:[%s1044 + $0x6c] sm:$0xf]
      %v1073 = vld [vmem:[%s1044 + $0x70] sm:$0xf]
      %v1074 = vld [vmem:[%s1044 + $0x74] sm:$0xf]
      %v1075 = vld [vmem:[%s1044 + $0x78] sm:$0x7]
      %s1076 = scalar_lea.vmem %s316, 12
      %v1077 = vld [vmem:[%s1076] sm:$0xf]
      %v1109 = vunpack.c.l.b16 %v1045
      %v1110 = vunpack.c.l.b16 %v1046
      %v1111 = vunpack.c.l.b16 %v1047
      %v1112 = vunpack.c.l.b16 %v1048
      %v1113 = vunpack.c.l.b16 %v1049
      %v1114 = vunpack.c.l.b16 %v1050
      %v1115 = vunpack.c.l.b16 %v1051
      %v1116 = vunpack.c.l.b16 %v1052
      %v1117 = vunpack.c.l.b16 %v1053
      %v1118 = vunpack.c.l.b16 %v1054
      %v1119 = vunpack.c.l.b16 %v1055
      %v1120 = vunpack.c.l.b16 %v1056
      %v1121 = vunpack.c.l.b16 %v1057
      %v1122 = vunpack.c.l.b16 %v1058
      %v1123 = vunpack.c.l.b16 %v1059
      %v1124 = vunpack.c.l.b16 %v1060
      %v1125 = vunpack.c.l.b16 %v1061
      %v1126 = vunpack.c.l.b16 %v1062
      %v1127 = vunpack.c.l.b16 %v1063
      %v1128 = vunpack.c.l.b16 %v1064
      %v1129 = vunpack.c.l.b16 %v1065
      %v1130 = vunpack.c.l.b16 %v1066
      %v1131 = vunpack.c.l.b16 %v1067
      %v1132 = vunpack.c.l.b16 %v1068
      %v1133 = vunpack.c.l.b16 %v1069
      %v1134 = vunpack.c.l.b16 %v1070
      %v1135 = vunpack.c.l.b16 %v1071
      %v1136 = vunpack.c.l.b16 %v1072
      %v1137 = vunpack.c.l.b16 %v1073
      %v1138 = vunpack.c.l.b16 %v1074
      %v1139 = vunpack.c.l.b16 %v1075
      %v1140 = vpack.c.b16 %v1110, %v1109
      %v1141 = vpack.c.b16 %v1112, %v1111
      %v1142 = vpack.c.b16 %v1114, %v1113
      %v1143 = vpack.c.b16 %v1116, %v1115
      %v1144 = vpack.c.b16 %v1118, %v1117
      %v1145 = vpack.c.b16 %v1120, %v1119
      %v1146 = vpack.c.b16 %v1122, %v1121
      %v1147 = vpack.c.b16 %v1124, %v1123
      %v1148 = vpack.c.b16 %v1126, %v1125
      %v1149 = vpack.c.b16 %v1128, %v1127
      %v1150 = vpack.c.b16 %v1130, %v1129
      %v1151 = vpack.c.b16 %v1132, %v1131
      %v1152 = vpack.c.b16 %v1134, %v1133
      %v1153 = vpack.c.b16 %v1136, %v1135
      %v1154 = vpack.c.b16 %v1138, %v1137
      %v1155 = vpack.c.b16 %v1139, %v1139
      %v1157 = vsel %vm576, %v1140, 0
      %v1160 = vsel %vm576, %v1141, 0
      %v1163 = vsel %vm576, %v1142, 0
      %v1166 = vsel %vm576, %v1143, 0
      %v1169 = vsel %vm576, %v1144, 0
      %v1172 = vsel %vm576, %v1145, 0
      %v1175 = vsel %vm576, %v1146, 0
      %v1178 = vsel %vm576, %v1147, 0
      %v1181 = vsel %vm576, %v1148, 0
      %v1184 = vsel %vm576, %v1149, 0
      %v1187 = vsel %vm576, %v1150, 0
      %v1190 = vsel %vm576, %v1151, 0
      %v1193 = vsel %vm576, %v1152, 0
      %v1196 = vsel %vm576, %v1153, 0
      %v1199 = vsel %vm576, %v1154, 0
      %v1202 = vsel %vm576, %v1155, 0
      %v1205 = vsel %vm625, %v1077, 0
      %1207 = vmatpush.bf16.msra.mxu0 0
      %1208 = vmatpush.bf16.msra.mxu0 0
      %1209 = vmatpush.bf16.msra.mxu0 0
      %1210 = vmatpush.bf16.msra.mxu0 0
      %1211 = vmatpush.bf16.msra.mxu0 0
      %1212 = vmatpush.bf16.msra.mxu0 0
      %1213 = vmatpush.bf16.msra.mxu0 0
      %1214 = vmatpush.bf16.msra.mxu0 %v1205
      %1215 = vmatmul.bf16.gmra.mxu0 %v1157
      %v1216 = vpop.f32.mrf.mxu0
      %v1217 = vadd.f32 0.0, %v1216
      %v1218 = vpop.f32.mrf.mxu0
      %v1219 = vadd.f32 0.0, %v1218
      %1220 = vmatmul.bf16.gmra.mxu0 %v1160
      %v1221 = vpop.f32.mrf.mxu0
      %v1222 = vadd.f32 0.0, %v1221
      %v1223 = vpop.f32.mrf.mxu0
      %v1224 = vadd.f32 0.0, %v1223
      %1225 = vmatmul.bf16.gmra.mxu0 %v1163
      %v1226 = vpop.f32.mrf.mxu0
      %v1227 = vadd.f32 0.0, %v1226
      %v1228 = vpop.f32.mrf.mxu0
      %v1229 = vadd.f32 0.0, %v1228
      %1230 = vmatmul.bf16.gmra.mxu0 %v1166
      %v1231 = vpop.f32.mrf.mxu0
      %v1232 = vadd.f32 0.0, %v1231
      %v1233 = vpop.f32.mrf.mxu0
      %v1234 = vadd.f32 0.0, %v1233
      %1235 = vmatmul.bf16.gmra.mxu0 %v1169
      %v1236 = vpop.f32.mrf.mxu0
      %v1237 = vadd.f32 0.0, %v1236
      %v1238 = vpop.f32.mrf.mxu0
      %v1239 = vadd.f32 0.0, %v1238
      %1240 = vmatmul.bf16.gmra.mxu0 %v1172
      %v1241 = vpop.f32.mrf.mxu0
      %v1242 = vadd.f32 0.0, %v1241
      %v1243 = vpop.f32.mrf.mxu0
      %v1244 = vadd.f32 0.0, %v1243
      %1245 = vmatmul.bf16.gmra.mxu0 %v1175
      %v1246 = vpop.f32.mrf.mxu0
      %v1247 = vadd.f32 0.0, %v1246
      %v1248 = vpop.f32.mrf.mxu0
      %v1249 = vadd.f32 0.0, %v1248
      %1250 = vmatmul.bf16.gmra.mxu0 %v1178
      %v1251 = vpop.f32.mrf.mxu0
      %v1252 = vadd.f32 0.0, %v1251
      %v1253 = vpop.f32.mrf.mxu0
      %v1254 = vadd.f32 0.0, %v1253
      %1255 = vmatmul.bf16.gmra.mxu0 %v1181
      %v1256 = vpop.f32.mrf.mxu0
      %v1257 = vadd.f32 0.0, %v1256
      %v1258 = vpop.f32.mrf.mxu0
      %v1259 = vadd.f32 0.0, %v1258
      %1260 = vmatmul.bf16.gmra.mxu0 %v1184
      %v1261 = vpop.f32.mrf.mxu0
      %v1262 = vadd.f32 0.0, %v1261
      %v1263 = vpop.f32.mrf.mxu0
      %v1264 = vadd.f32 0.0, %v1263
      %1265 = vmatmul.bf16.gmra.mxu0 %v1187
      %v1266 = vpop.f32.mrf.mxu0
      %v1267 = vadd.f32 0.0, %v1266
      %v1268 = vpop.f32.mrf.mxu0
      %v1269 = vadd.f32 0.0, %v1268
      %1270 = vmatmul.bf16.gmra.mxu0 %v1190
      %v1271 = vpop.f32.mrf.mxu0
      %v1272 = vadd.f32 0.0, %v1271
      %v1273 = vpop.f32.mrf.mxu0
      %v1274 = vadd.f32 0.0, %v1273
      %1275 = vmatmul.bf16.gmra.mxu0 %v1193
      %v1276 = vpop.f32.mrf.mxu0
      %v1277 = vadd.f32 0.0, %v1276
      %v1278 = vpop.f32.mrf.mxu0
      %v1279 = vadd.f32 0.0, %v1278
      %1280 = vmatmul.bf16.gmra.mxu0 %v1196
      %v1281 = vpop.f32.mrf.mxu0
      %v1282 = vadd.f32 0.0, %v1281
      %v1283 = vpop.f32.mrf.mxu0
      %v1284 = vadd.f32 0.0, %v1283
      %1285 = vmatmul.bf16.gmra.mxu0 %v1199
      %v1286 = vpop.f32.mrf.mxu0
      %v1287 = vadd.f32 0.0, %v1286
      %v1288 = vpop.f32.mrf.mxu0
      %v1289 = vadd.f32 0.0, %v1288
      %1290 = vmatmul.bf16.gmra.mxu0 %v1202
      %v1291 = vpop.f32.mrf.mxu0
      %v1292 = vadd.f32 0.0, %v1291
      %v1293 = vpop.f32.mrf.mxu0
      %1294 = vdwg.mxu0
      %v1295 = vadd.f32 %v1013, %v1217
      %v1296 = vadd.f32 %v1014, %v1219
      %v1297 = vadd.f32 %v1015, %v1222
      %v1298 = vadd.f32 %v1016, %v1224
      %v1299 = vadd.f32 %v1017, %v1227
      %v1300 = vadd.f32 %v1018, %v1229
      %v1301 = vadd.f32 %v1019, %v1232
      %v1302 = vadd.f32 %v1020, %v1234
      %v1303 = vadd.f32 %v1021, %v1237
      %v1304 = vadd.f32 %v1022, %v1239
      %v1305 = vadd.f32 %v1023, %v1242
      %v1306 = vadd.f32 %v1024, %v1244
      %v1307 = vadd.f32 %v1025, %v1247
      %v1308 = vadd.f32 %v1026, %v1249
      %v1309 = vadd.f32 %v1027, %v1252
      %v1310 = vadd.f32 %v1028, %v1254
      %v1311 = vadd.f32 %v1029, %v1257
      %v1312 = vadd.f32 %v1030, %v1259
      %v1313 = vadd.f32 %v1031, %v1262
      %v1314 = vadd.f32 %v1032, %v1264
      %v1315 = vadd.f32 %v1033, %v1267
      %v1316 = vadd.f32 %v1034, %v1269
      %v1317 = vadd.f32 %v1035, %v1272
      %v1318 = vadd.f32 %v1036, %v1274
      %v1319 = vadd.f32 %v1037, %v1277
      %v1320 = vadd.f32 %v1038, %v1279
      %v1321 = vadd.f32 %v1039, %v1282
      %v1322 = vadd.f32 %v1040, %v1284
      %v1323 = vadd.f32 %v1041, %v1287
      %v1324 = vadd.f32 %v1042, %v1289
      %v1325 = vadd.f32 %v1043, %v1292
      %s1326 = scalar_lea.vmem %s316, 16
      %v1327 = vld [vmem:[%s1326] sm:$0xf]
      %v1328 = vshrl.u32 %v1140, 16
      %v1330 = vshll.u32 %v1140, 16
      %v1332 = vrot.slane %v1330, 1
      %v1333 = vor.u32 %v1328, %v1332
      %v1334 = vshll.u32 %v1141, 16
      %v1336 = vrot.slane %v1334, 1
      %v1337 = vsel %vm448, %v1333, %v1336
      %v1338 = vshrl.u32 %v1141, 16
      %v1340 = vor.u32 %v1338, %v1336
      %v1341 = vshll.u32 %v1142, 16
      %v1343 = vrot.slane %v1341, 1
      %v1344 = vsel %vm448, %v1340, %v1343
      %v1345 = vshrl.u32 %v1142, 16
      %v1347 = vor.u32 %v1345, %v1343
      %v1348 = vshll.u32 %v1143, 16
      %v1350 = vrot.slane %v1348, 1
      %v1351 = vsel %vm448, %v1347, %v1350
      %v1352 = vshrl.u32 %v1143, 16
      %v1354 = vor.u32 %v1352, %v1350
      %v1355 = vshll.u32 %v1144, 16
      %v1357 = vrot.slane %v1355, 1
      %v1358 = vsel %vm448, %v1354, %v1357
      %v1359 = vshrl.u32 %v1144, 16
      %v1361 = vor.u32 %v1359, %v1357
      %v1362 = vshll.u32 %v1145, 16
      %v1364 = vrot.slane %v1362, 1
      %v1365 = vsel %vm448, %v1361, %v1364
      %v1366 = vshrl.u32 %v1145, 16
      %v1368 = vor.u32 %v1366, %v1364
      %v1369 = vshll.u32 %v1146, 16
      %v1371 = vrot.slane %v1369, 1
      %v1372 = vsel %vm448, %v1368, %v1371
      %v1373 = vshrl.u32 %v1146, 16
      %v1375 = vor.u32 %v1373, %v1371
      %v1376 = vshll.u32 %v1147, 16
      %v1378 = vrot.slane %v1376, 1
      %v1379 = vsel %vm448, %v1375, %v1378
      %v1380 = vshrl.u32 %v1147, 16
      %v1382 = vor.u32 %v1380, %v1378
      %v1383 = vshll.u32 %v1148, 16
      %v1385 = vrot.slane %v1383, 1
      %v1386 = vsel %vm448, %v1382, %v1385
      %v1387 = vshrl.u32 %v1148, 16
      %v1389 = vor.u32 %v1387, %v1385
      %v1390 = vshll.u32 %v1149, 16
      %v1392 = vrot.slane %v1390, 1
      %v1393 = vsel %vm448, %v1389, %v1392
      %v1394 = vshrl.u32 %v1149, 16
      %v1396 = vor.u32 %v1394, %v1392
      %v1397 = vshll.u32 %v1150, 16
      %v1399 = vrot.slane %v1397, 1
      %v1400 = vsel %vm448, %v1396, %v1399
      %v1401 = vshrl.u32 %v1150, 16
      %v1403 = vor.u32 %v1401, %v1399
      %v1404 = vshll.u32 %v1151, 16
      %v1406 = vrot.slane %v1404, 1
      %v1407 = vsel %vm448, %v1403, %v1406
      %v1408 = vshrl.u32 %v1151, 16
      %v1410 = vor.u32 %v1408, %v1406
      %v1411 = vshll.u32 %v1152, 16
      %v1413 = vrot.slane %v1411, 1
      %v1414 = vsel %vm448, %v1410, %v1413
      %v1415 = vshrl.u32 %v1152, 16
      %v1417 = vor.u32 %v1415, %v1413
      %v1418 = vshll.u32 %v1153, 16
      %v1420 = vrot.slane %v1418, 1
      %v1421 = vsel %vm448, %v1417, %v1420
      %v1422 = vshrl.u32 %v1153, 16
      %v1424 = vor.u32 %v1422, %v1420
      %v1425 = vshll.u32 %v1154, 16
      %v1427 = vrot.slane %v1425, 1
      %v1428 = vsel %vm448, %v1424, %v1427
      %v1429 = vshrl.u32 %v1154, 16
      %v1431 = vor.u32 %v1429, %v1427
      %v1432 = vshll.u32 %v1155, 16
      %v1434 = vrot.slane %v1432, 1
      %v1435 = vsel %vm448, %v1431, %v1434
      %v1436 = vshrl.u32 %v1155, 16
      %v1438 = vor.u32 %v1436, %v1434
      %v1440 = vsel %vm576, %v1337, 0
      %v1443 = vsel %vm576, %v1344, 0
      %v1446 = vsel %vm576, %v1351, 0
      %v1449 = vsel %vm576, %v1358, 0
      %v1452 = vsel %vm576, %v1365, 0
      %v1455 = vsel %vm576, %v1372, 0
      %v1458 = vsel %vm576, %v1379, 0
      %v1461 = vsel %vm576, %v1386, 0
      %v1464 = vsel %vm576, %v1393, 0
      %v1467 = vsel %vm576, %v1400, 0
      %v1470 = vsel %vm576, %v1407, 0
      %v1473 = vsel %vm576, %v1414, 0
      %v1476 = vsel %vm576, %v1421, 0
      %v1479 = vsel %vm576, %v1428, 0
      %v1482 = vsel %vm576, %v1435, 0
      %v1485 = vsel %vm576, %v1438, 0
      %v1488 = vsel %vm625, %v1327, 0
      %1490 = vmatpush.bf16.msra.mxu0 0
      %1491 = vmatpush.bf16.msra.mxu0 0
      %1492 = vmatpush.bf16.msra.mxu0 0
      %1493 = vmatpush.bf16.msra.mxu0 0
      %1494 = vmatpush.bf16.msra.mxu0 0
      %1495 = vmatpush.bf16.msra.mxu0 0
      %1496 = vmatpush.bf16.msra.mxu0 0
      %1497 = vmatpush.bf16.msra.mxu0 %v1488
      %1498 = vmatmul.bf16.gmra.mxu0 %v1440
      %v1499 = vpop.f32.mrf.mxu0
      %v1500 = vadd.f32 0.0, %v1499
      %v1501 = vpop.f32.mrf.mxu0
      %v1502 = vadd.f32 0.0, %v1501
      %1503 = vmatmul.bf16.gmra.mxu0 %v1443
      %v1504 = vpop.f32.mrf.mxu0
      %v1505 = vadd.f32 0.0, %v1504
      %v1506 = vpop.f32.mrf.mxu0
      %v1507 = vadd.f32 0.0, %v1506
      %1508 = vmatmul.bf16.gmra.mxu0 %v1446
      %v1509 = vpop.f32.mrf.mxu0
      %v1510 = vadd.f32 0.0, %v1509
      %v1511 = vpop.f32.mrf.mxu0
      %v1512 = vadd.f32 0.0, %v1511
      %1513 = vmatmul.bf16.gmra.mxu0 %v1449
      %v1514 = vpop.f32.mrf.mxu0
      %v1515 = vadd.f32 0.0, %v1514
      %v1516 = vpop.f32.mrf.mxu0
      %v1517 = vadd.f32 0.0, %v1516
      %1518 = vmatmul.bf16.gmra.mxu0 %v1452
      %v1519 = vpop.f32.mrf.mxu0
      %v1520 = vadd.f32 0.0, %v1519
      %v1521 = vpop.f32.mrf.mxu0
      %v1522 = vadd.f32 0.0, %v1521
      %1523 = vmatmul.bf16.gmra.mxu0 %v1455
      %v1524 = vpop.f32.mrf.mxu0
      %v1525 = vadd.f32 0.0, %v1524
      %v1526 = vpop.f32.mrf.mxu0
      %v1527 = vadd.f32 0.0, %v1526
      %1528 = vmatmul.bf16.gmra.mxu0 %v1458
      %v1529 = vpop.f32.mrf.mxu0
      %v1530 = vadd.f32 0.0, %v1529
      %v1531 = vpop.f32.mrf.mxu0
      %v1532 = vadd.f32 0.0, %v1531
      %1533 = vmatmul.bf16.gmra.mxu0 %v1461
      %v1534 = vpop.f32.mrf.mxu0
      %v1535 = vadd.f32 0.0, %v1534
      %v1536 = vpop.f32.mrf.mxu0
      %v1537 = vadd.f32 0.0, %v1536
      %1538 = vmatmul.bf16.gmra.mxu0 %v1464
      %v1539 = vpop.f32.mrf.mxu0
      %v1540 = vadd.f32 0.0, %v1539
      %v1541 = vpop.f32.mrf.mxu0
      %v1542 = vadd.f32 0.0, %v1541
      %1543 = vmatmul.bf16.gmra.mxu0 %v1467
      %v1544 = vpop.f32.mrf.mxu0
      %v1545 = vadd.f32 0.0, %v1544
      %v1546 = vpop.f32.mrf.mxu0
      %v1547 = vadd.f32 0.0, %v1546
      %1548 = vmatmul.bf16.gmra.mxu0 %v1470
      %v1549 = vpop.f32.mrf.mxu0
      %v1550 = vadd.f32 0.0, %v1549
      %v1551 = vpop.f32.mrf.mxu0
      %v1552 = vadd.f32 0.0, %v1551
      %1553 = vmatmul.bf16.gmra.mxu0 %v1473
      %v1554 = vpop.f32.mrf.mxu0
      %v1555 = vadd.f32 0.0, %v1554
      %v1556 = vpop.f32.mrf.mxu0
      %v1557 = vadd.f32 0.0, %v1556
      %1558 = vmatmul.bf16.gmra.mxu0 %v1476
      %v1559 = vpop.f32.mrf.mxu0
      %v1560 = vadd.f32 0.0, %v1559
      %v1561 = vpop.f32.mrf.mxu0
      %v1562 = vadd.f32 0.0, %v1561
      %1563 = vmatmul.bf16.gmra.mxu0 %v1479
      %v1564 = vpop.f32.mrf.mxu0
      %v1565 = vadd.f32 0.0, %v1564
      %v1566 = vpop.f32.mrf.mxu0
      %v1567 = vadd.f32 0.0, %v1566
      %1568 = vmatmul.bf16.gmra.mxu0 %v1482
      %v1569 = vpop.f32.mrf.mxu0
      %v1570 = vadd.f32 0.0, %v1569
      %v1571 = vpop.f32.mrf.mxu0
      %v1572 = vadd.f32 0.0, %v1571
      %1573 = vmatmul.bf16.gmra.mxu0 %v1485
      %v1574 = vpop.f32.mrf.mxu0
      %v1575 = vadd.f32 0.0, %v1574
      %v1576 = vpop.f32.mrf.mxu0
      %1577 = vdwg.mxu0
      %v1578 = vadd.f32 %v1295, %v1500
      %v1579 = vadd.f32 %v1296, %v1502
      %v1580 = vadd.f32 %v1297, %v1505
      %v1581 = vadd.f32 %v1298, %v1507
      %v1582 = vadd.f32 %v1299, %v1510
      %v1583 = vadd.f32 %v1300, %v1512
      %v1584 = vadd.f32 %v1301, %v1515
      %v1585 = vadd.f32 %v1302, %v1517
      %v1586 = vadd.f32 %v1303, %v1520
      %v1587 = vadd.f32 %v1304, %v1522
      %v1588 = vadd.f32 %v1305, %v1525
      %v1589 = vadd.f32 %v1306, %v1527
      %v1590 = vadd.f32 %v1307, %v1530
      %v1591 = vadd.f32 %v1308, %v1532
      %v1592 = vadd.f32 %v1309, %v1535
      %v1593 = vadd.f32 %v1310, %v1537
      %v1594 = vadd.f32 %v1311, %v1540
      %v1595 = vadd.f32 %v1312, %v1542
      %v1596 = vadd.f32 %v1313, %v1545
      %v1597 = vadd.f32 %v1314, %v1547
      %v1598 = vadd.f32 %v1315, %v1550
      %v1599 = vadd.f32 %v1316, %v1552
      %v1600 = vadd.f32 %v1317, %v1555
      %v1601 = vadd.f32 %v1318, %v1557
      %v1602 = vadd.f32 %v1319, %v1560
      %v1603 = vadd.f32 %v1320, %v1562
      %v1604 = vadd.f32 %v1321, %v1565
      %v1605 = vadd.f32 %v1322, %v1567
      %v1606 = vadd.f32 %v1323, %v1570
      %v1607 = vadd.f32 %v1324, %v1572
      %v1608 = vadd.f32 %v1325, %v1575
      %s1609 = scalar_lea.vmem %s316, 20
      %v1610 = vld [vmem:[%s1609] sm:$0xf]
      %v1611 = vrot.slane %v1140, 1
      %v1612 = vrot.slane %v1141, 1
      %v1613 = vsel %vm842, %v1611, %v1612
      %v1614 = vrot.slane %v1142, 1
      %v1615 = vsel %vm842, %v1612, %v1614
      %v1616 = vrot.slane %v1143, 1
      %v1617 = vsel %vm842, %v1614, %v1616
      %v1618 = vrot.slane %v1144, 1
      %v1619 = vsel %vm842, %v1616, %v1618
      %v1620 = vrot.slane %v1145, 1
      %v1621 = vsel %vm842, %v1618, %v1620
      %v1622 = vrot.slane %v1146, 1
      %v1623 = vsel %vm842, %v1620, %v1622
      %v1624 = vrot.slane %v1147, 1
      %v1625 = vsel %vm842, %v1622, %v1624
      %v1626 = vrot.slane %v1148, 1
      %v1627 = vsel %vm842, %v1624, %v1626
      %v1628 = vrot.slane %v1149, 1
      %v1629 = vsel %vm842, %v1626, %v1628
      %v1630 = vrot.slane %v1150, 1
      %v1631 = vsel %vm842, %v1628, %v1630
      %v1632 = vrot.slane %v1151, 1
      %v1633 = vsel %vm842, %v1630, %v1632
      %v1634 = vrot.slane %v1152, 1
      %v1635 = vsel %vm842, %v1632, %v1634
      %v1636 = vrot.slane %v1153, 1
      %v1637 = vsel %vm842, %v1634, %v1636
      %v1638 = vrot.slane %v1154, 1
      %v1639 = vsel %vm842, %v1636, %v1638
      %v1640 = vrot.slane %v1155, 1
      %v1641 = vsel %vm842, %v1638, %v1640
      %v1643 = vsel %vm576, %v1613, 0
      %v1646 = vsel %vm576, %v1615, 0
      %v1649 = vsel %vm576, %v1617, 0
      %v1652 = vsel %vm576, %v1619, 0
      %v1655 = vsel %vm576, %v1621, 0
      %v1658 = vsel %vm576, %v1623, 0
      %v1661 = vsel %vm576, %v1625, 0
      %v1664 = vsel %vm576, %v1627, 0
      %v1667 = vsel %vm576, %v1629, 0
      %v1670 = vsel %vm576, %v1631, 0
      %v1673 = vsel %vm576, %v1633, 0
      %v1676 = vsel %vm576, %v1635, 0
      %v1679 = vsel %vm576, %v1637, 0
      %v1682 = vsel %vm576, %v1639, 0
      %v1685 = vsel %vm576, %v1641, 0
      %v1688 = vsel %vm576, %v1640, 0
      %v1691 = vsel %vm625, %v1610, 0
      %1693 = vmatpush.bf16.msra.mxu0 0
      %1694 = vmatpush.bf16.msra.mxu0 0
      %1695 = vmatpush.bf16.msra.mxu0 0
      %1696 = vmatpush.bf16.msra.mxu0 0
      %1697 = vmatpush.bf16.msra.mxu0 0
      %1698 = vmatpush.bf16.msra.mxu0 0
      %1699 = vmatpush.bf16.msra.mxu0 0
      %1700 = vmatpush.bf16.msra.mxu0 %v1691
      %1701 = vmatmul.bf16.gmra.mxu0 %v1643
      %v1702 = vpop.f32.mrf.mxu0
      %v1703 = vadd.f32 0.0, %v1702
      %v1704 = vpop.f32.mrf.mxu0
      %v1705 = vadd.f32 0.0, %v1704
      %1706 = vmatmul.bf16.gmra.mxu0 %v1646
      %v1707 = vpop.f32.mrf.mxu0
      %v1708 = vadd.f32 0.0, %v1707
      %v1709 = vpop.f32.mrf.mxu0
      %v1710 = vadd.f32 0.0, %v1709
      %1711 = vmatmul.bf16.gmra.mxu0 %v1649
      %v1712 = vpop.f32.mrf.mxu0
      %v1713 = vadd.f32 0.0, %v1712
      %v1714 = vpop.f32.mrf.mxu0
      %v1715 = vadd.f32 0.0, %v1714
      %1716 = vmatmul.bf16.gmra.mxu0 %v1652
      %v1717 = vpop.f32.mrf.mxu0
      %v1718 = vadd.f32 0.0, %v1717
      %v1719 = vpop.f32.mrf.mxu0
      %v1720 = vadd.f32 0.0, %v1719
      %1721 = vmatmul.bf16.gmra.mxu0 %v1655
      %v1722 = vpop.f32.mrf.mxu0
      %v1723 = vadd.f32 0.0, %v1722
      %v1724 = vpop.f32.mrf.mxu0
      %v1725 = vadd.f32 0.0, %v1724
      %1726 = vmatmul.bf16.gmra.mxu0 %v1658
      %v1727 = vpop.f32.mrf.mxu0
      %v1728 = vadd.f32 0.0, %v1727
      %v1729 = vpop.f32.mrf.mxu0
      %v1730 = vadd.f32 0.0, %v1729
      %1731 = vmatmul.bf16.gmra.mxu0 %v1661
      %v1732 = vpop.f32.mrf.mxu0
      %v1733 = vadd.f32 0.0, %v1732
      %v1734 = vpop.f32.mrf.mxu0
      %v1735 = vadd.f32 0.0, %v1734
      %1736 = vmatmul.bf16.gmra.mxu0 %v1664
      %v1737 = vpop.f32.mrf.mxu0
      %v1738 = vadd.f32 0.0, %v1737
      %v1739 = vpop.f32.mrf.mxu0
      %v1740 = vadd.f32 0.0, %v1739
      %1741 = vmatmul.bf16.gmra.mxu0 %v1667
      %v1742 = vpop.f32.mrf.mxu0
      %v1743 = vadd.f32 0.0, %v1742
      %v1744 = vpop.f32.mrf.mxu0
      %v1745 = vadd.f32 0.0, %v1744
      %1746 = vmatmul.bf16.gmra.mxu0 %v1670
      %v1747 = vpop.f32.mrf.mxu0
      %v1748 = vadd.f32 0.0, %v1747
      %v1749 = vpop.f32.mrf.mxu0
      %v1750 = vadd.f32 0.0, %v1749
      %1751 = vmatmul.bf16.gmra.mxu0 %v1673
      %v1752 = vpop.f32.mrf.mxu0
      %v1753 = vadd.f32 0.0, %v1752
      %v1754 = vpop.f32.mrf.mxu0
      %v1755 = vadd.f32 0.0, %v1754
      %1756 = vmatmul.bf16.gmra.mxu0 %v1676
      %v1757 = vpop.f32.mrf.mxu0
      %v1758 = vadd.f32 0.0, %v1757
      %v1759 = vpop.f32.mrf.mxu0
      %v1760 = vadd.f32 0.0, %v1759
      %1761 = vmatmul.bf16.gmra.mxu0 %v1679
      %v1762 = vpop.f32.mrf.mxu0
      %v1763 = vadd.f32 0.0, %v1762
      %v1764 = vpop.f32.mrf.mxu0
      %v1765 = vadd.f32 0.0, %v1764
      %1766 = vmatmul.bf16.gmra.mxu0 %v1682
      %v1767 = vpop.f32.mrf.mxu0
      %v1768 = vadd.f32 0.0, %v1767
      %v1769 = vpop.f32.mrf.mxu0
      %v1770 = vadd.f32 0.0, %v1769
      %1771 = vmatmul.bf16.gmra.mxu0 %v1685
      %v1772 = vpop.f32.mrf.mxu0
      %v1773 = vadd.f32 0.0, %v1772
      %v1774 = vpop.f32.mrf.mxu0
      %v1775 = vadd.f32 0.0, %v1774
      %1776 = vmatmul.bf16.gmra.mxu0 %v1688
      %v1777 = vpop.f32.mrf.mxu0
      %v1778 = vadd.f32 0.0, %v1777
      %v1779 = vpop.f32.mrf.mxu0
      %1780 = vdwg.mxu0
      %v1781 = vadd.f32 %v1578, %v1703
      %v1782 = vadd.f32 %v1579, %v1705
      %v1783 = vadd.f32 %v1580, %v1708
      %v1784 = vadd.f32 %v1581, %v1710
      %v1785 = vadd.f32 %v1582, %v1713
      %v1786 = vadd.f32 %v1583, %v1715
      %v1787 = vadd.f32 %v1584, %v1718
      %v1788 = vadd.f32 %v1585, %v1720
      %v1789 = vadd.f32 %v1586, %v1723
      %v1790 = vadd.f32 %v1587, %v1725
      %v1791 = vadd.f32 %v1588, %v1728
      %v1792 = vadd.f32 %v1589, %v1730
      %v1793 = vadd.f32 %v1590, %v1733
      %v1794 = vadd.f32 %v1591, %v1735
      %v1795 = vadd.f32 %v1592, %v1738
      %v1796 = vadd.f32 %v1593, %v1740
      %v1797 = vadd.f32 %v1594, %v1743
      %v1798 = vadd.f32 %v1595, %v1745
      %v1799 = vadd.f32 %v1596, %v1748
      %v1800 = vadd.f32 %v1597, %v1750
      %v1801 = vadd.f32 %v1598, %v1753
      %v1802 = vadd.f32 %v1599, %v1755
      %v1803 = vadd.f32 %v1600, %v1758
      %v1804 = vadd.f32 %v1601, %v1760
      %v1805 = vadd.f32 %v1602, %v1763
      %v1806 = vadd.f32 %v1603, %v1765
      %v1807 = vadd.f32 %v1604, %v1768
      %v1808 = vadd.f32 %v1605, %v1770
      %v1809 = vadd.f32 %v1606, %v1773
      %v1810 = vadd.f32 %v1607, %v1775
      %v1811 = vadd.f32 %v1608, %v1778
      %s1812 = scalar_lea.vmem %s298, 248
      %v1813 = vld [vmem:[%s1812] sm:$0xf]
      %v1814 = vld [vmem:[%s1812 + $0x4] sm:$0xf]
      %v1815 = vld [vmem:[%s1812 + $0x8] sm:$0xf]
      %v1816 = vld [vmem:[%s1812 + $0xc] sm:$0xf]
      %v1817 = vld [vmem:[%s1812 + $0x10] sm:$0xf]
      %v1818 = vld [vmem:[%s1812 + $0x14] sm:$0xf]
      %v1819 = vld [vmem:[%s1812 + $0x18] sm:$0xf]
      %v1820 = vld [vmem:[%s1812 + $0x1c] sm:$0xf]
      %v1821 = vld [vmem:[%s1812 + $0x20] sm:$0xf]
      %v1822 = vld [vmem:[%s1812 + $0x24] sm:$0xf]
      %v1823 = vld [vmem:[%s1812 + $0x28] sm:$0xf]
      %v1824 = vld [vmem:[%s1812 + $0x2c] sm:$0xf]
      %v1825 = vld [vmem:[%s1812 + $0x30] sm:$0xf]
      %v1826 = vld [vmem:[%s1812 + $0x34] sm:$0xf]
      %v1827 = vld [vmem:[%s1812 + $0x38] sm:$0xf]
      %v1828 = vld [vmem:[%s1812 + $0x3c] sm:$0xf]
      %v1829 = vld [vmem:[%s1812 + $0x40] sm:$0xf]
      %v1830 = vld [vmem:[%s1812 + $0x44] sm:$0xf]
      %v1831 = vld [vmem:[%s1812 + $0x48] sm:$0xf]
      %v1832 = vld [vmem:[%s1812 + $0x4c] sm:$0xf]
      %v1833 = vld [vmem:[%s1812 + $0x50] sm:$0xf]
      %v1834 = vld [vmem:[%s1812 + $0x54] sm:$0xf]
      %v1835 = vld [vmem:[%s1812 + $0x58] sm:$0xf]
      %v1836 = vld [vmem:[%s1812 + $0x5c] sm:$0xf]
      %v1837 = vld [vmem:[%s1812 + $0x60] sm:$0xf]
      %v1838 = vld [vmem:[%s1812 + $0x64] sm:$0xf]
      %v1839 = vld [vmem:[%s1812 + $0x68] sm:$0xf]
      %v1840 = vld [vmem:[%s1812 + $0x6c] sm:$0xf]
      %v1841 = vld [vmem:[%s1812 + $0x70] sm:$0xf]
      %v1842 = vld [vmem:[%s1812 + $0x74] sm:$0xf]
      %v1843 = vld [vmem:[%s1812 + $0x78] sm:$0x7]
      %s1844 = scalar_lea.vmem %s316, 24
      %v1845 = vld [vmem:[%s1844] sm:$0xf]
      %v1877 = vunpack.c.l.b16 %v1813
      %v1878 = vunpack.c.l.b16 %v1814
      %v1879 = vunpack.c.l.b16 %v1815
      %v1880 = vunpack.c.l.b16 %v1816
      %v1881 = vunpack.c.l.b16 %v1817
      %v1882 = vunpack.c.l.b16 %v1818
      %v1883 = vunpack.c.l.b16 %v1819
      %v1884 = vunpack.c.l.b16 %v1820
      %v1885 = vunpack.c.l.b16 %v1821
      %v1886 = vunpack.c.l.b16 %v1822
      %v1887 = vunpack.c.l.b16 %v1823
      %v1888 = vunpack.c.l.b16 %v1824
      %v1889 = vunpack.c.l.b16 %v1825
      %v1890 = vunpack.c.l.b16 %v1826
      %v1891 = vunpack.c.l.b16 %v1827
      %v1892 = vunpack.c.l.b16 %v1828
      %v1893 = vunpack.c.l.b16 %v1829
      %v1894 = vunpack.c.l.b16 %v1830
      %v1895 = vunpack.c.l.b16 %v1831
      %v1896 = vunpack.c.l.b16 %v1832
      %v1897 = vunpack.c.l.b16 %v1833
      %v1898 = vunpack.c.l.b16 %v1834
      %v1899 = vunpack.c.l.b16 %v1835
      %v1900 = vunpack.c.l.b16 %v1836
      %v1901 = vunpack.c.l.b16 %v1837
      %v1902 = vunpack.c.l.b16 %v1838
      %v1903 = vunpack.c.l.b16 %v1839
      %v1904 = vunpack.c.l.b16 %v1840
      %v1905 = vunpack.c.l.b16 %v1841
      %v1906 = vunpack.c.l.b16 %v1842
      %v1907 = vunpack.c.l.b16 %v1843
      %v1908 = vpack.c.b16 %v1878, %v1877
      %v1909 = vpack.c.b16 %v1880, %v1879
      %v1910 = vpack.c.b16 %v1882, %v1881
      %v1911 = vpack.c.b16 %v1884, %v1883
      %v1912 = vpack.c.b16 %v1886, %v1885
      %v1913 = vpack.c.b16 %v1888, %v1887
      %v1914 = vpack.c.b16 %v1890, %v1889
      %v1915 = vpack.c.b16 %v1892, %v1891
      %v1916 = vpack.c.b16 %v1894, %v1893
      %v1917 = vpack.c.b16 %v1896, %v1895
      %v1918 = vpack.c.b16 %v1898, %v1897
      %v1919 = vpack.c.b16 %v1900, %v1899
      %v1920 = vpack.c.b16 %v1902, %v1901
      %v1921 = vpack.c.b16 %v1904, %v1903
      %v1922 = vpack.c.b16 %v1906, %v1905
      %v1923 = vpack.c.b16 %v1907, %v1907
      %v1925 = vsel %vm576, %v1908, 0
      %v1928 = vsel %vm576, %v1909, 0
      %v1931 = vsel %vm576, %v1910, 0
      %v1934 = vsel %vm576, %v1911, 0
      %v1937 = vsel %vm576, %v1912, 0
      %v1940 = vsel %vm576, %v1913, 0
      %v1943 = vsel %vm576, %v1914, 0
      %v1946 = vsel %vm576, %v1915, 0
      %v1949 = vsel %vm576, %v1916, 0
      %v1952 = vsel %vm576, %v1917, 0
      %v1955 = vsel %vm576, %v1918, 0
      %v1958 = vsel %vm576, %v1919, 0
      %v1961 = vsel %vm576, %v1920, 0
      %v1964 = vsel %vm576, %v1921, 0
      %v1967 = vsel %vm576, %v1922, 0
      %v1970 = vsel %vm576, %v1923, 0
      %v1973 = vsel %vm625, %v1845, 0
      %1975 = vmatpush.bf16.msra.mxu0 0
      %1976 = vmatpush.bf16.msra.mxu0 0
      %1977 = vmatpush.bf16.msra.mxu0 0
      %1978 = vmatpush.bf16.msra.mxu0 0
      %1979 = vmatpush.bf16.msra.mxu0 0
      %1980 = vmatpush.bf16.msra.mxu0 0
      %1981 = vmatpush.bf16.msra.mxu0 0
      %1982 = vmatpush.bf16.msra.mxu0 %v1973
      %1983 = vmatmul.bf16.gmra.mxu0 %v1925
      %v1984 = vpop.f32.mrf.mxu0
      %v1985 = vadd.f32 0.0, %v1984
      %v1986 = vpop.f32.mrf.mxu0
      %v1987 = vadd.f32 0.0, %v1986
      %1988 = vmatmul.bf16.gmra.mxu0 %v1928
      %v1989 = vpop.f32.mrf.mxu0
      %v1990 = vadd.f32 0.0, %v1989
      %v1991 = vpop.f32.mrf.mxu0
      %v1992 = vadd.f32 0.0, %v1991
      %1993 = vmatmul.bf16.gmra.mxu0 %v1931
      %v1994 = vpop.f32.mrf.mxu0
      %v1995 = vadd.f32 0.0, %v1994
      %v1996 = vpop.f32.mrf.mxu0
      %v1997 = vadd.f32 0.0, %v1996
      %1998 = vmatmul.bf16.gmra.mxu0 %v1934
      %v1999 = vpop.f32.mrf.mxu0
      %v2000 = vadd.f32 0.0, %v1999
      %v2001 = vpop.f32.mrf.mxu0
      %v2002 = vadd.f32 0.0, %v2001
      %2003 = vmatmul.bf16.gmra.mxu0 %v1937
      %v2004 = vpop.f32.mrf.mxu0
      %v2005 = vadd.f32 0.0, %v2004
      %v2006 = vpop.f32.mrf.mxu0
      %v2007 = vadd.f32 0.0, %v2006
      %2008 = vmatmul.bf16.gmra.mxu0 %v1940
      %v2009 = vpop.f32.mrf.mxu0
      %v2010 = vadd.f32 0.0, %v2009
      %v2011 = vpop.f32.mrf.mxu0
      %v2012 = vadd.f32 0.0, %v2011
      %2013 = vmatmul.bf16.gmra.mxu0 %v1943
      %v2014 = vpop.f32.mrf.mxu0
      %v2015 = vadd.f32 0.0, %v2014
      %v2016 = vpop.f32.mrf.mxu0
      %v2017 = vadd.f32 0.0, %v2016
      %2018 = vmatmul.bf16.gmra.mxu0 %v1946
      %v2019 = vpop.f32.mrf.mxu0
      %v2020 = vadd.f32 0.0, %v2019
      %v2021 = vpop.f32.mrf.mxu0
      %v2022 = vadd.f32 0.0, %v2021
      %2023 = vmatmul.bf16.gmra.mxu0 %v1949
      %v2024 = vpop.f32.mrf.mxu0
      %v2025 = vadd.f32 0.0, %v2024
      %v2026 = vpop.f32.mrf.mxu0
      %v2027 = vadd.f32 0.0, %v2026
      %2028 = vmatmul.bf16.gmra.mxu0 %v1952
      %v2029 = vpop.f32.mrf.mxu0
      %v2030 = vadd.f32 0.0, %v2029
      %v2031 = vpop.f32.mrf.mxu0
      %v2032 = vadd.f32 0.0, %v2031
      %2033 = vmatmul.bf16.gmra.mxu0 %v1955
      %v2034 = vpop.f32.mrf.mxu0
      %v2035 = vadd.f32 0.0, %v2034
      %v2036 = vpop.f32.mrf.mxu0
      %v2037 = vadd.f32 0.0, %v2036
      %2038 = vmatmul.bf16.gmra.mxu0 %v1958
      %v2039 = vpop.f32.mrf.mxu0
      %v2040 = vadd.f32 0.0, %v2039
      %v2041 = vpop.f32.mrf.mxu0
      %v2042 = vadd.f32 0.0, %v2041
      %2043 = vmatmul.bf16.gmra.mxu0 %v1961
      %v2044 = vpop.f32.mrf.mxu0
      %v2045 = vadd.f32 0.0, %v2044
      %v2046 = vpop.f32.mrf.mxu0
      %v2047 = vadd.f32 0.0, %v2046
      %2048 = vmatmul.bf16.gmra.mxu0 %v1964
      %v2049 = vpop.f32.mrf.mxu0
      %v2050 = vadd.f32 0.0, %v2049
      %v2051 = vpop.f32.mrf.mxu0
      %v2052 = vadd.f32 0.0, %v2051
      %2053 = vmatmul.bf16.gmra.mxu0 %v1967
      %v2054 = vpop.f32.mrf.mxu0
      %v2055 = vadd.f32 0.0, %v2054
      %v2056 = vpop.f32.mrf.mxu0
      %v2057 = vadd.f32 0.0, %v2056
      %2058 = vmatmul.bf16.gmra.mxu0 %v1970
      %v2059 = vpop.f32.mrf.mxu0
      %v2060 = vadd.f32 0.0, %v2059
      %v2061 = vpop.f32.mrf.mxu0
      %2062 = vdwg.mxu0
      %v2063 = vadd.f32 %v1781, %v1985
      %v2064 = vadd.f32 %v1782, %v1987
      %v2065 = vadd.f32 %v1783, %v1990
      %v2066 = vadd.f32 %v1784, %v1992
      %v2067 = vadd.f32 %v1785, %v1995
      %v2068 = vadd.f32 %v1786, %v1997
      %v2069 = vadd.f32 %v1787, %v2000
      %v2070 = vadd.f32 %v1788, %v2002
      %v2071 = vadd.f32 %v1789, %v2005
      %v2072 = vadd.f32 %v1790, %v2007
      %v2073 = vadd.f32 %v1791, %v2010
      %v2074 = vadd.f32 %v1792, %v2012
      %v2075 = vadd.f32 %v1793, %v2015
      %v2076 = vadd.f32 %v1794, %v2017
      %v2077 = vadd.f32 %v1795, %v2020
      %v2078 = vadd.f32 %v1796, %v2022
      %v2079 = vadd.f32 %v1797, %v2025
      %v2080 = vadd.f32 %v1798, %v2027
      %v2081 = vadd.f32 %v1799, %v2030
      %v2082 = vadd.f32 %v1800, %v2032
      %v2083 = vadd.f32 %v1801, %v2035
      %v2084 = vadd.f32 %v1802, %v2037
      %v2085 = vadd.f32 %v1803, %v2040
      %v2086 = vadd.f32 %v1804, %v2042
      %v2087 = vadd.f32 %v1805, %v2045
      %v2088 = vadd.f32 %v1806, %v2047
      %v2089 = vadd.f32 %v1807, %v2050
      %v2090 = vadd.f32 %v1808, %v2052
      %v2091 = vadd.f32 %v1809, %v2055
      %v2092 = vadd.f32 %v1810, %v2057
      %v2093 = vadd.f32 %v1811, %v2060
      %s2094 = scalar_lea.vmem %s316, 28
      %v2095 = vld [vmem:[%s2094] sm:$0xf]
      %v2096 = vshrl.u32 %v1908, 16
      %v2098 = vshll.u32 %v1908, 16
      %v2100 = vrot.slane %v2098, 1
      %v2101 = vor.u32 %v2096, %v2100
      %v2102 = vshll.u32 %v1909, 16
      %v2104 = vrot.slane %v2102, 1
      %v2105 = vsel %vm448, %v2101, %v2104
      %v2106 = vshrl.u32 %v1909, 16
      %v2108 = vor.u32 %v2106, %v2104
      %v2109 = vshll.u32 %v1910, 16
      %v2111 = vrot.slane %v2109, 1
      %v2112 = vsel %vm448, %v2108, %v2111
      %v2113 = vshrl.u32 %v1910, 16
      %v2115 = vor.u32 %v2113, %v2111
      %v2116 = vshll.u32 %v1911, 16
      %v2118 = vrot.slane %v2116, 1
      %v2119 = vsel %vm448, %v2115, %v2118
      %v2120 = vshrl.u32 %v1911, 16
      %v2122 = vor.u32 %v2120, %v2118
      %v2123 = vshll.u32 %v1912, 16
      %v2125 = vrot.slane %v2123, 1
      %v2126 = vsel %vm448, %v2122, %v2125
      %v2127 = vshrl.u32 %v1912, 16
      %v2129 = vor.u32 %v2127, %v2125
      %v2130 = vshll.u32 %v1913, 16
      %v2132 = vrot.slane %v2130, 1
      %v2133 = vsel %vm448, %v2129, %v2132
      %v2134 = vshrl.u32 %v1913, 16
      %v2136 = vor.u32 %v2134, %v2132
      %v2137 = vshll.u32 %v1914, 16
      %v2139 = vrot.slane %v2137, 1
      %v2140 = vsel %vm448, %v2136, %v2139
      %v2141 = vshrl.u32 %v1914, 16
      %v2143 = vor.u32 %v2141, %v2139
      %v2144 = vshll.u32 %v1915, 16
      %v2146 = vrot.slane %v2144, 1
      %v2147 = vsel %vm448, %v2143, %v2146
      %v2148 = vshrl.u32 %v1915, 16
      %v2150 = vor.u32 %v2148, %v2146
      %v2151 = vshll.u32 %v1916, 16
      %v2153 = vrot.slane %v2151, 1
      %v2154 = vsel %vm448, %v2150, %v2153
      %v2155 = vshrl.u32 %v1916, 16
      %v2157 = vor.u32 %v2155, %v2153
      %v2158 = vshll.u32 %v1917, 16
      %v2160 = vrot.slane %v2158, 1
      %v2161 = vsel %vm448, %v2157, %v2160
      %v2162 = vshrl.u32 %v1917, 16
      %v2164 = vor.u32 %v2162, %v2160
      %v2165 = vshll.u32 %v1918, 16
      %v2167 = vrot.slane %v2165, 1
      %v2168 = vsel %vm448, %v2164, %v2167
      %v2169 = vshrl.u32 %v1918, 16
      %v2171 = vor.u32 %v2169, %v2167
      %v2172 = vshll.u32 %v1919, 16
      %v2174 = vrot.slane %v2172, 1
      %v2175 = vsel %vm448, %v2171, %v2174
      %v2176 = vshrl.u32 %v1919, 16
      %v2178 = vor.u32 %v2176, %v2174
      %v2179 = vshll.u32 %v1920, 16
      %v2181 = vrot.slane %v2179, 1
      %v2182 = vsel %vm448, %v2178, %v2181
      %v2183 = vshrl.u32 %v1920, 16
      %v2185 = vor.u32 %v2183, %v2181
      %v2186 = vshll.u32 %v1921, 16
      %v2188 = vrot.slane %v2186, 1
      %v2189 = vsel %vm448, %v2185, %v2188
      %v2190 = vshrl.u32 %v1921, 16
      %v2192 = vor.u32 %v2190, %v2188
      %v2193 = vshll.u32 %v1922, 16
      %v2195 = vrot.slane %v2193, 1
      %v2196 = vsel %vm448, %v2192, %v2195
      %v2197 = vshrl.u32 %v1922, 16
      %v2199 = vor.u32 %v2197, %v2195
      %v2200 = vshll.u32 %v1923, 16
      %v2202 = vrot.slane %v2200, 1
      %v2203 = vsel %vm448, %v2199, %v2202
      %v2204 = vshrl.u32 %v1923, 16
      %v2206 = vor.u32 %v2204, %v2202
      %v2208 = vsel %vm576, %v2105, 0
      %v2211 = vsel %vm576, %v2112, 0
      %v2214 = vsel %vm576, %v2119, 0
      %v2217 = vsel %vm576, %v2126, 0
      %v2220 = vsel %vm576, %v2133, 0
      %v2223 = vsel %vm576, %v2140, 0
      %v2226 = vsel %vm576, %v2147, 0
      %v2229 = vsel %vm576, %v2154, 0
      %v2232 = vsel %vm576, %v2161, 0
      %v2235 = vsel %vm576, %v2168, 0
      %v2238 = vsel %vm576, %v2175, 0
      %v2241 = vsel %vm576, %v2182, 0
      %v2244 = vsel %vm576, %v2189, 0
      %v2247 = vsel %vm576, %v2196, 0
      %v2250 = vsel %vm576, %v2203, 0
      %v2253 = vsel %vm576, %v2206, 0
      %v2256 = vsel %vm625, %v2095, 0
      %2258 = vmatpush.bf16.msra.mxu0 0
      %2259 = vmatpush.bf16.msra.mxu0 0
      %2260 = vmatpush.bf16.msra.mxu0 0
      %2261 = vmatpush.bf16.msra.mxu0 0
      %2262 = vmatpush.bf16.msra.mxu0 0
      %2263 = vmatpush.bf16.msra.mxu0 0
      %2264 = vmatpush.bf16.msra.mxu0 0
      %2265 = vmatpush.bf16.msra.mxu0 %v2256
      %2266 = vmatmul.bf16.gmra.mxu0 %v2208
      %v2267 = vpop.f32.mrf.mxu0
      %v2268 = vadd.f32 0.0, %v2267
      %v2269 = vpop.f32.mrf.mxu0
      %v2270 = vadd.f32 0.0, %v2269
      %2271 = vmatmul.bf16.gmra.mxu0 %v2211
      %v2272 = vpop.f32.mrf.mxu0
      %v2273 = vadd.f32 0.0, %v2272
      %v2274 = vpop.f32.mrf.mxu0
      %v2275 = vadd.f32 0.0, %v2274
      %2276 = vmatmul.bf16.gmra.mxu0 %v2214
      %v2277 = vpop.f32.mrf.mxu0
      %v2278 = vadd.f32 0.0, %v2277
      %v2279 = vpop.f32.mrf.mxu0
      %v2280 = vadd.f32 0.0, %v2279
      %2281 = vmatmul.bf16.gmra.mxu0 %v2217
      %v2282 = vpop.f32.mrf.mxu0
      %v2283 = vadd.f32 0.0, %v2282
      %v2284 = vpop.f32.mrf.mxu0
      %v2285 = vadd.f32 0.0, %v2284
      %2286 = vmatmul.bf16.gmra.mxu0 %v2220
      %v2287 = vpop.f32.mrf.mxu0
      %v2288 = vadd.f32 0.0, %v2287
      %v2289 = vpop.f32.mrf.mxu0
      %v2290 = vadd.f32 0.0, %v2289
      %2291 = vmatmul.bf16.gmra.mxu0 %v2223
      %v2292 = vpop.f32.mrf.mxu0
      %v2293 = vadd.f32 0.0, %v2292
      %v2294 = vpop.f32.mrf.mxu0
      %v2295 = vadd.f32 0.0, %v2294
      %2296 = vmatmul.bf16.gmra.mxu0 %v2226
      %v2297 = vpop.f32.mrf.mxu0
      %v2298 = vadd.f32 0.0, %v2297
      %v2299 = vpop.f32.mrf.mxu0
      %v2300 = vadd.f32 0.0, %v2299
      %2301 = vmatmul.bf16.gmra.mxu0 %v2229
      %v2302 = vpop.f32.mrf.mxu0
      %v2303 = vadd.f32 0.0, %v2302
      %v2304 = vpop.f32.mrf.mxu0
      %v2305 = vadd.f32 0.0, %v2304
      %2306 = vmatmul.bf16.gmra.mxu0 %v2232
      %v2307 = vpop.f32.mrf.mxu0
      %v2308 = vadd.f32 0.0, %v2307
      %v2309 = vpop.f32.mrf.mxu0
      %v2310 = vadd.f32 0.0, %v2309
      %2311 = vmatmul.bf16.gmra.mxu0 %v2235
      %v2312 = vpop.f32.mrf.mxu0
      %v2313 = vadd.f32 0.0, %v2312
      %v2314 = vpop.f32.mrf.mxu0
      %v2315 = vadd.f32 0.0, %v2314
      %2316 = vmatmul.bf16.gmra.mxu0 %v2238
      %v2317 = vpop.f32.mrf.mxu0
      %v2318 = vadd.f32 0.0, %v2317
      %v2319 = vpop.f32.mrf.mxu0
      %v2320 = vadd.f32 0.0, %v2319
      %2321 = vmatmul.bf16.gmra.mxu0 %v2241
      %v2322 = vpop.f32.mrf.mxu0
      %v2323 = vadd.f32 0.0, %v2322
      %v2324 = vpop.f32.mrf.mxu0
      %v2325 = vadd.f32 0.0, %v2324
      %2326 = vmatmul.bf16.gmra.mxu0 %v2244
      %v2327 = vpop.f32.mrf.mxu0
      %v2328 = vadd.f32 0.0, %v2327
      %v2329 = vpop.f32.mrf.mxu0
      %v2330 = vadd.f32 0.0, %v2329
      %2331 = vmatmul.bf16.gmra.mxu0 %v2247
      %v2332 = vpop.f32.mrf.mxu0
      %v2333 = vadd.f32 0.0, %v2332
      %v2334 = vpop.f32.mrf.mxu0
      %v2335 = vadd.f32 0.0, %v2334
      %2336 = vmatmul.bf16.gmra.mxu0 %v2250
      %v2337 = vpop.f32.mrf.mxu0
      %v2338 = vadd.f32 0.0, %v2337
      %v2339 = vpop.f32.mrf.mxu0
      %v2340 = vadd.f32 0.0, %v2339
      %2341 = vmatmul.bf16.gmra.mxu0 %v2253
      %v2342 = vpop.f32.mrf.mxu0
      %v2343 = vadd.f32 0.0, %v2342
      %v2344 = vpop.f32.mrf.mxu0
      %2345 = vdwg.mxu0
      %v2346 = vadd.f32 %v2063, %v2268
      %v2347 = vadd.f32 %v2064, %v2270
      %v2348 = vadd.f32 %v2065, %v2273
      %v2349 = vadd.f32 %v2066, %v2275
      %v2350 = vadd.f32 %v2067, %v2278
      %v2351 = vadd.f32 %v2068, %v2280
      %v2352 = vadd.f32 %v2069, %v2283
      %v2353 = vadd.f32 %v2070, %v2285
      %v2354 = vadd.f32 %v2071, %v2288
      %v2355 = vadd.f32 %v2072, %v2290
      %v2356 = vadd.f32 %v2073, %v2293
      %v2357 = vadd.f32 %v2074, %v2295
      %v2358 = vadd.f32 %v2075, %v2298
      %v2359 = vadd.f32 %v2076, %v2300
      %v2360 = vadd.f32 %v2077, %v2303
      %v2361 = vadd.f32 %v2078, %v2305
      %v2362 = vadd.f32 %v2079, %v2308
      %v2363 = vadd.f32 %v2080, %v2310
      %v2364 = vadd.f32 %v2081, %v2313
      %v2365 = vadd.f32 %v2082, %v2315
      %v2366 = vadd.f32 %v2083, %v2318
      %v2367 = vadd.f32 %v2084, %v2320
      %v2368 = vadd.f32 %v2085, %v2323
      %v2369 = vadd.f32 %v2086, %v2325
      %v2370 = vadd.f32 %v2087, %v2328
      %v2371 = vadd.f32 %v2088, %v2330
      %v2372 = vadd.f32 %v2089, %v2333
      %v2373 = vadd.f32 %v2090, %v2335
      %v2374 = vadd.f32 %v2091, %v2338
      %v2375 = vadd.f32 %v2092, %v2340
      %v2376 = vadd.f32 %v2093, %v2343
      %s2377 = scalar_lea.vmem %s316, 32
      %v2378 = vld [vmem:[%s2377] sm:$0xf]
      %v2379 = vrot.slane %v1908, 1
      %v2380 = vrot.slane %v1909, 1
      %v2381 = vsel %vm842, %v2379, %v2380
      %v2382 = vrot.slane %v1910, 1
      %v2383 = vsel %vm842, %v2380, %v2382
      %v2384 = vrot.slane %v1911, 1
      %v2385 = vsel %vm842, %v2382, %v2384
      %v2386 = vrot.slane %v1912, 1
      %v2387 = vsel %vm842, %v2384, %v2386
      %v2388 = vrot.slane %v1913, 1
      %v2389 = vsel %vm842, %v2386, %v2388
      %v2390 = vrot.slane %v1914, 1
      %v2391 = vsel %vm842, %v2388, %v2390
      %v2392 = vrot.slane %v1915, 1
      %v2393 = vsel %vm842, %v2390, %v2392
      %v2394 = vrot.slane %v1916, 1
      %v2395 = vsel %vm842, %v2392, %v2394
      %v2396 = vrot.slane %v1917, 1
      %v2397 = vsel %vm842, %v2394, %v2396
      %v2398 = vrot.slane %v1918, 1
      %v2399 = vsel %vm842, %v2396, %v2398
      %v2400 = vrot.slane %v1919, 1
      %v2401 = vsel %vm842, %v2398, %v2400
      %v2402 = vrot.slane %v1920, 1
      %v2403 = vsel %vm842, %v2400, %v2402
      %v2404 = vrot.slane %v1921, 1
      %v2405 = vsel %vm842, %v2402, %v2404
      %v2406 = vrot.slane %v1922, 1
      %v2407 = vsel %vm842, %v2404, %v2406
      %v2408 = vrot.slane %v1923, 1
      %v2409 = vsel %vm842, %v2406, %v2408
      %v2411 = vsel %vm576, %v2381, 0
      %v2414 = vsel %vm576, %v2383, 0
      %v2417 = vsel %vm576, %v2385, 0
      %v2420 = vsel %vm576, %v2387, 0
      %v2423 = vsel %vm576, %v2389, 0
      %v2426 = vsel %vm576, %v2391, 0
      %v2429 = vsel %vm576, %v2393, 0
      %v2432 = vsel %vm576, %v2395, 0
      %v2435 = vsel %vm576, %v2397, 0
      %v2438 = vsel %vm576, %v2399, 0
      %v2441 = vsel %vm576, %v2401, 0
      %v2444 = vsel %vm576, %v2403, 0
      %v2447 = vsel %vm576, %v2405, 0
      %v2450 = vsel %vm576, %v2407, 0
      %v2453 = vsel %vm576, %v2409, 0
      %v2456 = vsel %vm576, %v2408, 0
      %v2459 = vsel %vm625, %v2378, 0
      %2461 = vmatpush.bf16.msra.mxu0 0
      %2462 = vmatpush.bf16.msra.mxu0 0
      %2463 = vmatpush.bf16.msra.mxu0 0
      %2464 = vmatpush.bf16.msra.mxu0 0
      %2465 = vmatpush.bf16.msra.mxu0 0
      %2466 = vmatpush.bf16.msra.mxu0 0
      %2467 = vmatpush.bf16.msra.mxu0 0
      %2468 = vmatpush.bf16.msra.mxu0 %v2459
      %2469 = vmatmul.bf16.gmra.mxu0 %v2411
      %v2470 = vpop.f32.mrf.mxu0
      %v2471 = vadd.f32 0.0, %v2470
      %v2472 = vpop.f32.mrf.mxu0
      %v2473 = vadd.f32 0.0, %v2472
      %2474 = vmatmul.bf16.gmra.mxu0 %v2414
      %v2475 = vpop.f32.mrf.mxu0
      %v2476 = vadd.f32 0.0, %v2475
      %v2477 = vpop.f32.mrf.mxu0
      %v2478 = vadd.f32 0.0, %v2477
      %2479 = vmatmul.bf16.gmra.mxu0 %v2417
      %v2480 = vpop.f32.mrf.mxu0
      %v2481 = vadd.f32 0.0, %v2480
      %v2482 = vpop.f32.mrf.mxu0
      %v2483 = vadd.f32 0.0, %v2482
      %2484 = vmatmul.bf16.gmra.mxu0 %v2420
      %v2485 = vpop.f32.mrf.mxu0
      %v2486 = vadd.f32 0.0, %v2485
      %v2487 = vpop.f32.mrf.mxu0
      %v2488 = vadd.f32 0.0, %v2487
      %2489 = vmatmul.bf16.gmra.mxu0 %v2423
      %v2490 = vpop.f32.mrf.mxu0
      %v2491 = vadd.f32 0.0, %v2490
      %v2492 = vpop.f32.mrf.mxu0
      %v2493 = vadd.f32 0.0, %v2492
      %2494 = vmatmul.bf16.gmra.mxu0 %v2426
      %v2495 = vpop.f32.mrf.mxu0
      %v2496 = vadd.f32 0.0, %v2495
      %v2497 = vpop.f32.mrf.mxu0
      %v2498 = vadd.f32 0.0, %v2497
      %2499 = vmatmul.bf16.gmra.mxu0 %v2429
      %v2500 = vpop.f32.mrf.mxu0
      %v2501 = vadd.f32 0.0, %v2500
      %v2502 = vpop.f32.mrf.mxu0
      %v2503 = vadd.f32 0.0, %v2502
      %2504 = vmatmul.bf16.gmra.mxu0 %v2432
      %v2505 = vpop.f32.mrf.mxu0
      %v2506 = vadd.f32 0.0, %v2505
      %v2507 = vpop.f32.mrf.mxu0
      %v2508 = vadd.f32 0.0, %v2507
      %2509 = vmatmul.bf16.gmra.mxu0 %v2435
      %v2510 = vpop.f32.mrf.mxu0
      %v2511 = vadd.f32 0.0, %v2510
      %v2512 = vpop.f32.mrf.mxu0
      %v2513 = vadd.f32 0.0, %v2512
      %2514 = vmatmul.bf16.gmra.mxu0 %v2438
      %v2515 = vpop.f32.mrf.mxu0
      %v2516 = vadd.f32 0.0, %v2515
      %v2517 = vpop.f32.mrf.mxu0
      %v2518 = vadd.f32 0.0, %v2517
      %2519 = vmatmul.bf16.gmra.mxu0 %v2441
      %v2520 = vpop.f32.mrf.mxu0
      %v2521 = vadd.f32 0.0, %v2520
      %v2522 = vpop.f32.mrf.mxu0
      %v2523 = vadd.f32 0.0, %v2522
      %2524 = vmatmul.bf16.gmra.mxu0 %v2444
      %v2525 = vpop.f32.mrf.mxu0
      %v2526 = vadd.f32 0.0, %v2525
      %v2527 = vpop.f32.mrf.mxu0
      %v2528 = vadd.f32 0.0, %v2527
      %2529 = vmatmul.bf16.gmra.mxu0 %v2447
      %v2530 = vpop.f32.mrf.mxu0
      %v2531 = vadd.f32 0.0, %v2530
      %v2532 = vpop.f32.mrf.mxu0
      %v2533 = vadd.f32 0.0, %v2532
      %2534 = vmatmul.bf16.gmra.mxu0 %v2450
      %v2535 = vpop.f32.mrf.mxu0
      %v2536 = vadd.f32 0.0, %v2535
      %v2537 = vpop.f32.mrf.mxu0
      %v2538 = vadd.f32 0.0, %v2537
      %2539 = vmatmul.bf16.gmra.mxu0 %v2453
      %v2540 = vpop.f32.mrf.mxu0
      %v2541 = vadd.f32 0.0, %v2540
      %v2542 = vpop.f32.mrf.mxu0
      %v2543 = vadd.f32 0.0, %v2542
      %2544 = vmatmul.bf16.gmra.mxu0 %v2456
      %v2545 = vpop.f32.mrf.mxu0
      %v2546 = vadd.f32 0.0, %v2545
      %v2547 = vpop.f32.mrf.mxu0
      %2548 = vdwg.mxu0
      %v2549 = vadd.f32 %v2346, %v2471
      %v2550 = vadd.f32 %v2347, %v2473
      %v2551 = vadd.f32 %v2348, %v2476
      %v2552 = vadd.f32 %v2349, %v2478
      %v2553 = vadd.f32 %v2350, %v2481
      %v2554 = vadd.f32 %v2351, %v2483
      %v2555 = vadd.f32 %v2352, %v2486
      %v2556 = vadd.f32 %v2353, %v2488
      %v2557 = vadd.f32 %v2354, %v2491
      %v2558 = vadd.f32 %v2355, %v2493
      %v2559 = vadd.f32 %v2356, %v2496
      %v2560 = vadd.f32 %v2357, %v2498
      %v2561 = vadd.f32 %v2358, %v2501
      %v2562 = vadd.f32 %v2359, %v2503
      %v2563 = vadd.f32 %v2360, %v2506
      %v2564 = vadd.f32 %v2361, %v2508
      %v2565 = vadd.f32 %v2362, %v2511
      %v2566 = vadd.f32 %v2363, %v2513
      %v2567 = vadd.f32 %v2364, %v2516
      %v2568 = vadd.f32 %v2365, %v2518
      %v2569 = vadd.f32 %v2366, %v2521
      %v2570 = vadd.f32 %v2367, %v2523
      %v2571 = vadd.f32 %v2368, %v2526
      %v2572 = vadd.f32 %v2369, %v2528
      %v2573 = vadd.f32 %v2370, %v2531
      %v2574 = vadd.f32 %v2371, %v2533
      %v2575 = vadd.f32 %v2372, %v2536
      %v2576 = vadd.f32 %v2373, %v2538
      %v2577 = vadd.f32 %v2374, %v2541
      %v2578 = vadd.f32 %v2375, %v2543
      %v2579 = vadd.f32 %v2376, %v2546
      %v2581 = vperm.slane %v335, 0
      %v2583 = vadd.f32 %v2549, %v2581
      %v2584 = vadd.f32 %v2550, %v2581
      %v2585 = vadd.f32 %v2551, %v2581
      %v2586 = vadd.f32 %v2552, %v2581
      %v2587 = vadd.f32 %v2553, %v2581
      %v2588 = vadd.f32 %v2554, %v2581
      %v2589 = vadd.f32 %v2555, %v2581
      %v2590 = vadd.f32 %v2556, %v2581
      %v2591 = vadd.f32 %v2557, %v2581
      %v2592 = vadd.f32 %v2558, %v2581
      %v2593 = vadd.f32 %v2559, %v2581
      %v2594 = vadd.f32 %v2560, %v2581
      %v2595 = vadd.f32 %v2561, %v2581
      %v2596 = vadd.f32 %v2562, %v2581
      %v2597 = vadd.f32 %v2563, %v2581
      %v2598 = vadd.f32 %v2564, %v2581
      %v2599 = vadd.f32 %v2565, %v2581
      %v2600 = vadd.f32 %v2566, %v2581
      %v2601 = vadd.f32 %v2567, %v2581
      %v2602 = vadd.f32 %v2568, %v2581
      %v2603 = vadd.f32 %v2569, %v2581
      %v2604 = vadd.f32 %v2570, %v2581
      %v2605 = vadd.f32 %v2571, %v2581
      %v2606 = vadd.f32 %v2572, %v2581
      %v2607 = vadd.f32 %v2573, %v2581
      %v2608 = vadd.f32 %v2574, %v2581
      %v2609 = vadd.f32 %v2575, %v2581
      %v2610 = vadd.f32 %v2576, %v2581
      %v2611 = vadd.f32 %v2577, %v2581
      %v2612 = vadd.f32 %v2578, %v2581
      %v2613 = vadd.f32 %v2579, %v2581
      %v2614 = vmax.f32 %v2583, 0.0
      %v2615 = vmax.f32 %v2584, 0.0
      %v2616 = vmax.f32 %v2585, 0.0
      %v2617 = vmax.f32 %v2586, 0.0
      %v2618 = vmax.f32 %v2587, 0.0
      %v2619 = vmax.f32 %v2588, 0.0
      %v2620 = vmax.f32 %v2589, 0.0
      %v2621 = vmax.f32 %v2590, 0.0
      %v2622 = vmax.f32 %v2591, 0.0
      %v2623 = vmax.f32 %v2592, 0.0
      %v2624 = vmax.f32 %v2593, 0.0
      %v2625 = vmax.f32 %v2594, 0.0
      %v2626 = vmax.f32 %v2595, 0.0
      %v2627 = vmax.f32 %v2596, 0.0
      %v2628 = vmax.f32 %v2597, 0.0
      %v2629 = vmax.f32 %v2598, 0.0
      %v2630 = vmax.f32 %v2599, 0.0
      %v2631 = vmax.f32 %v2600, 0.0
      %v2632 = vmax.f32 %v2601, 0.0
      %v2633 = vmax.f32 %v2602, 0.0
      %v2634 = vmax.f32 %v2603, 0.0
      %v2635 = vmax.f32 %v2604, 0.0
      %v2636 = vmax.f32 %v2605, 0.0
      %v2637 = vmax.f32 %v2606, 0.0
      %v2638 = vmax.f32 %v2607, 0.0
      %v2639 = vmax.f32 %v2608, 0.0
      %v2640 = vmax.f32 %v2609, 0.0
      %v2641 = vmax.f32 %v2610, 0.0
      %v2642 = vmax.f32 %v2611, 0.0
      %v2643 = vmax.f32 %v2612, 0.0
      %v2644 = vmax.f32 %v2613, 0.0
      %v2645 = vpack.c.bf16 %v2614, %v2614
      %v2646 = vpack.c.bf16 %v2615, %v2615
      %v2647 = vpack.c.bf16 %v2616, %v2616
      %v2648 = vpack.c.bf16 %v2617, %v2617
      %v2649 = vpack.c.bf16 %v2618, %v2618
      %v2650 = vpack.c.bf16 %v2619, %v2619
      %v2651 = vpack.c.bf16 %v2620, %v2620
      %v2652 = vpack.c.bf16 %v2621, %v2621
      %v2653 = vpack.c.bf16 %v2622, %v2622
      %v2654 = vpack.c.bf16 %v2623, %v2623
      %v2655 = vpack.c.bf16 %v2624, %v2624
      %v2656 = vpack.c.bf16 %v2625, %v2625
      %v2657 = vpack.c.bf16 %v2626, %v2626
      %v2658 = vpack.c.bf16 %v2627, %v2627
      %v2659 = vpack.c.bf16 %v2628, %v2628
      %v2660 = vpack.c.bf16 %v2629, %v2629
      %v2661 = vpack.c.bf16 %v2630, %v2630
      %v2662 = vpack.c.bf16 %v2631, %v2631
      %v2663 = vpack.c.bf16 %v2632, %v2632
      %v2664 = vpack.c.bf16 %v2633, %v2633
      %v2665 = vpack.c.bf16 %v2634, %v2634
      %v2666 = vpack.c.bf16 %v2635, %v2635
      %v2667 = vpack.c.bf16 %v2636, %v2636
      %v2668 = vpack.c.bf16 %v2637, %v2637
      %v2669 = vpack.c.bf16 %v2638, %v2638
      %v2670 = vpack.c.bf16 %v2639, %v2639
      %v2671 = vpack.c.bf16 %v2640, %v2640
      %v2672 = vpack.c.bf16 %v2641, %v2641
      %v2673 = vpack.c.bf16 %v2642, %v2642
      %v2674 = vpack.c.bf16 %v2643, %v2643
      %v2675 = vpack.c.bf16 %v2644, %v2644
      %vm2676 = vcmask 519168
      %2677 = vst.msk [vmem:[%s332] sm:$0xf] %vm2676, %v2645
      %2678 = vst.msk [vmem:[%s332 + $0x4] sm:$0xf] %vm2676, %v2646
      %2679 = vst.msk [vmem:[%s332 + $0x8] sm:$0xf] %vm2676, %v2647
      %2680 = vst.msk [vmem:[%s332 + $0xc] sm:$0xf] %vm2676, %v2648
      %2681 = vst.msk [vmem:[%s332 + $0x10] sm:$0xf] %vm2676, %v2649
      %2682 = vst.msk [vmem:[%s332 + $0x14] sm:$0xf] %vm2676, %v2650
      %2683 = vst.msk [vmem:[%s332 + $0x18] sm:$0xf] %vm2676, %v2651
      %2684 = vst.msk [vmem:[%s332 + $0x1c] sm:$0xf] %vm2676, %v2652
      %2685 = vst.msk [vmem:[%s332 + $0x20] sm:$0xf] %vm2676, %v2653
      %2686 = vst.msk [vmem:[%s332 + $0x24] sm:$0xf] %vm2676, %v2654
      %2687 = vst.msk [vmem:[%s332 + $0x28] sm:$0xf] %vm2676, %v2655
      %2688 = vst.msk [vmem:[%s332 + $0x2c] sm:$0xf] %vm2676, %v2656
      %2689 = vst.msk [vmem:[%s332 + $0x30] sm:$0xf] %vm2676, %v2657
      %2690 = vst.msk [vmem:[%s332 + $0x34] sm:$0xf] %vm2676, %v2658
      %2691 = vst.msk [vmem:[%s332 + $0x38] sm:$0xf] %vm2676, %v2659
      %2692 = vst.msk [vmem:[%s332 + $0x3c] sm:$0xf] %vm2676, %v2660
      %2693 = vst.msk [vmem:[%s332 + $0x40] sm:$0xf] %vm2676, %v2661
      %2694 = vst.msk [vmem:[%s332 + $0x44] sm:$0xf] %vm2676, %v2662
      %2695 = vst.msk [vmem:[%s332 + $0x48] sm:$0xf] %vm2676, %v2663
      %2696 = vst.msk [vmem:[%s332 + $0x4c] sm:$0xf] %vm2676, %v2664
      %2697 = vst.msk [vmem:[%s332 + $0x50] sm:$0xf] %vm2676, %v2665
      %2698 = vst.msk [vmem:[%s332 + $0x54] sm:$0xf] %vm2676, %v2666
      %2699 = vst.msk [vmem:[%s332 + $0x58] sm:$0xf] %vm2676, %v2667
      %2700 = vst.msk [vmem:[%s332 + $0x5c] sm:$0xf] %vm2676, %v2668
      %2701 = vst.msk [vmem:[%s332 + $0x60] sm:$0xf] %vm2676, %v2669
      %2702 = vst.msk [vmem:[%s332 + $0x64] sm:$0xf] %vm2676, %v2670
      %2703 = vst.msk [vmem:[%s332 + $0x68] sm:$0xf] %vm2676, %v2671
      %2704 = vst.msk [vmem:[%s332 + $0x6c] sm:$0xf] %vm2676, %v2672
      %2705 = vst.msk [vmem:[%s332 + $0x70] sm:$0xf] %vm2676, %v2673
      %2706 = vst.msk [vmem:[%s332 + $0x74] sm:$0xf] %vm2676, %v2674
      %vm2707 = vcmask 517120
      %2708 = vst.msk [vmem:[%s332 + $0x78] sm:$0x3] %vm2707, %v2675
      %v2709 = vld [vmem:[%s1044] sm:$0xf]
      %v2710 = vld [vmem:[%s1044 + $0x4] sm:$0xf]
      %v2711 = vld [vmem:[%s1044 + $0x8] sm:$0xf]
      %v2712 = vld [vmem:[%s1044 + $0xc] sm:$0xf]
      %v2713 = vld [vmem:[%s1044 + $0x10] sm:$0xf]
      %v2714 = vld [vmem:[%s1044 + $0x14] sm:$0xf]
      %v2715 = vld [vmem:[%s1044 + $0x18] sm:$0xf]
      %v2716 = vld [vmem:[%s1044 + $0x1c] sm:$0xf]
      %v2717 = vld [vmem:[%s1044 + $0x20] sm:$0xf]
      %v2718 = vld [vmem:[%s1044 + $0x24] sm:$0xf]
      %v2719 = vld [vmem:[%s1044 + $0x28] sm:$0xf]
      %v2720 = vld [vmem:[%s1044 + $0x2c] sm:$0xf]
      %v2721 = vld [vmem:[%s1044 + $0x30] sm:$0xf]
      %v2722 = vld [vmem:[%s1044 + $0x34] sm:$0xf]
      %v2723 = vld [vmem:[%s1044 + $0x38] sm:$0xf]
      %v2724 = vld [vmem:[%s1044 + $0x3c] sm:$0xf]
      %v2725 = vld [vmem:[%s1044 + $0x40] sm:$0xf]
      %v2726 = vld [vmem:[%s1044 + $0x44] sm:$0xf]
      %v2727 = vld [vmem:[%s1044 + $0x48] sm:$0xf]
      %v2728 = vld [vmem:[%s1044 + $0x4c] sm:$0xf]
      %v2729 = vld [vmem:[%s1044 + $0x50] sm:$0xf]
      %v2730 = vld [vmem:[%s1044 + $0x54] sm:$0xf]
      %v2731 = vld [vmem:[%s1044 + $0x58] sm:$0xf]
      %v2732 = vld [vmem:[%s1044 + $0x5c] sm:$0xf]
      %v2733 = vld [vmem:[%s1044 + $0x60] sm:$0xf]
      %v2734 = vld [vmem:[%s1044 + $0x64] sm:$0xf]
      %v2735 = vld [vmem:[%s1044 + $0x68] sm:$0xf]
      %v2736 = vld [vmem:[%s1044 + $0x6c] sm:$0xf]
      %v2737 = vld [vmem:[%s1044 + $0x70] sm:$0xf]
      %v2738 = vld [vmem:[%s1044 + $0x74] sm:$0xf]
      %v2739 = vld [vmem:[%s1044 + $0x78] sm:$0x7]
      %v2740 = vld [vmem:[%s316] sm:$0xf]
      %v2741 = vld [vmem:[%s368] sm:$0xf]
      %v2773 = vunpack.c.l.b16 %v2709
      %v2774 = vunpack.c.l.b16 %v2710
      %v2775 = vunpack.c.l.b16 %v2711
      %v2776 = vunpack.c.l.b16 %v2712
      %v2777 = vunpack.c.l.b16 %v2713
      %v2778 = vunpack.c.l.b16 %v2714
      %v2779 = vunpack.c.l.b16 %v2715
      %v2780 = vunpack.c.l.b16 %v2716
      %v2781 = vunpack.c.l.b16 %v2717
      %v2782 = vunpack.c.l.b16 %v2718
      %v2783 = vunpack.c.l.b16 %v2719
      %v2784 = vunpack.c.l.b16 %v2720
      %v2785 = vunpack.c.l.b16 %v2721
      %v2786 = vunpack.c.l.b16 %v2722
      %v2787 = vunpack.c.l.b16 %v2723
      %v2788 = vunpack.c.l.b16 %v2724
      %v2789 = vunpack.c.l.b16 %v2725
      %v2790 = vunpack.c.l.b16 %v2726
      %v2791 = vunpack.c.l.b16 %v2727
      %v2792 = vunpack.c.l.b16 %v2728
      %v2793 = vunpack.c.l.b16 %v2729
      %v2794 = vunpack.c.l.b16 %v2730
      %v2795 = vunpack.c.l.b16 %v2731
      %v2796 = vunpack.c.l.b16 %v2732
      %v2797 = vunpack.c.l.b16 %v2733
      %v2798 = vunpack.c.l.b16 %v2734
      %v2799 = vunpack.c.l.b16 %v2735
      %v2800 = vunpack.c.l.b16 %v2736
      %v2801 = vunpack.c.l.b16 %v2737
      %v2802 = vunpack.c.l.b16 %v2738
      %v2803 = vunpack.c.l.b16 %v2739
      %v2804 = vpack.c.b16 %v2774, %v2773
      %v2805 = vpack.c.b16 %v2776, %v2775
      %v2806 = vpack.c.b16 %v2778, %v2777
      %v2807 = vpack.c.b16 %v2780, %v2779
      %v2808 = vpack.c.b16 %v2782, %v2781
      %v2809 = vpack.c.b16 %v2784, %v2783
      %v2810 = vpack.c.b16 %v2786, %v2785
      %v2811 = vpack.c.b16 %v2788, %v2787
      %v2812 = vpack.c.b16 %v2790, %v2789
      %v2813 = vpack.c.b16 %v2792, %v2791
      %v2814 = vpack.c.b16 %v2794, %v2793
      %v2815 = vpack.c.b16 %v2796, %v2795
      %v2816 = vpack.c.b16 %v2798, %v2797
      %v2817 = vpack.c.b16 %v2800, %v2799
      %v2818 = vpack.c.b16 %v2802, %v2801
      %v2819 = vpack.c.b16 %v2803, %v2803
      %v2821 = vshrl.u32 %v2804, 16
      %v2823 = vshll.u32 %v2804, 16
      %v2825 = vrot.slane %v2823, 1
      %v2826 = vor.u32 %v2821, %v2825
      %v2828 = vshll.u32 %v2805, 16
      %v2830 = vrot.slane %v2828, 1
      %v2831 = vsel %vm448, %v2826, %v2830
      %v2832 = vshrl.u32 %v2805, 16
      %v2834 = vor.u32 %v2832, %v2830
      %v2836 = vshll.u32 %v2806, 16
      %v2838 = vrot.slane %v2836, 1
      %v2839 = vsel %vm448, %v2834, %v2838
      %v2840 = vshrl.u32 %v2806, 16
      %v2842 = vor.u32 %v2840, %v2838
      %v2844 = vshll.u32 %v2807, 16
      %v2846 = vrot.slane %v2844, 1
      %v2847 = vsel %vm448, %v2842, %v2846
      %v2848 = vshrl.u32 %v2807, 16
      %v2850 = vor.u32 %v2848, %v2846
      %v2852 = vshll.u32 %v2808, 16
      %v2854 = vrot.slane %v2852, 1
      %v2855 = vsel %vm448, %v2850, %v2854
      %v2856 = vshrl.u32 %v2808, 16
      %v2858 = vor.u32 %v2856, %v2854
      %v2860 = vshll.u32 %v2809, 16
      %v2862 = vrot.slane %v2860, 1
      %v2863 = vsel %vm448, %v2858, %v2862
      %v2864 = vshrl.u32 %v2809, 16
      %v2866 = vor.u32 %v2864, %v2862
      %v2868 = vshll.u32 %v2810, 16
      %v2870 = vrot.slane %v2868, 1
      %v2871 = vsel %vm448, %v2866, %v2870
      %v2872 = vshrl.u32 %v2810, 16
      %v2874 = vor.u32 %v2872, %v2870
      %v2876 = vshll.u32 %v2811, 16
      %v2878 = vrot.slane %v2876, 1
      %v2879 = vsel %vm448, %v2874, %v2878
      %v2880 = vshrl.u32 %v2811, 16
      %v2882 = vor.u32 %v2880, %v2878
      %v2884 = vshll.u32 %v2812, 16
      %v2886 = vrot.slane %v2884, 1
      %v2887 = vsel %vm448, %v2882, %v2886
      %v2888 = vshrl.u32 %v2812, 16
      %v2890 = vor.u32 %v2888, %v2886
      %v2892 = vshll.u32 %v2813, 16
      %v2894 = vrot.slane %v2892, 1
      %v2895 = vsel %vm448, %v2890, %v2894
      %v2896 = vshrl.u32 %v2813, 16
      %v2898 = vor.u32 %v2896, %v2894
      %v2900 = vshll.u32 %v2814, 16
      %v2902 = vrot.slane %v2900, 1
      %v2903 = vsel %vm448, %v2898, %v2902
      %v2904 = vshrl.u32 %v2814, 16
      %v2906 = vor.u32 %v2904, %v2902
      %v2908 = vshll.u32 %v2815, 16
      %v2910 = vrot.slane %v2908, 1
      %v2911 = vsel %vm448, %v2906, %v2910
      %v2912 = vshrl.u32 %v2815, 16
      %v2914 = vor.u32 %v2912, %v2910
      %v2916 = vshll.u32 %v2816, 16
      %v2918 = vrot.slane %v2916, 1
      %v2919 = vsel %vm448, %v2914, %v2918
      %v2920 = vshrl.u32 %v2816, 16
      %v2922 = vor.u32 %v2920, %v2918
      %v2924 = vshll.u32 %v2817, 16
      %v2926 = vrot.slane %v2924, 1
      %v2927 = vsel %vm448, %v2922, %v2926
      %v2928 = vshrl.u32 %v2817, 16
      %v2930 = vor.u32 %v2928, %v2926
      %v2932 = vshll.u32 %v2818, 16
      %v2934 = vrot.slane %v2932, 1
      %v2935 = vsel %vm448, %v2930, %v2934
      %v2936 = vshrl.u32 %v2818, 16
      %v2938 = vor.u32 %v2936, %v2934
      %v2940 = vshll.u32 %v2819, 16
      %v2942 = vrot.slane %v2940, 1
      %v2943 = vsel %vm448, %v2938, %v2942
      %v2944 = vshrl.u32 %v2819, 16
      %v2946 = vor.u32 %v2944, %v2942
      %v2948 = vsel %vm576, %v2831, 0
      %v2951 = vsel %vm576, %v2839, 0
      %v2954 = vsel %vm576, %v2847, 0
      %v2957 = vsel %vm576, %v2855, 0
      %v2960 = vsel %vm576, %v2863, 0
      %v2963 = vsel %vm576, %v2871, 0
      %v2966 = vsel %vm576, %v2879, 0
      %v2969 = vsel %vm576, %v2887, 0
      %v2972 = vsel %vm576, %v2895, 0
      %v2975 = vsel %vm576, %v2903, 0
      %v2978 = vsel %vm576, %v2911, 0
      %v2981 = vsel %vm576, %v2919, 0
      %v2984 = vsel %vm576, %v2927, 0
      %v2987 = vsel %vm576, %v2935, 0
      %v2990 = vsel %vm576, %v2943, 0
      %v2993 = vsel %vm576, %v2946, 0
      %v2996 = vsel %vm625, %v2741, 0
      %2998 = vmatpush.bf16.msra.mxu0 0
      %2999 = vmatpush.bf16.msra.mxu0 0
      %3000 = vmatpush.bf16.msra.mxu0 0
      %3001 = vmatpush.bf16.msra.mxu0 0
      %3002 = vmatpush.bf16.msra.mxu0 0
      %3003 = vmatpush.bf16.msra.mxu0 0
      %3004 = vmatpush.bf16.msra.mxu0 0
      %3005 = vmatpush.bf16.msra.mxu0 %v2996
      %3006 = vmatmul.bf16.gmra.mxu0 %v2948
      %v3007 = vpop.f32.mrf.mxu0
      %v3008 = vadd.f32 0.0, %v3007
      %v3009 = vpop.f32.mrf.mxu0
      %v3010 = vadd.f32 0.0, %v3009
      %3011 = vmatmul.bf16.gmra.mxu0 %v2951
      %v3012 = vpop.f32.mrf.mxu0
      %v3013 = vadd.f32 0.0, %v3012
      %v3014 = vpop.f32.mrf.mxu0
      %v3015 = vadd.f32 0.0, %v3014
      %3016 = vmatmul.bf16.gmra.mxu0 %v2954
      %v3017 = vpop.f32.mrf.mxu0
      %v3018 = vadd.f32 0.0, %v3017
      %v3019 = vpop.f32.mrf.mxu0
      %v3020 = vadd.f32 0.0, %v3019
      %3021 = vmatmul.bf16.gmra.mxu0 %v2957
      %v3022 = vpop.f32.mrf.mxu0
      %v3023 = vadd.f32 0.0, %v3022
      %v3024 = vpop.f32.mrf.mxu0
      %v3025 = vadd.f32 0.0, %v3024
      %3026 = vmatmul.bf16.gmra.mxu0 %v2960
      %v3027 = vpop.f32.mrf.mxu0
      %v3028 = vadd.f32 0.0, %v3027
      %v3029 = vpop.f32.mrf.mxu0
      %v3030 = vadd.f32 0.0, %v3029
      %3031 = vmatmul.bf16.gmra.mxu0 %v2963
      %v3032 = vpop.f32.mrf.mxu0
      %v3033 = vadd.f32 0.0, %v3032
      %v3034 = vpop.f32.mrf.mxu0
      %v3035 = vadd.f32 0.0, %v3034
      %3036 = vmatmul.bf16.gmra.mxu0 %v2966
      %v3037 = vpop.f32.mrf.mxu0
      %v3038 = vadd.f32 0.0, %v3037
      %v3039 = vpop.f32.mrf.mxu0
      %v3040 = vadd.f32 0.0, %v3039
      %3041 = vmatmul.bf16.gmra.mxu0 %v2969
      %v3042 = vpop.f32.mrf.mxu0
      %v3043 = vadd.f32 0.0, %v3042
      %v3044 = vpop.f32.mrf.mxu0
      %v3045 = vadd.f32 0.0, %v3044
      %3046 = vmatmul.bf16.gmra.mxu0 %v2972
      %v3047 = vpop.f32.mrf.mxu0
      %v3048 = vadd.f32 0.0, %v3047
      %v3049 = vpop.f32.mrf.mxu0
      %v3050 = vadd.f32 0.0, %v3049
      %3051 = vmatmul.bf16.gmra.mxu0 %v2975
      %v3052 = vpop.f32.mrf.mxu0
      %v3053 = vadd.f32 0.0, %v3052
      %v3054 = vpop.f32.mrf.mxu0
      %v3055 = vadd.f32 0.0, %v3054
      %3056 = vmatmul.bf16.gmra.mxu0 %v2978
      %v3057 = vpop.f32.mrf.mxu0
      %v3058 = vadd.f32 0.0, %v3057
      %v3059 = vpop.f32.mrf.mxu0
      %v3060 = vadd.f32 0.0, %v3059
      %3061 = vmatmul.bf16.gmra.mxu0 %v2981
      %v3062 = vpop.f32.mrf.mxu0
      %v3063 = vadd.f32 0.0, %v3062
      %v3064 = vpop.f32.mrf.mxu0
      %v3065 = vadd.f32 0.0, %v3064
      %3066 = vmatmul.bf16.gmra.mxu0 %v2984
      %v3067 = vpop.f32.mrf.mxu0
      %v3068 = vadd.f32 0.0, %v3067
      %v3069 = vpop.f32.mrf.mxu0
      %v3070 = vadd.f32 0.0, %v3069
      %3071 = vmatmul.bf16.gmra.mxu0 %v2987
      %v3072 = vpop.f32.mrf.mxu0
      %v3073 = vadd.f32 0.0, %v3072
      %v3074 = vpop.f32.mrf.mxu0
      %v3075 = vadd.f32 0.0, %v3074
      %3076 = vmatmul.bf16.gmra.mxu0 %v2990
      %v3077 = vpop.f32.mrf.mxu0
      %v3078 = vadd.f32 0.0, %v3077
      %v3079 = vpop.f32.mrf.mxu0
      %v3080 = vadd.f32 0.0, %v3079
      %3081 = vmatmul.bf16.gmra.mxu0 %v2993
      %v3082 = vpop.f32.mrf.mxu0
      %v3083 = vadd.f32 0.0, %v3082
      %v3084 = vpop.f32.mrf.mxu0
      %3085 = vdwg.mxu0
      %v3086 = vsel %vm576, %v2804, 0
      %v3088 = vsel %vm576, %v2805, 0
      %v3090 = vsel %vm576, %v2806, 0
      %v3092 = vsel %vm576, %v2807, 0
      %v3094 = vsel %vm576, %v2808, 0
      %v3096 = vsel %vm576, %v2809, 0
      %v3098 = vsel %vm576, %v2810, 0
      %v3100 = vsel %vm576, %v2811, 0
      %v3102 = vsel %vm576, %v2812, 0
      %v3104 = vsel %vm576, %v2813, 0
      %v3106 = vsel %vm576, %v2814, 0
      %v3108 = vsel %vm576, %v2815, 0
      %v3110 = vsel %vm576, %v2816, 0
      %v3112 = vsel %vm576, %v2817, 0
      %v3114 = vsel %vm576, %v2818, 0
      %v3116 = vsel %vm576, %v2819, 0
      %v3119 = vsel %vm625, %v2740, 0
      %3121 = vmatpush.bf16.msra.mxu0 0
      %3122 = vmatpush.bf16.msra.mxu0 0
      %3123 = vmatpush.bf16.msra.mxu0 0
      %3124 = vmatpush.bf16.msra.mxu0 0
      %3125 = vmatpush.bf16.msra.mxu0 0
      %3126 = vmatpush.bf16.msra.mxu0 0
      %3127 = vmatpush.bf16.msra.mxu0 0
      %3128 = vmatpush.bf16.msra.mxu0 %v3119
      %3129 = vmatmul.bf16.gmra.mxu0 %v3086
      %v3130 = vpop.f32.mrf.mxu0
      %v3131 = vadd.f32 %v3008, %v3130
      %v3132 = vpop.f32.mrf.mxu0
      %v3133 = vadd.f32 %v3010, %v3132
      %3134 = vmatmul.bf16.gmra.mxu0 %v3088
      %v3135 = vpop.f32.mrf.mxu0
      %v3136 = vadd.f32 %v3013, %v3135
      %v3137 = vpop.f32.mrf.mxu0
      %v3138 = vadd.f32 %v3015, %v3137
      %3139 = vmatmul.bf16.gmra.mxu0 %v3090
      %v3140 = vpop.f32.mrf.mxu0
      %v3141 = vadd.f32 %v3018, %v3140
      %v3142 = vpop.f32.mrf.mxu0
      %v3143 = vadd.f32 %v3020, %v3142
      %3144 = vmatmul.bf16.gmra.mxu0 %v3092
      %v3145 = vpop.f32.mrf.mxu0
      %v3146 = vadd.f32 %v3023, %v3145
      %v3147 = vpop.f32.mrf.mxu0
      %v3148 = vadd.f32 %v3025, %v3147
      %3149 = vmatmul.bf16.gmra.mxu0 %v3094
      %v3150 = vpop.f32.mrf.mxu0
      %v3151 = vadd.f32 %v3028, %v3150
      %v3152 = vpop.f32.mrf.mxu0
      %v3153 = vadd.f32 %v3030, %v3152
      %3154 = vmatmul.bf16.gmra.mxu0 %v3096
      %v3155 = vpop.f32.mrf.mxu0
      %v3156 = vadd.f32 %v3033, %v3155
      %v3157 = vpop.f32.mrf.mxu0
      %v3158 = vadd.f32 %v3035, %v3157
      %3159 = vmatmul.bf16.gmra.mxu0 %v3098
      %v3160 = vpop.f32.mrf.mxu0
      %v3161 = vadd.f32 %v3038, %v3160
      %v3162 = vpop.f32.mrf.mxu0
      %v3163 = vadd.f32 %v3040, %v3162
      %3164 = vmatmul.bf16.gmra.mxu0 %v3100
      %v3165 = vpop.f32.mrf.mxu0
      %v3166 = vadd.f32 %v3043, %v3165
      %v3167 = vpop.f32.mrf.mxu0
      %v3168 = vadd.f32 %v3045, %v3167
      %3169 = vmatmul.bf16.gmra.mxu0 %v3102
      %v3170 = vpop.f32.mrf.mxu0
      %v3171 = vadd.f32 %v3048, %v3170
      %v3172 = vpop.f32.mrf.mxu0
      %v3173 = vadd.f32 %v3050, %v3172
      %3174 = vmatmul.bf16.gmra.mxu0 %v3104
      %v3175 = vpop.f32.mrf.mxu0
      %v3176 = vadd.f32 %v3053, %v3175
      %v3177 = vpop.f32.mrf.mxu0
      %v3178 = vadd.f32 %v3055, %v3177
      %3179 = vmatmul.bf16.gmra.mxu0 %v3106
      %v3180 = vpop.f32.mrf.mxu0
      %v3181 = vadd.f32 %v3058, %v3180
      %v3182 = vpop.f32.mrf.mxu0
      %v3183 = vadd.f32 %v3060, %v3182
      %3184 = vmatmul.bf16.gmra.mxu0 %v3108
      %v3185 = vpop.f32.mrf.mxu0
      %v3186 = vadd.f32 %v3063, %v3185
      %v3187 = vpop.f32.mrf.mxu0
      %v3188 = vadd.f32 %v3065, %v3187
      %3189 = vmatmul.bf16.gmra.mxu0 %v3110
      %v3190 = vpop.f32.mrf.mxu0
      %v3191 = vadd.f32 %v3068, %v3190
      %v3192 = vpop.f32.mrf.mxu0
      %v3193 = vadd.f32 %v3070, %v3192
      %3194 = vmatmul.bf16.gmra.mxu0 %v3112
      %v3195 = vpop.f32.mrf.mxu0
      %v3196 = vadd.f32 %v3073, %v3195
      %v3197 = vpop.f32.mrf.mxu0
      %v3198 = vadd.f32 %v3075, %v3197
      %3199 = vmatmul.bf16.gmra.mxu0 %v3114
      %v3200 = vpop.f32.mrf.mxu0
      %v3201 = vadd.f32 %v3078, %v3200
      %v3202 = vpop.f32.mrf.mxu0
      %v3203 = vadd.f32 %v3080, %v3202
      %3204 = vmatmul.bf16.gmra.mxu0 %v3116
      %v3205 = vpop.f32.mrf.mxu0
      %v3206 = vadd.f32 %v3083, %v3205
      %v3207 = vpop.f32.mrf.mxu0
      %3208 = vdwg.mxu0
      %v3209 = vld [vmem:[%s840] sm:$0xf]
      %v3210 = vrot.slane %v2804, 1
      %v3211 = vrot.slane %v2805, 1
      %v3212 = vsel %vm842, %v3210, %v3211
      %v3213 = vrot.slane %v2806, 1
      %v3214 = vsel %vm842, %v3211, %v3213
      %v3215 = vrot.slane %v2807, 1
      %v3216 = vsel %vm842, %v3213, %v3215
      %v3217 = vrot.slane %v2808, 1
      %v3218 = vsel %vm842, %v3215, %v3217
      %v3219 = vrot.slane %v2809, 1
      %v3220 = vsel %vm842, %v3217, %v3219
      %v3221 = vrot.slane %v2810, 1
      %v3222 = vsel %vm842, %v3219, %v3221
      %v3223 = vrot.slane %v2811, 1
      %v3224 = vsel %vm842, %v3221, %v3223
      %v3225 = vrot.slane %v2812, 1
      %v3226 = vsel %vm842, %v3223, %v3225
      %v3227 = vrot.slane %v2813, 1
      %v3228 = vsel %vm842, %v3225, %v3227
      %v3229 = vrot.slane %v2814, 1
      %v3230 = vsel %vm842, %v3227, %v3229
      %v3231 = vrot.slane %v2815, 1
      %v3232 = vsel %vm842, %v3229, %v3231
      %v3233 = vrot.slane %v2816, 1
      %v3234 = vsel %vm842, %v3231, %v3233
      %v3235 = vrot.slane %v2817, 1
      %v3236 = vsel %vm842, %v3233, %v3235
      %v3237 = vrot.slane %v2818, 1
      %v3238 = vsel %vm842, %v3235, %v3237
      %v3239 = vrot.slane %v2819, 1
      %v3240 = vsel %vm842, %v3237, %v3239
      %v3242 = vsel %vm576, %v3212, 0
      %v3245 = vsel %vm576, %v3214, 0
      %v3248 = vsel %vm576, %v3216, 0
      %v3251 = vsel %vm576, %v3218, 0
      %v3254 = vsel %vm576, %v3220, 0
      %v3257 = vsel %vm576, %v3222, 0
      %v3260 = vsel %vm576, %v3224, 0
      %v3263 = vsel %vm576, %v3226, 0
      %v3266 = vsel %vm576, %v3228, 0
      %v3269 = vsel %vm576, %v3230, 0
      %v3272 = vsel %vm576, %v3232, 0
      %v3275 = vsel %vm576, %v3234, 0
      %v3278 = vsel %vm576, %v3236, 0
      %v3281 = vsel %vm576, %v3238, 0
      %v3284 = vsel %vm576, %v3240, 0
      %v3287 = vsel %vm576, %v3239, 0
      %v3290 = vsel %vm625, %v3209, 0
      %3292 = vmatpush.bf16.msra.mxu0 0
      %3293 = vmatpush.bf16.msra.mxu0 0
      %3294 = vmatpush.bf16.msra.mxu0 0
      %3295 = vmatpush.bf16.msra.mxu0 0
      %3296 = vmatpush.bf16.msra.mxu0 0
      %3297 = vmatpush.bf16.msra.mxu0 0
      %3298 = vmatpush.bf16.msra.mxu0 0
      %3299 = vmatpush.bf16.msra.mxu0 %v3290
      %3300 = vmatmul.bf16.gmra.mxu0 %v3242
      %v3301 = vpop.f32.mrf.mxu0
      %v3302 = vadd.f32 0.0, %v3301
      %v3303 = vpop.f32.mrf.mxu0
      %v3304 = vadd.f32 0.0, %v3303
      %3305 = vmatmul.bf16.gmra.mxu0 %v3245
      %v3306 = vpop.f32.mrf.mxu0
      %v3307 = vadd.f32 0.0, %v3306
      %v3308 = vpop.f32.mrf.mxu0
      %v3309 = vadd.f32 0.0, %v3308
      %3310 = vmatmul.bf16.gmra.mxu0 %v3248
      %v3311 = vpop.f32.mrf.mxu0
      %v3312 = vadd.f32 0.0, %v3311
      %v3313 = vpop.f32.mrf.mxu0
      %v3314 = vadd.f32 0.0, %v3313
      %3315 = vmatmul.bf16.gmra.mxu0 %v3251
      %v3316 = vpop.f32.mrf.mxu0
      %v3317 = vadd.f32 0.0, %v3316
      %v3318 = vpop.f32.mrf.mxu0
      %v3319 = vadd.f32 0.0, %v3318
      %3320 = vmatmul.bf16.gmra.mxu0 %v3254
      %v3321 = vpop.f32.mrf.mxu0
      %v3322 = vadd.f32 0.0, %v3321
      %v3323 = vpop.f32.mrf.mxu0
      %v3324 = vadd.f32 0.0, %v3323
      %3325 = vmatmul.bf16.gmra.mxu0 %v3257
      %v3326 = vpop.f32.mrf.mxu0
      %v3327 = vadd.f32 0.0, %v3326
      %v3328 = vpop.f32.mrf.mxu0
      %v3329 = vadd.f32 0.0, %v3328
      %3330 = vmatmul.bf16.gmra.mxu0 %v3260
      %v3331 = vpop.f32.mrf.mxu0
      %v3332 = vadd.f32 0.0, %v3331
      %v3333 = vpop.f32.mrf.mxu0
      %v3334 = vadd.f32 0.0, %v3333
      %3335 = vmatmul.bf16.gmra.mxu0 %v3263
      %v3336 = vpop.f32.mrf.mxu0
      %v3337 = vadd.f32 0.0, %v3336
      %v3338 = vpop.f32.mrf.mxu0
      %v3339 = vadd.f32 0.0, %v3338
      %3340 = vmatmul.bf16.gmra.mxu0 %v3266
      %v3341 = vpop.f32.mrf.mxu0
      %v3342 = vadd.f32 0.0, %v3341
      %v3343 = vpop.f32.mrf.mxu0
      %v3344 = vadd.f32 0.0, %v3343
      %3345 = vmatmul.bf16.gmra.mxu0 %v3269
      %v3346 = vpop.f32.mrf.mxu0
      %v3347 = vadd.f32 0.0, %v3346
      %v3348 = vpop.f32.mrf.mxu0
      %v3349 = vadd.f32 0.0, %v3348
      %3350 = vmatmul.bf16.gmra.mxu0 %v3272
      %v3351 = vpop.f32.mrf.mxu0
      %v3352 = vadd.f32 0.0, %v3351
      %v3353 = vpop.f32.mrf.mxu0
      %v3354 = vadd.f32 0.0, %v3353
      %3355 = vmatmul.bf16.gmra.mxu0 %v3275
      %v3356 = vpop.f32.mrf.mxu0
      %v3357 = vadd.f32 0.0, %v3356
      %v3358 = vpop.f32.mrf.mxu0
      %v3359 = vadd.f32 0.0, %v3358
      %3360 = vmatmul.bf16.gmra.mxu0 %v3278
      %v3361 = vpop.f32.mrf.mxu0
      %v3362 = vadd.f32 0.0, %v3361
      %v3363 = vpop.f32.mrf.mxu0
      %v3364 = vadd.f32 0.0, %v3363
      %3365 = vmatmul.bf16.gmra.mxu0 %v3281
      %v3366 = vpop.f32.mrf.mxu0
      %v3367 = vadd.f32 0.0, %v3366
      %v3368 = vpop.f32.mrf.mxu0
      %v3369 = vadd.f32 0.0, %v3368
      %3370 = vmatmul.bf16.gmra.mxu0 %v3284
      %v3371 = vpop.f32.mrf.mxu0
      %v3372 = vadd.f32 0.0, %v3371
      %v3373 = vpop.f32.mrf.mxu0
      %v3374 = vadd.f32 0.0, %v3373
      %3375 = vmatmul.bf16.gmra.mxu0 %v3287
      %v3376 = vpop.f32.mrf.mxu0
      %v3377 = vadd.f32 0.0, %v3376
      %v3378 = vpop.f32.mrf.mxu0
      %3379 = vdwg.mxu0
      %v3380 = vadd.f32 %v3131, %v3302
      %v3381 = vadd.f32 %v3133, %v3304
      %v3382 = vadd.f32 %v3136, %v3307
      %v3383 = vadd.f32 %v3138, %v3309
      %v3384 = vadd.f32 %v3141, %v3312
      %v3385 = vadd.f32 %v3143, %v3314
      %v3386 = vadd.f32 %v3146, %v3317
      %v3387 = vadd.f32 %v3148, %v3319
      %v3388 = vadd.f32 %v3151, %v3322
      %v3389 = vadd.f32 %v3153, %v3324
      %v3390 = vadd.f32 %v3156, %v3327
      %v3391 = vadd.f32 %v3158, %v3329
      %v3392 = vadd.f32 %v3161, %v3332
      %v3393 = vadd.f32 %v3163, %v3334
      %v3394 = vadd.f32 %v3166, %v3337
      %v3395 = vadd.f32 %v3168, %v3339
      %v3396 = vadd.f32 %v3171, %v3342
      %v3397 = vadd.f32 %v3173, %v3344
      %v3398 = vadd.f32 %v3176, %v3347
      %v3399 = vadd.f32 %v3178, %v3349
      %v3400 = vadd.f32 %v3181, %v3352
      %v3401 = vadd.f32 %v3183, %v3354
      %v3402 = vadd.f32 %v3186, %v3357
      %v3403 = vadd.f32 %v3188, %v3359
      %v3404 = vadd.f32 %v3191, %v3362
      %v3405 = vadd.f32 %v3193, %v3364
      %v3406 = vadd.f32 %v3196, %v3367
      %v3407 = vadd.f32 %v3198, %v3369
      %v3408 = vadd.f32 %v3201, %v3372
      %v3409 = vadd.f32 %v3203, %v3374
      %v3410 = vadd.f32 %v3206, %v3377
      %v3411 = vld [vmem:[%s1812] sm:$0xf]
      %v3412 = vld [vmem:[%s1812 + $0x4] sm:$0xf]
      %v3413 = vld [vmem:[%s1812 + $0x8] sm:$0xf]
      %v3414 = vld [vmem:[%s1812 + $0xc] sm:$0xf]
      %v3415 = vld [vmem:[%s1812 + $0x10] sm:$0xf]
      %v3416 = vld [vmem:[%s1812 + $0x14] sm:$0xf]
      %v3417 = vld [vmem:[%s1812 + $0x18] sm:$0xf]
      %v3418 = vld [vmem:[%s1812 + $0x1c] sm:$0xf]
      %v3419 = vld [vmem:[%s1812 + $0x20] sm:$0xf]
      %v3420 = vld [vmem:[%s1812 + $0x24] sm:$0xf]
      %v3421 = vld [vmem:[%s1812 + $0x28] sm:$0xf]
      %v3422 = vld [vmem:[%s1812 + $0x2c] sm:$0xf]
      %v3423 = vld [vmem:[%s1812 + $0x30] sm:$0xf]
      %v3424 = vld [vmem:[%s1812 + $0x34] sm:$0xf]
      %v3425 = vld [vmem:[%s1812 + $0x38] sm:$0xf]
      %v3426 = vld [vmem:[%s1812 + $0x3c] sm:$0xf]
      %v3427 = vld [vmem:[%s1812 + $0x40] sm:$0xf]
      %v3428 = vld [vmem:[%s1812 + $0x44] sm:$0xf]
      %v3429 = vld [vmem:[%s1812 + $0x48] sm:$0xf]
      %v3430 = vld [vmem:[%s1812 + $0x4c] sm:$0xf]
      %v3431 = vld [vmem:[%s1812 + $0x50] sm:$0xf]
      %v3432 = vld [vmem:[%s1812 + $0x54] sm:$0xf]
      %v3433 = vld [vmem:[%s1812 + $0x58] sm:$0xf]
      %v3434 = vld [vmem:[%s1812 + $0x5c] sm:$0xf]
      %v3435 = vld [vmem:[%s1812 + $0x60] sm:$0xf]
      %v3436 = vld [vmem:[%s1812 + $0x64] sm:$0xf]
      %v3437 = vld [vmem:[%s1812 + $0x68] sm:$0xf]
      %v3438 = vld [vmem:[%s1812 + $0x6c] sm:$0xf]
      %v3439 = vld [vmem:[%s1812 + $0x70] sm:$0xf]
      %v3440 = vld [vmem:[%s1812 + $0x74] sm:$0xf]
      %v3441 = vld [vmem:[%s1812 + $0x78] sm:$0x7]
      %v3442 = vld [vmem:[%s1076] sm:$0xf]
      %v3474 = vunpack.c.l.b16 %v3411
      %v3475 = vunpack.c.l.b16 %v3412
      %v3476 = vunpack.c.l.b16 %v3413
      %v3477 = vunpack.c.l.b16 %v3414
      %v3478 = vunpack.c.l.b16 %v3415
      %v3479 = vunpack.c.l.b16 %v3416
      %v3480 = vunpack.c.l.b16 %v3417
      %v3481 = vunpack.c.l.b16 %v3418
      %v3482 = vunpack.c.l.b16 %v3419
      %v3483 = vunpack.c.l.b16 %v3420
      %v3484 = vunpack.c.l.b16 %v3421
      %v3485 = vunpack.c.l.b16 %v3422
      %v3486 = vunpack.c.l.b16 %v3423
      %v3487 = vunpack.c.l.b16 %v3424
      %v3488 = vunpack.c.l.b16 %v3425
      %v3489 = vunpack.c.l.b16 %v3426
      %v3490 = vunpack.c.l.b16 %v3427
      %v3491 = vunpack.c.l.b16 %v3428
      %v3492 = vunpack.c.l.b16 %v3429
      %v3493 = vunpack.c.l.b16 %v3430
      %v3494 = vunpack.c.l.b16 %v3431
      %v3495 = vunpack.c.l.b16 %v3432
      %v3496 = vunpack.c.l.b16 %v3433
      %v3497 = vunpack.c.l.b16 %v3434
      %v3498 = vunpack.c.l.b16 %v3435
      %v3499 = vunpack.c.l.b16 %v3436
      %v3500 = vunpack.c.l.b16 %v3437
      %v3501 = vunpack.c.l.b16 %v3438
      %v3502 = vunpack.c.l.b16 %v3439
      %v3503 = vunpack.c.l.b16 %v3440
      %v3504 = vunpack.c.l.b16 %v3441
      %v3505 = vpack.c.b16 %v3475, %v3474
      %v3506 = vpack.c.b16 %v3477, %v3476
      %v3507 = vpack.c.b16 %v3479, %v3478
      %v3508 = vpack.c.b16 %v3481, %v3480
      %v3509 = vpack.c.b16 %v3483, %v3482
      %v3510 = vpack.c.b16 %v3485, %v3484
      %v3511 = vpack.c.b16 %v3487, %v3486
      %v3512 = vpack.c.b16 %v3489, %v3488
      %v3513 = vpack.c.b16 %v3491, %v3490
      %v3514 = vpack.c.b16 %v3493, %v3492
      %v3515 = vpack.c.b16 %v3495, %v3494
      %v3516 = vpack.c.b16 %v3497, %v3496
      %v3517 = vpack.c.b16 %v3499, %v3498
      %v3518 = vpack.c.b16 %v3501, %v3500
      %v3519 = vpack.c.b16 %v3503, %v3502
      %v3520 = vpack.c.b16 %v3504, %v3504
      %v3522 = vsel %vm576, %v3505, 0
      %v3525 = vsel %vm576, %v3506, 0
      %v3528 = vsel %vm576, %v3507, 0
      %v3531 = vsel %vm576, %v3508, 0
      %v3534 = vsel %vm576, %v3509, 0
      %v3537 = vsel %vm576, %v3510, 0
      %v3540 = vsel %vm576, %v3511, 0
      %v3543 = vsel %vm576, %v3512, 0
      %v3546 = vsel %vm576, %v3513, 0
      %v3549 = vsel %vm576, %v3514, 0
      %v3552 = vsel %vm576, %v3515, 0
      %v3555 = vsel %vm576, %v3516, 0
      %v3558 = vsel %vm576, %v3517, 0
      %v3561 = vsel %vm576, %v3518, 0
      %v3564 = vsel %vm576, %v3519, 0
      %v3567 = vsel %vm576, %v3520, 0
      %v3570 = vsel %vm625, %v3442, 0
      %3572 = vmatpush.bf16.msra.mxu0 0
      %3573 = vmatpush.bf16.msra.mxu0 0
      %3574 = vmatpush.bf16.msra.mxu0 0
      %3575 = vmatpush.bf16.msra.mxu0 0
      %3576 = vmatpush.bf16.msra.mxu0 0
      %3577 = vmatpush.bf16.msra.mxu0 0
      %3578 = vmatpush.bf16.msra.mxu0 0
      %3579 = vmatpush.bf16.msra.mxu0 %v3570
      %3580 = vmatmul.bf16.gmra.mxu0 %v3522
      %v3581 = vpop.f32.mrf.mxu0
      %v3582 = vadd.f32 0.0, %v3581
      %v3583 = vpop.f32.mrf.mxu0
      %v3584 = vadd.f32 0.0, %v3583
      %3585 = vmatmul.bf16.gmra.mxu0 %v3525
      %v3586 = vpop.f32.mrf.mxu0
      %v3587 = vadd.f32 0.0, %v3586
      %v3588 = vpop.f32.mrf.mxu0
      %v3589 = vadd.f32 0.0, %v3588
      %3590 = vmatmul.bf16.gmra.mxu0 %v3528
      %v3591 = vpop.f32.mrf.mxu0
      %v3592 = vadd.f32 0.0, %v3591
      %v3593 = vpop.f32.mrf.mxu0
      %v3594 = vadd.f32 0.0, %v3593
      %3595 = vmatmul.bf16.gmra.mxu0 %v3531
      %v3596 = vpop.f32.mrf.mxu0
      %v3597 = vadd.f32 0.0, %v3596
      %v3598 = vpop.f32.mrf.mxu0
      %v3599 = vadd.f32 0.0, %v3598
      %3600 = vmatmul.bf16.gmra.mxu0 %v3534
      %v3601 = vpop.f32.mrf.mxu0
      %v3602 = vadd.f32 0.0, %v3601
      %v3603 = vpop.f32.mrf.mxu0
      %v3604 = vadd.f32 0.0, %v3603
      %3605 = vmatmul.bf16.gmra.mxu0 %v3537
      %v3606 = vpop.f32.mrf.mxu0
      %v3607 = vadd.f32 0.0, %v3606
      %v3608 = vpop.f32.mrf.mxu0
      %v3609 = vadd.f32 0.0, %v3608
      %3610 = vmatmul.bf16.gmra.mxu0 %v3540
      %v3611 = vpop.f32.mrf.mxu0
      %v3612 = vadd.f32 0.0, %v3611
      %v3613 = vpop.f32.mrf.mxu0
      %v3614 = vadd.f32 0.0, %v3613
      %3615 = vmatmul.bf16.gmra.mxu0 %v3543
      %v3616 = vpop.f32.mrf.mxu0
      %v3617 = vadd.f32 0.0, %v3616
      %v3618 = vpop.f32.mrf.mxu0
      %v3619 = vadd.f32 0.0, %v3618
      %3620 = vmatmul.bf16.gmra.mxu0 %v3546
      %v3621 = vpop.f32.mrf.mxu0
      %v3622 = vadd.f32 0.0, %v3621
      %v3623 = vpop.f32.mrf.mxu0
      %v3624 = vadd.f32 0.0, %v3623
      %3625 = vmatmul.bf16.gmra.mxu0 %v3549
      %v3626 = vpop.f32.mrf.mxu0
      %v3627 = vadd.f32 0.0, %v3626
      %v3628 = vpop.f32.mrf.mxu0
      %v3629 = vadd.f32 0.0, %v3628
      %3630 = vmatmul.bf16.gmra.mxu0 %v3552
      %v3631 = vpop.f32.mrf.mxu0
      %v3632 = vadd.f32 0.0, %v3631
      %v3633 = vpop.f32.mrf.mxu0
      %v3634 = vadd.f32 0.0, %v3633
      %3635 = vmatmul.bf16.gmra.mxu0 %v3555
      %v3636 = vpop.f32.mrf.mxu0
      %v3637 = vadd.f32 0.0, %v3636
      %v3638 = vpop.f32.mrf.mxu0
      %v3639 = vadd.f32 0.0, %v3638
      %3640 = vmatmul.bf16.gmra.mxu0 %v3558
      %v3641 = vpop.f32.mrf.mxu0
      %v3642 = vadd.f32 0.0, %v3641
      %v3643 = vpop.f32.mrf.mxu0
      %v3644 = vadd.f32 0.0, %v3643
      %3645 = vmatmul.bf16.gmra.mxu0 %v3561
      %v3646 = vpop.f32.mrf.mxu0
      %v3647 = vadd.f32 0.0, %v3646
      %v3648 = vpop.f32.mrf.mxu0
      %v3649 = vadd.f32 0.0, %v3648
      %3650 = vmatmul.bf16.gmra.mxu0 %v3564
      %v3651 = vpop.f32.mrf.mxu0
      %v3652 = vadd.f32 0.0, %v3651
      %v3653 = vpop.f32.mrf.mxu0
      %v3654 = vadd.f32 0.0, %v3653
      %3655 = vmatmul.bf16.gmra.mxu0 %v3567
      %v3656 = vpop.f32.mrf.mxu0
      %v3657 = vadd.f32 0.0, %v3656
      %v3658 = vpop.f32.mrf.mxu0
      %3659 = vdwg.mxu0
      %v3660 = vadd.f32 %v3380, %v3582
      %v3661 = vadd.f32 %v3381, %v3584
      %v3662 = vadd.f32 %v3382, %v3587
      %v3663 = vadd.f32 %v3383, %v3589
      %v3664 = vadd.f32 %v3384, %v3592
      %v3665 = vadd.f32 %v3385, %v3594
      %v3666 = vadd.f32 %v3386, %v3597
      %v3667 = vadd.f32 %v3387, %v3599
      %v3668 = vadd.f32 %v3388, %v3602
      %v3669 = vadd.f32 %v3389, %v3604
      %v3670 = vadd.f32 %v3390, %v3607
      %v3671 = vadd.f32 %v3391, %v3609
      %v3672 = vadd.f32 %v3392, %v3612
      %v3673 = vadd.f32 %v3393, %v3614
      %v3674 = vadd.f32 %v3394, %v3617
      %v3675 = vadd.f32 %v3395, %v3619
      %v3676 = vadd.f32 %v3396, %v3622
      %v3677 = vadd.f32 %v3397, %v3624
      %v3678 = vadd.f32 %v3398, %v3627
      %v3679 = vadd.f32 %v3399, %v3629
      %v3680 = vadd.f32 %v3400, %v3632
      %v3681 = vadd.f32 %v3401, %v3634
      %v3682 = vadd.f32 %v3402, %v3637
      %v3683 = vadd.f32 %v3403, %v3639
      %v3684 = vadd.f32 %v3404, %v3642
      %v3685 = vadd.f32 %v3405, %v3644
      %v3686 = vadd.f32 %v3406, %v3647
      %v3687 = vadd.f32 %v3407, %v3649
      %v3688 = vadd.f32 %v3408, %v3652
      %v3689 = vadd.f32 %v3409, %v3654
      %v3690 = vadd.f32 %v3410, %v3657
      %v3691 = vld [vmem:[%s1326] sm:$0xf]
      %v3692 = vshrl.u32 %v3505, 16
      %v3694 = vshll.u32 %v3505, 16
      %v3696 = vrot.slane %v3694, 1
      %v3697 = vor.u32 %v3692, %v3696
      %v3698 = vshll.u32 %v3506, 16
      %v3700 = vrot.slane %v3698, 1
      %v3701 = vsel %vm448, %v3697, %v3700
      %v3702 = vshrl.u32 %v3506, 16
      %v3704 = vor.u32 %v3702, %v3700
      %v3705 = vshll.u32 %v3507, 16
      %v3707 = vrot.slane %v3705, 1
      %v3708 = vsel %vm448, %v3704, %v3707
      %v3709 = vshrl.u32 %v3507, 16
      %v3711 = vor.u32 %v3709, %v3707
      %v3712 = vshll.u32 %v3508, 16
      %v3714 = vrot.slane %v3712, 1
      %v3715 = vsel %vm448, %v3711, %v3714
      %v3716 = vshrl.u32 %v3508, 16
      %v3718 = vor.u32 %v3716, %v3714
      %v3719 = vshll.u32 %v3509, 16
      %v3721 = vrot.slane %v3719, 1
      %v3722 = vsel %vm448, %v3718, %v3721
      %v3723 = vshrl.u32 %v3509, 16
      %v3725 = vor.u32 %v3723, %v3721
      %v3726 = vshll.u32 %v3510, 16
      %v3728 = vrot.slane %v3726, 1
      %v3729 = vsel %vm448, %v3725, %v3728
      %v3730 = vshrl.u32 %v3510, 16
      %v3732 = vor.u32 %v3730, %v3728
      %v3733 = vshll.u32 %v3511, 16
      %v3735 = vrot.slane %v3733, 1
      %v3736 = vsel %vm448, %v3732, %v3735
      %v3737 = vshrl.u32 %v3511, 16
      %v3739 = vor.u32 %v3737, %v3735
      %v3740 = vshll.u32 %v3512, 16
      %v3742 = vrot.slane %v3740, 1
      %v3743 = vsel %vm448, %v3739, %v3742
      %v3744 = vshrl.u32 %v3512, 16
      %v3746 = vor.u32 %v3744, %v3742
      %v3747 = vshll.u32 %v3513, 16
      %v3749 = vrot.slane %v3747, 1
      %v3750 = vsel %vm448, %v3746, %v3749
      %v3751 = vshrl.u32 %v3513, 16
      %v3753 = vor.u32 %v3751, %v3749
      %v3754 = vshll.u32 %v3514, 16
      %v3756 = vrot.slane %v3754, 1
      %v3757 = vsel %vm448, %v3753, %v3756
      %v3758 = vshrl.u32 %v3514, 16
      %v3760 = vor.u32 %v3758, %v3756
      %v3761 = vshll.u32 %v3515, 16
      %v3763 = vrot.slane %v3761, 1
      %v3764 = vsel %vm448, %v3760, %v3763
      %v3765 = vshrl.u32 %v3515, 16
      %v3767 = vor.u32 %v3765, %v3763
      %v3768 = vshll.u32 %v3516, 16
      %v3770 = vrot.slane %v3768, 1
      %v3771 = vsel %vm448, %v3767, %v3770
      %v3772 = vshrl.u32 %v3516, 16
      %v3774 = vor.u32 %v3772, %v3770
      %v3775 = vshll.u32 %v3517, 16
      %v3777 = vrot.slane %v3775, 1
      %v3778 = vsel %vm448, %v3774, %v3777
      %v3779 = vshrl.u32 %v3517, 16
      %v3781 = vor.u32 %v3779, %v3777
      %v3782 = vshll.u32 %v3518, 16
      %v3784 = vrot.slane %v3782, 1
      %v3785 = vsel %vm448, %v3781, %v3784
      %v3786 = vshrl.u32 %v3518, 16
      %v3788 = vor.u32 %v3786, %v3784
      %v3789 = vshll.u32 %v3519, 16
      %v3791 = vrot.slane %v3789, 1
      %v3792 = vsel %vm448, %v3788, %v3791
      %v3793 = vshrl.u32 %v3519, 16
      %v3795 = vor.u32 %v3793, %v3791
      %v3796 = vshll.u32 %v3520, 16
      %v3798 = vrot.slane %v3796, 1
      %v3799 = vsel %vm448, %v3795, %v3798
      %v3800 = vshrl.u32 %v3520, 16
      %v3802 = vor.u32 %v3800, %v3798
      %v3804 = vsel %vm576, %v3701, 0
      %v3807 = vsel %vm576, %v3708, 0
      %v3810 = vsel %vm576, %v3715, 0
      %v3813 = vsel %vm576, %v3722, 0
      %v3816 = vsel %vm576, %v3729, 0
      %v3819 = vsel %vm576, %v3736, 0
      %v3822 = vsel %vm576, %v3743, 0
      %v3825 = vsel %vm576, %v3750, 0
      %v3828 = vsel %vm576, %v3757, 0
      %v3831 = vsel %vm576, %v3764, 0
      %v3834 = vsel %vm576, %v3771, 0
      %v3837 = vsel %vm576, %v3778, 0
      %v3840 = vsel %vm576, %v3785, 0
      %v3843 = vsel %vm576, %v3792, 0
      %v3846 = vsel %vm576, %v3799, 0
      %v3849 = vsel %vm576, %v3802, 0
      %v3852 = vsel %vm625, %v3691, 0
      %3854 = vmatpush.bf16.msra.mxu0 0
      %3855 = vmatpush.bf16.msra.mxu0 0
      %3856 = vmatpush.bf16.msra.mxu0 0
      %3857 = vmatpush.bf16.msra.mxu0 0
      %3858 = vmatpush.bf16.msra.mxu0 0
      %3859 = vmatpush.bf16.msra.mxu0 0
      %3860 = vmatpush.bf16.msra.mxu0 0
      %3861 = vmatpush.bf16.msra.mxu0 %v3852
      %3862 = vmatmul.bf16.gmra.mxu0 %v3804
      %v3863 = vpop.f32.mrf.mxu0
      %v3864 = vadd.f32 0.0, %v3863
      %v3865 = vpop.f32.mrf.mxu0
      %v3866 = vadd.f32 0.0, %v3865
      %3867 = vmatmul.bf16.gmra.mxu0 %v3807
      %v3868 = vpop.f32.mrf.mxu0
      %v3869 = vadd.f32 0.0, %v3868
      %v3870 = vpop.f32.mrf.mxu0
      %v3871 = vadd.f32 0.0, %v3870
      %3872 = vmatmul.bf16.gmra.mxu0 %v3810
      %v3873 = vpop.f32.mrf.mxu0
      %v3874 = vadd.f32 0.0, %v3873
      %v3875 = vpop.f32.mrf.mxu0
      %v3876 = vadd.f32 0.0, %v3875
      %3877 = vmatmul.bf16.gmra.mxu0 %v3813
      %v3878 = vpop.f32.mrf.mxu0
      %v3879 = vadd.f32 0.0, %v3878
      %v3880 = vpop.f32.mrf.mxu0
      %v3881 = vadd.f32 0.0, %v3880
      %3882 = vmatmul.bf16.gmra.mxu0 %v3816
      %v3883 = vpop.f32.mrf.mxu0
      %v3884 = vadd.f32 0.0, %v3883
      %v3885 = vpop.f32.mrf.mxu0
      %v3886 = vadd.f32 0.0, %v3885
      %3887 = vmatmul.bf16.gmra.mxu0 %v3819
      %v3888 = vpop.f32.mrf.mxu0
      %v3889 = vadd.f32 0.0, %v3888
      %v3890 = vpop.f32.mrf.mxu0
      %v3891 = vadd.f32 0.0, %v3890
      %3892 = vmatmul.bf16.gmra.mxu0 %v3822
      %v3893 = vpop.f32.mrf.mxu0
      %v3894 = vadd.f32 0.0, %v3893
      %v3895 = vpop.f32.mrf.mxu0
      %v3896 = vadd.f32 0.0, %v3895
      %3897 = vmatmul.bf16.gmra.mxu0 %v3825
      %v3898 = vpop.f32.mrf.mxu0
      %v3899 = vadd.f32 0.0, %v3898
      %v3900 = vpop.f32.mrf.mxu0
      %v3901 = vadd.f32 0.0, %v3900
      %3902 = vmatmul.bf16.gmra.mxu0 %v3828
      %v3903 = vpop.f32.mrf.mxu0
      %v3904 = vadd.f32 0.0, %v3903
      %v3905 = vpop.f32.mrf.mxu0
      %v3906 = vadd.f32 0.0, %v3905
      %3907 = vmatmul.bf16.gmra.mxu0 %v3831
      %v3908 = vpop.f32.mrf.mxu0
      %v3909 = vadd.f32 0.0, %v3908
      %v3910 = vpop.f32.mrf.mxu0
      %v3911 = vadd.f32 0.0, %v3910
      %3912 = vmatmul.bf16.gmra.mxu0 %v3834
      %v3913 = vpop.f32.mrf.mxu0
      %v3914 = vadd.f32 0.0, %v3913
      %v3915 = vpop.f32.mrf.mxu0
      %v3916 = vadd.f32 0.0, %v3915
      %3917 = vmatmul.bf16.gmra.mxu0 %v3837
      %v3918 = vpop.f32.mrf.mxu0
      %v3919 = vadd.f32 0.0, %v3918
      %v3920 = vpop.f32.mrf.mxu0
      %v3921 = vadd.f32 0.0, %v3920
      %3922 = vmatmul.bf16.gmra.mxu0 %v3840
      %v3923 = vpop.f32.mrf.mxu0
      %v3924 = vadd.f32 0.0, %v3923
      %v3925 = vpop.f32.mrf.mxu0
      %v3926 = vadd.f32 0.0, %v3925
      %3927 = vmatmul.bf16.gmra.mxu0 %v3843
      %v3928 = vpop.f32.mrf.mxu0
      %v3929 = vadd.f32 0.0, %v3928
      %v3930 = vpop.f32.mrf.mxu0
      %v3931 = vadd.f32 0.0, %v3930
      %3932 = vmatmul.bf16.gmra.mxu0 %v3846
      %v3933 = vpop.f32.mrf.mxu0
      %v3934 = vadd.f32 0.0, %v3933
      %v3935 = vpop.f32.mrf.mxu0
      %v3936 = vadd.f32 0.0, %v3935
      %3937 = vmatmul.bf16.gmra.mxu0 %v3849
      %v3938 = vpop.f32.mrf.mxu0
      %v3939 = vadd.f32 0.0, %v3938
      %v3940 = vpop.f32.mrf.mxu0
      %3941 = vdwg.mxu0
      %v3942 = vadd.f32 %v3660, %v3864
      %v3943 = vadd.f32 %v3661, %v3866
      %v3944 = vadd.f32 %v3662, %v3869
      %v3945 = vadd.f32 %v3663, %v3871
      %v3946 = vadd.f32 %v3664, %v3874
      %v3947 = vadd.f32 %v3665, %v3876
      %v3948 = vadd.f32 %v3666, %v3879
      %v3949 = vadd.f32 %v3667, %v3881
      %v3950 = vadd.f32 %v3668, %v3884
      %v3951 = vadd.f32 %v3669, %v3886
      %v3952 = vadd.f32 %v3670, %v3889
      %v3953 = vadd.f32 %v3671, %v3891
      %v3954 = vadd.f32 %v3672, %v3894
      %v3955 = vadd.f32 %v3673, %v3896
      %v3956 = vadd.f32 %v3674, %v3899
      %v3957 = vadd.f32 %v3675, %v3901
      %v3958 = vadd.f32 %v3676, %v3904
      %v3959 = vadd.f32 %v3677, %v3906
      %v3960 = vadd.f32 %v3678, %v3909
      %v3961 = vadd.f32 %v3679, %v3911
      %v3962 = vadd.f32 %v3680, %v3914
      %v3963 = vadd.f32 %v3681, %v3916
      %v3964 = vadd.f32 %v3682, %v3919
      %v3965 = vadd.f32 %v3683, %v3921
      %v3966 = vadd.f32 %v3684, %v3924
      %v3967 = vadd.f32 %v3685, %v3926
      %v3968 = vadd.f32 %v3686, %v3929
      %v3969 = vadd.f32 %v3687, %v3931
      %v3970 = vadd.f32 %v3688, %v3934
      %v3971 = vadd.f32 %v3689, %v3936
      %v3972 = vadd.f32 %v3690, %v3939
      %v3973 = vld [vmem:[%s1609] sm:$0xf]
      %v3974 = vrot.slane %v3505, 1
      %v3975 = vrot.slane %v3506, 1
      %v3976 = vsel %vm842, %v3974, %v3975
      %v3977 = vrot.slane %v3507, 1
      %v3978 = vsel %vm842, %v3975, %v3977
      %v3979 = vrot.slane %v3508, 1
      %v3980 = vsel %vm842, %v3977, %v3979
      %v3981 = vrot.slane %v3509, 1
      %v3982 = vsel %vm842, %v3979, %v3981
      %v3983 = vrot.slane %v3510, 1
      %v3984 = vsel %vm842, %v3981, %v3983
      %v3985 = vrot.slane %v3511, 1
      %v3986 = vsel %vm842, %v3983, %v3985
      %v3987 = vrot.slane %v3512, 1
      %v3988 = vsel %vm842, %v3985, %v3987
      %v3989 = vrot.slane %v3513, 1
      %v3990 = vsel %vm842, %v3987, %v3989
      %v3991 = vrot.slane %v3514, 1
      %v3992 = vsel %vm842, %v3989, %v3991
      %v3993 = vrot.slane %v3515, 1
      %v3994 = vsel %vm842, %v3991, %v3993
      %v3995 = vrot.slane %v3516, 1
      %v3996 = vsel %vm842, %v3993, %v3995
      %v3997 = vrot.slane %v3517, 1
      %v3998 = vsel %vm842, %v3995, %v3997
      %v3999 = vrot.slane %v3518, 1
      %v4000 = vsel %vm842, %v3997, %v3999
      %v4001 = vrot.slane %v3519, 1
      %v4002 = vsel %vm842, %v3999, %v4001
      %v4003 = vrot.slane %v3520, 1
      %v4004 = vsel %vm842, %v4001, %v4003
      %v4006 = vsel %vm576, %v3976, 0
      %v4009 = vsel %vm576, %v3978, 0
      %v4012 = vsel %vm576, %v3980, 0
      %v4015 = vsel %vm576, %v3982, 0
      %v4018 = vsel %vm576, %v3984, 0
      %v4021 = vsel %vm576, %v3986, 0
      %v4024 = vsel %vm576, %v3988, 0
      %v4027 = vsel %vm576, %v3990, 0
      %v4030 = vsel %vm576, %v3992, 0
      %v4033 = vsel %vm576, %v3994, 0
      %v4036 = vsel %vm576, %v3996, 0
      %v4039 = vsel %vm576, %v3998, 0
      %v4042 = vsel %vm576, %v4000, 0
      %v4045 = vsel %vm576, %v4002, 0
      %v4048 = vsel %vm576, %v4004, 0
      %v4051 = vsel %vm576, %v4003, 0
      %v4054 = vsel %vm625, %v3973, 0
      %4056 = vmatpush.bf16.msra.mxu0 0
      %4057 = vmatpush.bf16.msra.mxu0 0
      %4058 = vmatpush.bf16.msra.mxu0 0
      %4059 = vmatpush.bf16.msra.mxu0 0
      %4060 = vmatpush.bf16.msra.mxu0 0
      %4061 = vmatpush.bf16.msra.mxu0 0
      %4062 = vmatpush.bf16.msra.mxu0 0
      %4063 = vmatpush.bf16.msra.mxu0 %v4054
      %4064 = vmatmul.bf16.gmra.mxu0 %v4006
      %v4065 = vpop.f32.mrf.mxu0
      %v4066 = vadd.f32 0.0, %v4065
      %v4067 = vpop.f32.mrf.mxu0
      %v4068 = vadd.f32 0.0, %v4067
      %4069 = vmatmul.bf16.gmra.mxu0 %v4009
      %v4070 = vpop.f32.mrf.mxu0
      %v4071 = vadd.f32 0.0, %v4070
      %v4072 = vpop.f32.mrf.mxu0
      %v4073 = vadd.f32 0.0, %v4072
      %4074 = vmatmul.bf16.gmra.mxu0 %v4012
      %v4075 = vpop.f32.mrf.mxu0
      %v4076 = vadd.f32 0.0, %v4075
      %v4077 = vpop.f32.mrf.mxu0
      %v4078 = vadd.f32 0.0, %v4077
      %4079 = vmatmul.bf16.gmra.mxu0 %v4015
      %v4080 = vpop.f32.mrf.mxu0
      %v4081 = vadd.f32 0.0, %v4080
      %v4082 = vpop.f32.mrf.mxu0
      %v4083 = vadd.f32 0.0, %v4082
      %4084 = vmatmul.bf16.gmra.mxu0 %v4018
      %v4085 = vpop.f32.mrf.mxu0
      %v4086 = vadd.f32 0.0, %v4085
      %v4087 = vpop.f32.mrf.mxu0
      %v4088 = vadd.f32 0.0, %v4087
      %4089 = vmatmul.bf16.gmra.mxu0 %v4021
      %v4090 = vpop.f32.mrf.mxu0
      %v4091 = vadd.f32 0.0, %v4090
      %v4092 = vpop.f32.mrf.mxu0
      %v4093 = vadd.f32 0.0, %v4092
      %4094 = vmatmul.bf16.gmra.mxu0 %v4024
      %v4095 = vpop.f32.mrf.mxu0
      %v4096 = vadd.f32 0.0, %v4095
      %v4097 = vpop.f32.mrf.mxu0
      %v4098 = vadd.f32 0.0, %v4097
      %4099 = vmatmul.bf16.gmra.mxu0 %v4027
      %v4100 = vpop.f32.mrf.mxu0
      %v4101 = vadd.f32 0.0, %v4100
      %v4102 = vpop.f32.mrf.mxu0
      %v4103 = vadd.f32 0.0, %v4102
      %4104 = vmatmul.bf16.gmra.mxu0 %v4030
      %v4105 = vpop.f32.mrf.mxu0
      %v4106 = vadd.f32 0.0, %v4105
      %v4107 = vpop.f32.mrf.mxu0
      %v4108 = vadd.f32 0.0, %v4107
      %4109 = vmatmul.bf16.gmra.mxu0 %v4033
      %v4110 = vpop.f32.mrf.mxu0
      %v4111 = vadd.f32 0.0, %v4110
      %v4112 = vpop.f32.mrf.mxu0
      %v4113 = vadd.f32 0.0, %v4112
      %4114 = vmatmul.bf16.gmra.mxu0 %v4036
      %v4115 = vpop.f32.mrf.mxu0
      %v4116 = vadd.f32 0.0, %v4115
      %v4117 = vpop.f32.mrf.mxu0
      %v4118 = vadd.f32 0.0, %v4117
      %4119 = vmatmul.bf16.gmra.mxu0 %v4039
      %v4120 = vpop.f32.mrf.mxu0
      %v4121 = vadd.f32 0.0, %v4120
      %v4122 = vpop.f32.mrf.mxu0
      %v4123 = vadd.f32 0.0, %v4122
      %4124 = vmatmul.bf16.gmra.mxu0 %v4042
      %v4125 = vpop.f32.mrf.mxu0
      %v4126 = vadd.f32 0.0, %v4125
      %v4127 = vpop.f32.mrf.mxu0
      %v4128 = vadd.f32 0.0, %v4127
      %4129 = vmatmul.bf16.gmra.mxu0 %v4045
      %v4130 = vpop.f32.mrf.mxu0
      %v4131 = vadd.f32 0.0, %v4130
      %v4132 = vpop.f32.mrf.mxu0
      %v4133 = vadd.f32 0.0, %v4132
      %4134 = vmatmul.bf16.gmra.mxu0 %v4048
      %v4135 = vpop.f32.mrf.mxu0
      %v4136 = vadd.f32 0.0, %v4135
      %v4137 = vpop.f32.mrf.mxu0
      %v4138 = vadd.f32 0.0, %v4137
      %4139 = vmatmul.bf16.gmra.mxu0 %v4051
      %v4140 = vpop.f32.mrf.mxu0
      %v4141 = vadd.f32 0.0, %v4140
      %v4142 = vpop.f32.mrf.mxu0
      %4143 = vdwg.mxu0
      %v4144 = vadd.f32 %v3942, %v4066
      %v4145 = vadd.f32 %v3943, %v4068
      %v4146 = vadd.f32 %v3944, %v4071
      %v4147 = vadd.f32 %v3945, %v4073
      %v4148 = vadd.f32 %v3946, %v4076
      %v4149 = vadd.f32 %v3947, %v4078
      %v4150 = vadd.f32 %v3948, %v4081
      %v4151 = vadd.f32 %v3949, %v4083
      %v4152 = vadd.f32 %v3950, %v4086
      %v4153 = vadd.f32 %v3951, %v4088
      %v4154 = vadd.f32 %v3952, %v4091
      %v4155 = vadd.f32 %v3953, %v4093
      %v4156 = vadd.f32 %v3954, %v4096
      %v4157 = vadd.f32 %v3955, %v4098
      %v4158 = vadd.f32 %v3956, %v4101
      %v4159 = vadd.f32 %v3957, %v4103
      %v4160 = vadd.f32 %v3958, %v4106
      %v4161 = vadd.f32 %v3959, %v4108
      %v4162 = vadd.f32 %v3960, %v4111
      %v4163 = vadd.f32 %v3961, %v4113
      %v4164 = vadd.f32 %v3962, %v4116
      %v4165 = vadd.f32 %v3963, %v4118
      %v4166 = vadd.f32 %v3964, %v4121
      %v4167 = vadd.f32 %v3965, %v4123
      %v4168 = vadd.f32 %v3966, %v4126
      %v4169 = vadd.f32 %v3967, %v4128
      %v4170 = vadd.f32 %v3968, %v4131
      %v4171 = vadd.f32 %v3969, %v4133
      %v4172 = vadd.f32 %v3970, %v4136
      %v4173 = vadd.f32 %v3971, %v4138
      %v4174 = vadd.f32 %v3972, %v4141
      %s4175 = scalar_lea.vmem %s298, 372
      %v4176 = vld [vmem:[%s4175] sm:$0xf]
      %v4177 = vld [vmem:[%s4175 + $0x4] sm:$0xf]
      %v4178 = vld [vmem:[%s4175 + $0x8] sm:$0xf]
      %v4179 = vld [vmem:[%s4175 + $0xc] sm:$0xf]
      %v4180 = vld [vmem:[%s4175 + $0x10] sm:$0xf]
      %v4181 = vld [vmem:[%s4175 + $0x14] sm:$0xf]
      %v4182 = vld [vmem:[%s4175 + $0x18] sm:$0xf]
      %v4183 = vld [vmem:[%s4175 + $0x1c] sm:$0xf]
      %v4184 = vld [vmem:[%s4175 + $0x20] sm:$0xf]
      %v4185 = vld [vmem:[%s4175 + $0x24] sm:$0xf]
      %v4186 = vld [vmem:[%s4175 + $0x28] sm:$0xf]
      %v4187 = vld [vmem:[%s4175 + $0x2c] sm:$0xf]
      %v4188 = vld [vmem:[%s4175 + $0x30] sm:$0xf]
      %v4189 = vld [vmem:[%s4175 + $0x34] sm:$0xf]
      %v4190 = vld [vmem:[%s4175 + $0x38] sm:$0xf]
      %v4191 = vld [vmem:[%s4175 + $0x3c] sm:$0xf]
      %v4192 = vld [vmem:[%s4175 + $0x40] sm:$0xf]
      %v4193 = vld [vmem:[%s4175 + $0x44] sm:$0xf]
      %v4194 = vld [vmem:[%s4175 + $0x48] sm:$0xf]
      %v4195 = vld [vmem:[%s4175 + $0x4c] sm:$0xf]
      %v4196 = vld [vmem:[%s4175 + $0x50] sm:$0xf]
      %v4197 = vld [vmem:[%s4175 + $0x54] sm:$0xf]
      %v4198 = vld [vmem:[%s4175 + $0x58] sm:$0xf]
      %v4199 = vld [vmem:[%s4175 + $0x5c] sm:$0xf]
      %v4200 = vld [vmem:[%s4175 + $0x60] sm:$0xf]
      %v4201 = vld [vmem:[%s4175 + $0x64] sm:$0xf]
      %v4202 = vld [vmem:[%s4175 + $0x68] sm:$0xf]
      %v4203 = vld [vmem:[%s4175 + $0x6c] sm:$0xf]
      %v4204 = vld [vmem:[%s4175 + $0x70] sm:$0xf]
      %v4205 = vld [vmem:[%s4175 + $0x74] sm:$0xf]
      %v4206 = vld [vmem:[%s4175 + $0x78] sm:$0x7]
      %v4207 = vld [vmem:[%s1844] sm:$0xf]
      %v4239 = vunpack.c.l.b16 %v4176
      %v4240 = vunpack.c.l.b16 %v4177
      %v4241 = vunpack.c.l.b16 %v4178
      %v4242 = vunpack.c.l.b16 %v4179
      %v4243 = vunpack.c.l.b16 %v4180
      %v4244 = vunpack.c.l.b16 %v4181
      %v4245 = vunpack.c.l.b16 %v4182
      %v4246 = vunpack.c.l.b16 %v4183
      %v4247 = vunpack.c.l.b16 %v4184
      %v4248 = vunpack.c.l.b16 %v4185
      %v4249 = vunpack.c.l.b16 %v4186
      %v4250 = vunpack.c.l.b16 %v4187
      %v4251 = vunpack.c.l.b16 %v4188
      %v4252 = vunpack.c.l.b16 %v4189
      %v4253 = vunpack.c.l.b16 %v4190
      %v4254 = vunpack.c.l.b16 %v4191
      %v4255 = vunpack.c.l.b16 %v4192
      %v4256 = vunpack.c.l.b16 %v4193
      %v4257 = vunpack.c.l.b16 %v4194
      %v4258 = vunpack.c.l.b16 %v4195
      %v4259 = vunpack.c.l.b16 %v4196
      %v4260 = vunpack.c.l.b16 %v4197
      %v4261 = vunpack.c.l.b16 %v4198
      %v4262 = vunpack.c.l.b16 %v4199
      %v4263 = vunpack.c.l.b16 %v4200
      %v4264 = vunpack.c.l.b16 %v4201
      %v4265 = vunpack.c.l.b16 %v4202
      %v4266 = vunpack.c.l.b16 %v4203
      %v4267 = vunpack.c.l.b16 %v4204
      %v4268 = vunpack.c.l.b16 %v4205
      %v4269 = vunpack.c.l.b16 %v4206
      %v4270 = vpack.c.b16 %v4240, %v4239
      %v4271 = vpack.c.b16 %v4242, %v4241
      %v4272 = vpack.c.b16 %v4244, %v4243
      %v4273 = vpack.c.b16 %v4246, %v4245
      %v4274 = vpack.c.b16 %v4248, %v4247
      %v4275 = vpack.c.b16 %v4250, %v4249
      %v4276 = vpack.c.b16 %v4252, %v4251
      %v4277 = vpack.c.b16 %v4254, %v4253
      %v4278 = vpack.c.b16 %v4256, %v4255
      %v4279 = vpack.c.b16 %v4258, %v4257
      %v4280 = vpack.c.b16 %v4260, %v4259
      %v4281 = vpack.c.b16 %v4262, %v4261
      %v4282 = vpack.c.b16 %v4264, %v4263
      %v4283 = vpack.c.b16 %v4266, %v4265
      %v4284 = vpack.c.b16 %v4268, %v4267
      %v4285 = vpack.c.b16 %v4269, %v4269
      %v4287 = vsel %vm576, %v4270, 0
      %v4290 = vsel %vm576, %v4271, 0
      %v4293 = vsel %vm576, %v4272, 0
      %v4296 = vsel %vm576, %v4273, 0
      %v4299 = vsel %vm576, %v4274, 0
      %v4302 = vsel %vm576, %v4275, 0
      %v4305 = vsel %vm576, %v4276, 0
      %v4308 = vsel %vm576, %v4277, 0
      %v4311 = vsel %vm576, %v4278, 0
      %v4314 = vsel %vm576, %v4279, 0
      %v4317 = vsel %vm576, %v4280, 0
      %v4320 = vsel %vm576, %v4281, 0
      %v4323 = vsel %vm576, %v4282, 0
      %v4326 = vsel %vm576, %v4283, 0
      %v4329 = vsel %vm576, %v4284, 0
      %v4332 = vsel %vm576, %v4285, 0
      %v4335 = vsel %vm625, %v4207, 0
      %4337 = vmatpush.bf16.msra.mxu0 0
      %4338 = vmatpush.bf16.msra.mxu0 0
      %4339 = vmatpush.bf16.msra.mxu0 0
      %4340 = vmatpush.bf16.msra.mxu0 0
      %4341 = vmatpush.bf16.msra.mxu0 0
      %4342 = vmatpush.bf16.msra.mxu0 0
      %4343 = vmatpush.bf16.msra.mxu0 0
      %4344 = vmatpush.bf16.msra.mxu0 %v4335
      %4345 = vmatmul.bf16.gmra.mxu0 %v4287
      %v4346 = vpop.f32.mrf.mxu0
      %v4347 = vadd.f32 0.0, %v4346
      %v4348 = vpop.f32.mrf.mxu0
      %v4349 = vadd.f32 0.0, %v4348
      %4350 = vmatmul.bf16.gmra.mxu0 %v4290
      %v4351 = vpop.f32.mrf.mxu0
      %v4352 = vadd.f32 0.0, %v4351
      %v4353 = vpop.f32.mrf.mxu0
      %v4354 = vadd.f32 0.0, %v4353
      %4355 = vmatmul.bf16.gmra.mxu0 %v4293
      %v4356 = vpop.f32.mrf.mxu0
      %v4357 = vadd.f32 0.0, %v4356
      %v4358 = vpop.f32.mrf.mxu0
      %v4359 = vadd.f32 0.0, %v4358
      %4360 = vmatmul.bf16.gmra.mxu0 %v4296
      %v4361 = vpop.f32.mrf.mxu0
      %v4362 = vadd.f32 0.0, %v4361
      %v4363 = vpop.f32.mrf.mxu0
      %v4364 = vadd.f32 0.0, %v4363
      %4365 = vmatmul.bf16.gmra.mxu0 %v4299
      %v4366 = vpop.f32.mrf.mxu0
      %v4367 = vadd.f32 0.0, %v4366
      %v4368 = vpop.f32.mrf.mxu0
      %v4369 = vadd.f32 0.0, %v4368
      %4370 = vmatmul.bf16.gmra.mxu0 %v4302
      %v4371 = vpop.f32.mrf.mxu0
      %v4372 = vadd.f32 0.0, %v4371
      %v4373 = vpop.f32.mrf.mxu0
      %v4374 = vadd.f32 0.0, %v4373
      %4375 = vmatmul.bf16.gmra.mxu0 %v4305
      %v4376 = vpop.f32.mrf.mxu0
      %v4377 = vadd.f32 0.0, %v4376
      %v4378 = vpop.f32.mrf.mxu0
      %v4379 = vadd.f32 0.0, %v4378
      %4380 = vmatmul.bf16.gmra.mxu0 %v4308
      %v4381 = vpop.f32.mrf.mxu0
      %v4382 = vadd.f32 0.0, %v4381
      %v4383 = vpop.f32.mrf.mxu0
      %v4384 = vadd.f32 0.0, %v4383
      %4385 = vmatmul.bf16.gmra.mxu0 %v4311
      %v4386 = vpop.f32.mrf.mxu0
      %v4387 = vadd.f32 0.0, %v4386
      %v4388 = vpop.f32.mrf.mxu0
      %v4389 = vadd.f32 0.0, %v4388
      %4390 = vmatmul.bf16.gmra.mxu0 %v4314
      %v4391 = vpop.f32.mrf.mxu0
      %v4392 = vadd.f32 0.0, %v4391
      %v4393 = vpop.f32.mrf.mxu0
      %v4394 = vadd.f32 0.0, %v4393
      %4395 = vmatmul.bf16.gmra.mxu0 %v4317
      %v4396 = vpop.f32.mrf.mxu0
      %v4397 = vadd.f32 0.0, %v4396
      %v4398 = vpop.f32.mrf.mxu0
      %v4399 = vadd.f32 0.0, %v4398
      %4400 = vmatmul.bf16.gmra.mxu0 %v4320
      %v4401 = vpop.f32.mrf.mxu0
      %v4402 = vadd.f32 0.0, %v4401
      %v4403 = vpop.f32.mrf.mxu0
      %v4404 = vadd.f32 0.0, %v4403
      %4405 = vmatmul.bf16.gmra.mxu0 %v4323
      %v4406 = vpop.f32.mrf.mxu0
      %v4407 = vadd.f32 0.0, %v4406
      %v4408 = vpop.f32.mrf.mxu0
      %v4409 = vadd.f32 0.0, %v4408
      %4410 = vmatmul.bf16.gmra.mxu0 %v4326
      %v4411 = vpop.f32.mrf.mxu0
      %v4412 = vadd.f32 0.0, %v4411
      %v4413 = vpop.f32.mrf.mxu0
      %v4414 = vadd.f32 0.0, %v4413
      %4415 = vmatmul.bf16.gmra.mxu0 %v4329
      %v4416 = vpop.f32.mrf.mxu0
      %v4417 = vadd.f32 0.0, %v4416
      %v4418 = vpop.f32.mrf.mxu0
      %v4419 = vadd.f32 0.0, %v4418
      %4420 = vmatmul.bf16.gmra.mxu0 %v4332
      %v4421 = vpop.f32.mrf.mxu0
      %v4422 = vadd.f32 0.0, %v4421
      %v4423 = vpop.f32.mrf.mxu0
      %4424 = vdwg.mxu0
      %v4425 = vadd.f32 %v4144, %v4347
      %v4426 = vadd.f32 %v4145, %v4349
      %v4427 = vadd.f32 %v4146, %v4352
      %v4428 = vadd.f32 %v4147, %v4354
      %v4429 = vadd.f32 %v4148, %v4357
      %v4430 = vadd.f32 %v4149, %v4359
      %v4431 = vadd.f32 %v4150, %v4362
      %v4432 = vadd.f32 %v4151, %v4364
      %v4433 = vadd.f32 %v4152, %v4367
      %v4434 = vadd.f32 %v4153, %v4369
      %v4435 = vadd.f32 %v4154, %v4372
      %v4436 = vadd.f32 %v4155, %v4374
      %v4437 = vadd.f32 %v4156, %v4377
      %v4438 = vadd.f32 %v4157, %v4379
      %v4439 = vadd.f32 %v4158, %v4382
      %v4440 = vadd.f32 %v4159, %v4384
      %v4441 = vadd.f32 %v4160, %v4387
      %v4442 = vadd.f32 %v4161, %v4389
      %v4443 = vadd.f32 %v4162, %v4392
      %v4444 = vadd.f32 %v4163, %v4394
      %v4445 = vadd.f32 %v4164, %v4397
      %v4446 = vadd.f32 %v4165, %v4399
      %v4447 = vadd.f32 %v4166, %v4402
      %v4448 = vadd.f32 %v4167, %v4404
      %v4449 = vadd.f32 %v4168, %v4407
      %v4450 = vadd.f32 %v4169, %v4409
      %v4451 = vadd.f32 %v4170, %v4412
      %v4452 = vadd.f32 %v4171, %v4414
      %v4453 = vadd.f32 %v4172, %v4417
      %v4454 = vadd.f32 %v4173, %v4419
      %v4455 = vadd.f32 %v4174, %v4422
      %v4456 = vld [vmem:[%s2094] sm:$0xf]
      %v4457 = vshrl.u32 %v4270, 16
      %v4459 = vshll.u32 %v4270, 16
      %v4461 = vrot.slane %v4459, 1
      %v4462 = vor.u32 %v4457, %v4461
      %v4463 = vshll.u32 %v4271, 16
      %v4465 = vrot.slane %v4463, 1
      %v4466 = vsel %vm448, %v4462, %v4465
      %v4467 = vshrl.u32 %v4271, 16
      %v4469 = vor.u32 %v4467, %v4465
      %v4470 = vshll.u32 %v4272, 16
      %v4472 = vrot.slane %v4470, 1
      %v4473 = vsel %vm448, %v4469, %v4472
      %v4474 = vshrl.u32 %v4272, 16
      %v4476 = vor.u32 %v4474, %v4472
      %v4477 = vshll.u32 %v4273, 16
      %v4479 = vrot.slane %v4477, 1
      %v4480 = vsel %vm448, %v4476, %v4479
      %v4481 = vshrl.u32 %v4273, 16
      %v4483 = vor.u32 %v4481, %v4479
      %v4484 = vshll.u32 %v4274, 16
      %v4486 = vrot.slane %v4484, 1
      %v4487 = vsel %vm448, %v4483, %v4486
      %v4488 = vshrl.u32 %v4274, 16
      %v4490 = vor.u32 %v4488, %v4486
      %v4491 = vshll.u32 %v4275, 16
      %v4493 = vrot.slane %v4491, 1
      %v4494 = vsel %vm448, %v4490, %v4493
      %v4495 = vshrl.u32 %v4275, 16
      %v4497 = vor.u32 %v4495, %v4493
      %v4498 = vshll.u32 %v4276, 16
      %v4500 = vrot.slane %v4498, 1
      %v4501 = vsel %vm448, %v4497, %v4500
      %v4502 = vshrl.u32 %v4276, 16
      %v4504 = vor.u32 %v4502, %v4500
      %v4505 = vshll.u32 %v4277, 16
      %v4507 = vrot.slane %v4505, 1
      %v4508 = vsel %vm448, %v4504, %v4507
      %v4509 = vshrl.u32 %v4277, 16
      %v4511 = vor.u32 %v4509, %v4507
      %v4512 = vshll.u32 %v4278, 16
      %v4514 = vrot.slane %v4512, 1
      %v4515 = vsel %vm448, %v4511, %v4514
      %v4516 = vshrl.u32 %v4278, 16
      %v4518 = vor.u32 %v4516, %v4514
      %v4519 = vshll.u32 %v4279, 16
      %v4521 = vrot.slane %v4519, 1
      %v4522 = vsel %vm448, %v4518, %v4521
      %v4523 = vshrl.u32 %v4279, 16
      %v4525 = vor.u32 %v4523, %v4521
      %v4526 = vshll.u32 %v4280, 16
      %v4528 = vrot.slane %v4526, 1
      %v4529 = vsel %vm448, %v4525, %v4528
      %v4530 = vshrl.u32 %v4280, 16
      %v4532 = vor.u32 %v4530, %v4528
      %v4533 = vshll.u32 %v4281, 16
      %v4535 = vrot.slane %v4533, 1
      %v4536 = vsel %vm448, %v4532, %v4535
      %v4537 = vshrl.u32 %v4281, 16
      %v4539 = vor.u32 %v4537, %v4535
      %v4540 = vshll.u32 %v4282, 16
      %v4542 = vrot.slane %v4540, 1
      %v4543 = vsel %vm448, %v4539, %v4542
      %v4544 = vshrl.u32 %v4282, 16
      %v4546 = vor.u32 %v4544, %v4542
      %v4547 = vshll.u32 %v4283, 16
      %v4549 = vrot.slane %v4547, 1
      %v4550 = vsel %vm448, %v4546, %v4549
      %v4551 = vshrl.u32 %v4283, 16
      %v4553 = vor.u32 %v4551, %v4549
      %v4554 = vshll.u32 %v4284, 16
      %v4556 = vrot.slane %v4554, 1
      %v4557 = vsel %vm448, %v4553, %v4556
      %v4558 = vshrl.u32 %v4284, 16
      %v4560 = vor.u32 %v4558, %v4556
      %v4561 = vshll.u32 %v4285, 16
      %v4563 = vrot.slane %v4561, 1
      %v4564 = vsel %vm448, %v4560, %v4563
      %v4565 = vshrl.u32 %v4285, 16
      %v4567 = vor.u32 %v4565, %v4563
      %v4569 = vsel %vm576, %v4466, 0
      %v4572 = vsel %vm576, %v4473, 0
      %v4575 = vsel %vm576, %v4480, 0
      %v4578 = vsel %vm576, %v4487, 0
      %v4581 = vsel %vm576, %v4494, 0
      %v4584 = vsel %vm576, %v4501, 0
      %v4587 = vsel %vm576, %v4508, 0
      %v4590 = vsel %vm576, %v4515, 0
      %v4593 = vsel %vm576, %v4522, 0
      %v4596 = vsel %vm576, %v4529, 0
      %v4599 = vsel %vm576, %v4536, 0
      %v4602 = vsel %vm576, %v4543, 0
      %v4605 = vsel %vm576, %v4550, 0
      %v4608 = vsel %vm576, %v4557, 0
      %v4611 = vsel %vm576, %v4564, 0
      %v4614 = vsel %vm576, %v4567, 0
      %v4617 = vsel %vm625, %v4456, 0
      %4619 = vmatpush.bf16.msra.mxu0 0
      %4620 = vmatpush.bf16.msra.mxu0 0
      %4621 = vmatpush.bf16.msra.mxu0 0
      %4622 = vmatpush.bf16.msra.mxu0 0
      %4623 = vmatpush.bf16.msra.mxu0 0
      %4624 = vmatpush.bf16.msra.mxu0 0
      %4625 = vmatpush.bf16.msra.mxu0 0
      %4626 = vmatpush.bf16.msra.mxu0 %v4617
      %4627 = vmatmul.bf16.gmra.mxu0 %v4569
      %v4628 = vpop.f32.mrf.mxu0
      %v4629 = vadd.f32 0.0, %v4628
      %v4630 = vpop.f32.mrf.mxu0
      %v4631 = vadd.f32 0.0, %v4630
      %4632 = vmatmul.bf16.gmra.mxu0 %v4572
      %v4633 = vpop.f32.mrf.mxu0
      %v4634 = vadd.f32 0.0, %v4633
      %v4635 = vpop.f32.mrf.mxu0
      %v4636 = vadd.f32 0.0, %v4635
      %4637 = vmatmul.bf16.gmra.mxu0 %v4575
      %v4638 = vpop.f32.mrf.mxu0
      %v4639 = vadd.f32 0.0, %v4638
      %v4640 = vpop.f32.mrf.mxu0
      %v4641 = vadd.f32 0.0, %v4640
      %4642 = vmatmul.bf16.gmra.mxu0 %v4578
      %v4643 = vpop.f32.mrf.mxu0
      %v4644 = vadd.f32 0.0, %v4643
      %v4645 = vpop.f32.mrf.mxu0
      %v4646 = vadd.f32 0.0, %v4645
      %4647 = vmatmul.bf16.gmra.mxu0 %v4581
      %v4648 = vpop.f32.mrf.mxu0
      %v4649 = vadd.f32 0.0, %v4648
      %v4650 = vpop.f32.mrf.mxu0
      %v4651 = vadd.f32 0.0, %v4650
      %4652 = vmatmul.bf16.gmra.mxu0 %v4584
      %v4653 = vpop.f32.mrf.mxu0
      %v4654 = vadd.f32 0.0, %v4653
      %v4655 = vpop.f32.mrf.mxu0
      %v4656 = vadd.f32 0.0, %v4655
      %4657 = vmatmul.bf16.gmra.mxu0 %v4587
      %v4658 = vpop.f32.mrf.mxu0
      %v4659 = vadd.f32 0.0, %v4658
      %v4660 = vpop.f32.mrf.mxu0
      %v4661 = vadd.f32 0.0, %v4660
      %4662 = vmatmul.bf16.gmra.mxu0 %v4590
      %v4663 = vpop.f32.mrf.mxu0
      %v4664 = vadd.f32 0.0, %v4663
      %v4665 = vpop.f32.mrf.mxu0
      %v4666 = vadd.f32 0.0, %v4665
      %4667 = vmatmul.bf16.gmra.mxu0 %v4593
      %v4668 = vpop.f32.mrf.mxu0
      %v4669 = vadd.f32 0.0, %v4668
      %v4670 = vpop.f32.mrf.mxu0
      %v4671 = vadd.f32 0.0, %v4670
      %4672 = vmatmul.bf16.gmra.mxu0 %v4596
      %v4673 = vpop.f32.mrf.mxu0
      %v4674 = vadd.f32 0.0, %v4673
      %v4675 = vpop.f32.mrf.mxu0
      %v4676 = vadd.f32 0.0, %v4675
      %4677 = vmatmul.bf16.gmra.mxu0 %v4599
      %v4678 = vpop.f32.mrf.mxu0
      %v4679 = vadd.f32 0.0, %v4678
      %v4680 = vpop.f32.mrf.mxu0
      %v4681 = vadd.f32 0.0, %v4680
      %4682 = vmatmul.bf16.gmra.mxu0 %v4602
      %v4683 = vpop.f32.mrf.mxu0
      %v4684 = vadd.f32 0.0, %v4683
      %v4685 = vpop.f32.mrf.mxu0
      %v4686 = vadd.f32 0.0, %v4685
      %4687 = vmatmul.bf16.gmra.mxu0 %v4605
      %v4688 = vpop.f32.mrf.mxu0
      %v4689 = vadd.f32 0.0, %v4688
      %v4690 = vpop.f32.mrf.mxu0
      %v4691 = vadd.f32 0.0, %v4690
      %4692 = vmatmul.bf16.gmra.mxu0 %v4608
      %v4693 = vpop.f32.mrf.mxu0
      %v4694 = vadd.f32 0.0, %v4693
      %v4695 = vpop.f32.mrf.mxu0
      %v4696 = vadd.f32 0.0, %v4695
      %4697 = vmatmul.bf16.gmra.mxu0 %v4611
      %v4698 = vpop.f32.mrf.mxu0
      %v4699 = vadd.f32 0.0, %v4698
      %v4700 = vpop.f32.mrf.mxu0
      %v4701 = vadd.f32 0.0, %v4700
      %4702 = vmatmul.bf16.gmra.mxu0 %v4614
      %v4703 = vpop.f32.mrf.mxu0
      %v4704 = vadd.f32 0.0, %v4703
      %v4705 = vpop.f32.mrf.mxu0
      %4706 = vdwg.mxu0
      %v4707 = vadd.f32 %v4425, %v4629
      %v4708 = vadd.f32 %v4426, %v4631
      %v4709 = vadd.f32 %v4427, %v4634
      %v4710 = vadd.f32 %v4428, %v4636
      %v4711 = vadd.f32 %v4429, %v4639
      %v4712 = vadd.f32 %v4430, %v4641
      %v4713 = vadd.f32 %v4431, %v4644
      %v4714 = vadd.f32 %v4432, %v4646
      %v4715 = vadd.f32 %v4433, %v4649
      %v4716 = vadd.f32 %v4434, %v4651
      %v4717 = vadd.f32 %v4435, %v4654
      %v4718 = vadd.f32 %v4436, %v4656
      %v4719 = vadd.f32 %v4437, %v4659
      %v4720 = vadd.f32 %v4438, %v4661
      %v4721 = vadd.f32 %v4439, %v4664
      %v4722 = vadd.f32 %v4440, %v4666
      %v4723 = vadd.f32 %v4441, %v4669
      %v4724 = vadd.f32 %v4442, %v4671
      %v4725 = vadd.f32 %v4443, %v4674
      %v4726 = vadd.f32 %v4444, %v4676
      %v4727 = vadd.f32 %v4445, %v4679
      %v4728 = vadd.f32 %v4446, %v4681
      %v4729 = vadd.f32 %v4447, %v4684
      %v4730 = vadd.f32 %v4448, %v4686
      %v4731 = vadd.f32 %v4449, %v4689
      %v4732 = vadd.f32 %v4450, %v4691
      %v4733 = vadd.f32 %v4451, %v4694
      %v4734 = vadd.f32 %v4452, %v4696
      %v4735 = vadd.f32 %v4453, %v4699
      %v4736 = vadd.f32 %v4454, %v4701
      %v4737 = vadd.f32 %v4455, %v4704
      %v4738 = vld [vmem:[%s2377] sm:$0xf]
      %v4739 = vrot.slane %v4270, 1
      %v4740 = vrot.slane %v4271, 1
      %v4741 = vsel %vm842, %v4739, %v4740
      %v4742 = vrot.slane %v4272, 1
      %v4743 = vsel %vm842, %v4740, %v4742
      %v4744 = vrot.slane %v4273, 1
      %v4745 = vsel %vm842, %v4742, %v4744
      %v4746 = vrot.slane %v4274, 1
      %v4747 = vsel %vm842, %v4744, %v4746
      %v4748 = vrot.slane %v4275, 1
      %v4749 = vsel %vm842, %v4746, %v4748
      %v4750 = vrot.slane %v4276, 1
      %v4751 = vsel %vm842, %v4748, %v4750
      %v4752 = vrot.slane %v4277, 1
      %v4753 = vsel %vm842, %v4750, %v4752
      %v4754 = vrot.slane %v4278, 1
      %v4755 = vsel %vm842, %v4752, %v4754
      %v4756 = vrot.slane %v4279, 1
      %v4757 = vsel %vm842, %v4754, %v4756
      %v4758 = vrot.slane %v4280, 1
      %v4759 = vsel %vm842, %v4756, %v4758
      %v4760 = vrot.slane %v4281, 1
      %v4761 = vsel %vm842, %v4758, %v4760
      %v4762 = vrot.slane %v4282, 1
      %v4763 = vsel %vm842, %v4760, %v4762
      %v4764 = vrot.slane %v4283, 1
      %v4765 = vsel %vm842, %v4762, %v4764
      %v4766 = vrot.slane %v4284, 1
      %v4767 = vsel %vm842, %v4764, %v4766
      %v4768 = vrot.slane %v4285, 1
      %v4769 = vsel %vm842, %v4766, %v4768
      %v4771 = vsel %vm576, %v4741, 0
      %v4774 = vsel %vm576, %v4743, 0
      %v4777 = vsel %vm576, %v4745, 0
      %v4780 = vsel %vm576, %v4747, 0
      %v4783 = vsel %vm576, %v4749, 0
      %v4786 = vsel %vm576, %v4751, 0
      %v4789 = vsel %vm576, %v4753, 0
      %v4792 = vsel %vm576, %v4755, 0
      %v4795 = vsel %vm576, %v4757, 0
      %v4798 = vsel %vm576, %v4759, 0
      %v4801 = vsel %vm576, %v4761, 0
      %v4804 = vsel %vm576, %v4763, 0
      %v4807 = vsel %vm576, %v4765, 0
      %v4810 = vsel %vm576, %v4767, 0
      %v4813 = vsel %vm576, %v4769, 0
      %v4816 = vsel %vm576, %v4768, 0
      %v4819 = vsel %vm625, %v4738, 0
      %4821 = vmatpush.bf16.msra.mxu0 0
      %4822 = vmatpush.bf16.msra.mxu0 0
      %4823 = vmatpush.bf16.msra.mxu0 0
      %4824 = vmatpush.bf16.msra.mxu0 0
      %4825 = vmatpush.bf16.msra.mxu0 0
      %4826 = vmatpush.bf16.msra.mxu0 0
      %4827 = vmatpush.bf16.msra.mxu0 0
      %4828 = vmatpush.bf16.msra.mxu0 %v4819
      %4829 = vmatmul.bf16.gmra.mxu0 %v4771
      %v4830 = vpop.f32.mrf.mxu0
      %v4831 = vadd.f32 0.0, %v4830
      %v4832 = vpop.f32.mrf.mxu0
      %v4833 = vadd.f32 0.0, %v4832
      %4834 = vmatmul.bf16.gmra.mxu0 %v4774
      %v4835 = vpop.f32.mrf.mxu0
      %v4836 = vadd.f32 0.0, %v4835
      %v4837 = vpop.f32.mrf.mxu0
      %v4838 = vadd.f32 0.0, %v4837
      %4839 = vmatmul.bf16.gmra.mxu0 %v4777
      %v4840 = vpop.f32.mrf.mxu0
      %v4841 = vadd.f32 0.0, %v4840
      %v4842 = vpop.f32.mrf.mxu0
      %v4843 = vadd.f32 0.0, %v4842
      %4844 = vmatmul.bf16.gmra.mxu0 %v4780
      %v4845 = vpop.f32.mrf.mxu0
      %v4846 = vadd.f32 0.0, %v4845
      %v4847 = vpop.f32.mrf.mxu0
      %v4848 = vadd.f32 0.0, %v4847
      %4849 = vmatmul.bf16.gmra.mxu0 %v4783
      %v4850 = vpop.f32.mrf.mxu0
      %v4851 = vadd.f32 0.0, %v4850
      %v4852 = vpop.f32.mrf.mxu0
      %v4853 = vadd.f32 0.0, %v4852
      %4854 = vmatmul.bf16.gmra.mxu0 %v4786
      %v4855 = vpop.f32.mrf.mxu0
      %v4856 = vadd.f32 0.0, %v4855
      %v4857 = vpop.f32.mrf.mxu0
      %v4858 = vadd.f32 0.0, %v4857
      %4859 = vmatmul.bf16.gmra.mxu0 %v4789
      %v4860 = vpop.f32.mrf.mxu0
      %v4861 = vadd.f32 0.0, %v4860
      %v4862 = vpop.f32.mrf.mxu0
      %v4863 = vadd.f32 0.0, %v4862
      %4864 = vmatmul.bf16.gmra.mxu0 %v4792
      %v4865 = vpop.f32.mrf.mxu0
      %v4866 = vadd.f32 0.0, %v4865
      %v4867 = vpop.f32.mrf.mxu0
      %v4868 = vadd.f32 0.0, %v4867
      %4869 = vmatmul.bf16.gmra.mxu0 %v4795
      %v4870 = vpop.f32.mrf.mxu0
      %v4871 = vadd.f32 0.0, %v4870
      %v4872 = vpop.f32.mrf.mxu0
      %v4873 = vadd.f32 0.0, %v4872
      %4874 = vmatmul.bf16.gmra.mxu0 %v4798
      %v4875 = vpop.f32.mrf.mxu0
      %v4876 = vadd.f32 0.0, %v4875
      %v4877 = vpop.f32.mrf.mxu0
      %v4878 = vadd.f32 0.0, %v4877
      %4879 = vmatmul.bf16.gmra.mxu0 %v4801
      %v4880 = vpop.f32.mrf.mxu0
      %v4881 = vadd.f32 0.0, %v4880
      %v4882 = vpop.f32.mrf.mxu0
      %v4883 = vadd.f32 0.0, %v4882
      %4884 = vmatmul.bf16.gmra.mxu0 %v4804
      %v4885 = vpop.f32.mrf.mxu0
      %v4886 = vadd.f32 0.0, %v4885
      %v4887 = vpop.f32.mrf.mxu0
      %v4888 = vadd.f32 0.0, %v4887
      %4889 = vmatmul.bf16.gmra.mxu0 %v4807
      %v4890 = vpop.f32.mrf.mxu0
      %v4891 = vadd.f32 0.0, %v4890
      %v4892 = vpop.f32.mrf.mxu0
      %v4893 = vadd.f32 0.0, %v4892
      %4894 = vmatmul.bf16.gmra.mxu0 %v4810
      %v4895 = vpop.f32.mrf.mxu0
      %v4896 = vadd.f32 0.0, %v4895
      %v4897 = vpop.f32.mrf.mxu0
      %v4898 = vadd.f32 0.0, %v4897
      %4899 = vmatmul.bf16.gmra.mxu0 %v4813
      %v4900 = vpop.f32.mrf.mxu0
      %v4901 = vadd.f32 0.0, %v4900
      %v4902 = vpop.f32.mrf.mxu0
      %v4903 = vadd.f32 0.0, %v4902
      %4904 = vmatmul.bf16.gmra.mxu0 %v4816
      %v4905 = vpop.f32.mrf.mxu0
      %v4906 = vadd.f32 0.0, %v4905
      %v4907 = vpop.f32.mrf.mxu0
      %4908 = vdwg.mxu0
      %v4909 = vadd.f32 %v4707, %v4831
      %v4910 = vadd.f32 %v4708, %v4833
      %v4911 = vadd.f32 %v4709, %v4836
      %v4912 = vadd.f32 %v4710, %v4838
      %v4913 = vadd.f32 %v4711, %v4841
      %v4914 = vadd.f32 %v4712, %v4843
      %v4915 = vadd.f32 %v4713, %v4846
      %v4916 = vadd.f32 %v4714, %v4848
      %v4917 = vadd.f32 %v4715, %v4851
      %v4918 = vadd.f32 %v4716, %v4853
      %v4919 = vadd.f32 %v4717, %v4856
      %v4920 = vadd.f32 %v4718, %v4858
      %v4921 = vadd.f32 %v4719, %v4861
      %v4922 = vadd.f32 %v4720, %v4863
      %v4923 = vadd.f32 %v4721, %v4866
      %v4924 = vadd.f32 %v4722, %v4868
      %v4925 = vadd.f32 %v4723, %v4871
      %v4926 = vadd.f32 %v4724, %v4873
      %v4927 = vadd.f32 %v4725, %v4876
      %v4928 = vadd.f32 %v4726, %v4878
      %v4929 = vadd.f32 %v4727, %v4881
      %v4930 = vadd.f32 %v4728, %v4883
      %v4931 = vadd.f32 %v4729, %v4886
      %v4932 = vadd.f32 %v4730, %v4888
      %v4933 = vadd.f32 %v4731, %v4891
      %v4934 = vadd.f32 %v4732, %v4893
      %v4935 = vadd.f32 %v4733, %v4896
      %v4936 = vadd.f32 %v4734, %v4898
      %v4937 = vadd.f32 %v4735, %v4901
      %v4938 = vadd.f32 %v4736, %v4903
      %v4939 = vadd.f32 %v4737, %v4906
      %v4940 = vadd.f32 %v4909, %v2581
      %v4941 = vadd.f32 %v4910, %v2581
      %v4942 = vadd.f32 %v4911, %v2581
      %v4943 = vadd.f32 %v4912, %v2581
      %v4944 = vadd.f32 %v4913, %v2581
      %v4945 = vadd.f32 %v4914, %v2581
      %v4946 = vadd.f32 %v4915, %v2581
      %v4947 = vadd.f32 %v4916, %v2581
      %v4948 = vadd.f32 %v4917, %v2581
      %v4949 = vadd.f32 %v4918, %v2581
      %v4950 = vadd.f32 %v4919, %v2581
      %v4951 = vadd.f32 %v4920, %v2581
      %v4952 = vadd.f32 %v4921, %v2581
      %v4953 = vadd.f32 %v4922, %v2581
      %v4954 = vadd.f32 %v4923, %v2581
      %v4955 = vadd.f32 %v4924, %v2581
      %v4956 = vadd.f32 %v4925, %v2581
      %v4957 = vadd.f32 %v4926, %v2581
      %v4958 = vadd.f32 %v4927, %v2581
      %v4959 = vadd.f32 %v4928, %v2581
      %v4960 = vadd.f32 %v4929, %v2581
      %v4961 = vadd.f32 %v4930, %v2581
      %v4962 = vadd.f32 %v4931, %v2581
      %v4963 = vadd.f32 %v4932, %v2581
      %v4964 = vadd.f32 %v4933, %v2581
      %v4965 = vadd.f32 %v4934, %v2581
      %v4966 = vadd.f32 %v4935, %v2581
      %v4967 = vadd.f32 %v4936, %v2581
      %v4968 = vadd.f32 %v4937, %v2581
      %v4969 = vadd.f32 %v4938, %v2581
      %v4970 = vadd.f32 %v4939, %v2581
      %v4971 = vmax.f32 %v4940, 0.0
      %v4972 = vmax.f32 %v4941, 0.0
      %v4973 = vmax.f32 %v4942, 0.0
      %v4974 = vmax.f32 %v4943, 0.0
      %v4975 = vmax.f32 %v4944, 0.0
      %v4976 = vmax.f32 %v4945, 0.0
      %v4977 = vmax.f32 %v4946, 0.0
      %v4978 = vmax.f32 %v4947, 0.0
      %v4979 = vmax.f32 %v4948, 0.0
      %v4980 = vmax.f32 %v4949, 0.0
      %v4981 = vmax.f32 %v4950, 0.0
      %v4982 = vmax.f32 %v4951, 0.0
      %v4983 = vmax.f32 %v4952, 0.0
      %v4984 = vmax.f32 %v4953, 0.0
      %v4985 = vmax.f32 %v4954, 0.0
      %v4986 = vmax.f32 %v4955, 0.0
      %v4987 = vmax.f32 %v4956, 0.0
      %v4988 = vmax.f32 %v4957, 0.0
      %v4989 = vmax.f32 %v4958, 0.0
      %v4990 = vmax.f32 %v4959, 0.0
      %v4991 = vmax.f32 %v4960, 0.0
      %v4992 = vmax.f32 %v4961, 0.0
      %v4993 = vmax.f32 %v4962, 0.0
      %v4994 = vmax.f32 %v4963, 0.0
      %v4995 = vmax.f32 %v4964, 0.0
      %v4996 = vmax.f32 %v4965, 0.0
      %v4997 = vmax.f32 %v4966, 0.0
      %v4998 = vmax.f32 %v4967, 0.0
      %v4999 = vmax.f32 %v4968, 0.0
      %v5000 = vmax.f32 %v4969, 0.0
      %v5001 = vmax.f32 %v4970, 0.0
      %v5002 = vpack.c.bf16 %v4971, %v4971
      %v5003 = vpack.c.bf16 %v4972, %v4972
      %v5004 = vpack.c.bf16 %v4973, %v4973
      %v5005 = vpack.c.bf16 %v4974, %v4974
      %v5006 = vpack.c.bf16 %v4975, %v4975
      %v5007 = vpack.c.bf16 %v4976, %v4976
      %v5008 = vpack.c.bf16 %v4977, %v4977
      %v5009 = vpack.c.bf16 %v4978, %v4978
      %v5010 = vpack.c.bf16 %v4979, %v4979
      %v5011 = vpack.c.bf16 %v4980, %v4980
      %v5012 = vpack.c.bf16 %v4981, %v4981
      %v5013 = vpack.c.bf16 %v4982, %v4982
      %v5014 = vpack.c.bf16 %v4983, %v4983
      %v5015 = vpack.c.bf16 %v4984, %v4984
      %v5016 = vpack.c.bf16 %v4985, %v4985
      %v5017 = vpack.c.bf16 %v4986, %v4986
      %v5018 = vpack.c.bf16 %v4987, %v4987
      %v5019 = vpack.c.bf16 %v4988, %v4988
      %v5020 = vpack.c.bf16 %v4989, %v4989
      %v5021 = vpack.c.bf16 %v4990, %v4990
      %v5022 = vpack.c.bf16 %v4991, %v4991
      %v5023 = vpack.c.bf16 %v4992, %v4992
      %v5024 = vpack.c.bf16 %v4993, %v4993
      %v5025 = vpack.c.bf16 %v4994, %v4994
      %v5026 = vpack.c.bf16 %v4995, %v4995
      %v5027 = vpack.c.bf16 %v4996, %v4996
      %v5028 = vpack.c.bf16 %v4997, %v4997
      %v5029 = vpack.c.bf16 %v4998, %v4998
      %v5030 = vpack.c.bf16 %v4999, %v4999
      %v5031 = vpack.c.bf16 %v5000, %v5000
      %v5032 = vpack.c.bf16 %v5001, %v5001
      %s5033 = scalar_lea.vmem %s332, 124
      %5034 = vst.msk [vmem:[%s5033] sm:$0xf] %vm2676, %v5002
      %5035 = vst.msk [vmem:[%s5033 + $0x4] sm:$0xf] %vm2676, %v5003
      %5036 = vst.msk [vmem:[%s5033 + $0x8] sm:$0xf] %vm2676, %v5004
      %5037 = vst.msk [vmem:[%s5033 + $0xc] sm:$0xf] %vm2676, %v5005
      %5038 = vst.msk [vmem:[%s5033 + $0x10] sm:$0xf] %vm2676, %v5006
      %5039 = vst.msk [vmem:[%s5033 + $0x14] sm:$0xf] %vm2676, %v5007
      %5040 = vst.msk [vmem:[%s5033 + $0x18] sm:$0xf] %vm2676, %v5008
      %5041 = vst.msk [vmem:[%s5033 + $0x1c] sm:$0xf] %vm2676, %v5009
      %5042 = vst.msk [vmem:[%s5033 + $0x20] sm:$0xf] %vm2676, %v5010
      %5043 = vst.msk [vmem:[%s5033 + $0x24] sm:$0xf] %vm2676, %v5011
      %5044 = vst.msk [vmem:[%s5033 + $0x28] sm:$0xf] %vm2676, %v5012
      %5045 = vst.msk [vmem:[%s5033 + $0x2c] sm:$0xf] %vm2676, %v5013
      %5046 = vst.msk [vmem:[%s5033 + $0x30] sm:$0xf] %vm2676, %v5014
      %5047 = vst.msk [vmem:[%s5033 + $0x34] sm:$0xf] %vm2676, %v5015
      %5048 = vst.msk [vmem:[%s5033 + $0x38] sm:$0xf] %vm2676, %v5016
      %5049 = vst.msk [vmem:[%s5033 + $0x3c] sm:$0xf] %vm2676, %v5017
      %5050 = vst.msk [vmem:[%s5033 + $0x40] sm:$0xf] %vm2676, %v5018
      %5051 = vst.msk [vmem:[%s5033 + $0x44] sm:$0xf] %vm2676, %v5019
      %5052 = vst.msk [vmem:[%s5033 + $0x48] sm:$0xf] %vm2676, %v5020
      %5053 = vst.msk [vmem:[%s5033 + $0x4c] sm:$0xf] %vm2676, %v5021
      %5054 = vst.msk [vmem:[%s5033 + $0x50] sm:$0xf] %vm2676, %v5022
      %5055 = vst.msk [vmem:[%s5033 + $0x54] sm:$0xf] %vm2676, %v5023
      %5056 = vst.msk [vmem:[%s5033 + $0x58] sm:$0xf] %vm2676, %v5024
      %5057 = vst.msk [vmem:[%s5033 + $0x5c] sm:$0xf] %vm2676, %v5025
      %5058 = vst.msk [vmem:[%s5033 + $0x60] sm:$0xf] %vm2676, %v5026
      %5059 = vst.msk [vmem:[%s5033 + $0x64] sm:$0xf] %vm2676, %v5027
      %5060 = vst.msk [vmem:[%s5033 + $0x68] sm:$0xf] %vm2676, %v5028
      %5061 = vst.msk [vmem:[%s5033 + $0x6c] sm:$0xf] %vm2676, %v5029
      %5062 = vst.msk [vmem:[%s5033 + $0x70] sm:$0xf] %vm2676, %v5030
      %5063 = vst.msk [vmem:[%s5033 + $0x74] sm:$0xf] %vm2676, %v5031
      %5064 = vst.msk [vmem:[%s5033 + $0x78] sm:$0x3] %vm2707, %v5032
      %v5065 = vld [vmem:[%s1812] sm:$0xf]
      %v5066 = vld [vmem:[%s1812 + $0x4] sm:$0xf]
      %v5067 = vld [vmem:[%s1812 + $0x8] sm:$0xf]
      %v5068 = vld [vmem:[%s1812 + $0xc] sm:$0xf]
      %v5069 = vld [vmem:[%s1812 + $0x10] sm:$0xf]
      %v5070 = vld [vmem:[%s1812 + $0x14] sm:$0xf]
      %v5071 = vld [vmem:[%s1812 + $0x18] sm:$0xf]
      %v5072 = vld [vmem:[%s1812 + $0x1c] sm:$0xf]
      %v5073 = vld [vmem:[%s1812 + $0x20] sm:$0xf]
      %v5074 = vld [vmem:[%s1812 + $0x24] sm:$0xf]
      %v5075 = vld [vmem:[%s1812 + $0x28] sm:$0xf]
      %v5076 = vld [vmem:[%s1812 + $0x2c] sm:$0xf]
      %v5077 = vld [vmem:[%s1812 + $0x30] sm:$0xf]
      %v5078 = vld [vmem:[%s1812 + $0x34] sm:$0xf]
      %v5079 = vld [vmem:[%s1812 + $0x38] sm:$0xf]
      %v5080 = vld [vmem:[%s1812 + $0x3c] sm:$0xf]
      %v5081 = vld [vmem:[%s1812 + $0x40] sm:$0xf]
      %v5082 = vld [vmem:[%s1812 + $0x44] sm:$0xf]
      %v5083 = vld [vmem:[%s1812 + $0x48] sm:$0xf]
      %v5084 = vld [vmem:[%s1812 + $0x4c] sm:$0xf]
      %v5085 = vld [vmem:[%s1812 + $0x50] sm:$0xf]
      %v5086 = vld [vmem:[%s1812 + $0x54] sm:$0xf]
      %v5087 = vld [vmem:[%s1812 + $0x58] sm:$0xf]
      %v5088 = vld [vmem:[%s1812 + $0x5c] sm:$0xf]
      %v5089 = vld [vmem:[%s1812 + $0x60] sm:$0xf]
      %v5090 = vld [vmem:[%s1812 + $0x64] sm:$0xf]
      %v5091 = vld [vmem:[%s1812 + $0x68] sm:$0xf]
      %v5092 = vld [vmem:[%s1812 + $0x6c] sm:$0xf]
      %v5093 = vld [vmem:[%s1812 + $0x70] sm:$0xf]
      %v5094 = vld [vmem:[%s1812 + $0x74] sm:$0xf]
      %v5095 = vld [vmem:[%s1812 + $0x78] sm:$0x7]
      %v5096 = vld [vmem:[%s316] sm:$0xf]
      %v5097 = vld [vmem:[%s368] sm:$0xf]
      %v5129 = vunpack.c.l.b16 %v5065
      %v5130 = vunpack.c.l.b16 %v5066
      %v5131 = vunpack.c.l.b16 %v5067
      %v5132 = vunpack.c.l.b16 %v5068
      %v5133 = vunpack.c.l.b16 %v5069
      %v5134 = vunpack.c.l.b16 %v5070
      %v5135 = vunpack.c.l.b16 %v5071
      %v5136 = vunpack.c.l.b16 %v5072
      %v5137 = vunpack.c.l.b16 %v5073
      %v5138 = vunpack.c.l.b16 %v5074
      %v5139 = vunpack.c.l.b16 %v5075
      %v5140 = vunpack.c.l.b16 %v5076
      %v5141 = vunpack.c.l.b16 %v5077
      %v5142 = vunpack.c.l.b16 %v5078
      %v5143 = vunpack.c.l.b16 %v5079
      %v5144 = vunpack.c.l.b16 %v5080
      %v5145 = vunpack.c.l.b16 %v5081
      %v5146 = vunpack.c.l.b16 %v5082
      %v5147 = vunpack.c.l.b16 %v5083
      %v5148 = vunpack.c.l.b16 %v5084
      %v5149 = vunpack.c.l.b16 %v5085
      %v5150 = vunpack.c.l.b16 %v5086
      %v5151 = vunpack.c.l.b16 %v5087
      %v5152 = vunpack.c.l.b16 %v5088
      %v5153 = vunpack.c.l.b16 %v5089
      %v5154 = vunpack.c.l.b16 %v5090
      %v5155 = vunpack.c.l.b16 %v5091
      %v5156 = vunpack.c.l.b16 %v5092
      %v5157 = vunpack.c.l.b16 %v5093
      %v5158 = vunpack.c.l.b16 %v5094
      %v5159 = vunpack.c.l.b16 %v5095
      %v5160 = vpack.c.b16 %v5130, %v5129
      %v5161 = vpack.c.b16 %v5132, %v5131
      %v5162 = vpack.c.b16 %v5134, %v5133
      %v5163 = vpack.c.b16 %v5136, %v5135
      %v5164 = vpack.c.b16 %v5138, %v5137
      %v5165 = vpack.c.b16 %v5140, %v5139
      %v5166 = vpack.c.b16 %v5142, %v5141
      %v5167 = vpack.c.b16 %v5144, %v5143
      %v5168 = vpack.c.b16 %v5146, %v5145
      %v5169 = vpack.c.b16 %v5148, %v5147
      %v5170 = vpack.c.b16 %v5150, %v5149
      %v5171 = vpack.c.b16 %v5152, %v5151
      %v5172 = vpack.c.b16 %v5154, %v5153
      %v5173 = vpack.c.b16 %v5156, %v5155
      %v5174 = vpack.c.b16 %v5158, %v5157
      %v5175 = vpack.c.b16 %v5159, %v5159
      %v5177 = vshrl.u32 %v5160, 16
      %v5179 = vshll.u32 %v5160, 16
      %v5181 = vrot.slane %v5179, 1
      %v5182 = vor.u32 %v5177, %v5181
      %v5184 = vshll.u32 %v5161, 16
      %v5186 = vrot.slane %v5184, 1
      %v5187 = vsel %vm448, %v5182, %v5186
      %v5188 = vshrl.u32 %v5161, 16
      %v5190 = vor.u32 %v5188, %v5186
      %v5192 = vshll.u32 %v5162, 16
      %v5194 = vrot.slane %v5192, 1
      %v5195 = vsel %vm448, %v5190, %v5194
      %v5196 = vshrl.u32 %v5162, 16
      %v5198 = vor.u32 %v5196, %v5194
      %v5200 = vshll.u32 %v5163, 16
      %v5202 = vrot.slane %v5200, 1
      %v5203 = vsel %vm448, %v5198, %v5202
      %v5204 = vshrl.u32 %v5163, 16
      %v5206 = vor.u32 %v5204, %v5202
      %v5208 = vshll.u32 %v5164, 16
      %v5210 = vrot.slane %v5208, 1
      %v5211 = vsel %vm448, %v5206, %v5210
      %v5212 = vshrl.u32 %v5164, 16
      %v5214 = vor.u32 %v5212, %v5210
      %v5216 = vshll.u32 %v5165, 16
      %v5218 = vrot.slane %v5216, 1
      %v5219 = vsel %vm448, %v5214, %v5218
      %v5220 = vshrl.u32 %v5165, 16
      %v5222 = vor.u32 %v5220, %v5218
      %v5224 = vshll.u32 %v5166, 16
      %v5226 = vrot.slane %v5224, 1
      %v5227 = vsel %vm448, %v5222, %v5226
      %v5228 = vshrl.u32 %v5166, 16
      %v5230 = vor.u32 %v5228, %v5226
      %v5232 = vshll.u32 %v5167, 16
      %v5234 = vrot.slane %v5232, 1
      %v5235 = vsel %vm448, %v5230, %v5234
      %v5236 = vshrl.u32 %v5167, 16
      %v5238 = vor.u32 %v5236, %v5234
      %v5240 = vshll.u32 %v5168, 16
      %v5242 = vrot.slane %v5240, 1
      %v5243 = vsel %vm448, %v5238, %v5242
      %v5244 = vshrl.u32 %v5168, 16
      %v5246 = vor.u32 %v5244, %v5242
      %v5248 = vshll.u32 %v5169, 16
      %v5250 = vrot.slane %v5248, 1
      %v5251 = vsel %vm448, %v5246, %v5250
      %v5252 = vshrl.u32 %v5169, 16
      %v5254 = vor.u32 %v5252, %v5250
      %v5256 = vshll.u32 %v5170, 16
      %v5258 = vrot.slane %v5256, 1
      %v5259 = vsel %vm448, %v5254, %v5258
      %v5260 = vshrl.u32 %v5170, 16
      %v5262 = vor.u32 %v5260, %v5258
      %v5264 = vshll.u32 %v5171, 16
      %v5266 = vrot.slane %v5264, 1
      %v5267 = vsel %vm448, %v5262, %v5266
      %v5268 = vshrl.u32 %v5171, 16
      %v5270 = vor.u32 %v5268, %v5266
      %v5272 = vshll.u32 %v5172, 16
      %v5274 = vrot.slane %v5272, 1
      %v5275 = vsel %vm448, %v5270, %v5274
      %v5276 = vshrl.u32 %v5172, 16
      %v5278 = vor.u32 %v5276, %v5274
      %v5280 = vshll.u32 %v5173, 16
      %v5282 = vrot.slane %v5280, 1
      %v5283 = vsel %vm448, %v5278, %v5282
      %v5284 = vshrl.u32 %v5173, 16
      %v5286 = vor.u32 %v5284, %v5282
      %v5288 = vshll.u32 %v5174, 16
      %v5290 = vrot.slane %v5288, 1
      %v5291 = vsel %vm448, %v5286, %v5290
      %v5292 = vshrl.u32 %v5174, 16
      %v5294 = vor.u32 %v5292, %v5290
      %v5296 = vshll.u32 %v5175, 16
      %v5298 = vrot.slane %v5296, 1
      %v5299 = vsel %vm448, %v5294, %v5298
      %v5300 = vshrl.u32 %v5175, 16
      %v5302 = vor.u32 %v5300, %v5298
      %v5304 = vsel %vm576, %v5187, 0
      %v5307 = vsel %vm576, %v5195, 0
      %v5310 = vsel %vm576, %v5203, 0
      %v5313 = vsel %vm576, %v5211, 0
      %v5316 = vsel %vm576, %v5219, 0
      %v5319 = vsel %vm576, %v5227, 0
      %v5322 = vsel %vm576, %v5235, 0
      %v5325 = vsel %vm576, %v5243, 0
      %v5328 = vsel %vm576, %v5251, 0
      %v5331 = vsel %vm576, %v5259, 0
      %v5334 = vsel %vm576, %v5267, 0
      %v5337 = vsel %vm576, %v5275, 0
      %v5340 = vsel %vm576, %v5283, 0
      %v5343 = vsel %vm576, %v5291, 0
      %v5346 = vsel %vm576, %v5299, 0
      %v5349 = vsel %vm576, %v5302, 0
      %v5352 = vsel %vm625, %v5097, 0
      %5354 = vmatpush.bf16.msra.mxu0 0
      %5355 = vmatpush.bf16.msra.mxu0 0
      %5356 = vmatpush.bf16.msra.mxu0 0
      %5357 = vmatpush.bf16.msra.mxu0 0
      %5358 = vmatpush.bf16.msra.mxu0 0
      %5359 = vmatpush.bf16.msra.mxu0 0
      %5360 = vmatpush.bf16.msra.mxu0 0
      %5361 = vmatpush.bf16.msra.mxu0 %v5352
      %5362 = vmatmul.bf16.gmra.mxu0 %v5304
      %v5363 = vpop.f32.mrf.mxu0
      %v5364 = vadd.f32 0.0, %v5363
      %v5365 = vpop.f32.mrf.mxu0
      %v5366 = vadd.f32 0.0, %v5365
      %5367 = vmatmul.bf16.gmra.mxu0 %v5307
      %v5368 = vpop.f32.mrf.mxu0
      %v5369 = vadd.f32 0.0, %v5368
      %v5370 = vpop.f32.mrf.mxu0
      %v5371 = vadd.f32 0.0, %v5370
      %5372 = vmatmul.bf16.gmra.mxu0 %v5310
      %v5373 = vpop.f32.mrf.mxu0
      %v5374 = vadd.f32 0.0, %v5373
      %v5375 = vpop.f32.mrf.mxu0
      %v5376 = vadd.f32 0.0, %v5375
      %5377 = vmatmul.bf16.gmra.mxu0 %v5313
      %v5378 = vpop.f32.mrf.mxu0
      %v5379 = vadd.f32 0.0, %v5378
      %v5380 = vpop.f32.mrf.mxu0
      %v5381 = vadd.f32 0.0, %v5380
      %5382 = vmatmul.bf16.gmra.mxu0 %v5316
      %v5383 = vpop.f32.mrf.mxu0
      %v5384 = vadd.f32 0.0, %v5383
      %v5385 = vpop.f32.mrf.mxu0
      %v5386 = vadd.f32 0.0, %v5385
      %5387 = vmatmul.bf16.gmra.mxu0 %v5319
      %v5388 = vpop.f32.mrf.mxu0
      %v5389 = vadd.f32 0.0, %v5388
      %v5390 = vpop.f32.mrf.mxu0
      %v5391 = vadd.f32 0.0, %v5390
      %5392 = vmatmul.bf16.gmra.mxu0 %v5322
      %v5393 = vpop.f32.mrf.mxu0
      %v5394 = vadd.f32 0.0, %v5393
      %v5395 = vpop.f32.mrf.mxu0
      %v5396 = vadd.f32 0.0, %v5395
      %5397 = vmatmul.bf16.gmra.mxu0 %v5325
      %v5398 = vpop.f32.mrf.mxu0
      %v5399 = vadd.f32 0.0, %v5398
      %v5400 = vpop.f32.mrf.mxu0
      %v5401 = vadd.f32 0.0, %v5400
      %5402 = vmatmul.bf16.gmra.mxu0 %v5328
      %v5403 = vpop.f32.mrf.mxu0
      %v5404 = vadd.f32 0.0, %v5403
      %v5405 = vpop.f32.mrf.mxu0
      %v5406 = vadd.f32 0.0, %v5405
      %5407 = vmatmul.bf16.gmra.mxu0 %v5331
      %v5408 = vpop.f32.mrf.mxu0
      %v5409 = vadd.f32 0.0, %v5408
      %v5410 = vpop.f32.mrf.mxu0
      %v5411 = vadd.f32 0.0, %v5410
      %5412 = vmatmul.bf16.gmra.mxu0 %v5334
      %v5413 = vpop.f32.mrf.mxu0
      %v5414 = vadd.f32 0.0, %v5413
      %v5415 = vpop.f32.mrf.mxu0
      %v5416 = vadd.f32 0.0, %v5415
      %5417 = vmatmul.bf16.gmra.mxu0 %v5337
      %v5418 = vpop.f32.mrf.mxu0
      %v5419 = vadd.f32 0.0, %v5418
      %v5420 = vpop.f32.mrf.mxu0
      %v5421 = vadd.f32 0.0, %v5420
      %5422 = vmatmul.bf16.gmra.mxu0 %v5340
      %v5423 = vpop.f32.mrf.mxu0
      %v5424 = vadd.f32 0.0, %v5423
      %v5425 = vpop.f32.mrf.mxu0
      %v5426 = vadd.f32 0.0, %v5425
      %5427 = vmatmul.bf16.gmra.mxu0 %v5343
      %v5428 = vpop.f32.mrf.mxu0
      %v5429 = vadd.f32 0.0, %v5428
      %v5430 = vpop.f32.mrf.mxu0
      %v5431 = vadd.f32 0.0, %v5430
      %5432 = vmatmul.bf16.gmra.mxu0 %v5346
      %v5433 = vpop.f32.mrf.mxu0
      %v5434 = vadd.f32 0.0, %v5433
      %v5435 = vpop.f32.mrf.mxu0
      %v5436 = vadd.f32 0.0, %v5435
      %5437 = vmatmul.bf16.gmra.mxu0 %v5349
      %v5438 = vpop.f32.mrf.mxu0
      %v5439 = vadd.f32 0.0, %v5438
      %v5440 = vpop.f32.mrf.mxu0
      %5441 = vdwg.mxu0
      %v5442 = vsel %vm576, %v5160, 0
      %v5444 = vsel %vm576, %v5161, 0
      %v5446 = vsel %vm576, %v5162, 0
      %v5448 = vsel %vm576, %v5163, 0
      %v5450 = vsel %vm576, %v5164, 0
      %v5452 = vsel %vm576, %v5165, 0
      %v5454 = vsel %vm576, %v5166, 0
      %v5456 = vsel %vm576, %v5167, 0
      %v5458 = vsel %vm576, %v5168, 0
      %v5460 = vsel %vm576, %v5169, 0
      %v5462 = vsel %vm576, %v5170, 0
      %v5464 = vsel %vm576, %v5171, 0
      %v5466 = vsel %vm576, %v5172, 0
      %v5468 = vsel %vm576, %v5173, 0
      %v5470 = vsel %vm576, %v5174, 0
      %v5472 = vsel %vm576, %v5175, 0
      %v5475 = vsel %vm625, %v5096, 0
      %5477 = vmatpush.bf16.msra.mxu0 0
      %5478 = vmatpush.bf16.msra.mxu0 0
      %5479 = vmatpush.bf16.msra.mxu0 0
      %5480 = vmatpush.bf16.msra.mxu0 0
      %5481 = vmatpush.bf16.msra.mxu0 0
      %5482 = vmatpush.bf16.msra.mxu0 0
      %5483 = vmatpush.bf16.msra.mxu0 0
      %5484 = vmatpush.bf16.msra.mxu0 %v5475
      %5485 = vmatmul.bf16.gmra.mxu0 %v5442
      %v5486 = vpop.f32.mrf.mxu0
      %v5487 = vadd.f32 %v5364, %v5486
      %v5488 = vpop.f32.mrf.mxu0
      %v5489 = vadd.f32 %v5366, %v5488
      %5490 = vmatmul.bf16.gmra.mxu0 %v5444
      %v5491 = vpop.f32.mrf.mxu0
      %v5492 = vadd.f32 %v5369, %v5491
      %v5493 = vpop.f32.mrf.mxu0
      %v5494 = vadd.f32 %v5371, %v5493
      %5495 = vmatmul.bf16.gmra.mxu0 %v5446
      %v5496 = vpop.f32.mrf.mxu0
      %v5497 = vadd.f32 %v5374, %v5496
      %v5498 = vpop.f32.mrf.mxu0
      %v5499 = vadd.f32 %v5376, %v5498
      %5500 = vmatmul.bf16.gmra.mxu0 %v5448
      %v5501 = vpop.f32.mrf.mxu0
      %v5502 = vadd.f32 %v5379, %v5501
      %v5503 = vpop.f32.mrf.mxu0
      %v5504 = vadd.f32 %v5381, %v5503
      %5505 = vmatmul.bf16.gmra.mxu0 %v5450
      %v5506 = vpop.f32.mrf.mxu0
      %v5507 = vadd.f32 %v5384, %v5506
      %v5508 = vpop.f32.mrf.mxu0
      %v5509 = vadd.f32 %v5386, %v5508
      %5510 = vmatmul.bf16.gmra.mxu0 %v5452
      %v5511 = vpop.f32.mrf.mxu0
      %v5512 = vadd.f32 %v5389, %v5511
      %v5513 = vpop.f32.mrf.mxu0
      %v5514 = vadd.f32 %v5391, %v5513
      %5515 = vmatmul.bf16.gmra.mxu0 %v5454
      %v5516 = vpop.f32.mrf.mxu0
      %v5517 = vadd.f32 %v5394, %v5516
      %v5518 = vpop.f32.mrf.mxu0
      %v5519 = vadd.f32 %v5396, %v5518
      %5520 = vmatmul.bf16.gmra.mxu0 %v5456
      %v5521 = vpop.f32.mrf.mxu0
      %v5522 = vadd.f32 %v5399, %v5521
      %v5523 = vpop.f32.mrf.mxu0
      %v5524 = vadd.f32 %v5401, %v5523
      %5525 = vmatmul.bf16.gmra.mxu0 %v5458
      %v5526 = vpop.f32.mrf.mxu0
      %v5527 = vadd.f32 %v5404, %v5526
      %v5528 = vpop.f32.mrf.mxu0
      %v5529 = vadd.f32 %v5406, %v5528
      %5530 = vmatmul.bf16.gmra.mxu0 %v5460
      %v5531 = vpop.f32.mrf.mxu0
      %v5532 = vadd.f32 %v5409, %v5531
      %v5533 = vpop.f32.mrf.mxu0
      %v5534 = vadd.f32 %v5411, %v5533
      %5535 = vmatmul.bf16.gmra.mxu0 %v5462
      %v5536 = vpop.f32.mrf.mxu0
      %v5537 = vadd.f32 %v5414, %v5536
      %v5538 = vpop.f32.mrf.mxu0
      %v5539 = vadd.f32 %v5416, %v5538
      %5540 = vmatmul.bf16.gmra.mxu0 %v5464
      %v5541 = vpop.f32.mrf.mxu0
      %v5542 = vadd.f32 %v5419, %v5541
      %v5543 = vpop.f32.mrf.mxu0
      %v5544 = vadd.f32 %v5421, %v5543
      %5545 = vmatmul.bf16.gmra.mxu0 %v5466
      %v5546 = vpop.f32.mrf.mxu0
      %v5547 = vadd.f32 %v5424, %v5546
      %v5548 = vpop.f32.mrf.mxu0
      %v5549 = vadd.f32 %v5426, %v5548
      %5550 = vmatmul.bf16.gmra.mxu0 %v5468
      %v5551 = vpop.f32.mrf.mxu0
      %v5552 = vadd.f32 %v5429, %v5551
      %v5553 = vpop.f32.mrf.mxu0
      %v5554 = vadd.f32 %v5431, %v5553
      %5555 = vmatmul.bf16.gmra.mxu0 %v5470
      %v5556 = vpop.f32.mrf.mxu0
      %v5557 = vadd.f32 %v5434, %v5556
      %v5558 = vpop.f32.mrf.mxu0
      %v5559 = vadd.f32 %v5436, %v5558
      %5560 = vmatmul.bf16.gmra.mxu0 %v5472
      %v5561 = vpop.f32.mrf.mxu0
      %v5562 = vadd.f32 %v5439, %v5561
      %v5563 = vpop.f32.mrf.mxu0
      %5564 = vdwg.mxu0
      %v5565 = vld [vmem:[%s840] sm:$0xf]
      %v5566 = vrot.slane %v5160, 1
      %v5567 = vrot.slane %v5161, 1
      %v5568 = vsel %vm842, %v5566, %v5567
      %v5569 = vrot.slane %v5162, 1
      %v5570 = vsel %vm842, %v5567, %v5569
      %v5571 = vrot.slane %v5163, 1
      %v5572 = vsel %vm842, %v5569, %v5571
      %v5573 = vrot.slane %v5164, 1
      %v5574 = vsel %vm842, %v5571, %v5573
      %v5575 = vrot.slane %v5165, 1
      %v5576 = vsel %vm842, %v5573, %v5575
      %v5577 = vrot.slane %v5166, 1
      %v5578 = vsel %vm842, %v5575, %v5577
      %v5579 = vrot.slane %v5167, 1
      %v5580 = vsel %vm842, %v5577, %v5579
      %v5581 = vrot.slane %v5168, 1
      %v5582 = vsel %vm842, %v5579, %v5581
      %v5583 = vrot.slane %v5169, 1
      %v5584 = vsel %vm842, %v5581, %v5583
      %v5585 = vrot.slane %v5170, 1
      %v5586 = vsel %vm842, %v5583, %v5585
      %v5587 = vrot.slane %v5171, 1
      %v5588 = vsel %vm842, %v5585, %v5587
      %v5589 = vrot.slane %v5172, 1
      %v5590 = vsel %vm842, %v5587, %v5589
      %v5591 = vrot.slane %v5173, 1
      %v5592 = vsel %vm842, %v5589, %v5591
      %v5593 = vrot.slane %v5174, 1
      %v5594 = vsel %vm842, %v5591, %v5593
      %v5595 = vrot.slane %v5175, 1
      %v5596 = vsel %vm842, %v5593, %v5595
      %v5598 = vsel %vm576, %v5568, 0
      %v5601 = vsel %vm576, %v5570, 0
      %v5604 = vsel %vm576, %v5572, 0
      %v5607 = vsel %vm576, %v5574, 0
      %v5610 = vsel %vm576, %v5576, 0
      %v5613 = vsel %vm576, %v5578, 0
      %v5616 = vsel %vm576, %v5580, 0
      %v5619 = vsel %vm576, %v5582, 0
      %v5622 = vsel %vm576, %v5584, 0
      %v5625 = vsel %vm576, %v5586, 0
      %v5628 = vsel %vm576, %v5588, 0
      %v5631 = vsel %vm576, %v5590, 0
      %v5634 = vsel %vm576, %v5592, 0
      %v5637 = vsel %vm576, %v5594, 0
      %v5640 = vsel %vm576, %v5596, 0
      %v5643 = vsel %vm576, %v5595, 0
      %v5646 = vsel %vm625, %v5565, 0
      %5648 = vmatpush.bf16.msra.mxu0 0
      %5649 = vmatpush.bf16.msra.mxu0 0
      %5650 = vmatpush.bf16.msra.mxu0 0
      %5651 = vmatpush.bf16.msra.mxu0 0
      %5652 = vmatpush.bf16.msra.mxu0 0
      %5653 = vmatpush.bf16.msra.mxu0 0
      %5654 = vmatpush.bf16.msra.mxu0 0
      %5655 = vmatpush.bf16.msra.mxu0 %v5646
      %5656 = vmatmul.bf16.gmra.mxu0 %v5598
      %v5657 = vpop.f32.mrf.mxu0
      %v5658 = vadd.f32 0.0, %v5657
      %v5659 = vpop.f32.mrf.mxu0
      %v5660 = vadd.f32 0.0, %v5659
      %5661 = vmatmul.bf16.gmra.mxu0 %v5601
      %v5662 = vpop.f32.mrf.mxu0
      %v5663 = vadd.f32 0.0, %v5662
      %v5664 = vpop.f32.mrf.mxu0
      %v5665 = vadd.f32 0.0, %v5664
      %5666 = vmatmul.bf16.gmra.mxu0 %v5604
      %v5667 = vpop.f32.mrf.mxu0
      %v5668 = vadd.f32 0.0, %v5667
      %v5669 = vpop.f32.mrf.mxu0
      %v5670 = vadd.f32 0.0, %v5669
      %5671 = vmatmul.bf16.gmra.mxu0 %v5607
      %v5672 = vpop.f32.mrf.mxu0
      %v5673 = vadd.f32 0.0, %v5672
      %v5674 = vpop.f32.mrf.mxu0
      %v5675 = vadd.f32 0.0, %v5674
      %5676 = vmatmul.bf16.gmra.mxu0 %v5610
      %v5677 = vpop.f32.mrf.mxu0
      %v5678 = vadd.f32 0.0, %v5677
      %v5679 = vpop.f32.mrf.mxu0
      %v5680 = vadd.f32 0.0, %v5679
      %5681 = vmatmul.bf16.gmra.mxu0 %v5613
      %v5682 = vpop.f32.mrf.mxu0
      %v5683 = vadd.f32 0.0, %v5682
      %v5684 = vpop.f32.mrf.mxu0
      %v5685 = vadd.f32 0.0, %v5684
      %5686 = vmatmul.bf16.gmra.mxu0 %v5616
      %v5687 = vpop.f32.mrf.mxu0
      %v5688 = vadd.f32 0.0, %v5687
      %v5689 = vpop.f32.mrf.mxu0
      %v5690 = vadd.f32 0.0, %v5689
      %5691 = vmatmul.bf16.gmra.mxu0 %v5619
      %v5692 = vpop.f32.mrf.mxu0
      %v5693 = vadd.f32 0.0, %v5692
      %v5694 = vpop.f32.mrf.mxu0
      %v5695 = vadd.f32 0.0, %v5694
      %5696 = vmatmul.bf16.gmra.mxu0 %v5622
      %v5697 = vpop.f32.mrf.mxu0
      %v5698 = vadd.f32 0.0, %v5697
      %v5699 = vpop.f32.mrf.mxu0
      %v5700 = vadd.f32 0.0, %v5699
      %5701 = vmatmul.bf16.gmra.mxu0 %v5625
      %v5702 = vpop.f32.mrf.mxu0
      %v5703 = vadd.f32 0.0, %v5702
      %v5704 = vpop.f32.mrf.mxu0
      %v5705 = vadd.f32 0.0, %v5704
      %5706 = vmatmul.bf16.gmra.mxu0 %v5628
      %v5707 = vpop.f32.mrf.mxu0
      %v5708 = vadd.f32 0.0, %v5707
      %v5709 = vpop.f32.mrf.mxu0
      %v5710 = vadd.f32 0.0, %v5709
      %5711 = vmatmul.bf16.gmra.mxu0 %v5631
      %v5712 = vpop.f32.mrf.mxu0
      %v5713 = vadd.f32 0.0, %v5712
      %v5714 = vpop.f32.mrf.mxu0
      %v5715 = vadd.f32 0.0, %v5714
      %5716 = vmatmul.bf16.gmra.mxu0 %v5634
      %v5717 = vpop.f32.mrf.mxu0
      %v5718 = vadd.f32 0.0, %v5717
      %v5719 = vpop.f32.mrf.mxu0
      %v5720 = vadd.f32 0.0, %v5719
      %5721 = vmatmul.bf16.gmra.mxu0 %v5637
      %v5722 = vpop.f32.mrf.mxu0
      %v5723 = vadd.f32 0.0, %v5722
      %v5724 = vpop.f32.mrf.mxu0
      %v5725 = vadd.f32 0.0, %v5724
      %5726 = vmatmul.bf16.gmra.mxu0 %v5640
      %v5727 = vpop.f32.mrf.mxu0
      %v5728 = vadd.f32 0.0, %v5727
      %v5729 = vpop.f32.mrf.mxu0
      %v5730 = vadd.f32 0.0, %v5729
      %5731 = vmatmul.bf16.gmra.mxu0 %v5643
      %v5732 = vpop.f32.mrf.mxu0
      %v5733 = vadd.f32 0.0, %v5732
      %v5734 = vpop.f32.mrf.mxu0
      %5735 = vdwg.mxu0
      %v5736 = vadd.f32 %v5487, %v5658
      %v5737 = vadd.f32 %v5489, %v5660
      %v5738 = vadd.f32 %v5492, %v5663
      %v5739 = vadd.f32 %v5494, %v5665
      %v5740 = vadd.f32 %v5497, %v5668
      %v5741 = vadd.f32 %v5499, %v5670
      %v5742 = vadd.f32 %v5502, %v5673
      %v5743 = vadd.f32 %v5504, %v5675
      %v5744 = vadd.f32 %v5507, %v5678
      %v5745 = vadd.f32 %v5509, %v5680
      %v5746 = vadd.f32 %v5512, %v5683
      %v5747 = vadd.f32 %v5514, %v5685
      %v5748 = vadd.f32 %v5517, %v5688
      %v5749 = vadd.f32 %v5519, %v5690
      %v5750 = vadd.f32 %v5522, %v5693
      %v5751 = vadd.f32 %v5524, %v5695
      %v5752 = vadd.f32 %v5527, %v5698
      %v5753 = vadd.f32 %v5529, %v5700
      %v5754 = vadd.f32 %v5532, %v5703
      %v5755 = vadd.f32 %v5534, %v5705
      %v5756 = vadd.f32 %v5537, %v5708
      %v5757 = vadd.f32 %v5539, %v5710
      %v5758 = vadd.f32 %v5542, %v5713
      %v5759 = vadd.f32 %v5544, %v5715
      %v5760 = vadd.f32 %v5547, %v5718
      %v5761 = vadd.f32 %v5549, %v5720
      %v5762 = vadd.f32 %v5552, %v5723
      %v5763 = vadd.f32 %v5554, %v5725
      %v5764 = vadd.f32 %v5557, %v5728
      %v5765 = vadd.f32 %v5559, %v5730
      %v5766 = vadd.f32 %v5562, %v5733
      %v5767 = vld [vmem:[%s4175] sm:$0xf]
      %v5768 = vld [vmem:[%s4175 + $0x4] sm:$0xf]
      %v5769 = vld [vmem:[%s4175 + $0x8] sm:$0xf]
      %v5770 = vld [vmem:[%s4175 + $0xc] sm:$0xf]
      %v5771 = vld [vmem:[%s4175 + $0x10] sm:$0xf]
      %v5772 = vld [vmem:[%s4175 + $0x14] sm:$0xf]
      %v5773 = vld [vmem:[%s4175 + $0x18] sm:$0xf]
      %v5774 = vld [vmem:[%s4175 + $0x1c] sm:$0xf]
      %v5775 = vld [vmem:[%s4175 + $0x20] sm:$0xf]
      %v5776 = vld [vmem:[%s4175 + $0x24] sm:$0xf]
      %v5777 = vld [vmem:[%s4175 + $0x28] sm:$0xf]
      %v5778 = vld [vmem:[%s4175 + $0x2c] sm:$0xf]
      %v5779 = vld [vmem:[%s4175 + $0x30] sm:$0xf]
      %v5780 = vld [vmem:[%s4175 + $0x34] sm:$0xf]
      %v5781 = vld [vmem:[%s4175 + $0x38] sm:$0xf]
      %v5782 = vld [vmem:[%s4175 + $0x3c] sm:$0xf]
      %v5783 = vld [vmem:[%s4175 + $0x40] sm:$0xf]
      %v5784 = vld [vmem:[%s4175 + $0x44] sm:$0xf]
      %v5785 = vld [vmem:[%s4175 + $0x48] sm:$0xf]
      %v5786 = vld [vmem:[%s4175 + $0x4c] sm:$0xf]
      %v5787 = vld [vmem:[%s4175 + $0x50] sm:$0xf]
      %v5788 = vld [vmem:[%s4175 + $0x54] sm:$0xf]
      %v5789 = vld [vmem:[%s4175 + $0x58] sm:$0xf]
      %v5790 = vld [vmem:[%s4175 + $0x5c] sm:$0xf]
      %v5791 = vld [vmem:[%s4175 + $0x60] sm:$0xf]
      %v5792 = vld [vmem:[%s4175 + $0x64] sm:$0xf]
      %v5793 = vld [vmem:[%s4175 + $0x68] sm:$0xf]
      %v5794 = vld [vmem:[%s4175 + $0x6c] sm:$0xf]
      %v5795 = vld [vmem:[%s4175 + $0x70] sm:$0xf]
      %v5796 = vld [vmem:[%s4175 + $0x74] sm:$0xf]
      %v5797 = vld [vmem:[%s4175 + $0x78] sm:$0x7]
      %v5798 = vld [vmem:[%s1076] sm:$0xf]
      %v5830 = vunpack.c.l.b16 %v5767
      %v5831 = vunpack.c.l.b16 %v5768
      %v5832 = vunpack.c.l.b16 %v5769
      %v5833 = vunpack.c.l.b16 %v5770
      %v5834 = vunpack.c.l.b16 %v5771
      %v5835 = vunpack.c.l.b16 %v5772
      %v5836 = vunpack.c.l.b16 %v5773
      %v5837 = vunpack.c.l.b16 %v5774
      %v5838 = vunpack.c.l.b16 %v5775
      %v5839 = vunpack.c.l.b16 %v5776
      %v5840 = vunpack.c.l.b16 %v5777
      %v5841 = vunpack.c.l.b16 %v5778
      %v5842 = vunpack.c.l.b16 %v5779
      %v5843 = vunpack.c.l.b16 %v5780
      %v5844 = vunpack.c.l.b16 %v5781
      %v5845 = vunpack.c.l.b16 %v5782
      %v5846 = vunpack.c.l.b16 %v5783
      %v5847 = vunpack.c.l.b16 %v5784
      %v5848 = vunpack.c.l.b16 %v5785
      %v5849 = vunpack.c.l.b16 %v5786
      %v5850 = vunpack.c.l.b16 %v5787
      %v5851 = vunpack.c.l.b16 %v5788
      %v5852 = vunpack.c.l.b16 %v5789
      %v5853 = vunpack.c.l.b16 %v5790
      %v5854 = vunpack.c.l.b16 %v5791
      %v5855 = vunpack.c.l.b16 %v5792
      %v5856 = vunpack.c.l.b16 %v5793
      %v5857 = vunpack.c.l.b16 %v5794
      %v5858 = vunpack.c.l.b16 %v5795
      %v5859 = vunpack.c.l.b16 %v5796
      %v5860 = vunpack.c.l.b16 %v5797
      %v5861 = vpack.c.b16 %v5831, %v5830
      %v5862 = vpack.c.b16 %v5833, %v5832
      %v5863 = vpack.c.b16 %v5835, %v5834
      %v5864 = vpack.c.b16 %v5837, %v5836
      %v5865 = vpack.c.b16 %v5839, %v5838
      %v5866 = vpack.c.b16 %v5841, %v5840
      %v5867 = vpack.c.b16 %v5843, %v5842
      %v5868 = vpack.c.b16 %v5845, %v5844
      %v5869 = vpack.c.b16 %v5847, %v5846
      %v5870 = vpack.c.b16 %v5849, %v5848
      %v5871 = vpack.c.b16 %v5851, %v5850
      %v5872 = vpack.c.b16 %v5853, %v5852
      %v5873 = vpack.c.b16 %v5855, %v5854
      %v5874 = vpack.c.b16 %v5857, %v5856
      %v5875 = vpack.c.b16 %v5859, %v5858
      %v5876 = vpack.c.b16 %v5860, %v5860
      %v5878 = vsel %vm576, %v5861, 0
      %v5881 = vsel %vm576, %v5862, 0
      %v5884 = vsel %vm576, %v5863, 0
      %v5887 = vsel %vm576, %v5864, 0
      %v5890 = vsel %vm576, %v5865, 0
      %v5893 = vsel %vm576, %v5866, 0
      %v5896 = vsel %vm576, %v5867, 0
      %v5899 = vsel %vm576, %v5868, 0
      %v5902 = vsel %vm576, %v5869, 0
      %v5905 = vsel %vm576, %v5870, 0
      %v5908 = vsel %vm576, %v5871, 0
      %v5911 = vsel %vm576, %v5872, 0
      %v5914 = vsel %vm576, %v5873, 0
      %v5917 = vsel %vm576, %v5874, 0
      %v5920 = vsel %vm576, %v5875, 0
      %v5923 = vsel %vm576, %v5876, 0
      %v5926 = vsel %vm625, %v5798, 0
      %5928 = vmatpush.bf16.msra.mxu0 0
      %5929 = vmatpush.bf16.msra.mxu0 0
      %5930 = vmatpush.bf16.msra.mxu0 0
      %5931 = vmatpush.bf16.msra.mxu0 0
      %5932 = vmatpush.bf16.msra.mxu0 0
      %5933 = vmatpush.bf16.msra.mxu0 0
      %5934 = vmatpush.bf16.msra.mxu0 0
      %5935 = vmatpush.bf16.msra.mxu0 %v5926
      %5936 = vmatmul.bf16.gmra.mxu0 %v5878
      %v5937 = vpop.f32.mrf.mxu0
      %v5938 = vadd.f32 0.0, %v5937
      %v5939 = vpop.f32.mrf.mxu0
      %v5940 = vadd.f32 0.0, %v5939
      %5941 = vmatmul.bf16.gmra.mxu0 %v5881
      %v5942 = vpop.f32.mrf.mxu0
      %v5943 = vadd.f32 0.0, %v5942
      %v5944 = vpop.f32.mrf.mxu0
      %v5945 = vadd.f32 0.0, %v5944
      %5946 = vmatmul.bf16.gmra.mxu0 %v5884
      %v5947 = vpop.f32.mrf.mxu0
      %v5948 = vadd.f32 0.0, %v5947
      %v5949 = vpop.f32.mrf.mxu0
      %v5950 = vadd.f32 0.0, %v5949
      %5951 = vmatmul.bf16.gmra.mxu0 %v5887
      %v5952 = vpop.f32.mrf.mxu0
      %v5953 = vadd.f32 0.0, %v5952
      %v5954 = vpop.f32.mrf.mxu0
      %v5955 = vadd.f32 0.0, %v5954
      %5956 = vmatmul.bf16.gmra.mxu0 %v5890
      %v5957 = vpop.f32.mrf.mxu0
      %v5958 = vadd.f32 0.0, %v5957
      %v5959 = vpop.f32.mrf.mxu0
      %v5960 = vadd.f32 0.0, %v5959
      %5961 = vmatmul.bf16.gmra.mxu0 %v5893
      %v5962 = vpop.f32.mrf.mxu0
      %v5963 = vadd.f32 0.0, %v5962
      %v5964 = vpop.f32.mrf.mxu0
      %v5965 = vadd.f32 0.0, %v5964
      %5966 = vmatmul.bf16.gmra.mxu0 %v5896
      %v5967 = vpop.f32.mrf.mxu0
      %v5968 = vadd.f32 0.0, %v5967
      %v5969 = vpop.f32.mrf.mxu0
      %v5970 = vadd.f32 0.0, %v5969
      %5971 = vmatmul.bf16.gmra.mxu0 %v5899
      %v5972 = vpop.f32.mrf.mxu0
      %v5973 = vadd.f32 0.0, %v5972
      %v5974 = vpop.f32.mrf.mxu0
      %v5975 = vadd.f32 0.0, %v5974
      %5976 = vmatmul.bf16.gmra.mxu0 %v5902
      %v5977 = vpop.f32.mrf.mxu0
      %v5978 = vadd.f32 0.0, %v5977
      %v5979 = vpop.f32.mrf.mxu0
      %v5980 = vadd.f32 0.0, %v5979
      %5981 = vmatmul.bf16.gmra.mxu0 %v5905
      %v5982 = vpop.f32.mrf.mxu0
      %v5983 = vadd.f32 0.0, %v5982
      %v5984 = vpop.f32.mrf.mxu0
      %v5985 = vadd.f32 0.0, %v5984
      %5986 = vmatmul.bf16.gmra.mxu0 %v5908
      %v5987 = vpop.f32.mrf.mxu0
      %v5988 = vadd.f32 0.0, %v5987
      %v5989 = vpop.f32.mrf.mxu0
      %v5990 = vadd.f32 0.0, %v5989
      %5991 = vmatmul.bf16.gmra.mxu0 %v5911
      %v5992 = vpop.f32.mrf.mxu0
      %v5993 = vadd.f32 0.0, %v5992
      %v5994 = vpop.f32.mrf.mxu0
      %v5995 = vadd.f32 0.0, %v5994
      %5996 = vmatmul.bf16.gmra.mxu0 %v5914
      %v5997 = vpop.f32.mrf.mxu0
      %v5998 = vadd.f32 0.0, %v5997
      %v5999 = vpop.f32.mrf.mxu0
      %v6000 = vadd.f32 0.0, %v5999
      %6001 = vmatmul.bf16.gmra.mxu0 %v5917
      %v6002 = vpop.f32.mrf.mxu0
      %v6003 = vadd.f32 0.0, %v6002
      %v6004 = vpop.f32.mrf.mxu0
      %v6005 = vadd.f32 0.0, %v6004
      %6006 = vmatmul.bf16.gmra.mxu0 %v5920
      %v6007 = vpop.f32.mrf.mxu0
      %v6008 = vadd.f32 0.0, %v6007
      %v6009 = vpop.f32.mrf.mxu0
      %v6010 = vadd.f32 0.0, %v6009
      %6011 = vmatmul.bf16.gmra.mxu0 %v5923
      %v6012 = vpop.f32.mrf.mxu0
      %v6013 = vadd.f32 0.0, %v6012
      %v6014 = vpop.f32.mrf.mxu0
      %6015 = vdwg.mxu0
      %v6016 = vadd.f32 %v5736, %v5938
      %v6017 = vadd.f32 %v5737, %v5940
      %v6018 = vadd.f32 %v5738, %v5943
      %v6019 = vadd.f32 %v5739, %v5945
      %v6020 = vadd.f32 %v5740, %v5948
      %v6021 = vadd.f32 %v5741, %v5950
      %v6022 = vadd.f32 %v5742, %v5953
      %v6023 = vadd.f32 %v5743, %v5955
      %v6024 = vadd.f32 %v5744, %v5958
      %v6025 = vadd.f32 %v5745, %v5960
      %v6026 = vadd.f32 %v5746, %v5963
      %v6027 = vadd.f32 %v5747, %v5965
      %v6028 = vadd.f32 %v5748, %v5968
      %v6029 = vadd.f32 %v5749, %v5970
      %v6030 = vadd.f32 %v5750, %v5973
      %v6031 = vadd.f32 %v5751, %v5975
      %v6032 = vadd.f32 %v5752, %v5978
      %v6033 = vadd.f32 %v5753, %v5980
      %v6034 = vadd.f32 %v5754, %v5983
      %v6035 = vadd.f32 %v5755, %v5985
      %v6036 = vadd.f32 %v5756, %v5988
      %v6037 = vadd.f32 %v5757, %v5990
      %v6038 = vadd.f32 %v5758, %v5993
      %v6039 = vadd.f32 %v5759, %v5995
      %v6040 = vadd.f32 %v5760, %v5998
      %v6041 = vadd.f32 %v5761, %v6000
      %v6042 = vadd.f32 %v5762, %v6003
      %v6043 = vadd.f32 %v5763, %v6005
      %v6044 = vadd.f32 %v5764, %v6008
      %v6045 = vadd.f32 %v5765, %v6010
      %v6046 = vadd.f32 %v5766, %v6013
      %v6047 = vld [vmem:[%s1326] sm:$0xf]
      %v6048 = vshrl.u32 %v5861, 16
      %v6050 = vshll.u32 %v5861, 16
      %v6052 = vrot.slane %v6050, 1
      %v6053 = vor.u32 %v6048, %v6052
      %v6054 = vshll.u32 %v5862, 16
      %v6056 = vrot.slane %v6054, 1
      %v6057 = vsel %vm448, %v6053, %v6056
      %v6058 = vshrl.u32 %v5862, 16
      %v6060 = vor.u32 %v6058, %v6056
      %v6061 = vshll.u32 %v5863, 16
      %v6063 = vrot.slane %v6061, 1
      %v6064 = vsel %vm448, %v6060, %v6063
      %v6065 = vshrl.u32 %v5863, 16
      %v6067 = vor.u32 %v6065, %v6063
      %v6068 = vshll.u32 %v5864, 16
      %v6070 = vrot.slane %v6068, 1
      %v6071 = vsel %vm448, %v6067, %v6070
      %v6072 = vshrl.u32 %v5864, 16
      %v6074 = vor.u32 %v6072, %v6070
      %v6075 = vshll.u32 %v5865, 16
      %v6077 = vrot.slane %v6075, 1
      %v6078 = vsel %vm448, %v6074, %v6077
      %v6079 = vshrl.u32 %v5865, 16
      %v6081 = vor.u32 %v6079, %v6077
      %v6082 = vshll.u32 %v5866, 16
      %v6084 = vrot.slane %v6082, 1
      %v6085 = vsel %vm448, %v6081, %v6084
      %v6086 = vshrl.u32 %v5866, 16
      %v6088 = vor.u32 %v6086, %v6084
      %v6089 = vshll.u32 %v5867, 16
      %v6091 = vrot.slane %v6089, 1
      %v6092 = vsel %vm448, %v6088, %v6091
      %v6093 = vshrl.u32 %v5867, 16
      %v6095 = vor.u32 %v6093, %v6091
      %v6096 = vshll.u32 %v5868, 16
      %v6098 = vrot.slane %v6096, 1
      %v6099 = vsel %vm448, %v6095, %v6098
      %v6100 = vshrl.u32 %v5868, 16
      %v6102 = vor.u32 %v6100, %v6098
      %v6103 = vshll.u32 %v5869, 16
      %v6105 = vrot.slane %v6103, 1
      %v6106 = vsel %vm448, %v6102, %v6105
      %v6107 = vshrl.u32 %v5869, 16
      %v6109 = vor.u32 %v6107, %v6105
      %v6110 = vshll.u32 %v5870, 16
      %v6112 = vrot.slane %v6110, 1
      %v6113 = vsel %vm448, %v6109, %v6112
      %v6114 = vshrl.u32 %v5870, 16
      %v6116 = vor.u32 %v6114, %v6112
      %v6117 = vshll.u32 %v5871, 16
      %v6119 = vrot.slane %v6117, 1
      %v6120 = vsel %vm448, %v6116, %v6119
      %v6121 = vshrl.u32 %v5871, 16
      %v6123 = vor.u32 %v6121, %v6119
      %v6124 = vshll.u32 %v5872, 16
      %v6126 = vrot.slane %v6124, 1
      %v6127 = vsel %vm448, %v6123, %v6126
      %v6128 = vshrl.u32 %v5872, 16
      %v6130 = vor.u32 %v6128, %v6126
      %v6131 = vshll.u32 %v5873, 16
      %v6133 = vrot.slane %v6131, 1
      %v6134 = vsel %vm448, %v6130, %v6133
      %v6135 = vshrl.u32 %v5873, 16
      %v6137 = vor.u32 %v6135, %v6133
      %v6138 = vshll.u32 %v5874, 16
      %v6140 = vrot.slane %v6138, 1
      %v6141 = vsel %vm448, %v6137, %v6140
      %v6142 = vshrl.u32 %v5874, 16
      %v6144 = vor.u32 %v6142, %v6140
      %v6145 = vshll.u32 %v5875, 16
      %v6147 = vrot.slane %v6145, 1
      %v6148 = vsel %vm448, %v6144, %v6147
      %v6149 = vshrl.u32 %v5875, 16
      %v6151 = vor.u32 %v6149, %v6147
      %v6152 = vshll.u32 %v5876, 16
      %v6154 = vrot.slane %v6152, 1
      %v6155 = vsel %vm448, %v6151, %v6154
      %v6156 = vshrl.u32 %v5876, 16
      %v6158 = vor.u32 %v6156, %v6154
      %v6160 = vsel %vm576, %v6057, 0
      %v6163 = vsel %vm576, %v6064, 0
      %v6166 = vsel %vm576, %v6071, 0
      %v6169 = vsel %vm576, %v6078, 0
      %v6172 = vsel %vm576, %v6085, 0
      %v6175 = vsel %vm576, %v6092, 0
      %v6178 = vsel %vm576, %v6099, 0
      %v6181 = vsel %vm576, %v6106, 0
      %v6184 = vsel %vm576, %v6113, 0
      %v6187 = vsel %vm576, %v6120, 0
      %v6190 = vsel %vm576, %v6127, 0
      %v6193 = vsel %vm576, %v6134, 0
      %v6196 = vsel %vm576, %v6141, 0
      %v6199 = vsel %vm576, %v6148, 0
      %v6202 = vsel %vm576, %v6155, 0
      %v6205 = vsel %vm576, %v6158, 0
      %v6208 = vsel %vm625, %v6047, 0
      %6210 = vmatpush.bf16.msra.mxu0 0
      %6211 = vmatpush.bf16.msra.mxu0 0
      %6212 = vmatpush.bf16.msra.mxu0 0
      %6213 = vmatpush.bf16.msra.mxu0 0
      %6214 = vmatpush.bf16.msra.mxu0 0
      %6215 = vmatpush.bf16.msra.mxu0 0
      %6216 = vmatpush.bf16.msra.mxu0 0
      %6217 = vmatpush.bf16.msra.mxu0 %v6208
      %6218 = vmatmul.bf16.gmra.mxu0 %v6160
      %v6219 = vpop.f32.mrf.mxu0
      %v6220 = vadd.f32 0.0, %v6219
      %v6221 = vpop.f32.mrf.mxu0
      %v6222 = vadd.f32 0.0, %v6221
      %6223 = vmatmul.bf16.gmra.mxu0 %v6163
      %v6224 = vpop.f32.mrf.mxu0
      %v6225 = vadd.f32 0.0, %v6224
      %v6226 = vpop.f32.mrf.mxu0
      %v6227 = vadd.f32 0.0, %v6226
      %6228 = vmatmul.bf16.gmra.mxu0 %v6166
      %v6229 = vpop.f32.mrf.mxu0
      %v6230 = vadd.f32 0.0, %v6229
      %v6231 = vpop.f32.mrf.mxu0
      %v6232 = vadd.f32 0.0, %v6231
      %6233 = vmatmul.bf16.gmra.mxu0 %v6169
      %v6234 = vpop.f32.mrf.mxu0
      %v6235 = vadd.f32 0.0, %v6234
      %v6236 = vpop.f32.mrf.mxu0
      %v6237 = vadd.f32 0.0, %v6236
      %6238 = vmatmul.bf16.gmra.mxu0 %v6172
      %v6239 = vpop.f32.mrf.mxu0
      %v6240 = vadd.f32 0.0, %v6239
      %v6241 = vpop.f32.mrf.mxu0
      %v6242 = vadd.f32 0.0, %v6241
      %6243 = vmatmul.bf16.gmra.mxu0 %v6175
      %v6244 = vpop.f32.mrf.mxu0
      %v6245 = vadd.f32 0.0, %v6244
      %v6246 = vpop.f32.mrf.mxu0
      %v6247 = vadd.f32 0.0, %v6246
      %6248 = vmatmul.bf16.gmra.mxu0 %v6178
      %v6249 = vpop.f32.mrf.mxu0
      %v6250 = vadd.f32 0.0, %v6249
      %v6251 = vpop.f32.mrf.mxu0
      %v6252 = vadd.f32 0.0, %v6251
      %6253 = vmatmul.bf16.gmra.mxu0 %v6181
      %v6254 = vpop.f32.mrf.mxu0
      %v6255 = vadd.f32 0.0, %v6254
      %v6256 = vpop.f32.mrf.mxu0
      %v6257 = vadd.f32 0.0, %v6256
      %6258 = vmatmul.bf16.gmra.mxu0 %v6184
      %v6259 = vpop.f32.mrf.mxu0
      %v6260 = vadd.f32 0.0, %v6259
      %v6261 = vpop.f32.mrf.mxu0
      %v6262 = vadd.f32 0.0, %v6261
      %6263 = vmatmul.bf16.gmra.mxu0 %v6187
      %v6264 = vpop.f32.mrf.mxu0
      %v6265 = vadd.f32 0.0, %v6264
      %v6266 = vpop.f32.mrf.mxu0
      %v6267 = vadd.f32 0.0, %v6266
      %6268 = vmatmul.bf16.gmra.mxu0 %v6190
      %v6269 = vpop.f32.mrf.mxu0
      %v6270 = vadd.f32 0.0, %v6269
      %v6271 = vpop.f32.mrf.mxu0
      %v6272 = vadd.f32 0.0, %v6271
      %6273 = vmatmul.bf16.gmra.mxu0 %v6193
      %v6274 = vpop.f32.mrf.mxu0
      %v6275 = vadd.f32 0.0, %v6274
      %v6276 = vpop.f32.mrf.mxu0
      %v6277 = vadd.f32 0.0, %v6276
      %6278 = vmatmul.bf16.gmra.mxu0 %v6196
      %v6279 = vpop.f32.mrf.mxu0
      %v6280 = vadd.f32 0.0, %v6279
      %v6281 = vpop.f32.mrf.mxu0
      %v6282 = vadd.f32 0.0, %v6281
      %6283 = vmatmul.bf16.gmra.mxu0 %v6199
      %v6284 = vpop.f32.mrf.mxu0
      %v6285 = vadd.f32 0.0, %v6284
      %v6286 = vpop.f32.mrf.mxu0
      %v6287 = vadd.f32 0.0, %v6286
      %6288 = vmatmul.bf16.gmra.mxu0 %v6202
      %v6289 = vpop.f32.mrf.mxu0
      %v6290 = vadd.f32 0.0, %v6289
      %v6291 = vpop.f32.mrf.mxu0
      %v6292 = vadd.f32 0.0, %v6291
      %6293 = vmatmul.bf16.gmra.mxu0 %v6205
      %v6294 = vpop.f32.mrf.mxu0
      %v6295 = vadd.f32 0.0, %v6294
      %v6296 = vpop.f32.mrf.mxu0
      %6297 = vdwg.mxu0
      %v6298 = vadd.f32 %v6016, %v6220
      %v6299 = vadd.f32 %v6017, %v6222
      %v6300 = vadd.f32 %v6018, %v6225
      %v6301 = vadd.f32 %v6019, %v6227
      %v6302 = vadd.f32 %v6020, %v6230
      %v6303 = vadd.f32 %v6021, %v6232
      %v6304 = vadd.f32 %v6022, %v6235
      %v6305 = vadd.f32 %v6023, %v6237
      %v6306 = vadd.f32 %v6024, %v6240
      %v6307 = vadd.f32 %v6025, %v6242
      %v6308 = vadd.f32 %v6026, %v6245
      %v6309 = vadd.f32 %v6027, %v6247
      %v6310 = vadd.f32 %v6028, %v6250
      %v6311 = vadd.f32 %v6029, %v6252
      %v6312 = vadd.f32 %v6030, %v6255
      %v6313 = vadd.f32 %v6031, %v6257
      %v6314 = vadd.f32 %v6032, %v6260
      %v6315 = vadd.f32 %v6033, %v6262
      %v6316 = vadd.f32 %v6034, %v6265
      %v6317 = vadd.f32 %v6035, %v6267
      %v6318 = vadd.f32 %v6036, %v6270
      %v6319 = vadd.f32 %v6037, %v6272
      %v6320 = vadd.f32 %v6038, %v6275
      %v6321 = vadd.f32 %v6039, %v6277
      %v6322 = vadd.f32 %v6040, %v6280
      %v6323 = vadd.f32 %v6041, %v6282
      %v6324 = vadd.f32 %v6042, %v6285
      %v6325 = vadd.f32 %v6043, %v6287
      %v6326 = vadd.f32 %v6044, %v6290
      %v6327 = vadd.f32 %v6045, %v6292
      %v6328 = vadd.f32 %v6046, %v6295
      %v6329 = vld [vmem:[%s1609] sm:$0xf]
      %v6330 = vrot.slane %v5861, 1
      %v6331 = vrot.slane %v5862, 1
      %v6332 = vsel %vm842, %v6330, %v6331
      %v6333 = vrot.slane %v5863, 1
      %v6334 = vsel %vm842, %v6331, %v6333
      %v6335 = vrot.slane %v5864, 1
      %v6336 = vsel %vm842, %v6333, %v6335
      %v6337 = vrot.slane %v5865, 1
      %v6338 = vsel %vm842, %v6335, %v6337
      %v6339 = vrot.slane %v5866, 1
      %v6340 = vsel %vm842, %v6337, %v6339
      %v6341 = vrot.slane %v5867, 1
      %v6342 = vsel %vm842, %v6339, %v6341
      %v6343 = vrot.slane %v5868, 1
      %v6344 = vsel %vm842, %v6341, %v6343
      %v6345 = vrot.slane %v5869, 1
      %v6346 = vsel %vm842, %v6343, %v6345
      %v6347 = vrot.slane %v5870, 1
      %v6348 = vsel %vm842, %v6345, %v6347
      %v6349 = vrot.slane %v5871, 1
      %v6350 = vsel %vm842, %v6347, %v6349
      %v6351 = vrot.slane %v5872, 1
      %v6352 = vsel %vm842, %v6349, %v6351
      %v6353 = vrot.slane %v5873, 1
      %v6354 = vsel %vm842, %v6351, %v6353
      %v6355 = vrot.slane %v5874, 1
      %v6356 = vsel %vm842, %v6353, %v6355
      %v6357 = vrot.slane %v5875, 1
      %v6358 = vsel %vm842, %v6355, %v6357
      %v6359 = vrot.slane %v5876, 1
      %v6360 = vsel %vm842, %v6357, %v6359
      %v6362 = vsel %vm576, %v6332, 0
      %v6365 = vsel %vm576, %v6334, 0
      %v6368 = vsel %vm576, %v6336, 0
      %v6371 = vsel %vm576, %v6338, 0
      %v6374 = vsel %vm576, %v6340, 0
      %v6377 = vsel %vm576, %v6342, 0
      %v6380 = vsel %vm576, %v6344, 0
      %v6383 = vsel %vm576, %v6346, 0
      %v6386 = vsel %vm576, %v6348, 0
      %v6389 = vsel %vm576, %v6350, 0
      %v6392 = vsel %vm576, %v6352, 0
      %v6395 = vsel %vm576, %v6354, 0
      %v6398 = vsel %vm576, %v6356, 0
      %v6401 = vsel %vm576, %v6358, 0
      %v6404 = vsel %vm576, %v6360, 0
      %v6407 = vsel %vm576, %v6359, 0
      %v6410 = vsel %vm625, %v6329, 0
      %6412 = vmatpush.bf16.msra.mxu0 0
      %6413 = vmatpush.bf16.msra.mxu0 0
      %6414 = vmatpush.bf16.msra.mxu0 0
      %6415 = vmatpush.bf16.msra.mxu0 0
      %6416 = vmatpush.bf16.msra.mxu0 0
      %6417 = vmatpush.bf16.msra.mxu0 0
      %6418 = vmatpush.bf16.msra.mxu0 0
      %6419 = vmatpush.bf16.msra.mxu0 %v6410
      %6420 = vmatmul.bf16.gmra.mxu0 %v6362
      %v6421 = vpop.f32.mrf.mxu0
      %v6422 = vadd.f32 0.0, %v6421
      %v6423 = vpop.f32.mrf.mxu0
      %v6424 = vadd.f32 0.0, %v6423
      %6425 = vmatmul.bf16.gmra.mxu0 %v6365
      %v6426 = vpop.f32.mrf.mxu0
      %v6427 = vadd.f32 0.0, %v6426
      %v6428 = vpop.f32.mrf.mxu0
      %v6429 = vadd.f32 0.0, %v6428
      %6430 = vmatmul.bf16.gmra.mxu0 %v6368
      %v6431 = vpop.f32.mrf.mxu0
      %v6432 = vadd.f32 0.0, %v6431
      %v6433 = vpop.f32.mrf.mxu0
      %v6434 = vadd.f32 0.0, %v6433
      %6435 = vmatmul.bf16.gmra.mxu0 %v6371
      %v6436 = vpop.f32.mrf.mxu0
      %v6437 = vadd.f32 0.0, %v6436
      %v6438 = vpop.f32.mrf.mxu0
      %v6439 = vadd.f32 0.0, %v6438
      %6440 = vmatmul.bf16.gmra.mxu0 %v6374
      %v6441 = vpop.f32.mrf.mxu0
      %v6442 = vadd.f32 0.0, %v6441
      %v6443 = vpop.f32.mrf.mxu0
      %v6444 = vadd.f32 0.0, %v6443
      %6445 = vmatmul.bf16.gmra.mxu0 %v6377
      %v6446 = vpop.f32.mrf.mxu0
      %v6447 = vadd.f32 0.0, %v6446
      %v6448 = vpop.f32.mrf.mxu0
      %v6449 = vadd.f32 0.0, %v6448
      %6450 = vmatmul.bf16.gmra.mxu0 %v6380
      %v6451 = vpop.f32.mrf.mxu0
      %v6452 = vadd.f32 0.0, %v6451
      %v6453 = vpop.f32.mrf.mxu0
      %v6454 = vadd.f32 0.0, %v6453
      %6455 = vmatmul.bf16.gmra.mxu0 %v6383
      %v6456 = vpop.f32.mrf.mxu0
      %v6457 = vadd.f32 0.0, %v6456
      %v6458 = vpop.f32.mrf.mxu0
      %v6459 = vadd.f32 0.0, %v6458
      %6460 = vmatmul.bf16.gmra.mxu0 %v6386
      %v6461 = vpop.f32.mrf.mxu0
      %v6462 = vadd.f32 0.0, %v6461
      %v6463 = vpop.f32.mrf.mxu0
      %v6464 = vadd.f32 0.0, %v6463
      %6465 = vmatmul.bf16.gmra.mxu0 %v6389
      %v6466 = vpop.f32.mrf.mxu0
      %v6467 = vadd.f32 0.0, %v6466
      %v6468 = vpop.f32.mrf.mxu0
      %v6469 = vadd.f32 0.0, %v6468
      %6470 = vmatmul.bf16.gmra.mxu0 %v6392
      %v6471 = vpop.f32.mrf.mxu0
      %v6472 = vadd.f32 0.0, %v6471
      %v6473 = vpop.f32.mrf.mxu0
      %v6474 = vadd.f32 0.0, %v6473
      %6475 = vmatmul.bf16.gmra.mxu0 %v6395
      %v6476 = vpop.f32.mrf.mxu0
      %v6477 = vadd.f32 0.0, %v6476
      %v6478 = vpop.f32.mrf.mxu0
      %v6479 = vadd.f32 0.0, %v6478
      %6480 = vmatmul.bf16.gmra.mxu0 %v6398
      %v6481 = vpop.f32.mrf.mxu0
      %v6482 = vadd.f32 0.0, %v6481
      %v6483 = vpop.f32.mrf.mxu0
      %v6484 = vadd.f32 0.0, %v6483
      %6485 = vmatmul.bf16.gmra.mxu0 %v6401
      %v6486 = vpop.f32.mrf.mxu0
      %v6487 = vadd.f32 0.0, %v6486
      %v6488 = vpop.f32.mrf.mxu0
      %v6489 = vadd.f32 0.0, %v6488
      %6490 = vmatmul.bf16.gmra.mxu0 %v6404
      %v6491 = vpop.f32.mrf.mxu0
      %v6492 = vadd.f32 0.0, %v6491
      %v6493 = vpop.f32.mrf.mxu0
      %v6494 = vadd.f32 0.0, %v6493
      %6495 = vmatmul.bf16.gmra.mxu0 %v6407
      %v6496 = vpop.f32.mrf.mxu0
      %v6497 = vadd.f32 0.0, %v6496
      %v6498 = vpop.f32.mrf.mxu0
      %6499 = vdwg.mxu0
      %v6500 = vadd.f32 %v6298, %v6422
      %v6501 = vadd.f32 %v6299, %v6424
      %v6502 = vadd.f32 %v6300, %v6427
      %v6503 = vadd.f32 %v6301, %v6429
      %v6504 = vadd.f32 %v6302, %v6432
      %v6505 = vadd.f32 %v6303, %v6434
      %v6506 = vadd.f32 %v6304, %v6437
      %v6507 = vadd.f32 %v6305, %v6439
      %v6508 = vadd.f32 %v6306, %v6442
      %v6509 = vadd.f32 %v6307, %v6444
      %v6510 = vadd.f32 %v6308, %v6447
      %v6511 = vadd.f32 %v6309, %v6449
      %v6512 = vadd.f32 %v6310, %v6452
      %v6513 = vadd.f32 %v6311, %v6454
      %v6514 = vadd.f32 %v6312, %v6457
      %v6515 = vadd.f32 %v6313, %v6459
      %v6516 = vadd.f32 %v6314, %v6462
      %v6517 = vadd.f32 %v6315, %v6464
      %v6518 = vadd.f32 %v6316, %v6467
      %v6519 = vadd.f32 %v6317, %v6469
      %v6520 = vadd.f32 %v6318, %v6472
      %v6521 = vadd.f32 %v6319, %v6474
      %v6522 = vadd.f32 %v6320, %v6477
      %v6523 = vadd.f32 %v6321, %v6479
      %v6524 = vadd.f32 %v6322, %v6482
      %v6525 = vadd.f32 %v6323, %v6484
      %v6526 = vadd.f32 %v6324, %v6487
      %v6527 = vadd.f32 %v6325, %v6489
      %v6528 = vadd.f32 %v6326, %v6492
      %v6529 = vadd.f32 %v6327, %v6494
      %v6530 = vadd.f32 %v6328, %v6497
      %v6531 = vld [vmem:[%s310] sm:$0xf]
      %v6532 = vld [vmem:[%s310 + $0x4] sm:$0xf]
      %v6533 = vld [vmem:[%s310 + $0x8] sm:$0xf]
      %v6534 = vld [vmem:[%s310 + $0xc] sm:$0xf]
      %v6535 = vld [vmem:[%s310 + $0x10] sm:$0xf]
      %v6536 = vld [vmem:[%s310 + $0x14] sm:$0xf]
      %v6537 = vld [vmem:[%s310 + $0x18] sm:$0xf]
      %v6538 = vld [vmem:[%s310 + $0x1c] sm:$0xf]
      %v6539 = vld [vmem:[%s310 + $0x20] sm:$0xf]
      %v6540 = vld [vmem:[%s310 + $0x24] sm:$0xf]
      %v6541 = vld [vmem:[%s310 + $0x28] sm:$0xf]
      %v6542 = vld [vmem:[%s310 + $0x2c] sm:$0xf]
      %v6543 = vld [vmem:[%s310 + $0x30] sm:$0xf]
      %v6544 = vld [vmem:[%s310 + $0x34] sm:$0xf]
      %v6545 = vld [vmem:[%s310 + $0x38] sm:$0xf]
      %v6546 = vld [vmem:[%s310 + $0x3c] sm:$0xf]
      %v6547 = vld [vmem:[%s310 + $0x40] sm:$0xf]
      %v6548 = vld [vmem:[%s310 + $0x44] sm:$0xf]
      %v6549 = vld [vmem:[%s310 + $0x48] sm:$0xf]
      %v6550 = vld [vmem:[%s310 + $0x4c] sm:$0xf]
      %v6551 = vld [vmem:[%s310 + $0x50] sm:$0xf]
      %v6552 = vld [vmem:[%s310 + $0x54] sm:$0xf]
      %v6553 = vld [vmem:[%s310 + $0x58] sm:$0xf]
      %v6554 = vld [vmem:[%s310 + $0x5c] sm:$0xf]
      %v6555 = vld [vmem:[%s310 + $0x60] sm:$0xf]
      %v6556 = vld [vmem:[%s310 + $0x64] sm:$0xf]
      %v6557 = vld [vmem:[%s310 + $0x68] sm:$0xf]
      %v6558 = vld [vmem:[%s310 + $0x6c] sm:$0xf]
      %v6559 = vld [vmem:[%s310 + $0x70] sm:$0xf]
      %v6560 = vld [vmem:[%s310 + $0x74] sm:$0xf]
      %v6561 = vld [vmem:[%s310 + $0x78] sm:$0x7]
      %v6562 = vld [vmem:[%s1844] sm:$0xf]
      %v6594 = vunpack.c.l.b16 %v6531
      %v6595 = vunpack.c.l.b16 %v6532
      %v6596 = vunpack.c.l.b16 %v6533
      %v6597 = vunpack.c.l.b16 %v6534
      %v6598 = vunpack.c.l.b16 %v6535
      %v6599 = vunpack.c.l.b16 %v6536
      %v6600 = vunpack.c.l.b16 %v6537
      %v6601 = vunpack.c.l.b16 %v6538
      %v6602 = vunpack.c.l.b16 %v6539
      %v6603 = vunpack.c.l.b16 %v6540
      %v6604 = vunpack.c.l.b16 %v6541
      %v6605 = vunpack.c.l.b16 %v6542
      %v6606 = vunpack.c.l.b16 %v6543
      %v6607 = vunpack.c.l.b16 %v6544
      %v6608 = vunpack.c.l.b16 %v6545
      %v6609 = vunpack.c.l.b16 %v6546
      %v6610 = vunpack.c.l.b16 %v6547
      %v6611 = vunpack.c.l.b16 %v6548
      %v6612 = vunpack.c.l.b16 %v6549
      %v6613 = vunpack.c.l.b16 %v6550
      %v6614 = vunpack.c.l.b16 %v6551
      %v6615 = vunpack.c.l.b16 %v6552
      %v6616 = vunpack.c.l.b16 %v6553
      %v6617 = vunpack.c.l.b16 %v6554
      %v6618 = vunpack.c.l.b16 %v6555
      %v6619 = vunpack.c.l.b16 %v6556
      %v6620 = vunpack.c.l.b16 %v6557
      %v6621 = vunpack.c.l.b16 %v6558
      %v6622 = vunpack.c.l.b16 %v6559
      %v6623 = vunpack.c.l.b16 %v6560
      %v6624 = vunpack.c.l.b16 %v6561
      %v6625 = vpack.c.b16 %v6595, %v6594
      %v6626 = vpack.c.b16 %v6597, %v6596
      %v6627 = vpack.c.b16 %v6599, %v6598
      %v6628 = vpack.c.b16 %v6601, %v6600
      %v6629 = vpack.c.b16 %v6603, %v6602
      %v6630 = vpack.c.b16 %v6605, %v6604
      %v6631 = vpack.c.b16 %v6607, %v6606
      %v6632 = vpack.c.b16 %v6609, %v6608
      %v6633 = vpack.c.b16 %v6611, %v6610
      %v6634 = vpack.c.b16 %v6613, %v6612
      %v6635 = vpack.c.b16 %v6615, %v6614
      %v6636 = vpack.c.b16 %v6617, %v6616
      %v6637 = vpack.c.b16 %v6619, %v6618
      %v6638 = vpack.c.b16 %v6621, %v6620
      %v6639 = vpack.c.b16 %v6623, %v6622
      %v6640 = vpack.c.b16 %v6624, %v6624
      %v6642 = vsel %vm576, %v6625, 0
      %v6645 = vsel %vm576, %v6626, 0
      %v6648 = vsel %vm576, %v6627, 0
      %v6651 = vsel %vm576, %v6628, 0
      %v6654 = vsel %vm576, %v6629, 0
      %v6657 = vsel %vm576, %v6630, 0
      %v6660 = vsel %vm576, %v6631, 0
      %v6663 = vsel %vm576, %v6632, 0
      %v6666 = vsel %vm576, %v6633, 0
      %v6669 = vsel %vm576, %v6634, 0
      %v6672 = vsel %vm576, %v6635, 0
      %v6675 = vsel %vm576, %v6636, 0
      %v6678 = vsel %vm576, %v6637, 0
      %v6681 = vsel %vm576, %v6638, 0
      %v6684 = vsel %vm576, %v6639, 0
      %v6687 = vsel %vm576, %v6640, 0
      %v6690 = vsel %vm625, %v6562, 0
      %6692 = vmatpush.bf16.msra.mxu0 0
      %6693 = vmatpush.bf16.msra.mxu0 0
      %6694 = vmatpush.bf16.msra.mxu0 0
      %6695 = vmatpush.bf16.msra.mxu0 0
      %6696 = vmatpush.bf16.msra.mxu0 0
      %6697 = vmatpush.bf16.msra.mxu0 0
      %6698 = vmatpush.bf16.msra.mxu0 0
      %6699 = vmatpush.bf16.msra.mxu0 %v6690
      %6700 = vmatmul.bf16.gmra.mxu0 %v6642
      %v6701 = vpop.f32.mrf.mxu0
      %v6702 = vadd.f32 0.0, %v6701
      %v6703 = vpop.f32.mrf.mxu0
      %v6704 = vadd.f32 0.0, %v6703
      %6705 = vmatmul.bf16.gmra.mxu0 %v6645
      %v6706 = vpop.f32.mrf.mxu0
      %v6707 = vadd.f32 0.0, %v6706
      %v6708 = vpop.f32.mrf.mxu0
      %v6709 = vadd.f32 0.0, %v6708
      %6710 = vmatmul.bf16.gmra.mxu0 %v6648
      %v6711 = vpop.f32.mrf.mxu0
      %v6712 = vadd.f32 0.0, %v6711
      %v6713 = vpop.f32.mrf.mxu0
      %v6714 = vadd.f32 0.0, %v6713
      %6715 = vmatmul.bf16.gmra.mxu0 %v6651
      %v6716 = vpop.f32.mrf.mxu0
      %v6717 = vadd.f32 0.0, %v6716
      %v6718 = vpop.f32.mrf.mxu0
      %v6719 = vadd.f32 0.0, %v6718
      %6720 = vmatmul.bf16.gmra.mxu0 %v6654
      %v6721 = vpop.f32.mrf.mxu0
      %v6722 = vadd.f32 0.0, %v6721
      %v6723 = vpop.f32.mrf.mxu0
      %v6724 = vadd.f32 0.0, %v6723
      %6725 = vmatmul.bf16.gmra.mxu0 %v6657
      %v6726 = vpop.f32.mrf.mxu0
      %v6727 = vadd.f32 0.0, %v6726
      %v6728 = vpop.f32.mrf.mxu0
      %v6729 = vadd.f32 0.0, %v6728
      %6730 = vmatmul.bf16.gmra.mxu0 %v6660
      %v6731 = vpop.f32.mrf.mxu0
      %v6732 = vadd.f32 0.0, %v6731
      %v6733 = vpop.f32.mrf.mxu0
      %v6734 = vadd.f32 0.0, %v6733
      %6735 = vmatmul.bf16.gmra.mxu0 %v6663
      %v6736 = vpop.f32.mrf.mxu0
      %v6737 = vadd.f32 0.0, %v6736
      %v6738 = vpop.f32.mrf.mxu0
      %v6739 = vadd.f32 0.0, %v6738
      %6740 = vmatmul.bf16.gmra.mxu0 %v6666
      %v6741 = vpop.f32.mrf.mxu0
      %v6742 = vadd.f32 0.0, %v6741
      %v6743 = vpop.f32.mrf.mxu0
      %v6744 = vadd.f32 0.0, %v6743
      %6745 = vmatmul.bf16.gmra.mxu0 %v6669
      %v6746 = vpop.f32.mrf.mxu0
      %v6747 = vadd.f32 0.0, %v6746
      %v6748 = vpop.f32.mrf.mxu0
      %v6749 = vadd.f32 0.0, %v6748
      %6750 = vmatmul.bf16.gmra.mxu0 %v6672
      %v6751 = vpop.f32.mrf.mxu0
      %v6752 = vadd.f32 0.0, %v6751
      %v6753 = vpop.f32.mrf.mxu0
      %v6754 = vadd.f32 0.0, %v6753
      %6755 = vmatmul.bf16.gmra.mxu0 %v6675
      %v6756 = vpop.f32.mrf.mxu0
      %v6757 = vadd.f32 0.0, %v6756
      %v6758 = vpop.f32.mrf.mxu0
      %v6759 = vadd.f32 0.0, %v6758
      %6760 = vmatmul.bf16.gmra.mxu0 %v6678
      %v6761 = vpop.f32.mrf.mxu0
      %v6762 = vadd.f32 0.0, %v6761
      %v6763 = vpop.f32.mrf.mxu0
      %v6764 = vadd.f32 0.0, %v6763
      %6765 = vmatmul.bf16.gmra.mxu0 %v6681
      %v6766 = vpop.f32.mrf.mxu0
      %v6767 = vadd.f32 0.0, %v6766
      %v6768 = vpop.f32.mrf.mxu0
      %v6769 = vadd.f32 0.0, %v6768
      %6770 = vmatmul.bf16.gmra.mxu0 %v6684
      %v6771 = vpop.f32.mrf.mxu0
      %v6772 = vadd.f32 0.0, %v6771
      %v6773 = vpop.f32.mrf.mxu0
      %v6774 = vadd.f32 0.0, %v6773
      %6775 = vmatmul.bf16.gmra.mxu0 %v6687
      %v6776 = vpop.f32.mrf.mxu0
      %v6777 = vadd.f32 0.0, %v6776
      %v6778 = vpop.f32.mrf.mxu0
      %6779 = vdwg.mxu0
      %v6780 = vadd.f32 %v6500, %v6702
      %v6781 = vadd.f32 %v6501, %v6704
      %v6782 = vadd.f32 %v6502, %v6707
      %v6783 = vadd.f32 %v6503, %v6709
      %v6784 = vadd.f32 %v6504, %v6712
      %v6785 = vadd.f32 %v6505, %v6714
      %v6786 = vadd.f32 %v6506, %v6717
      %v6787 = vadd.f32 %v6507, %v6719
      %v6788 = vadd.f32 %v6508, %v6722
      %v6789 = vadd.f32 %v6509, %v6724
      %v6790 = vadd.f32 %v6510, %v6727
      %v6791 = vadd.f32 %v6511, %v6729
      %v6792 = vadd.f32 %v6512, %v6732
      %v6793 = vadd.f32 %v6513, %v6734
      %v6794 = vadd.f32 %v6514, %v6737
      %v6795 = vadd.f32 %v6515, %v6739
      %v6796 = vadd.f32 %v6516, %v6742
      %v6797 = vadd.f32 %v6517, %v6744
      %v6798 = vadd.f32 %v6518, %v6747
      %v6799 = vadd.f32 %v6519, %v6749
      %v6800 = vadd.f32 %v6520, %v6752
      %v6801 = vadd.f32 %v6521, %v6754
      %v6802 = vadd.f32 %v6522, %v6757
      %v6803 = vadd.f32 %v6523, %v6759
      %v6804 = vadd.f32 %v6524, %v6762
      %v6805 = vadd.f32 %v6525, %v6764
      %v6806 = vadd.f32 %v6526, %v6767
      %v6807 = vadd.f32 %v6527, %v6769
      %v6808 = vadd.f32 %v6528, %v6772
      %v6809 = vadd.f32 %v6529, %v6774
      %v6810 = vadd.f32 %v6530, %v6777
      %v6811 = vld [vmem:[%s2094] sm:$0xf]
      %v6812 = vshrl.u32 %v6625, 16
      %v6814 = vshll.u32 %v6625, 16
      %v6816 = vrot.slane %v6814, 1
      %v6817 = vor.u32 %v6812, %v6816
      %v6818 = vshll.u32 %v6626, 16
      %v6820 = vrot.slane %v6818, 1
      %v6821 = vsel %vm448, %v6817, %v6820
      %v6822 = vshrl.u32 %v6626, 16
      %v6824 = vor.u32 %v6822, %v6820
      %v6825 = vshll.u32 %v6627, 16
      %v6827 = vrot.slane %v6825, 1
      %v6828 = vsel %vm448, %v6824, %v6827
      %v6829 = vshrl.u32 %v6627, 16
      %v6831 = vor.u32 %v6829, %v6827
      %v6832 = vshll.u32 %v6628, 16
      %v6834 = vrot.slane %v6832, 1
      %v6835 = vsel %vm448, %v6831, %v6834
      %v6836 = vshrl.u32 %v6628, 16
      %v6838 = vor.u32 %v6836, %v6834
      %v6839 = vshll.u32 %v6629, 16
      %v6841 = vrot.slane %v6839, 1
      %v6842 = vsel %vm448, %v6838, %v6841
      %v6843 = vshrl.u32 %v6629, 16
      %v6845 = vor.u32 %v6843, %v6841
      %v6846 = vshll.u32 %v6630, 16
      %v6848 = vrot.slane %v6846, 1
      %v6849 = vsel %vm448, %v6845, %v6848
      %v6850 = vshrl.u32 %v6630, 16
      %v6852 = vor.u32 %v6850, %v6848
      %v6853 = vshll.u32 %v6631, 16
      %v6855 = vrot.slane %v6853, 1
      %v6856 = vsel %vm448, %v6852, %v6855
      %v6857 = vshrl.u32 %v6631, 16
      %v6859 = vor.u32 %v6857, %v6855
      %v6860 = vshll.u32 %v6632, 16
      %v6862 = vrot.slane %v6860, 1
      %v6863 = vsel %vm448, %v6859, %v6862
      %v6864 = vshrl.u32 %v6632, 16
      %v6866 = vor.u32 %v6864, %v6862
      %v6867 = vshll.u32 %v6633, 16
      %v6869 = vrot.slane %v6867, 1
      %v6870 = vsel %vm448, %v6866, %v6869
      %v6871 = vshrl.u32 %v6633, 16
      %v6873 = vor.u32 %v6871, %v6869
      %v6874 = vshll.u32 %v6634, 16
      %v6876 = vrot.slane %v6874, 1
      %v6877 = vsel %vm448, %v6873, %v6876
      %v6878 = vshrl.u32 %v6634, 16
      %v6880 = vor.u32 %v6878, %v6876
      %v6881 = vshll.u32 %v6635, 16
      %v6883 = vrot.slane %v6881, 1
      %v6884 = vsel %vm448, %v6880, %v6883
      %v6885 = vshrl.u32 %v6635, 16
      %v6887 = vor.u32 %v6885, %v6883
      %v6888 = vshll.u32 %v6636, 16
      %v6890 = vrot.slane %v6888, 1
      %v6891 = vsel %vm448, %v6887, %v6890
      %v6892 = vshrl.u32 %v6636, 16
      %v6894 = vor.u32 %v6892, %v6890
      %v6895 = vshll.u32 %v6637, 16
      %v6897 = vrot.slane %v6895, 1
      %v6898 = vsel %vm448, %v6894, %v6897
      %v6899 = vshrl.u32 %v6637, 16
      %v6901 = vor.u32 %v6899, %v6897
      %v6902 = vshll.u32 %v6638, 16
      %v6904 = vrot.slane %v6902, 1
      %v6905 = vsel %vm448, %v6901, %v6904
      %v6906 = vshrl.u32 %v6638, 16
      %v6908 = vor.u32 %v6906, %v6904
      %v6909 = vshll.u32 %v6639, 16
      %v6911 = vrot.slane %v6909, 1
      %v6912 = vsel %vm448, %v6908, %v6911
      %v6913 = vshrl.u32 %v6639, 16
      %v6915 = vor.u32 %v6913, %v6911
      %v6916 = vshll.u32 %v6640, 16
      %v6918 = vrot.slane %v6916, 1
      %v6919 = vsel %vm448, %v6915, %v6918
      %v6920 = vshrl.u32 %v6640, 16
      %v6922 = vor.u32 %v6920, %v6918
      %v6924 = vsel %vm576, %v6821, 0
      %v6927 = vsel %vm576, %v6828, 0
      %v6930 = vsel %vm576, %v6835, 0
      %v6933 = vsel %vm576, %v6842, 0
      %v6936 = vsel %vm576, %v6849, 0
      %v6939 = vsel %vm576, %v6856, 0
      %v6942 = vsel %vm576, %v6863, 0
      %v6945 = vsel %vm576, %v6870, 0
      %v6948 = vsel %vm576, %v6877, 0
      %v6951 = vsel %vm576, %v6884, 0
      %v6954 = vsel %vm576, %v6891, 0
      %v6957 = vsel %vm576, %v6898, 0
      %v6960 = vsel %vm576, %v6905, 0
      %v6963 = vsel %vm576, %v6912, 0
      %v6966 = vsel %vm576, %v6919, 0
      %v6969 = vsel %vm576, %v6922, 0
      %v6972 = vsel %vm625, %v6811, 0
      %6974 = vmatpush.bf16.msra.mxu0 0
      %6975 = vmatpush.bf16.msra.mxu0 0
      %6976 = vmatpush.bf16.msra.mxu0 0
      %6977 = vmatpush.bf16.msra.mxu0 0
      %6978 = vmatpush.bf16.msra.mxu0 0
      %6979 = vmatpush.bf16.msra.mxu0 0
      %6980 = vmatpush.bf16.msra.mxu0 0
      %6981 = vmatpush.bf16.msra.mxu0 %v6972
      %6982 = vmatmul.bf16.gmra.mxu0 %v6924
      %v6983 = vpop.f32.mrf.mxu0
      %v6984 = vadd.f32 0.0, %v6983
      %v6985 = vpop.f32.mrf.mxu0
      %v6986 = vadd.f32 0.0, %v6985
      %6987 = vmatmul.bf16.gmra.mxu0 %v6927
      %v6988 = vpop.f32.mrf.mxu0
      %v6989 = vadd.f32 0.0, %v6988
      %v6990 = vpop.f32.mrf.mxu0
      %v6991 = vadd.f32 0.0, %v6990
      %6992 = vmatmul.bf16.gmra.mxu0 %v6930
      %v6993 = vpop.f32.mrf.mxu0
      %v6994 = vadd.f32 0.0, %v6993
      %v6995 = vpop.f32.mrf.mxu0
      %v6996 = vadd.f32 0.0, %v6995
      %6997 = vmatmul.bf16.gmra.mxu0 %v6933
      %v6998 = vpop.f32.mrf.mxu0
      %v6999 = vadd.f32 0.0, %v6998
      %v7000 = vpop.f32.mrf.mxu0
      %v7001 = vadd.f32 0.0, %v7000
      %7002 = vmatmul.bf16.gmra.mxu0 %v6936
      %v7003 = vpop.f32.mrf.mxu0
      %v7004 = vadd.f32 0.0, %v7003
      %v7005 = vpop.f32.mrf.mxu0
      %v7006 = vadd.f32 0.0, %v7005
      %7007 = vmatmul.bf16.gmra.mxu0 %v6939
      %v7008 = vpop.f32.mrf.mxu0
      %v7009 = vadd.f32 0.0, %v7008
      %v7010 = vpop.f32.mrf.mxu0
      %v7011 = vadd.f32 0.0, %v7010
      %7012 = vmatmul.bf16.gmra.mxu0 %v6942
      %v7013 = vpop.f32.mrf.mxu0
      %v7014 = vadd.f32 0.0, %v7013
      %v7015 = vpop.f32.mrf.mxu0
      %v7016 = vadd.f32 0.0, %v7015
      %7017 = vmatmul.bf16.gmra.mxu0 %v6945
      %v7018 = vpop.f32.mrf.mxu0
      %v7019 = vadd.f32 0.0, %v7018
      %v7020 = vpop.f32.mrf.mxu0
      %v7021 = vadd.f32 0.0, %v7020
      %7022 = vmatmul.bf16.gmra.mxu0 %v6948
      %v7023 = vpop.f32.mrf.mxu0
      %v7024 = vadd.f32 0.0, %v7023
      %v7025 = vpop.f32.mrf.mxu0
      %v7026 = vadd.f32 0.0, %v7025
      %7027 = vmatmul.bf16.gmra.mxu0 %v6951
      %v7028 = vpop.f32.mrf.mxu0
      %v7029 = vadd.f32 0.0, %v7028
      %v7030 = vpop.f32.mrf.mxu0
      %v7031 = vadd.f32 0.0, %v7030
      %7032 = vmatmul.bf16.gmra.mxu0 %v6954
      %v7033 = vpop.f32.mrf.mxu0
      %v7034 = vadd.f32 0.0, %v7033
      %v7035 = vpop.f32.mrf.mxu0
      %v7036 = vadd.f32 0.0, %v7035
      %7037 = vmatmul.bf16.gmra.mxu0 %v6957
      %v7038 = vpop.f32.mrf.mxu0
      %v7039 = vadd.f32 0.0, %v7038
      %v7040 = vpop.f32.mrf.mxu0
      %v7041 = vadd.f32 0.0, %v7040
      %7042 = vmatmul.bf16.gmra.mxu0 %v6960
      %v7043 = vpop.f32.mrf.mxu0
      %v7044 = vadd.f32 0.0, %v7043
      %v7045 = vpop.f32.mrf.mxu0
      %v7046 = vadd.f32 0.0, %v7045
      %7047 = vmatmul.bf16.gmra.mxu0 %v6963
      %v7048 = vpop.f32.mrf.mxu0
      %v7049 = vadd.f32 0.0, %v7048
      %v7050 = vpop.f32.mrf.mxu0
      %v7051 = vadd.f32 0.0, %v7050
      %7052 = vmatmul.bf16.gmra.mxu0 %v6966
      %v7053 = vpop.f32.mrf.mxu0
      %v7054 = vadd.f32 0.0, %v7053
      %v7055 = vpop.f32.mrf.mxu0
      %v7056 = vadd.f32 0.0, %v7055
      %7057 = vmatmul.bf16.gmra.mxu0 %v6969
      %v7058 = vpop.f32.mrf.mxu0
      %v7059 = vadd.f32 0.0, %v7058
      %v7060 = vpop.f32.mrf.mxu0
      %7061 = vdwg.mxu0
      %v7062 = vadd.f32 %v6780, %v6984
      %v7063 = vadd.f32 %v6781, %v6986
      %v7064 = vadd.f32 %v6782, %v6989
      %v7065 = vadd.f32 %v6783, %v6991
      %v7066 = vadd.f32 %v6784, %v6994
      %v7067 = vadd.f32 %v6785, %v6996
      %v7068 = vadd.f32 %v6786, %v6999
      %v7069 = vadd.f32 %v6787, %v7001
      %v7070 = vadd.f32 %v6788, %v7004
      %v7071 = vadd.f32 %v6789, %v7006
      %v7072 = vadd.f32 %v6790, %v7009
      %v7073 = vadd.f32 %v6791, %v7011
      %v7074 = vadd.f32 %v6792, %v7014
      %v7075 = vadd.f32 %v6793, %v7016
      %v7076 = vadd.f32 %v6794, %v7019
      %v7077 = vadd.f32 %v6795, %v7021
      %v7078 = vadd.f32 %v6796, %v7024
      %v7079 = vadd.f32 %v6797, %v7026
      %v7080 = vadd.f32 %v6798, %v7029
      %v7081 = vadd.f32 %v6799, %v7031
      %v7082 = vadd.f32 %v6800, %v7034
      %v7083 = vadd.f32 %v6801, %v7036
      %v7084 = vadd.f32 %v6802, %v7039
      %v7085 = vadd.f32 %v6803, %v7041
      %v7086 = vadd.f32 %v6804, %v7044
      %v7087 = vadd.f32 %v6805, %v7046
      %v7088 = vadd.f32 %v6806, %v7049
      %v7089 = vadd.f32 %v6807, %v7051
      %v7090 = vadd.f32 %v6808, %v7054
      %v7091 = vadd.f32 %v6809, %v7056
      %v7092 = vadd.f32 %v6810, %v7059
      %v7093 = vld [vmem:[%s2377] sm:$0xf]
      %v7094 = vrot.slane %v6625, 1
      %v7095 = vrot.slane %v6626, 1
      %v7096 = vsel %vm842, %v7094, %v7095
      %v7097 = vrot.slane %v6627, 1
      %v7098 = vsel %vm842, %v7095, %v7097
      %v7099 = vrot.slane %v6628, 1
      %v7100 = vsel %vm842, %v7097, %v7099
      %v7101 = vrot.slane %v6629, 1
      %v7102 = vsel %vm842, %v7099, %v7101
      %v7103 = vrot.slane %v6630, 1
      %v7104 = vsel %vm842, %v7101, %v7103
      %v7105 = vrot.slane %v6631, 1
      %v7106 = vsel %vm842, %v7103, %v7105
      %v7107 = vrot.slane %v6632, 1
      %v7108 = vsel %vm842, %v7105, %v7107
      %v7109 = vrot.slane %v6633, 1
      %v7110 = vsel %vm842, %v7107, %v7109
      %v7111 = vrot.slane %v6634, 1
      %v7112 = vsel %vm842, %v7109, %v7111
      %v7113 = vrot.slane %v6635, 1
      %v7114 = vsel %vm842, %v7111, %v7113
      %v7115 = vrot.slane %v6636, 1
      %v7116 = vsel %vm842, %v7113, %v7115
      %v7117 = vrot.slane %v6637, 1
      %v7118 = vsel %vm842, %v7115, %v7117
      %v7119 = vrot.slane %v6638, 1
      %v7120 = vsel %vm842, %v7117, %v7119
      %v7121 = vrot.slane %v6639, 1
      %v7122 = vsel %vm842, %v7119, %v7121
      %v7123 = vrot.slane %v6640, 1
      %v7124 = vsel %vm842, %v7121, %v7123
      %v7126 = vsel %vm576, %v7096, 0
      %v7129 = vsel %vm576, %v7098, 0
      %v7132 = vsel %vm576, %v7100, 0
      %v7135 = vsel %vm576, %v7102, 0
      %v7138 = vsel %vm576, %v7104, 0
      %v7141 = vsel %vm576, %v7106, 0
      %v7144 = vsel %vm576, %v7108, 0
      %v7147 = vsel %vm576, %v7110, 0
      %v7150 = vsel %vm576, %v7112, 0
      %v7153 = vsel %vm576, %v7114, 0
      %v7156 = vsel %vm576, %v7116, 0
      %v7159 = vsel %vm576, %v7118, 0
      %v7162 = vsel %vm576, %v7120, 0
      %v7165 = vsel %vm576, %v7122, 0
      %v7168 = vsel %vm576, %v7124, 0
      %v7171 = vsel %vm576, %v7123, 0
      %v7174 = vsel %vm625, %v7093, 0
      %7176 = vmatpush.bf16.msra.mxu0 0
      %7177 = vmatpush.bf16.msra.mxu0 0
      %7178 = vmatpush.bf16.msra.mxu0 0
      %7179 = vmatpush.bf16.msra.mxu0 0
      %7180 = vmatpush.bf16.msra.mxu0 0
      %7181 = vmatpush.bf16.msra.mxu0 0
      %7182 = vmatpush.bf16.msra.mxu0 0
      %7183 = vmatpush.bf16.msra.mxu0 %v7174
      %7184 = vmatmul.bf16.gmra.mxu0 %v7126
      %v7185 = vpop.f32.mrf.mxu0
      %v7186 = vadd.f32 0.0, %v7185
      %v7187 = vpop.f32.mrf.mxu0
      %v7188 = vadd.f32 0.0, %v7187
      %7189 = vmatmul.bf16.gmra.mxu0 %v7129
      %v7190 = vpop.f32.mrf.mxu0
      %v7191 = vadd.f32 0.0, %v7190
      %v7192 = vpop.f32.mrf.mxu0
      %v7193 = vadd.f32 0.0, %v7192
      %7194 = vmatmul.bf16.gmra.mxu0 %v7132
      %v7195 = vpop.f32.mrf.mxu0
      %v7196 = vadd.f32 0.0, %v7195
      %v7197 = vpop.f32.mrf.mxu0
      %v7198 = vadd.f32 0.0, %v7197
      %7199 = vmatmul.bf16.gmra.mxu0 %v7135
      %v7200 = vpop.f32.mrf.mxu0
      %v7201 = vadd.f32 0.0, %v7200
      %v7202 = vpop.f32.mrf.mxu0
      %v7203 = vadd.f32 0.0, %v7202
      %7204 = vmatmul.bf16.gmra.mxu0 %v7138
      %v7205 = vpop.f32.mrf.mxu0
      %v7206 = vadd.f32 0.0, %v7205
      %v7207 = vpop.f32.mrf.mxu0
      %v7208 = vadd.f32 0.0, %v7207
      %7209 = vmatmul.bf16.gmra.mxu0 %v7141
      %v7210 = vpop.f32.mrf.mxu0
      %v7211 = vadd.f32 0.0, %v7210
      %v7212 = vpop.f32.mrf.mxu0
      %v7213 = vadd.f32 0.0, %v7212
      %7214 = vmatmul.bf16.gmra.mxu0 %v7144
      %v7215 = vpop.f32.mrf.mxu0
      %v7216 = vadd.f32 0.0, %v7215
      %v7217 = vpop.f32.mrf.mxu0
      %v7218 = vadd.f32 0.0, %v7217
      %7219 = vmatmul.bf16.gmra.mxu0 %v7147
      %v7220 = vpop.f32.mrf.mxu0
      %v7221 = vadd.f32 0.0, %v7220
      %v7222 = vpop.f32.mrf.mxu0
      %v7223 = vadd.f32 0.0, %v7222
      %7224 = vmatmul.bf16.gmra.mxu0 %v7150
      %v7225 = vpop.f32.mrf.mxu0
      %v7226 = vadd.f32 0.0, %v7225
      %v7227 = vpop.f32.mrf.mxu0
      %v7228 = vadd.f32 0.0, %v7227
      %7229 = vmatmul.bf16.gmra.mxu0 %v7153
      %v7230 = vpop.f32.mrf.mxu0
      %v7231 = vadd.f32 0.0, %v7230
      %v7232 = vpop.f32.mrf.mxu0
      %v7233 = vadd.f32 0.0, %v7232
      %7234 = vmatmul.bf16.gmra.mxu0 %v7156
      %v7235 = vpop.f32.mrf.mxu0
      %v7236 = vadd.f32 0.0, %v7235
      %v7237 = vpop.f32.mrf.mxu0
      %v7238 = vadd.f32 0.0, %v7237
      %7239 = vmatmul.bf16.gmra.mxu0 %v7159
      %v7240 = vpop.f32.mrf.mxu0
      %v7241 = vadd.f32 0.0, %v7240
      %v7242 = vpop.f32.mrf.mxu0
      %v7243 = vadd.f32 0.0, %v7242
      %7244 = vmatmul.bf16.gmra.mxu0 %v7162
      %v7245 = vpop.f32.mrf.mxu0
      %v7246 = vadd.f32 0.0, %v7245
      %v7247 = vpop.f32.mrf.mxu0
      %v7248 = vadd.f32 0.0, %v7247
      %7249 = vmatmul.bf16.gmra.mxu0 %v7165
      %v7250 = vpop.f32.mrf.mxu0
      %v7251 = vadd.f32 0.0, %v7250
      %v7252 = vpop.f32.mrf.mxu0
      %v7253 = vadd.f32 0.0, %v7252
      %7254 = vmatmul.bf16.gmra.mxu0 %v7168
      %v7255 = vpop.f32.mrf.mxu0
      %v7256 = vadd.f32 0.0, %v7255
      %v7257 = vpop.f32.mrf.mxu0
      %v7258 = vadd.f32 0.0, %v7257
      %7259 = vmatmul.bf16.gmra.mxu0 %v7171
      %v7260 = vpop.f32.mrf.mxu0
      %v7261 = vadd.f32 0.0, %v7260
      %v7262 = vpop.f32.mrf.mxu0
      %7263 = vdwg.mxu0
      %v7264 = vadd.f32 %v7062, %v7186
      %v7265 = vadd.f32 %v7063, %v7188
      %v7266 = vadd.f32 %v7064, %v7191
      %v7267 = vadd.f32 %v7065, %v7193
      %v7268 = vadd.f32 %v7066, %v7196
      %v7269 = vadd.f32 %v7067, %v7198
      %v7270 = vadd.f32 %v7068, %v7201
      %v7271 = vadd.f32 %v7069, %v7203
      %v7272 = vadd.f32 %v7070, %v7206
      %v7273 = vadd.f32 %v7071, %v7208
      %v7274 = vadd.f32 %v7072, %v7211
      %v7275 = vadd.f32 %v7073, %v7213
      %v7276 = vadd.f32 %v7074, %v7216
      %v7277 = vadd.f32 %v7075, %v7218
      %v7278 = vadd.f32 %v7076, %v7221
      %v7279 = vadd.f32 %v7077, %v7223
      %v7280 = vadd.f32 %v7078, %v7226
      %v7281 = vadd.f32 %v7079, %v7228
      %v7282 = vadd.f32 %v7080, %v7231
      %v7283 = vadd.f32 %v7081, %v7233
      %v7284 = vadd.f32 %v7082, %v7236
      %v7285 = vadd.f32 %v7083, %v7238
      %v7286 = vadd.f32 %v7084, %v7241
      %v7287 = vadd.f32 %v7085, %v7243
      %v7288 = vadd.f32 %v7086, %v7246
      %v7289 = vadd.f32 %v7087, %v7248
      %v7290 = vadd.f32 %v7088, %v7251
      %v7291 = vadd.f32 %v7089, %v7253
      %v7292 = vadd.f32 %v7090, %v7256
      %v7293 = vadd.f32 %v7091, %v7258
      %v7294 = vadd.f32 %v7092, %v7261
      %v7295 = vadd.f32 %v7264, %v2581
      %v7296 = vadd.f32 %v7265, %v2581
      %v7297 = vadd.f32 %v7266, %v2581
      %v7298 = vadd.f32 %v7267, %v2581
      %v7299 = vadd.f32 %v7268, %v2581
      %v7300 = vadd.f32 %v7269, %v2581
      %v7301 = vadd.f32 %v7270, %v2581
      %v7302 = vadd.f32 %v7271, %v2581
      %v7303 = vadd.f32 %v7272, %v2581
      %v7304 = vadd.f32 %v7273, %v2581
      %v7305 = vadd.f32 %v7274, %v2581
      %v7306 = vadd.f32 %v7275, %v2581
      %v7307 = vadd.f32 %v7276, %v2581
      %v7308 = vadd.f32 %v7277, %v2581
      %v7309 = vadd.f32 %v7278, %v2581
      %v7310 = vadd.f32 %v7279, %v2581
      %v7311 = vadd.f32 %v7280, %v2581
      %v7312 = vadd.f32 %v7281, %v2581
      %v7313 = vadd.f32 %v7282, %v2581
      %v7314 = vadd.f32 %v7283, %v2581
      %v7315 = vadd.f32 %v7284, %v2581
      %v7316 = vadd.f32 %v7285, %v2581
      %v7317 = vadd.f32 %v7286, %v2581
      %v7318 = vadd.f32 %v7287, %v2581
      %v7319 = vadd.f32 %v7288, %v2581
      %v7320 = vadd.f32 %v7289, %v2581
      %v7321 = vadd.f32 %v7290, %v2581
      %v7322 = vadd.f32 %v7291, %v2581
      %v7323 = vadd.f32 %v7292, %v2581
      %v7324 = vadd.f32 %v7293, %v2581
      %v7325 = vadd.f32 %v7294, %v2581
      %v7326 = vmax.f32 %v7295, 0.0
      %v7327 = vmax.f32 %v7296, 0.0
      %v7328 = vmax.f32 %v7297, 0.0
      %v7329 = vmax.f32 %v7298, 0.0
      %v7330 = vmax.f32 %v7299, 0.0
      %v7331 = vmax.f32 %v7300, 0.0
      %v7332 = vmax.f32 %v7301, 0.0
      %v7333 = vmax.f32 %v7302, 0.0
      %v7334 = vmax.f32 %v7303, 0.0
      %v7335 = vmax.f32 %v7304, 0.0
      %v7336 = vmax.f32 %v7305, 0.0
      %v7337 = vmax.f32 %v7306, 0.0
      %v7338 = vmax.f32 %v7307, 0.0
      %v7339 = vmax.f32 %v7308, 0.0
      %v7340 = vmax.f32 %v7309, 0.0
      %v7341 = vmax.f32 %v7310, 0.0
      %v7342 = vmax.f32 %v7311, 0.0
      %v7343 = vmax.f32 %v7312, 0.0
      %v7344 = vmax.f32 %v7313, 0.0
      %v7345 = vmax.f32 %v7314, 0.0
      %v7346 = vmax.f32 %v7315, 0.0
      %v7347 = vmax.f32 %v7316, 0.0
      %v7348 = vmax.f32 %v7317, 0.0
      %v7349 = vmax.f32 %v7318, 0.0
      %v7350 = vmax.f32 %v7319, 0.0
      %v7351 = vmax.f32 %v7320, 0.0
      %v7352 = vmax.f32 %v7321, 0.0
      %v7353 = vmax.f32 %v7322, 0.0
      %v7354 = vmax.f32 %v7323, 0.0
      %v7355 = vmax.f32 %v7324, 0.0
      %v7356 = vmax.f32 %v7325, 0.0
      %v7357 = vpack.c.bf16 %v7326, %v7326
      %v7358 = vpack.c.bf16 %v7327, %v7327
      %v7359 = vpack.c.bf16 %v7328, %v7328
      %v7360 = vpack.c.bf16 %v7329, %v7329
      %v7361 = vpack.c.bf16 %v7330, %v7330
      %v7362 = vpack.c.bf16 %v7331, %v7331
      %v7363 = vpack.c.bf16 %v7332, %v7332
      %v7364 = vpack.c.bf16 %v7333, %v7333
      %v7365 = vpack.c.bf16 %v7334, %v7334
      %v7366 = vpack.c.bf16 %v7335, %v7335
      %v7367 = vpack.c.bf16 %v7336, %v7336
      %v7368 = vpack.c.bf16 %v7337, %v7337
      %v7369 = vpack.c.bf16 %v7338, %v7338
      %v7370 = vpack.c.bf16 %v7339, %v7339
      %v7371 = vpack.c.bf16 %v7340, %v7340
      %v7372 = vpack.c.bf16 %v7341, %v7341
      %v7373 = vpack.c.bf16 %v7342, %v7342
      %v7374 = vpack.c.bf16 %v7343, %v7343
      %v7375 = vpack.c.bf16 %v7344, %v7344
      %v7376 = vpack.c.bf16 %v7345, %v7345
      %v7377 = vpack.c.bf16 %v7346, %v7346
      %v7378 = vpack.c.bf16 %v7347, %v7347
      %v7379 = vpack.c.bf16 %v7348, %v7348
      %v7380 = vpack.c.bf16 %v7349, %v7349
      %v7381 = vpack.c.bf16 %v7350, %v7350
      %v7382 = vpack.c.bf16 %v7351, %v7351
      %v7383 = vpack.c.bf16 %v7352, %v7352
      %v7384 = vpack.c.bf16 %v7353, %v7353
      %v7385 = vpack.c.bf16 %v7354, %v7354
      %v7386 = vpack.c.bf16 %v7355, %v7355
      %v7387 = vpack.c.bf16 %v7356, %v7356
      %s7388 = scalar_lea.vmem %s332, 248
      %7389 = vst.msk [vmem:[%s7388] sm:$0xf] %vm2676, %v7357
      %7390 = vst.msk [vmem:[%s7388 + $0x4] sm:$0xf] %vm2676, %v7358
      %7391 = vst.msk [vmem:[%s7388 + $0x8] sm:$0xf] %vm2676, %v7359
      %7392 = vst.msk [vmem:[%s7388 + $0xc] sm:$0xf] %vm2676, %v7360
      %7393 = vst.msk [vmem:[%s7388 + $0x10] sm:$0xf] %vm2676, %v7361
      %7394 = vst.msk [vmem:[%s7388 + $0x14] sm:$0xf] %vm2676, %v7362
      %7395 = vst.msk [vmem:[%s7388 + $0x18] sm:$0xf] %vm2676, %v7363
      %7396 = vst.msk [vmem:[%s7388 + $0x1c] sm:$0xf] %vm2676, %v7364
      %7397 = vst.msk [vmem:[%s7388 + $0x20] sm:$0xf] %vm2676, %v7365
      %7398 = vst.msk [vmem:[%s7388 + $0x24] sm:$0xf] %vm2676, %v7366
      %7399 = vst.msk [vmem:[%s7388 + $0x28] sm:$0xf] %vm2676, %v7367
      %7400 = vst.msk [vmem:[%s7388 + $0x2c] sm:$0xf] %vm2676, %v7368
      %7401 = vst.msk [vmem:[%s7388 + $0x30] sm:$0xf] %vm2676, %v7369
      %7402 = vst.msk [vmem:[%s7388 + $0x34] sm:$0xf] %vm2676, %v7370
      %7403 = vst.msk [vmem:[%s7388 + $0x38] sm:$0xf] %vm2676, %v7371
      %7404 = vst.msk [vmem:[%s7388 + $0x3c] sm:$0xf] %vm2676, %v7372
      %7405 = vst.msk [vmem:[%s7388 + $0x40] sm:$0xf] %vm2676, %v7373
      %7406 = vst.msk [vmem:[%s7388 + $0x44] sm:$0xf] %vm2676, %v7374
      %7407 = vst.msk [vmem:[%s7388 + $0x48] sm:$0xf] %vm2676, %v7375
      %7408 = vst.msk [vmem:[%s7388 + $0x4c] sm:$0xf] %vm2676, %v7376
      %7409 = vst.msk [vmem:[%s7388 + $0x50] sm:$0xf] %vm2676, %v7377
      %7410 = vst.msk [vmem:[%s7388 + $0x54] sm:$0xf] %vm2676, %v7378
      %7411 = vst.msk [vmem:[%s7388 + $0x58] sm:$0xf] %vm2676, %v7379
      %7412 = vst.msk [vmem:[%s7388 + $0x5c] sm:$0xf] %vm2676, %v7380
      %7413 = vst.msk [vmem:[%s7388 + $0x60] sm:$0xf] %vm2676, %v7381
      %7414 = vst.msk [vmem:[%s7388 + $0x64] sm:$0xf] %vm2676, %v7382
      %7415 = vst.msk [vmem:[%s7388 + $0x68] sm:$0xf] %vm2676, %v7383
      %7416 = vst.msk [vmem:[%s7388 + $0x6c] sm:$0xf] %vm2676, %v7384
      %7417 = vst.msk [vmem:[%s7388 + $0x70] sm:$0xf] %vm2676, %v7385
      %7418 = vst.msk [vmem:[%s7388 + $0x74] sm:$0xf] %vm2676, %v7386
      %7419 = vst.msk [vmem:[%s7388 + $0x78] sm:$0x3] %vm2707, %v7387
      %v7420 = vld [vmem:[%s4175] sm:$0xf]
      %v7421 = vld [vmem:[%s4175 + $0x4] sm:$0xf]
      %v7422 = vld [vmem:[%s4175 + $0x8] sm:$0xf]
      %v7423 = vld [vmem:[%s4175 + $0xc] sm:$0xf]
      %v7424 = vld [vmem:[%s4175 + $0x10] sm:$0xf]
      %v7425 = vld [vmem:[%s4175 + $0x14] sm:$0xf]
      %v7426 = vld [vmem:[%s4175 + $0x18] sm:$0xf]
      %v7427 = vld [vmem:[%s4175 + $0x1c] sm:$0xf]
      %v7428 = vld [vmem:[%s4175 + $0x20] sm:$0xf]
      %v7429 = vld [vmem:[%s4175 + $0x24] sm:$0xf]
      %v7430 = vld [vmem:[%s4175 + $0x28] sm:$0xf]
      %v7431 = vld [vmem:[%s4175 + $0x2c] sm:$0xf]
      %v7432 = vld [vmem:[%s4175 + $0x30] sm:$0xf]
      %v7433 = vld [vmem:[%s4175 + $0x34] sm:$0xf]
      %v7434 = vld [vmem:[%s4175 + $0x38] sm:$0xf]
      %v7435 = vld [vmem:[%s4175 + $0x3c] sm:$0xf]
      %v7436 = vld [vmem:[%s4175 + $0x40] sm:$0xf]
      %v7437 = vld [vmem:[%s4175 + $0x44] sm:$0xf]
      %v7438 = vld [vmem:[%s4175 + $0x48] sm:$0xf]
      %v7439 = vld [vmem:[%s4175 + $0x4c] sm:$0xf]
      %v7440 = vld [vmem:[%s4175 + $0x50] sm:$0xf]
      %v7441 = vld [vmem:[%s4175 + $0x54] sm:$0xf]
      %v7442 = vld [vmem:[%s4175 + $0x58] sm:$0xf]
      %v7443 = vld [vmem:[%s4175 + $0x5c] sm:$0xf]
      %v7444 = vld [vmem:[%s4175 + $0x60] sm:$0xf]
      %v7445 = vld [vmem:[%s4175 + $0x64] sm:$0xf]
      %v7446 = vld [vmem:[%s4175 + $0x68] sm:$0xf]
      %v7447 = vld [vmem:[%s4175 + $0x6c] sm:$0xf]
      %v7448 = vld [vmem:[%s4175 + $0x70] sm:$0xf]
      %v7449 = vld [vmem:[%s4175 + $0x74] sm:$0xf]
      %v7450 = vld [vmem:[%s4175 + $0x78] sm:$0x7]
      %v7451 = vld [vmem:[%s316] sm:$0xf]
      %v7452 = vld [vmem:[%s368] sm:$0xf]
      %v7484 = vunpack.c.l.b16 %v7420
      %v7485 = vunpack.c.l.b16 %v7421
      %v7486 = vunpack.c.l.b16 %v7422
      %v7487 = vunpack.c.l.b16 %v7423
      %v7488 = vunpack.c.l.b16 %v7424
      %v7489 = vunpack.c.l.b16 %v7425
      %v7490 = vunpack.c.l.b16 %v7426
      %v7491 = vunpack.c.l.b16 %v7427
      %v7492 = vunpack.c.l.b16 %v7428
      %v7493 = vunpack.c.l.b16 %v7429
      %v7494 = vunpack.c.l.b16 %v7430
      %v7495 = vunpack.c.l.b16 %v7431
      %v7496 = vunpack.c.l.b16 %v7432
      %v7497 = vunpack.c.l.b16 %v7433
      %v7498 = vunpack.c.l.b16 %v7434
      %v7499 = vunpack.c.l.b16 %v7435
      %v7500 = vunpack.c.l.b16 %v7436
      %v7501 = vunpack.c.l.b16 %v7437
      %v7502 = vunpack.c.l.b16 %v7438
      %v7503 = vunpack.c.l.b16 %v7439
      %v7504 = vunpack.c.l.b16 %v7440
      %v7505 = vunpack.c.l.b16 %v7441
      %v7506 = vunpack.c.l.b16 %v7442
      %v7507 = vunpack.c.l.b16 %v7443
      %v7508 = vunpack.c.l.b16 %v7444
      %v7509 = vunpack.c.l.b16 %v7445
      %v7510 = vunpack.c.l.b16 %v7446
      %v7511 = vunpack.c.l.b16 %v7447
      %v7512 = vunpack.c.l.b16 %v7448
      %v7513 = vunpack.c.l.b16 %v7449
      %v7514 = vunpack.c.l.b16 %v7450
      %v7515 = vpack.c.b16 %v7485, %v7484
      %v7516 = vpack.c.b16 %v7487, %v7486
      %v7517 = vpack.c.b16 %v7489, %v7488
      %v7518 = vpack.c.b16 %v7491, %v7490
      %v7519 = vpack.c.b16 %v7493, %v7492
      %v7520 = vpack.c.b16 %v7495, %v7494
      %v7521 = vpack.c.b16 %v7497, %v7496
      %v7522 = vpack.c.b16 %v7499, %v7498
      %v7523 = vpack.c.b16 %v7501, %v7500
      %v7524 = vpack.c.b16 %v7503, %v7502
      %v7525 = vpack.c.b16 %v7505, %v7504
      %v7526 = vpack.c.b16 %v7507, %v7506
      %v7527 = vpack.c.b16 %v7509, %v7508
      %v7528 = vpack.c.b16 %v7511, %v7510
      %v7529 = vpack.c.b16 %v7513, %v7512
      %v7530 = vpack.c.b16 %v7514, %v7514
      %v7532 = vshrl.u32 %v7515, 16
      %v7534 = vshll.u32 %v7515, 16
      %v7536 = vrot.slane %v7534, 1
      %v7537 = vor.u32 %v7532, %v7536
      %v7539 = vshll.u32 %v7516, 16
      %v7541 = vrot.slane %v7539, 1
      %v7542 = vsel %vm448, %v7537, %v7541
      %v7543 = vshrl.u32 %v7516, 16
      %v7545 = vor.u32 %v7543, %v7541
      %v7547 = vshll.u32 %v7517, 16
      %v7549 = vrot.slane %v7547, 1
      %v7550 = vsel %vm448, %v7545, %v7549
      %v7551 = vshrl.u32 %v7517, 16
      %v7553 = vor.u32 %v7551, %v7549
      %v7555 = vshll.u32 %v7518, 16
      %v7557 = vrot.slane %v7555, 1
      %v7558 = vsel %vm448, %v7553, %v7557
      %v7559 = vshrl.u32 %v7518, 16
      %v7561 = vor.u32 %v7559, %v7557
      %v7563 = vshll.u32 %v7519, 16
      %v7565 = vrot.slane %v7563, 1
      %v7566 = vsel %vm448, %v7561, %v7565
      %v7567 = vshrl.u32 %v7519, 16
      %v7569 = vor.u32 %v7567, %v7565
      %v7571 = vshll.u32 %v7520, 16
      %v7573 = vrot.slane %v7571, 1
      %v7574 = vsel %vm448, %v7569, %v7573
      %v7575 = vshrl.u32 %v7520, 16
      %v7577 = vor.u32 %v7575, %v7573
      %v7579 = vshll.u32 %v7521, 16
      %v7581 = vrot.slane %v7579, 1
      %v7582 = vsel %vm448, %v7577, %v7581
      %v7583 = vshrl.u32 %v7521, 16
      %v7585 = vor.u32 %v7583, %v7581
      %v7587 = vshll.u32 %v7522, 16
      %v7589 = vrot.slane %v7587, 1
      %v7590 = vsel %vm448, %v7585, %v7589
      %v7591 = vshrl.u32 %v7522, 16
      %v7593 = vor.u32 %v7591, %v7589
      %v7595 = vshll.u32 %v7523, 16
      %v7597 = vrot.slane %v7595, 1
      %v7598 = vsel %vm448, %v7593, %v7597
      %v7599 = vshrl.u32 %v7523, 16
      %v7601 = vor.u32 %v7599, %v7597
      %v7603 = vshll.u32 %v7524, 16
      %v7605 = vrot.slane %v7603, 1
      %v7606 = vsel %vm448, %v7601, %v7605
      %v7607 = vshrl.u32 %v7524, 16
      %v7609 = vor.u32 %v7607, %v7605
      %v7611 = vshll.u32 %v7525, 16
      %v7613 = vrot.slane %v7611, 1
      %v7614 = vsel %vm448, %v7609, %v7613
      %v7615 = vshrl.u32 %v7525, 16
      %v7617 = vor.u32 %v7615, %v7613
      %v7619 = vshll.u32 %v7526, 16
      %v7621 = vrot.slane %v7619, 1
      %v7622 = vsel %vm448, %v7617, %v7621
      %v7623 = vshrl.u32 %v7526, 16
      %v7625 = vor.u32 %v7623, %v7621
      %v7627 = vshll.u32 %v7527, 16
      %v7629 = vrot.slane %v7627, 1
      %v7630 = vsel %vm448, %v7625, %v7629
      %v7631 = vshrl.u32 %v7527, 16
      %v7633 = vor.u32 %v7631, %v7629
      %v7635 = vshll.u32 %v7528, 16
      %v7637 = vrot.slane %v7635, 1
      %v7638 = vsel %vm448, %v7633, %v7637
      %v7639 = vshrl.u32 %v7528, 16
      %v7641 = vor.u32 %v7639, %v7637
      %v7643 = vshll.u32 %v7529, 16
      %v7645 = vrot.slane %v7643, 1
      %v7646 = vsel %vm448, %v7641, %v7645
      %v7647 = vshrl.u32 %v7529, 16
      %v7649 = vor.u32 %v7647, %v7645
      %v7651 = vshll.u32 %v7530, 16
      %v7653 = vrot.slane %v7651, 1
      %v7654 = vsel %vm448, %v7649, %v7653
      %v7655 = vshrl.u32 %v7530, 16
      %v7657 = vor.u32 %v7655, %v7653
      %v7659 = vsel %vm576, %v7542, 0
      %v7662 = vsel %vm576, %v7550, 0
      %v7665 = vsel %vm576, %v7558, 0
      %v7668 = vsel %vm576, %v7566, 0
      %v7671 = vsel %vm576, %v7574, 0
      %v7674 = vsel %vm576, %v7582, 0
      %v7677 = vsel %vm576, %v7590, 0
      %v7680 = vsel %vm576, %v7598, 0
      %v7683 = vsel %vm576, %v7606, 0
      %v7686 = vsel %vm576, %v7614, 0
      %v7689 = vsel %vm576, %v7622, 0
      %v7692 = vsel %vm576, %v7630, 0
      %v7695 = vsel %vm576, %v7638, 0
      %v7698 = vsel %vm576, %v7646, 0
      %v7701 = vsel %vm576, %v7654, 0
      %v7704 = vsel %vm576, %v7657, 0
      %v7707 = vsel %vm625, %v7452, 0
      %7709 = vmatpush.bf16.msra.mxu0 0
      %7710 = vmatpush.bf16.msra.mxu0 0
      %7711 = vmatpush.bf16.msra.mxu0 0
      %7712 = vmatpush.bf16.msra.mxu0 0
      %7713 = vmatpush.bf16.msra.mxu0 0
      %7714 = vmatpush.bf16.msra.mxu0 0
      %7715 = vmatpush.bf16.msra.mxu0 0
      %7716 = vmatpush.bf16.msra.mxu0 %v7707
      %7717 = vmatmul.bf16.gmra.mxu0 %v7659
      %v7718 = vpop.f32.mrf.mxu0
      %v7719 = vadd.f32 0.0, %v7718
      %v7720 = vpop.f32.mrf.mxu0
      %v7721 = vadd.f32 0.0, %v7720
      %7722 = vmatmul.bf16.gmra.mxu0 %v7662
      %v7723 = vpop.f32.mrf.mxu0
      %v7724 = vadd.f32 0.0, %v7723
      %v7725 = vpop.f32.mrf.mxu0
      %v7726 = vadd.f32 0.0, %v7725
      %7727 = vmatmul.bf16.gmra.mxu0 %v7665
      %v7728 = vpop.f32.mrf.mxu0
      %v7729 = vadd.f32 0.0, %v7728
      %v7730 = vpop.f32.mrf.mxu0
      %v7731 = vadd.f32 0.0, %v7730
      %7732 = vmatmul.bf16.gmra.mxu0 %v7668
      %v7733 = vpop.f32.mrf.mxu0
      %v7734 = vadd.f32 0.0, %v7733
      %v7735 = vpop.f32.mrf.mxu0
      %v7736 = vadd.f32 0.0, %v7735
      %7737 = vmatmul.bf16.gmra.mxu0 %v7671
      %v7738 = vpop.f32.mrf.mxu0
      %v7739 = vadd.f32 0.0, %v7738
      %v7740 = vpop.f32.mrf.mxu0
      %v7741 = vadd.f32 0.0, %v7740
      %7742 = vmatmul.bf16.gmra.mxu0 %v7674
      %v7743 = vpop.f32.mrf.mxu0
      %v7744 = vadd.f32 0.0, %v7743
      %v7745 = vpop.f32.mrf.mxu0
      %v7746 = vadd.f32 0.0, %v7745
      %7747 = vmatmul.bf16.gmra.mxu0 %v7677
      %v7748 = vpop.f32.mrf.mxu0
      %v7749 = vadd.f32 0.0, %v7748
      %v7750 = vpop.f32.mrf.mxu0
      %v7751 = vadd.f32 0.0, %v7750
      %7752 = vmatmul.bf16.gmra.mxu0 %v7680
      %v7753 = vpop.f32.mrf.mxu0
      %v7754 = vadd.f32 0.0, %v7753
      %v7755 = vpop.f32.mrf.mxu0
      %v7756 = vadd.f32 0.0, %v7755
      %7757 = vmatmul.bf16.gmra.mxu0 %v7683
      %v7758 = vpop.f32.mrf.mxu0
      %v7759 = vadd.f32 0.0, %v7758
      %v7760 = vpop.f32.mrf.mxu0
      %v7761 = vadd.f32 0.0, %v7760
      %7762 = vmatmul.bf16.gmra.mxu0 %v7686
      %v7763 = vpop.f32.mrf.mxu0
      %v7764 = vadd.f32 0.0, %v7763
      %v7765 = vpop.f32.mrf.mxu0
      %v7766 = vadd.f32 0.0, %v7765
      %7767 = vmatmul.bf16.gmra.mxu0 %v7689
      %v7768 = vpop.f32.mrf.mxu0
      %v7769 = vadd.f32 0.0, %v7768
      %v7770 = vpop.f32.mrf.mxu0
      %v7771 = vadd.f32 0.0, %v7770
      %7772 = vmatmul.bf16.gmra.mxu0 %v7692
      %v7773 = vpop.f32.mrf.mxu0
      %v7774 = vadd.f32 0.0, %v7773
      %v7775 = vpop.f32.mrf.mxu0
      %v7776 = vadd.f32 0.0, %v7775
      %7777 = vmatmul.bf16.gmra.mxu0 %v7695
      %v7778 = vpop.f32.mrf.mxu0
      %v7779 = vadd.f32 0.0, %v7778
      %v7780 = vpop.f32.mrf.mxu0
      %v7781 = vadd.f32 0.0, %v7780
      %7782 = vmatmul.bf16.gmra.mxu0 %v7698
      %v7783 = vpop.f32.mrf.mxu0
      %v7784 = vadd.f32 0.0, %v7783
      %v7785 = vpop.f32.mrf.mxu0
      %v7786 = vadd.f32 0.0, %v7785
      %7787 = vmatmul.bf16.gmra.mxu0 %v7701
      %v7788 = vpop.f32.mrf.mxu0
      %v7789 = vadd.f32 0.0, %v7788
      %v7790 = vpop.f32.mrf.mxu0
      %v7791 = vadd.f32 0.0, %v7790
      %7792 = vmatmul.bf16.gmra.mxu0 %v7704
      %v7793 = vpop.f32.mrf.mxu0
      %v7794 = vadd.f32 0.0, %v7793
      %v7795 = vpop.f32.mrf.mxu0
      %7796 = vdwg.mxu0
      %v7797 = vsel %vm576, %v7515, 0
      %v7799 = vsel %vm576, %v7516, 0
      %v7801 = vsel %vm576, %v7517, 0
      %v7803 = vsel %vm576, %v7518, 0
      %v7805 = vsel %vm576, %v7519, 0
      %v7807 = vsel %vm576, %v7520, 0
      %v7809 = vsel %vm576, %v7521, 0
      %v7811 = vsel %vm576, %v7522, 0
      %v7813 = vsel %vm576, %v7523, 0
      %v7815 = vsel %vm576, %v7524, 0
      %v7817 = vsel %vm576, %v7525, 0
      %v7819 = vsel %vm576, %v7526, 0
      %v7821 = vsel %vm576, %v7527, 0
      %v7823 = vsel %vm576, %v7528, 0
      %v7825 = vsel %vm576, %v7529, 0
      %v7827 = vsel %vm576, %v7530, 0
      %v7830 = vsel %vm625, %v7451, 0
      %7832 = vmatpush.bf16.msra.mxu0 0
      %7833 = vmatpush.bf16.msra.mxu0 0
      %7834 = vmatpush.bf16.msra.mxu0 0
      %7835 = vmatpush.bf16.msra.mxu0 0
      %7836 = vmatpush.bf16.msra.mxu0 0
      %7837 = vmatpush.bf16.msra.mxu0 0
      %7838 = vmatpush.bf16.msra.mxu0 0
      %7839 = vmatpush.bf16.msra.mxu0 %v7830
      %7840 = vmatmul.bf16.gmra.mxu0 %v7797
      %v7841 = vpop.f32.mrf.mxu0
      %v7842 = vadd.f32 %v7719, %v7841
      %v7843 = vpop.f32.mrf.mxu0
      %v7844 = vadd.f32 %v7721, %v7843
      %7845 = vmatmul.bf16.gmra.mxu0 %v7799
      %v7846 = vpop.f32.mrf.mxu0
      %v7847 = vadd.f32 %v7724, %v7846
      %v7848 = vpop.f32.mrf.mxu0
      %v7849 = vadd.f32 %v7726, %v7848
      %7850 = vmatmul.bf16.gmra.mxu0 %v7801
      %v7851 = vpop.f32.mrf.mxu0
      %v7852 = vadd.f32 %v7729, %v7851
      %v7853 = vpop.f32.mrf.mxu0
      %v7854 = vadd.f32 %v7731, %v7853
      %7855 = vmatmul.bf16.gmra.mxu0 %v7803
      %v7856 = vpop.f32.mrf.mxu0
      %v7857 = vadd.f32 %v7734, %v7856
      %v7858 = vpop.f32.mrf.mxu0
      %v7859 = vadd.f32 %v7736, %v7858
      %7860 = vmatmul.bf16.gmra.mxu0 %v7805
      %v7861 = vpop.f32.mrf.mxu0
      %v7862 = vadd.f32 %v7739, %v7861
      %v7863 = vpop.f32.mrf.mxu0
      %v7864 = vadd.f32 %v7741, %v7863
      %7865 = vmatmul.bf16.gmra.mxu0 %v7807
      %v7866 = vpop.f32.mrf.mxu0
      %v7867 = vadd.f32 %v7744, %v7866
      %v7868 = vpop.f32.mrf.mxu0
      %v7869 = vadd.f32 %v7746, %v7868
      %7870 = vmatmul.bf16.gmra.mxu0 %v7809
      %v7871 = vpop.f32.mrf.mxu0
      %v7872 = vadd.f32 %v7749, %v7871
      %v7873 = vpop.f32.mrf.mxu0
      %v7874 = vadd.f32 %v7751, %v7873
      %7875 = vmatmul.bf16.gmra.mxu0 %v7811
      %v7876 = vpop.f32.mrf.mxu0
      %v7877 = vadd.f32 %v7754, %v7876
      %v7878 = vpop.f32.mrf.mxu0
      %v7879 = vadd.f32 %v7756, %v7878
      %7880 = vmatmul.bf16.gmra.mxu0 %v7813
      %v7881 = vpop.f32.mrf.mxu0
      %v7882 = vadd.f32 %v7759, %v7881
      %v7883 = vpop.f32.mrf.mxu0
      %v7884 = vadd.f32 %v7761, %v7883
      %7885 = vmatmul.bf16.gmra.mxu0 %v7815
      %v7886 = vpop.f32.mrf.mxu0
      %v7887 = vadd.f32 %v7764, %v7886
      %v7888 = vpop.f32.mrf.mxu0
      %v7889 = vadd.f32 %v7766, %v7888
      %7890 = vmatmul.bf16.gmra.mxu0 %v7817
      %v7891 = vpop.f32.mrf.mxu0
      %v7892 = vadd.f32 %v7769, %v7891
      %v7893 = vpop.f32.mrf.mxu0
      %v7894 = vadd.f32 %v7771, %v7893
      %7895 = vmatmul.bf16.gmra.mxu0 %v7819
      %v7896 = vpop.f32.mrf.mxu0
      %v7897 = vadd.f32 %v7774, %v7896
      %v7898 = vpop.f32.mrf.mxu0
      %v7899 = vadd.f32 %v7776, %v7898
      %7900 = vmatmul.bf16.gmra.mxu0 %v7821
      %v7901 = vpop.f32.mrf.mxu0
      %v7902 = vadd.f32 %v7779, %v7901
      %v7903 = vpop.f32.mrf.mxu0
      %v7904 = vadd.f32 %v7781, %v7903
      %7905 = vmatmul.bf16.gmra.mxu0 %v7823
      %v7906 = vpop.f32.mrf.mxu0
      %v7907 = vadd.f32 %v7784, %v7906
      %v7908 = vpop.f32.mrf.mxu0
      %v7909 = vadd.f32 %v7786, %v7908
      %7910 = vmatmul.bf16.gmra.mxu0 %v7825
      %v7911 = vpop.f32.mrf.mxu0
      %v7912 = vadd.f32 %v7789, %v7911
      %v7913 = vpop.f32.mrf.mxu0
      %v7914 = vadd.f32 %v7791, %v7913
      %7915 = vmatmul.bf16.gmra.mxu0 %v7827
      %v7916 = vpop.f32.mrf.mxu0
      %v7917 = vadd.f32 %v7794, %v7916
      %v7918 = vpop.f32.mrf.mxu0
      %7919 = vdwg.mxu0
      %v7920 = vld [vmem:[%s840] sm:$0xf]
      %v7921 = vrot.slane %v7515, 1
      %v7922 = vrot.slane %v7516, 1
      %v7923 = vsel %vm842, %v7921, %v7922
      %v7924 = vrot.slane %v7517, 1
      %v7925 = vsel %vm842, %v7922, %v7924
      %v7926 = vrot.slane %v7518, 1
      %v7927 = vsel %vm842, %v7924, %v7926
      %v7928 = vrot.slane %v7519, 1
      %v7929 = vsel %vm842, %v7926, %v7928
      %v7930 = vrot.slane %v7520, 1
      %v7931 = vsel %vm842, %v7928, %v7930
      %v7932 = vrot.slane %v7521, 1
      %v7933 = vsel %vm842, %v7930, %v7932
      %v7934 = vrot.slane %v7522, 1
      %v7935 = vsel %vm842, %v7932, %v7934
      %v7936 = vrot.slane %v7523, 1
      %v7937 = vsel %vm842, %v7934, %v7936
      %v7938 = vrot.slane %v7524, 1
      %v7939 = vsel %vm842, %v7936, %v7938
      %v7940 = vrot.slane %v7525, 1
      %v7941 = vsel %vm842, %v7938, %v7940
      %v7942 = vrot.slane %v7526, 1
      %v7943 = vsel %vm842, %v7940, %v7942
      %v7944 = vrot.slane %v7527, 1
      %v7945 = vsel %vm842, %v7942, %v7944
      %v7946 = vrot.slane %v7528, 1
      %v7947 = vsel %vm842, %v7944, %v7946
      %v7948 = vrot.slane %v7529, 1
      %v7949 = vsel %vm842, %v7946, %v7948
      %v7950 = vrot.slane %v7530, 1
      %v7951 = vsel %vm842, %v7948, %v7950
      %v7953 = vsel %vm576, %v7923, 0
      %v7956 = vsel %vm576, %v7925, 0
      %v7959 = vsel %vm576, %v7927, 0
      %v7962 = vsel %vm576, %v7929, 0
      %v7965 = vsel %vm576, %v7931, 0
      %v7968 = vsel %vm576, %v7933, 0
      %v7971 = vsel %vm576, %v7935, 0
      %v7974 = vsel %vm576, %v7937, 0
      %v7977 = vsel %vm576, %v7939, 0
      %v7980 = vsel %vm576, %v7941, 0
      %v7983 = vsel %vm576, %v7943, 0
      %v7986 = vsel %vm576, %v7945, 0
      %v7989 = vsel %vm576, %v7947, 0
      %v7992 = vsel %vm576, %v7949, 0
      %v7995 = vsel %vm576, %v7951, 0
      %v7998 = vsel %vm576, %v7950, 0
      %v8001 = vsel %vm625, %v7920, 0
      %8003 = vmatpush.bf16.msra.mxu0 0
      %8004 = vmatpush.bf16.msra.mxu0 0
      %8005 = vmatpush.bf16.msra.mxu0 0
      %8006 = vmatpush.bf16.msra.mxu0 0
      %8007 = vmatpush.bf16.msra.mxu0 0
      %8008 = vmatpush.bf16.msra.mxu0 0
      %8009 = vmatpush.bf16.msra.mxu0 0
      %8010 = vmatpush.bf16.msra.mxu0 %v8001
      %8011 = vmatmul.bf16.gmra.mxu0 %v7953
      %v8012 = vpop.f32.mrf.mxu0
      %v8013 = vadd.f32 0.0, %v8012
      %v8014 = vpop.f32.mrf.mxu0
      %v8015 = vadd.f32 0.0, %v8014
      %8016 = vmatmul.bf16.gmra.mxu0 %v7956
      %v8017 = vpop.f32.mrf.mxu0
      %v8018 = vadd.f32 0.0, %v8017
      %v8019 = vpop.f32.mrf.mxu0
      %v8020 = vadd.f32 0.0, %v8019
      %8021 = vmatmul.bf16.gmra.mxu0 %v7959
      %v8022 = vpop.f32.mrf.mxu0
      %v8023 = vadd.f32 0.0, %v8022
      %v8024 = vpop.f32.mrf.mxu0
      %v8025 = vadd.f32 0.0, %v8024
      %8026 = vmatmul.bf16.gmra.mxu0 %v7962
      %v8027 = vpop.f32.mrf.mxu0
      %v8028 = vadd.f32 0.0, %v8027
      %v8029 = vpop.f32.mrf.mxu0
      %v8030 = vadd.f32 0.0, %v8029
      %8031 = vmatmul.bf16.gmra.mxu0 %v7965
      %v8032 = vpop.f32.mrf.mxu0
      %v8033 = vadd.f32 0.0, %v8032
      %v8034 = vpop.f32.mrf.mxu0
      %v8035 = vadd.f32 0.0, %v8034
      %8036 = vmatmul.bf16.gmra.mxu0 %v7968
      %v8037 = vpop.f32.mrf.mxu0
      %v8038 = vadd.f32 0.0, %v8037
      %v8039 = vpop.f32.mrf.mxu0
      %v8040 = vadd.f32 0.0, %v8039
      %8041 = vmatmul.bf16.gmra.mxu0 %v7971
      %v8042 = vpop.f32.mrf.mxu0
      %v8043 = vadd.f32 0.0, %v8042
      %v8044 = vpop.f32.mrf.mxu0
      %v8045 = vadd.f32 0.0, %v8044
      %8046 = vmatmul.bf16.gmra.mxu0 %v7974
      %v8047 = vpop.f32.mrf.mxu0
      %v8048 = vadd.f32 0.0, %v8047
      %v8049 = vpop.f32.mrf.mxu0
      %v8050 = vadd.f32 0.0, %v8049
      %8051 = vmatmul.bf16.gmra.mxu0 %v7977
      %v8052 = vpop.f32.mrf.mxu0
      %v8053 = vadd.f32 0.0, %v8052
      %v8054 = vpop.f32.mrf.mxu0
      %v8055 = vadd.f32 0.0, %v8054
      %8056 = vmatmul.bf16.gmra.mxu0 %v7980
      %v8057 = vpop.f32.mrf.mxu0
      %v8058 = vadd.f32 0.0, %v8057
      %v8059 = vpop.f32.mrf.mxu0
      %v8060 = vadd.f32 0.0, %v8059
      %8061 = vmatmul.bf16.gmra.mxu0 %v7983
      %v8062 = vpop.f32.mrf.mxu0
      %v8063 = vadd.f32 0.0, %v8062
      %v8064 = vpop.f32.mrf.mxu0
      %v8065 = vadd.f32 0.0, %v8064
      %8066 = vmatmul.bf16.gmra.mxu0 %v7986
      %v8067 = vpop.f32.mrf.mxu0
      %v8068 = vadd.f32 0.0, %v8067
      %v8069 = vpop.f32.mrf.mxu0
      %v8070 = vadd.f32 0.0, %v8069
      %8071 = vmatmul.bf16.gmra.mxu0 %v7989
      %v8072 = vpop.f32.mrf.mxu0
      %v8073 = vadd.f32 0.0, %v8072
      %v8074 = vpop.f32.mrf.mxu0
      %v8075 = vadd.f32 0.0, %v8074
      %8076 = vmatmul.bf16.gmra.mxu0 %v7992
      %v8077 = vpop.f32.mrf.mxu0
      %v8078 = vadd.f32 0.0, %v8077
      %v8079 = vpop.f32.mrf.mxu0
      %v8080 = vadd.f32 0.0, %v8079
      %8081 = vmatmul.bf16.gmra.mxu0 %v7995
      %v8082 = vpop.f32.mrf.mxu0
      %v8083 = vadd.f32 0.0, %v8082
      %v8084 = vpop.f32.mrf.mxu0
      %v8085 = vadd.f32 0.0, %v8084
      %8086 = vmatmul.bf16.gmra.mxu0 %v7998
      %v8087 = vpop.f32.mrf.mxu0
      %v8088 = vadd.f32 0.0, %v8087
      %v8089 = vpop.f32.mrf.mxu0
      %8090 = vdwg.mxu0
      %v8091 = vadd.f32 %v7842, %v8013
      %v8092 = vadd.f32 %v7844, %v8015
      %v8093 = vadd.f32 %v7847, %v8018
      %v8094 = vadd.f32 %v7849, %v8020
      %v8095 = vadd.f32 %v7852, %v8023
      %v8096 = vadd.f32 %v7854, %v8025
      %v8097 = vadd.f32 %v7857, %v8028
      %v8098 = vadd.f32 %v7859, %v8030
      %v8099 = vadd.f32 %v7862, %v8033
      %v8100 = vadd.f32 %v7864, %v8035
      %v8101 = vadd.f32 %v7867, %v8038
      %v8102 = vadd.f32 %v7869, %v8040
      %v8103 = vadd.f32 %v7872, %v8043
      %v8104 = vadd.f32 %v7874, %v8045
      %v8105 = vadd.f32 %v7877, %v8048
      %v8106 = vadd.f32 %v7879, %v8050
      %v8107 = vadd.f32 %v7882, %v8053
      %v8108 = vadd.f32 %v7884, %v8055
      %v8109 = vadd.f32 %v7887, %v8058
      %v8110 = vadd.f32 %v7889, %v8060
      %v8111 = vadd.f32 %v7892, %v8063
      %v8112 = vadd.f32 %v7894, %v8065
      %v8113 = vadd.f32 %v7897, %v8068
      %v8114 = vadd.f32 %v7899, %v8070
      %v8115 = vadd.f32 %v7902, %v8073
      %v8116 = vadd.f32 %v7904, %v8075
      %v8117 = vadd.f32 %v7907, %v8078
      %v8118 = vadd.f32 %v7909, %v8080
      %v8119 = vadd.f32 %v7912, %v8083
      %v8120 = vadd.f32 %v7914, %v8085
      %v8121 = vadd.f32 %v7917, %v8088
      %v8122 = vld [vmem:[%s310] sm:$0xf]
      %v8123 = vld [vmem:[%s310 + $0x4] sm:$0xf]
      %v8124 = vld [vmem:[%s310 + $0x8] sm:$0xf]
      %v8125 = vld [vmem:[%s310 + $0xc] sm:$0xf]
      %v8126 = vld [vmem:[%s310 + $0x10] sm:$0xf]
      %v8127 = vld [vmem:[%s310 + $0x14] sm:$0xf]
      %v8128 = vld [vmem:[%s310 + $0x18] sm:$0xf]
      %v8129 = vld [vmem:[%s310 + $0x1c] sm:$0xf]
      %v8130 = vld [vmem:[%s310 + $0x20] sm:$0xf]
      %v8131 = vld [vmem:[%s310 + $0x24] sm:$0xf]
      %v8132 = vld [vmem:[%s310 + $0x28] sm:$0xf]
      %v8133 = vld [vmem:[%s310 + $0x2c] sm:$0xf]
      %v8134 = vld [vmem:[%s310 + $0x30] sm:$0xf]
      %v8135 = vld [vmem:[%s310 + $0x34] sm:$0xf]
      %v8136 = vld [vmem:[%s310 + $0x38] sm:$0xf]
      %v8137 = vld [vmem:[%s310 + $0x3c] sm:$0xf]
      %v8138 = vld [vmem:[%s310 + $0x40] sm:$0xf]
      %v8139 = vld [vmem:[%s310 + $0x44] sm:$0xf]
      %v8140 = vld [vmem:[%s310 + $0x48] sm:$0xf]
      %v8141 = vld [vmem:[%s310 + $0x4c] sm:$0xf]
      %v8142 = vld [vmem:[%s310 + $0x50] sm:$0xf]
      %v8143 = vld [vmem:[%s310 + $0x54] sm:$0xf]
      %v8144 = vld [vmem:[%s310 + $0x58] sm:$0xf]
      %v8145 = vld [vmem:[%s310 + $0x5c] sm:$0xf]
      %v8146 = vld [vmem:[%s310 + $0x60] sm:$0xf]
      %v8147 = vld [vmem:[%s310 + $0x64] sm:$0xf]
      %v8148 = vld [vmem:[%s310 + $0x68] sm:$0xf]
      %v8149 = vld [vmem:[%s310 + $0x6c] sm:$0xf]
      %v8150 = vld [vmem:[%s310 + $0x70] sm:$0xf]
      %v8151 = vld [vmem:[%s310 + $0x74] sm:$0xf]
      %v8152 = vld [vmem:[%s310 + $0x78] sm:$0x7]
      %v8153 = vld [vmem:[%s1076] sm:$0xf]
      %v8185 = vunpack.c.l.b16 %v8122
      %v8186 = vunpack.c.l.b16 %v8123
      %v8187 = vunpack.c.l.b16 %v8124
      %v8188 = vunpack.c.l.b16 %v8125
      %v8189 = vunpack.c.l.b16 %v8126
      %v8190 = vunpack.c.l.b16 %v8127
      %v8191 = vunpack.c.l.b16 %v8128
      %v8192 = vunpack.c.l.b16 %v8129
      %v8193 = vunpack.c.l.b16 %v8130
      %v8194 = vunpack.c.l.b16 %v8131
      %v8195 = vunpack.c.l.b16 %v8132
      %v8196 = vunpack.c.l.b16 %v8133
      %v8197 = vunpack.c.l.b16 %v8134
      %v8198 = vunpack.c.l.b16 %v8135
      %v8199 = vunpack.c.l.b16 %v8136
      %v8200 = vunpack.c.l.b16 %v8137
      %v8201 = vunpack.c.l.b16 %v8138
      %v8202 = vunpack.c.l.b16 %v8139
      %v8203 = vunpack.c.l.b16 %v8140
      %v8204 = vunpack.c.l.b16 %v8141
      %v8205 = vunpack.c.l.b16 %v8142
      %v8206 = vunpack.c.l.b16 %v8143
      %v8207 = vunpack.c.l.b16 %v8144
      %v8208 = vunpack.c.l.b16 %v8145
      %v8209 = vunpack.c.l.b16 %v8146
      %v8210 = vunpack.c.l.b16 %v8147
      %v8211 = vunpack.c.l.b16 %v8148
      %v8212 = vunpack.c.l.b16 %v8149
      %v8213 = vunpack.c.l.b16 %v8150
      %v8214 = vunpack.c.l.b16 %v8151
      %v8215 = vunpack.c.l.b16 %v8152
      %v8216 = vpack.c.b16 %v8186, %v8185
      %v8217 = vpack.c.b16 %v8188, %v8187
      %v8218 = vpack.c.b16 %v8190, %v8189
      %v8219 = vpack.c.b16 %v8192, %v8191
      %v8220 = vpack.c.b16 %v8194, %v8193
      %v8221 = vpack.c.b16 %v8196, %v8195
      %v8222 = vpack.c.b16 %v8198, %v8197
      %v8223 = vpack.c.b16 %v8200, %v8199
      %v8224 = vpack.c.b16 %v8202, %v8201
      %v8225 = vpack.c.b16 %v8204, %v8203
      %v8226 = vpack.c.b16 %v8206, %v8205
      %v8227 = vpack.c.b16 %v8208, %v8207
      %v8228 = vpack.c.b16 %v8210, %v8209
      %v8229 = vpack.c.b16 %v8212, %v8211
      %v8230 = vpack.c.b16 %v8214, %v8213
      %v8231 = vpack.c.b16 %v8215, %v8215
      %v8233 = vsel %vm576, %v8216, 0
      %v8236 = vsel %vm576, %v8217, 0
      %v8239 = vsel %vm576, %v8218, 0
      %v8242 = vsel %vm576, %v8219, 0
      %v8245 = vsel %vm576, %v8220, 0
      %v8248 = vsel %vm576, %v8221, 0
      %v8251 = vsel %vm576, %v8222, 0
      %v8254 = vsel %vm576, %v8223, 0
      %v8257 = vsel %vm576, %v8224, 0
      %v8260 = vsel %vm576, %v8225, 0
      %v8263 = vsel %vm576, %v8226, 0
      %v8266 = vsel %vm576, %v8227, 0
      %v8269 = vsel %vm576, %v8228, 0
      %v8272 = vsel %vm576, %v8229, 0
      %v8275 = vsel %vm576, %v8230, 0
      %v8278 = vsel %vm576, %v8231, 0
      %v8281 = vsel %vm625, %v8153, 0
      %8283 = vmatpush.bf16.msra.mxu0 0
      %8284 = vmatpush.bf16.msra.mxu0 0
      %8285 = vmatpush.bf16.msra.mxu0 0
      %8286 = vmatpush.bf16.msra.mxu0 0
      %8287 = vmatpush.bf16.msra.mxu0 0
      %8288 = vmatpush.bf16.msra.mxu0 0
      %8289 = vmatpush.bf16.msra.mxu0 0
      %8290 = vmatpush.bf16.msra.mxu0 %v8281
      %8291 = vmatmul.bf16.gmra.mxu0 %v8233
      %v8292 = vpop.f32.mrf.mxu0
      %v8293 = vadd.f32 0.0, %v8292
      %v8294 = vpop.f32.mrf.mxu0
      %v8295 = vadd.f32 0.0, %v8294
      %8296 = vmatmul.bf16.gmra.mxu0 %v8236
      %v8297 = vpop.f32.mrf.mxu0
      %v8298 = vadd.f32 0.0, %v8297
      %v8299 = vpop.f32.mrf.mxu0
      %v8300 = vadd.f32 0.0, %v8299
      %8301 = vmatmul.bf16.gmra.mxu0 %v8239
      %v8302 = vpop.f32.mrf.mxu0
      %v8303 = vadd.f32 0.0, %v8302
      %v8304 = vpop.f32.mrf.mxu0
      %v8305 = vadd.f32 0.0, %v8304
      %8306 = vmatmul.bf16.gmra.mxu0 %v8242
      %v8307 = vpop.f32.mrf.mxu0
      %v8308 = vadd.f32 0.0, %v8307
      %v8309 = vpop.f32.mrf.mxu0
      %v8310 = vadd.f32 0.0, %v8309
      %8311 = vmatmul.bf16.gmra.mxu0 %v8245
      %v8312 = vpop.f32.mrf.mxu0
      %v8313 = vadd.f32 0.0, %v8312
      %v8314 = vpop.f32.mrf.mxu0
      %v8315 = vadd.f32 0.0, %v8314
      %8316 = vmatmul.bf16.gmra.mxu0 %v8248
      %v8317 = vpop.f32.mrf.mxu0
      %v8318 = vadd.f32 0.0, %v8317
      %v8319 = vpop.f32.mrf.mxu0
      %v8320 = vadd.f32 0.0, %v8319
      %8321 = vmatmul.bf16.gmra.mxu0 %v8251
      %v8322 = vpop.f32.mrf.mxu0
      %v8323 = vadd.f32 0.0, %v8322
      %v8324 = vpop.f32.mrf.mxu0
      %v8325 = vadd.f32 0.0, %v8324
      %8326 = vmatmul.bf16.gmra.mxu0 %v8254
      %v8327 = vpop.f32.mrf.mxu0
      %v8328 = vadd.f32 0.0, %v8327
      %v8329 = vpop.f32.mrf.mxu0
      %v8330 = vadd.f32 0.0, %v8329
      %8331 = vmatmul.bf16.gmra.mxu0 %v8257
      %v8332 = vpop.f32.mrf.mxu0
      %v8333 = vadd.f32 0.0, %v8332
      %v8334 = vpop.f32.mrf.mxu0
      %v8335 = vadd.f32 0.0, %v8334
      %8336 = vmatmul.bf16.gmra.mxu0 %v8260
      %v8337 = vpop.f32.mrf.mxu0
      %v8338 = vadd.f32 0.0, %v8337
      %v8339 = vpop.f32.mrf.mxu0
      %v8340 = vadd.f32 0.0, %v8339
      %8341 = vmatmul.bf16.gmra.mxu0 %v8263
      %v8342 = vpop.f32.mrf.mxu0
      %v8343 = vadd.f32 0.0, %v8342
      %v8344 = vpop.f32.mrf.mxu0
      %v8345 = vadd.f32 0.0, %v8344
      %8346 = vmatmul.bf16.gmra.mxu0 %v8266
      %v8347 = vpop.f32.mrf.mxu0
      %v8348 = vadd.f32 0.0, %v8347
      %v8349 = vpop.f32.mrf.mxu0
      %v8350 = vadd.f32 0.0, %v8349
      %8351 = vmatmul.bf16.gmra.mxu0 %v8269
      %v8352 = vpop.f32.mrf.mxu0
      %v8353 = vadd.f32 0.0, %v8352
      %v8354 = vpop.f32.mrf.mxu0
      %v8355 = vadd.f32 0.0, %v8354
      %8356 = vmatmul.bf16.gmra.mxu0 %v8272
      %v8357 = vpop.f32.mrf.mxu0
      %v8358 = vadd.f32 0.0, %v8357
      %v8359 = vpop.f32.mrf.mxu0
      %v8360 = vadd.f32 0.0, %v8359
      %8361 = vmatmul.bf16.gmra.mxu0 %v8275
      %v8362 = vpop.f32.mrf.mxu0
      %v8363 = vadd.f32 0.0, %v8362
      %v8364 = vpop.f32.mrf.mxu0
      %v8365 = vadd.f32 0.0, %v8364
      %8366 = vmatmul.bf16.gmra.mxu0 %v8278
      %v8367 = vpop.f32.mrf.mxu0
      %v8368 = vadd.f32 0.0, %v8367
      %v8369 = vpop.f32.mrf.mxu0
      %8370 = vdwg.mxu0
      %v8371 = vadd.f32 %v8091, %v8293
      %v8372 = vadd.f32 %v8092, %v8295
      %v8373 = vadd.f32 %v8093, %v8298
      %v8374 = vadd.f32 %v8094, %v8300
      %v8375 = vadd.f32 %v8095, %v8303
      %v8376 = vadd.f32 %v8096, %v8305
      %v8377 = vadd.f32 %v8097, %v8308
      %v8378 = vadd.f32 %v8098, %v8310
      %v8379 = vadd.f32 %v8099, %v8313
      %v8380 = vadd.f32 %v8100, %v8315
      %v8381 = vadd.f32 %v8101, %v8318
      %v8382 = vadd.f32 %v8102, %v8320
      %v8383 = vadd.f32 %v8103, %v8323
      %v8384 = vadd.f32 %v8104, %v8325
      %v8385 = vadd.f32 %v8105, %v8328
      %v8386 = vadd.f32 %v8106, %v8330
      %v8387 = vadd.f32 %v8107, %v8333
      %v8388 = vadd.f32 %v8108, %v8335
      %v8389 = vadd.f32 %v8109, %v8338
      %v8390 = vadd.f32 %v8110, %v8340
      %v8391 = vadd.f32 %v8111, %v8343
      %v8392 = vadd.f32 %v8112, %v8345
      %v8393 = vadd.f32 %v8113, %v8348
      %v8394 = vadd.f32 %v8114, %v8350
      %v8395 = vadd.f32 %v8115, %v8353
      %v8396 = vadd.f32 %v8116, %v8355
      %v8397 = vadd.f32 %v8117, %v8358
      %v8398 = vadd.f32 %v8118, %v8360
      %v8399 = vadd.f32 %v8119, %v8363
      %v8400 = vadd.f32 %v8120, %v8365
      %v8401 = vadd.f32 %v8121, %v8368
      %v8402 = vld [vmem:[%s1326] sm:$0xf]
      %v8403 = vshrl.u32 %v8216, 16
      %v8405 = vshll.u32 %v8216, 16
      %v8407 = vrot.slane %v8405, 1
      %v8408 = vor.u32 %v8403, %v8407
      %v8409 = vshll.u32 %v8217, 16
      %v8411 = vrot.slane %v8409, 1
      %v8412 = vsel %vm448, %v8408, %v8411
      %v8413 = vshrl.u32 %v8217, 16
      %v8415 = vor.u32 %v8413, %v8411
      %v8416 = vshll.u32 %v8218, 16
      %v8418 = vrot.slane %v8416, 1
      %v8419 = vsel %vm448, %v8415, %v8418
      %v8420 = vshrl.u32 %v8218, 16
      %v8422 = vor.u32 %v8420, %v8418
      %v8423 = vshll.u32 %v8219, 16
      %v8425 = vrot.slane %v8423, 1
      %v8426 = vsel %vm448, %v8422, %v8425
      %v8427 = vshrl.u32 %v8219, 16
      %v8429 = vor.u32 %v8427, %v8425
      %v8430 = vshll.u32 %v8220, 16
      %v8432 = vrot.slane %v8430, 1
      %v8433 = vsel %vm448, %v8429, %v8432
      %v8434 = vshrl.u32 %v8220, 16
      %v8436 = vor.u32 %v8434, %v8432
      %v8437 = vshll.u32 %v8221, 16
      %v8439 = vrot.slane %v8437, 1
      %v8440 = vsel %vm448, %v8436, %v8439
      %v8441 = vshrl.u32 %v8221, 16
      %v8443 = vor.u32 %v8441, %v8439
      %v8444 = vshll.u32 %v8222, 16
      %v8446 = vrot.slane %v8444, 1
      %v8447 = vsel %vm448, %v8443, %v8446
      %v8448 = vshrl.u32 %v8222, 16
      %v8450 = vor.u32 %v8448, %v8446
      %v8451 = vshll.u32 %v8223, 16
      %v8453 = vrot.slane %v8451, 1
      %v8454 = vsel %vm448, %v8450, %v8453
      %v8455 = vshrl.u32 %v8223, 16
      %v8457 = vor.u32 %v8455, %v8453
      %v8458 = vshll.u32 %v8224, 16
      %v8460 = vrot.slane %v8458, 1
      %v8461 = vsel %vm448, %v8457, %v8460
      %v8462 = vshrl.u32 %v8224, 16
      %v8464 = vor.u32 %v8462, %v8460
      %v8465 = vshll.u32 %v8225, 16
      %v8467 = vrot.slane %v8465, 1
      %v8468 = vsel %vm448, %v8464, %v8467
      %v8469 = vshrl.u32 %v8225, 16
      %v8471 = vor.u32 %v8469, %v8467
      %v8472 = vshll.u32 %v8226, 16
      %v8474 = vrot.slane %v8472, 1
      %v8475 = vsel %vm448, %v8471, %v8474
      %v8476 = vshrl.u32 %v8226, 16
      %v8478 = vor.u32 %v8476, %v8474
      %v8479 = vshll.u32 %v8227, 16
      %v8481 = vrot.slane %v8479, 1
      %v8482 = vsel %vm448, %v8478, %v8481
      %v8483 = vshrl.u32 %v8227, 16
      %v8485 = vor.u32 %v8483, %v8481
      %v8486 = vshll.u32 %v8228, 16
      %v8488 = vrot.slane %v8486, 1
      %v8489 = vsel %vm448, %v8485, %v8488
      %v8490 = vshrl.u32 %v8228, 16
      %v8492 = vor.u32 %v8490, %v8488
      %v8493 = vshll.u32 %v8229, 16
      %v8495 = vrot.slane %v8493, 1
      %v8496 = vsel %vm448, %v8492, %v8495
      %v8497 = vshrl.u32 %v8229, 16
      %v8499 = vor.u32 %v8497, %v8495
      %v8500 = vshll.u32 %v8230, 16
      %v8502 = vrot.slane %v8500, 1
      %v8503 = vsel %vm448, %v8499, %v8502
      %v8504 = vshrl.u32 %v8230, 16
      %v8506 = vor.u32 %v8504, %v8502
      %v8507 = vshll.u32 %v8231, 16
      %v8509 = vrot.slane %v8507, 1
      %v8510 = vsel %vm448, %v8506, %v8509
      %v8511 = vshrl.u32 %v8231, 16
      %v8513 = vor.u32 %v8511, %v8509
      %v8515 = vsel %vm576, %v8412, 0
      %v8518 = vsel %vm576, %v8419, 0
      %v8521 = vsel %vm576, %v8426, 0
      %v8524 = vsel %vm576, %v8433, 0
      %v8527 = vsel %vm576, %v8440, 0
      %v8530 = vsel %vm576, %v8447, 0
      %v8533 = vsel %vm576, %v8454, 0
      %v8536 = vsel %vm576, %v8461, 0
      %v8539 = vsel %vm576, %v8468, 0
      %v8542 = vsel %vm576, %v8475, 0
      %v8545 = vsel %vm576, %v8482, 0
      %v8548 = vsel %vm576, %v8489, 0
      %v8551 = vsel %vm576, %v8496, 0
      %v8554 = vsel %vm576, %v8503, 0
      %v8557 = vsel %vm576, %v8510, 0
      %v8560 = vsel %vm576, %v8513, 0
      %v8563 = vsel %vm625, %v8402, 0
      %8565 = vmatpush.bf16.msra.mxu0 0
      %8566 = vmatpush.bf16.msra.mxu0 0
      %8567 = vmatpush.bf16.msra.mxu0 0
      %8568 = vmatpush.bf16.msra.mxu0 0
      %8569 = vmatpush.bf16.msra.mxu0 0
      %8570 = vmatpush.bf16.msra.mxu0 0
      %8571 = vmatpush.bf16.msra.mxu0 0
      %8572 = vmatpush.bf16.msra.mxu0 %v8563
      %8573 = vmatmul.bf16.gmra.mxu0 %v8515
      %v8574 = vpop.f32.mrf.mxu0
      %v8575 = vadd.f32 0.0, %v8574
      %v8576 = vpop.f32.mrf.mxu0
      %v8577 = vadd.f32 0.0, %v8576
      %8578 = vmatmul.bf16.gmra.mxu0 %v8518
      %v8579 = vpop.f32.mrf.mxu0
      %v8580 = vadd.f32 0.0, %v8579
      %v8581 = vpop.f32.mrf.mxu0
      %v8582 = vadd.f32 0.0, %v8581
      %8583 = vmatmul.bf16.gmra.mxu0 %v8521
      %v8584 = vpop.f32.mrf.mxu0
      %v8585 = vadd.f32 0.0, %v8584
      %v8586 = vpop.f32.mrf.mxu0
      %v8587 = vadd.f32 0.0, %v8586
      %8588 = vmatmul.bf16.gmra.mxu0 %v8524
      %v8589 = vpop.f32.mrf.mxu0
      %v8590 = vadd.f32 0.0, %v8589
      %v8591 = vpop.f32.mrf.mxu0
      %v8592 = vadd.f32 0.0, %v8591
      %8593 = vmatmul.bf16.gmra.mxu0 %v8527
      %v8594 = vpop.f32.mrf.mxu0
      %v8595 = vadd.f32 0.0, %v8594
      %v8596 = vpop.f32.mrf.mxu0
      %v8597 = vadd.f32 0.0, %v8596
      %8598 = vmatmul.bf16.gmra.mxu0 %v8530
      %v8599 = vpop.f32.mrf.mxu0
      %v8600 = vadd.f32 0.0, %v8599
      %v8601 = vpop.f32.mrf.mxu0
      %v8602 = vadd.f32 0.0, %v8601
      %8603 = vmatmul.bf16.gmra.mxu0 %v8533
      %v8604 = vpop.f32.mrf.mxu0
      %v8605 = vadd.f32 0.0, %v8604
      %v8606 = vpop.f32.mrf.mxu0
      %v8607 = vadd.f32 0.0, %v8606
      %8608 = vmatmul.bf16.gmra.mxu0 %v8536
      %v8609 = vpop.f32.mrf.mxu0
      %v8610 = vadd.f32 0.0, %v8609
      %v8611 = vpop.f32.mrf.mxu0
      %v8612 = vadd.f32 0.0, %v8611
      %8613 = vmatmul.bf16.gmra.mxu0 %v8539
      %v8614 = vpop.f32.mrf.mxu0
      %v8615 = vadd.f32 0.0, %v8614
      %v8616 = vpop.f32.mrf.mxu0
      %v8617 = vadd.f32 0.0, %v8616
      %8618 = vmatmul.bf16.gmra.mxu0 %v8542
      %v8619 = vpop.f32.mrf.mxu0
      %v8620 = vadd.f32 0.0, %v8619
      %v8621 = vpop.f32.mrf.mxu0
      %v8622 = vadd.f32 0.0, %v8621
      %8623 = vmatmul.bf16.gmra.mxu0 %v8545
      %v8624 = vpop.f32.mrf.mxu0
      %v8625 = vadd.f32 0.0, %v8624
      %v8626 = vpop.f32.mrf.mxu0
      %v8627 = vadd.f32 0.0, %v8626
      %8628 = vmatmul.bf16.gmra.mxu0 %v8548
      %v8629 = vpop.f32.mrf.mxu0
      %v8630 = vadd.f32 0.0, %v8629
      %v8631 = vpop.f32.mrf.mxu0
      %v8632 = vadd.f32 0.0, %v8631
      %8633 = vmatmul.bf16.gmra.mxu0 %v8551
      %v8634 = vpop.f32.mrf.mxu0
      %v8635 = vadd.f32 0.0, %v8634
      %v8636 = vpop.f32.mrf.mxu0
      %v8637 = vadd.f32 0.0, %v8636
      %8638 = vmatmul.bf16.gmra.mxu0 %v8554
      %v8639 = vpop.f32.mrf.mxu0
      %v8640 = vadd.f32 0.0, %v8639
      %v8641 = vpop.f32.mrf.mxu0
      %v8642 = vadd.f32 0.0, %v8641
      %8643 = vmatmul.bf16.gmra.mxu0 %v8557
      %v8644 = vpop.f32.mrf.mxu0
      %v8645 = vadd.f32 0.0, %v8644
      %v8646 = vpop.f32.mrf.mxu0
      %v8647 = vadd.f32 0.0, %v8646
      %8648 = vmatmul.bf16.gmra.mxu0 %v8560
      %v8649 = vpop.f32.mrf.mxu0
      %v8650 = vadd.f32 0.0, %v8649
      %v8651 = vpop.f32.mrf.mxu0
      %8652 = vdwg.mxu0
      %v8653 = vadd.f32 %v8371, %v8575
      %v8654 = vadd.f32 %v8372, %v8577
      %v8655 = vadd.f32 %v8373, %v8580
      %v8656 = vadd.f32 %v8374, %v8582
      %v8657 = vadd.f32 %v8375, %v8585
      %v8658 = vadd.f32 %v8376, %v8587
      %v8659 = vadd.f32 %v8377, %v8590
      %v8660 = vadd.f32 %v8378, %v8592
      %v8661 = vadd.f32 %v8379, %v8595
      %v8662 = vadd.f32 %v8380, %v8597
      %v8663 = vadd.f32 %v8381, %v8600
      %v8664 = vadd.f32 %v8382, %v8602
      %v8665 = vadd.f32 %v8383, %v8605
      %v8666 = vadd.f32 %v8384, %v8607
      %v8667 = vadd.f32 %v8385, %v8610
      %v8668 = vadd.f32 %v8386, %v8612
      %v8669 = vadd.f32 %v8387, %v8615
      %v8670 = vadd.f32 %v8388, %v8617
      %v8671 = vadd.f32 %v8389, %v8620
      %v8672 = vadd.f32 %v8390, %v8622
      %v8673 = vadd.f32 %v8391, %v8625
      %v8674 = vadd.f32 %v8392, %v8627
      %v8675 = vadd.f32 %v8393, %v8630
      %v8676 = vadd.f32 %v8394, %v8632
      %v8677 = vadd.f32 %v8395, %v8635
      %v8678 = vadd.f32 %v8396, %v8637
      %v8679 = vadd.f32 %v8397, %v8640
      %v8680 = vadd.f32 %v8398, %v8642
      %v8681 = vadd.f32 %v8399, %v8645
      %v8682 = vadd.f32 %v8400, %v8647
      %v8683 = vadd.f32 %v8401, %v8650
      %v8684 = vld [vmem:[%s1609] sm:$0xf]
      %v8685 = vrot.slane %v8216, 1
      %v8686 = vrot.slane %v8217, 1
      %v8687 = vsel %vm842, %v8685, %v8686
      %v8688 = vrot.slane %v8218, 1
      %v8689 = vsel %vm842, %v8686, %v8688
      %v8690 = vrot.slane %v8219, 1
      %v8691 = vsel %vm842, %v8688, %v8690
      %v8692 = vrot.slane %v8220, 1
      %v8693 = vsel %vm842, %v8690, %v8692
      %v8694 = vrot.slane %v8221, 1
      %v8695 = vsel %vm842, %v8692, %v8694
      %v8696 = vrot.slane %v8222, 1
      %v8697 = vsel %vm842, %v8694, %v8696
      %v8698 = vrot.slane %v8223, 1
      %v8699 = vsel %vm842, %v8696, %v8698
      %v8700 = vrot.slane %v8224, 1
      %v8701 = vsel %vm842, %v8698, %v8700
      %v8702 = vrot.slane %v8225, 1
      %v8703 = vsel %vm842, %v8700, %v8702
      %v8704 = vrot.slane %v8226, 1
      %v8705 = vsel %vm842, %v8702, %v8704
      %v8706 = vrot.slane %v8227, 1
      %v8707 = vsel %vm842, %v8704, %v8706
      %v8708 = vrot.slane %v8228, 1
      %v8709 = vsel %vm842, %v8706, %v8708
      %v8710 = vrot.slane %v8229, 1
      %v8711 = vsel %vm842, %v8708, %v8710
      %v8712 = vrot.slane %v8230, 1
      %v8713 = vsel %vm842, %v8710, %v8712
      %v8714 = vrot.slane %v8231, 1
      %v8715 = vsel %vm842, %v8712, %v8714
      %v8717 = vsel %vm576, %v8687, 0
      %v8720 = vsel %vm576, %v8689, 0
      %v8723 = vsel %vm576, %v8691, 0
      %v8726 = vsel %vm576, %v8693, 0
      %v8729 = vsel %vm576, %v8695, 0
      %v8732 = vsel %vm576, %v8697, 0
      %v8735 = vsel %vm576, %v8699, 0
      %v8738 = vsel %vm576, %v8701, 0
      %v8741 = vsel %vm576, %v8703, 0
      %v8744 = vsel %vm576, %v8705, 0
      %v8747 = vsel %vm576, %v8707, 0
      %v8750 = vsel %vm576, %v8709, 0
      %v8753 = vsel %vm576, %v8711, 0
      %v8756 = vsel %vm576, %v8713, 0
      %v8759 = vsel %vm576, %v8715, 0
      %v8762 = vsel %vm576, %v8714, 0
      %v8765 = vsel %vm625, %v8684, 0
      %8767 = vmatpush.bf16.msra.mxu0 0
      %8768 = vmatpush.bf16.msra.mxu0 0
      %8769 = vmatpush.bf16.msra.mxu0 0
      %8770 = vmatpush.bf16.msra.mxu0 0
      %8771 = vmatpush.bf16.msra.mxu0 0
      %8772 = vmatpush.bf16.msra.mxu0 0
      %8773 = vmatpush.bf16.msra.mxu0 0
      %8774 = vmatpush.bf16.msra.mxu0 %v8765
      %8775 = vmatmul.bf16.gmra.mxu0 %v8717
      %v8776 = vpop.f32.mrf.mxu0
      %v8777 = vadd.f32 0.0, %v8776
      %v8778 = vpop.f32.mrf.mxu0
      %v8779 = vadd.f32 0.0, %v8778
      %8780 = vmatmul.bf16.gmra.mxu0 %v8720
      %v8781 = vpop.f32.mrf.mxu0
      %v8782 = vadd.f32 0.0, %v8781
      %v8783 = vpop.f32.mrf.mxu0
      %v8784 = vadd.f32 0.0, %v8783
      %8785 = vmatmul.bf16.gmra.mxu0 %v8723
      %v8786 = vpop.f32.mrf.mxu0
      %v8787 = vadd.f32 0.0, %v8786
      %v8788 = vpop.f32.mrf.mxu0
      %v8789 = vadd.f32 0.0, %v8788
      %8790 = vmatmul.bf16.gmra.mxu0 %v8726
      %v8791 = vpop.f32.mrf.mxu0
      %v8792 = vadd.f32 0.0, %v8791
      %v8793 = vpop.f32.mrf.mxu0
      %v8794 = vadd.f32 0.0, %v8793
      %8795 = vmatmul.bf16.gmra.mxu0 %v8729
      %v8796 = vpop.f32.mrf.mxu0
      %v8797 = vadd.f32 0.0, %v8796
      %v8798 = vpop.f32.mrf.mxu0
      %v8799 = vadd.f32 0.0, %v8798
      %8800 = vmatmul.bf16.gmra.mxu0 %v8732
      %v8801 = vpop.f32.mrf.mxu0
      %v8802 = vadd.f32 0.0, %v8801
      %v8803 = vpop.f32.mrf.mxu0
      %v8804 = vadd.f32 0.0, %v8803
      %8805 = vmatmul.bf16.gmra.mxu0 %v8735
      %v8806 = vpop.f32.mrf.mxu0
      %v8807 = vadd.f32 0.0, %v8806
      %v8808 = vpop.f32.mrf.mxu0
      %v8809 = vadd.f32 0.0, %v8808
      %8810 = vmatmul.bf16.gmra.mxu0 %v8738
      %v8811 = vpop.f32.mrf.mxu0
      %v8812 = vadd.f32 0.0, %v8811
      %v8813 = vpop.f32.mrf.mxu0
      %v8814 = vadd.f32 0.0, %v8813
      %8815 = vmatmul.bf16.gmra.mxu0 %v8741
      %v8816 = vpop.f32.mrf.mxu0
      %v8817 = vadd.f32 0.0, %v8816
      %v8818 = vpop.f32.mrf.mxu0
      %v8819 = vadd.f32 0.0, %v8818
      %8820 = vmatmul.bf16.gmra.mxu0 %v8744
      %v8821 = vpop.f32.mrf.mxu0
      %v8822 = vadd.f32 0.0, %v8821
      %v8823 = vpop.f32.mrf.mxu0
      %v8824 = vadd.f32 0.0, %v8823
      %8825 = vmatmul.bf16.gmra.mxu0 %v8747
      %v8826 = vpop.f32.mrf.mxu0
      %v8827 = vadd.f32 0.0, %v8826
      %v8828 = vpop.f32.mrf.mxu0
      %v8829 = vadd.f32 0.0, %v8828
      %8830 = vmatmul.bf16.gmra.mxu0 %v8750
      %v8831 = vpop.f32.mrf.mxu0
      %v8832 = vadd.f32 0.0, %v8831
      %v8833 = vpop.f32.mrf.mxu0
      %v8834 = vadd.f32 0.0, %v8833
      %8835 = vmatmul.bf16.gmra.mxu0 %v8753
      %v8836 = vpop.f32.mrf.mxu0
      %v8837 = vadd.f32 0.0, %v8836
      %v8838 = vpop.f32.mrf.mxu0
      %v8839 = vadd.f32 0.0, %v8838
      %8840 = vmatmul.bf16.gmra.mxu0 %v8756
      %v8841 = vpop.f32.mrf.mxu0
      %v8842 = vadd.f32 0.0, %v8841
      %v8843 = vpop.f32.mrf.mxu0
      %v8844 = vadd.f32 0.0, %v8843
      %8845 = vmatmul.bf16.gmra.mxu0 %v8759
      %v8846 = vpop.f32.mrf.mxu0
      %v8847 = vadd.f32 0.0, %v8846
      %v8848 = vpop.f32.mrf.mxu0
      %v8849 = vadd.f32 0.0, %v8848
      %8850 = vmatmul.bf16.gmra.mxu0 %v8762
      %v8851 = vpop.f32.mrf.mxu0
      %v8852 = vadd.f32 0.0, %v8851
      %v8853 = vpop.f32.mrf.mxu0
      %8854 = vdwg.mxu0
      %v8855 = vadd.f32 %v8653, %v8777
      %v8856 = vadd.f32 %v8654, %v8779
      %v8857 = vadd.f32 %v8655, %v8782
      %v8858 = vadd.f32 %v8656, %v8784
      %v8859 = vadd.f32 %v8657, %v8787
      %v8860 = vadd.f32 %v8658, %v8789
      %v8861 = vadd.f32 %v8659, %v8792
      %v8862 = vadd.f32 %v8660, %v8794
      %v8863 = vadd.f32 %v8661, %v8797
      %v8864 = vadd.f32 %v8662, %v8799
      %v8865 = vadd.f32 %v8663, %v8802
      %v8866 = vadd.f32 %v8664, %v8804
      %v8867 = vadd.f32 %v8665, %v8807
      %v8868 = vadd.f32 %v8666, %v8809
      %v8869 = vadd.f32 %v8667, %v8812
      %v8870 = vadd.f32 %v8668, %v8814
      %v8871 = vadd.f32 %v8669, %v8817
      %v8872 = vadd.f32 %v8670, %v8819
      %v8873 = vadd.f32 %v8671, %v8822
      %v8874 = vadd.f32 %v8672, %v8824
      %v8875 = vadd.f32 %v8673, %v8827
      %v8876 = vadd.f32 %v8674, %v8829
      %v8877 = vadd.f32 %v8675, %v8832
      %v8878 = vadd.f32 %v8676, %v8834
      %v8879 = vadd.f32 %v8677, %v8837
      %v8880 = vadd.f32 %v8678, %v8839
      %v8881 = vadd.f32 %v8679, %v8842
      %v8882 = vadd.f32 %v8680, %v8844
      %v8883 = vadd.f32 %v8681, %v8847
      %v8884 = vadd.f32 %v8682, %v8849
      %v8885 = vadd.f32 %v8683, %v8852
      %s8886 = scalar_lea.vmem %s310, 124
      %v8887 = vld [vmem:[%s8886] sm:$0xf]
      %v8888 = vld [vmem:[%s8886 + $0x4] sm:$0xf]
      %v8889 = vld [vmem:[%s8886 + $0x8] sm:$0xf]
      %v8890 = vld [vmem:[%s8886 + $0xc] sm:$0xf]
      %v8891 = vld [vmem:[%s8886 + $0x10] sm:$0xf]
      %v8892 = vld [vmem:[%s8886 + $0x14] sm:$0xf]
      %v8893 = vld [vmem:[%s8886 + $0x18] sm:$0xf]
      %v8894 = vld [vmem:[%s8886 + $0x1c] sm:$0xf]
      %v8895 = vld [vmem:[%s8886 + $0x20] sm:$0xf]
      %v8896 = vld [vmem:[%s8886 + $0x24] sm:$0xf]
      %v8897 = vld [vmem:[%s8886 + $0x28] sm:$0xf]
      %v8898 = vld [vmem:[%s8886 + $0x2c] sm:$0xf]
      %v8899 = vld [vmem:[%s8886 + $0x30] sm:$0xf]
      %v8900 = vld [vmem:[%s8886 + $0x34] sm:$0xf]
      %v8901 = vld [vmem:[%s8886 + $0x38] sm:$0xf]
      %v8902 = vld [vmem:[%s8886 + $0x3c] sm:$0xf]
      %v8903 = vld [vmem:[%s8886 + $0x40] sm:$0xf]
      %v8904 = vld [vmem:[%s8886 + $0x44] sm:$0xf]
      %v8905 = vld [vmem:[%s8886 + $0x48] sm:$0xf]
      %v8906 = vld [vmem:[%s8886 + $0x4c] sm:$0xf]
      %v8907 = vld [vmem:[%s8886 + $0x50] sm:$0xf]
      %v8908 = vld [vmem:[%s8886 + $0x54] sm:$0xf]
      %v8909 = vld [vmem:[%s8886 + $0x58] sm:$0xf]
      %v8910 = vld [vmem:[%s8886 + $0x5c] sm:$0xf]
      %v8911 = vld [vmem:[%s8886 + $0x60] sm:$0xf]
      %v8912 = vld [vmem:[%s8886 + $0x64] sm:$0xf]
      %v8913 = vld [vmem:[%s8886 + $0x68] sm:$0xf]
      %v8914 = vld [vmem:[%s8886 + $0x6c] sm:$0xf]
      %v8915 = vld [vmem:[%s8886 + $0x70] sm:$0xf]
      %v8916 = vld [vmem:[%s8886 + $0x74] sm:$0xf]
      %v8917 = vld [vmem:[%s8886 + $0x78] sm:$0x7]
      %v8918 = vld [vmem:[%s1844] sm:$0xf]
      %v8950 = vunpack.c.l.b16 %v8887
      %v8951 = vunpack.c.l.b16 %v8888
      %v8952 = vunpack.c.l.b16 %v8889
      %v8953 = vunpack.c.l.b16 %v8890
      %v8954 = vunpack.c.l.b16 %v8891
      %v8955 = vunpack.c.l.b16 %v8892
      %v8956 = vunpack.c.l.b16 %v8893
      %v8957 = vunpack.c.l.b16 %v8894
      %v8958 = vunpack.c.l.b16 %v8895
      %v8959 = vunpack.c.l.b16 %v8896
      %v8960 = vunpack.c.l.b16 %v8897
      %v8961 = vunpack.c.l.b16 %v8898
      %v8962 = vunpack.c.l.b16 %v8899
      %v8963 = vunpack.c.l.b16 %v8900
      %v8964 = vunpack.c.l.b16 %v8901
      %v8965 = vunpack.c.l.b16 %v8902
      %v8966 = vunpack.c.l.b16 %v8903
      %v8967 = vunpack.c.l.b16 %v8904
      %v8968 = vunpack.c.l.b16 %v8905
      %v8969 = vunpack.c.l.b16 %v8906
      %v8970 = vunpack.c.l.b16 %v8907
      %v8971 = vunpack.c.l.b16 %v8908
      %v8972 = vunpack.c.l.b16 %v8909
      %v8973 = vunpack.c.l.b16 %v8910
      %v8974 = vunpack.c.l.b16 %v8911
      %v8975 = vunpack.c.l.b16 %v8912
      %v8976 = vunpack.c.l.b16 %v8913
      %v8977 = vunpack.c.l.b16 %v8914
      %v8978 = vunpack.c.l.b16 %v8915
      %v8979 = vunpack.c.l.b16 %v8916
      %v8980 = vunpack.c.l.b16 %v8917
      %v8981 = vpack.c.b16 %v8951, %v8950
      %v8982 = vpack.c.b16 %v8953, %v8952
      %v8983 = vpack.c.b16 %v8955, %v8954
      %v8984 = vpack.c.b16 %v8957, %v8956
      %v8985 = vpack.c.b16 %v8959, %v8958
      %v8986 = vpack.c.b16 %v8961, %v8960
      %v8987 = vpack.c.b16 %v8963, %v8962
      %v8988 = vpack.c.b16 %v8965, %v8964
      %v8989 = vpack.c.b16 %v8967, %v8966
      %v8990 = vpack.c.b16 %v8969, %v8968
      %v8991 = vpack.c.b16 %v8971, %v8970
      %v8992 = vpack.c.b16 %v8973, %v8972
      %v8993 = vpack.c.b16 %v8975, %v8974
      %v8994 = vpack.c.b16 %v8977, %v8976
      %v8995 = vpack.c.b16 %v8979, %v8978
      %v8996 = vpack.c.b16 %v8980, %v8980
      %v8998 = vsel %vm576, %v8981, 0
      %v9001 = vsel %vm576, %v8982, 0
      %v9004 = vsel %vm576, %v8983, 0
      %v9007 = vsel %vm576, %v8984, 0
      %v9010 = vsel %vm576, %v8985, 0
      %v9013 = vsel %vm576, %v8986, 0
      %v9016 = vsel %vm576, %v8987, 0
      %v9019 = vsel %vm576, %v8988, 0
      %v9022 = vsel %vm576, %v8989, 0
      %v9025 = vsel %vm576, %v8990, 0
      %v9028 = vsel %vm576, %v8991, 0
      %v9031 = vsel %vm576, %v8992, 0
      %v9034 = vsel %vm576, %v8993, 0
      %v9037 = vsel %vm576, %v8994, 0
      %v9040 = vsel %vm576, %v8995, 0
      %v9043 = vsel %vm576, %v8996, 0
      %v9046 = vsel %vm625, %v8918, 0
      %9048 = vmatpush.bf16.msra.mxu0 0
      %9049 = vmatpush.bf16.msra.mxu0 0
      %9050 = vmatpush.bf16.msra.mxu0 0
      %9051 = vmatpush.bf16.msra.mxu0 0
      %9052 = vmatpush.bf16.msra.mxu0 0
      %9053 = vmatpush.bf16.msra.mxu0 0
      %9054 = vmatpush.bf16.msra.mxu0 0
      %9055 = vmatpush.bf16.msra.mxu0 %v9046
      %9056 = vmatmul.bf16.gmra.mxu0 %v8998
      %v9057 = vpop.f32.mrf.mxu0
      %v9058 = vadd.f32 0.0, %v9057
      %v9059 = vpop.f32.mrf.mxu0
      %v9060 = vadd.f32 0.0, %v9059
      %9061 = vmatmul.bf16.gmra.mxu0 %v9001
      %v9062 = vpop.f32.mrf.mxu0
      %v9063 = vadd.f32 0.0, %v9062
      %v9064 = vpop.f32.mrf.mxu0
      %v9065 = vadd.f32 0.0, %v9064
      %9066 = vmatmul.bf16.gmra.mxu0 %v9004
      %v9067 = vpop.f32.mrf.mxu0
      %v9068 = vadd.f32 0.0, %v9067
      %v9069 = vpop.f32.mrf.mxu0
      %v9070 = vadd.f32 0.0, %v9069
      %9071 = vmatmul.bf16.gmra.mxu0 %v9007
      %v9072 = vpop.f32.mrf.mxu0
      %v9073 = vadd.f32 0.0, %v9072
      %v9074 = vpop.f32.mrf.mxu0
      %v9075 = vadd.f32 0.0, %v9074
      %9076 = vmatmul.bf16.gmra.mxu0 %v9010
      %v9077 = vpop.f32.mrf.mxu0
      %v9078 = vadd.f32 0.0, %v9077
      %v9079 = vpop.f32.mrf.mxu0
      %v9080 = vadd.f32 0.0, %v9079
      %9081 = vmatmul.bf16.gmra.mxu0 %v9013
      %v9082 = vpop.f32.mrf.mxu0
      %v9083 = vadd.f32 0.0, %v9082
      %v9084 = vpop.f32.mrf.mxu0
      %v9085 = vadd.f32 0.0, %v9084
      %9086 = vmatmul.bf16.gmra.mxu0 %v9016
      %v9087 = vpop.f32.mrf.mxu0
      %v9088 = vadd.f32 0.0, %v9087
      %v9089 = vpop.f32.mrf.mxu0
      %v9090 = vadd.f32 0.0, %v9089
      %9091 = vmatmul.bf16.gmra.mxu0 %v9019
      %v9092 = vpop.f32.mrf.mxu0
      %v9093 = vadd.f32 0.0, %v9092
      %v9094 = vpop.f32.mrf.mxu0
      %v9095 = vadd.f32 0.0, %v9094
      %9096 = vmatmul.bf16.gmra.mxu0 %v9022
      %v9097 = vpop.f32.mrf.mxu0
      %v9098 = vadd.f32 0.0, %v9097
      %v9099 = vpop.f32.mrf.mxu0
      %v9100 = vadd.f32 0.0, %v9099
      %9101 = vmatmul.bf16.gmra.mxu0 %v9025
      %v9102 = vpop.f32.mrf.mxu0
      %v9103 = vadd.f32 0.0, %v9102
      %v9104 = vpop.f32.mrf.mxu0
      %v9105 = vadd.f32 0.0, %v9104
      %9106 = vmatmul.bf16.gmra.mxu0 %v9028
      %v9107 = vpop.f32.mrf.mxu0
      %v9108 = vadd.f32 0.0, %v9107
      %v9109 = vpop.f32.mrf.mxu0
      %v9110 = vadd.f32 0.0, %v9109
      %9111 = vmatmul.bf16.gmra.mxu0 %v9031
      %v9112 = vpop.f32.mrf.mxu0
      %v9113 = vadd.f32 0.0, %v9112
      %v9114 = vpop.f32.mrf.mxu0
      %v9115 = vadd.f32 0.0, %v9114
      %9116 = vmatmul.bf16.gmra.mxu0 %v9034
      %v9117 = vpop.f32.mrf.mxu0
      %v9118 = vadd.f32 0.0, %v9117
      %v9119 = vpop.f32.mrf.mxu0
      %v9120 = vadd.f32 0.0, %v9119
      %9121 = vmatmul.bf16.gmra.mxu0 %v9037
      %v9122 = vpop.f32.mrf.mxu0
      %v9123 = vadd.f32 0.0, %v9122
      %v9124 = vpop.f32.mrf.mxu0
      %v9125 = vadd.f32 0.0, %v9124
      %9126 = vmatmul.bf16.gmra.mxu0 %v9040
      %v9127 = vpop.f32.mrf.mxu0
      %v9128 = vadd.f32 0.0, %v9127
      %v9129 = vpop.f32.mrf.mxu0
      %v9130 = vadd.f32 0.0, %v9129
      %9131 = vmatmul.bf16.gmra.mxu0 %v9043
      %v9132 = vpop.f32.mrf.mxu0
      %v9133 = vadd.f32 0.0, %v9132
      %v9134 = vpop.f32.mrf.mxu0
      %9135 = vdwg.mxu0
      %v9136 = vadd.f32 %v8855, %v9058
      %v9137 = vadd.f32 %v8856, %v9060
      %v9138 = vadd.f32 %v8857, %v9063
      %v9139 = vadd.f32 %v8858, %v9065
      %v9140 = vadd.f32 %v8859, %v9068
      %v9141 = vadd.f32 %v8860, %v9070
      %v9142 = vadd.f32 %v8861, %v9073
      %v9143 = vadd.f32 %v8862, %v9075
      %v9144 = vadd.f32 %v8863, %v9078
      %v9145 = vadd.f32 %v8864, %v9080
      %v9146 = vadd.f32 %v8865, %v9083
      %v9147 = vadd.f32 %v8866, %v9085
      %v9148 = vadd.f32 %v8867, %v9088
      %v9149 = vadd.f32 %v8868, %v9090
      %v9150 = vadd.f32 %v8869, %v9093
      %v9151 = vadd.f32 %v8870, %v9095
      %v9152 = vadd.f32 %v8871, %v9098
      %v9153 = vadd.f32 %v8872, %v9100
      %v9154 = vadd.f32 %v8873, %v9103
      %v9155 = vadd.f32 %v8874, %v9105
      %v9156 = vadd.f32 %v8875, %v9108
      %v9157 = vadd.f32 %v8876, %v9110
      %v9158 = vadd.f32 %v8877, %v9113
      %v9159 = vadd.f32 %v8878, %v9115
      %v9160 = vadd.f32 %v8879, %v9118
      %v9161 = vadd.f32 %v8880, %v9120
      %v9162 = vadd.f32 %v8881, %v9123
      %v9163 = vadd.f32 %v8882, %v9125
      %v9164 = vadd.f32 %v8883, %v9128
      %v9165 = vadd.f32 %v8884, %v9130
      %v9166 = vadd.f32 %v8885, %v9133
      %v9167 = vld [vmem:[%s2094] sm:$0xf]
      %v9168 = vshrl.u32 %v8981, 16
      %v9170 = vshll.u32 %v8981, 16
      %v9172 = vrot.slane %v9170, 1
      %v9173 = vor.u32 %v9168, %v9172
      %v9174 = vshll.u32 %v8982, 16
      %v9176 = vrot.slane %v9174, 1
      %v9177 = vsel %vm448, %v9173, %v9176
      %v9178 = vshrl.u32 %v8982, 16
      %v9180 = vor.u32 %v9178, %v9176
      %v9181 = vshll.u32 %v8983, 16
      %v9183 = vrot.slane %v9181, 1
      %v9184 = vsel %vm448, %v9180, %v9183
      %v9185 = vshrl.u32 %v8983, 16
      %v9187 = vor.u32 %v9185, %v9183
      %v9188 = vshll.u32 %v8984, 16
      %v9190 = vrot.slane %v9188, 1
      %v9191 = vsel %vm448, %v9187, %v9190
      %v9192 = vshrl.u32 %v8984, 16
      %v9194 = vor.u32 %v9192, %v9190
      %v9195 = vshll.u32 %v8985, 16
      %v9197 = vrot.slane %v9195, 1
      %v9198 = vsel %vm448, %v9194, %v9197
      %v9199 = vshrl.u32 %v8985, 16
      %v9201 = vor.u32 %v9199, %v9197
      %v9202 = vshll.u32 %v8986, 16
      %v9204 = vrot.slane %v9202, 1
      %v9205 = vsel %vm448, %v9201, %v9204
      %v9206 = vshrl.u32 %v8986, 16
      %v9208 = vor.u32 %v9206, %v9204
      %v9209 = vshll.u32 %v8987, 16
      %v9211 = vrot.slane %v9209, 1
      %v9212 = vsel %vm448, %v9208, %v9211
      %v9213 = vshrl.u32 %v8987, 16
      %v9215 = vor.u32 %v9213, %v9211
      %v9216 = vshll.u32 %v8988, 16
      %v9218 = vrot.slane %v9216, 1
      %v9219 = vsel %vm448, %v9215, %v9218
      %v9220 = vshrl.u32 %v8988, 16
      %v9222 = vor.u32 %v9220, %v9218
      %v9223 = vshll.u32 %v8989, 16
      %v9225 = vrot.slane %v9223, 1
      %v9226 = vsel %vm448, %v9222, %v9225
      %v9227 = vshrl.u32 %v8989, 16
      %v9229 = vor.u32 %v9227, %v9225
      %v9230 = vshll.u32 %v8990, 16
      %v9232 = vrot.slane %v9230, 1
      %v9233 = vsel %vm448, %v9229, %v9232
      %v9234 = vshrl.u32 %v8990, 16
      %v9236 = vor.u32 %v9234, %v9232
      %v9237 = vshll.u32 %v8991, 16
      %v9239 = vrot.slane %v9237, 1
      %v9240 = vsel %vm448, %v9236, %v9239
      %v9241 = vshrl.u32 %v8991, 16
      %v9243 = vor.u32 %v9241, %v9239
      %v9244 = vshll.u32 %v8992, 16
      %v9246 = vrot.slane %v9244, 1
      %v9247 = vsel %vm448, %v9243, %v9246
      %v9248 = vshrl.u32 %v8992, 16
      %v9250 = vor.u32 %v9248, %v9246
      %v9251 = vshll.u32 %v8993, 16
      %v9253 = vrot.slane %v9251, 1
      %v9254 = vsel %vm448, %v9250, %v9253
      %v9255 = vshrl.u32 %v8993, 16
      %v9257 = vor.u32 %v9255, %v9253
      %v9258 = vshll.u32 %v8994, 16
      %v9260 = vrot.slane %v9258, 1
      %v9261 = vsel %vm448, %v9257, %v9260
      %v9262 = vshrl.u32 %v8994, 16
      %v9264 = vor.u32 %v9262, %v9260
      %v9265 = vshll.u32 %v8995, 16
      %v9267 = vrot.slane %v9265, 1
      %v9268 = vsel %vm448, %v9264, %v9267
      %v9269 = vshrl.u32 %v8995, 16
      %v9271 = vor.u32 %v9269, %v9267
      %v9272 = vshll.u32 %v8996, 16
      %v9274 = vrot.slane %v9272, 1
      %v9275 = vsel %vm448, %v9271, %v9274
      %v9276 = vshrl.u32 %v8996, 16
      %v9278 = vor.u32 %v9276, %v9274
      %v9280 = vsel %vm576, %v9177, 0
      %v9283 = vsel %vm576, %v9184, 0
      %v9286 = vsel %vm576, %v9191, 0
      %v9289 = vsel %vm576, %v9198, 0
      %v9292 = vsel %vm576, %v9205, 0
      %v9295 = vsel %vm576, %v9212, 0
      %v9298 = vsel %vm576, %v9219, 0
      %v9301 = vsel %vm576, %v9226, 0
      %v9304 = vsel %vm576, %v9233, 0
      %v9307 = vsel %vm576, %v9240, 0
      %v9310 = vsel %vm576, %v9247, 0
      %v9313 = vsel %vm576, %v9254, 0
      %v9316 = vsel %vm576, %v9261, 0
      %v9319 = vsel %vm576, %v9268, 0
      %v9322 = vsel %vm576, %v9275, 0
      %v9325 = vsel %vm576, %v9278, 0
      %v9328 = vsel %vm625, %v9167, 0
      %9330 = vmatpush.bf16.msra.mxu0 0
      %9331 = vmatpush.bf16.msra.mxu0 0
      %9332 = vmatpush.bf16.msra.mxu0 0
      %9333 = vmatpush.bf16.msra.mxu0 0
      %9334 = vmatpush.bf16.msra.mxu0 0
      %9335 = vmatpush.bf16.msra.mxu0 0
      %9336 = vmatpush.bf16.msra.mxu0 0
      %9337 = vmatpush.bf16.msra.mxu0 %v9328
      %9338 = vmatmul.bf16.gmra.mxu0 %v9280
      %v9339 = vpop.f32.mrf.mxu0
      %v9340 = vadd.f32 0.0, %v9339
      %v9341 = vpop.f32.mrf.mxu0
      %v9342 = vadd.f32 0.0, %v9341
      %9343 = vmatmul.bf16.gmra.mxu0 %v9283
      %v9344 = vpop.f32.mrf.mxu0
      %v9345 = vadd.f32 0.0, %v9344
      %v9346 = vpop.f32.mrf.mxu0
      %v9347 = vadd.f32 0.0, %v9346
      %9348 = vmatmul.bf16.gmra.mxu0 %v9286
      %v9349 = vpop.f32.mrf.mxu0
      %v9350 = vadd.f32 0.0, %v9349
      %v9351 = vpop.f32.mrf.mxu0
      %v9352 = vadd.f32 0.0, %v9351
      %9353 = vmatmul.bf16.gmra.mxu0 %v9289
      %v9354 = vpop.f32.mrf.mxu0
      %v9355 = vadd.f32 0.0, %v9354
      %v9356 = vpop.f32.mrf.mxu0
      %v9357 = vadd.f32 0.0, %v9356
      %9358 = vmatmul.bf16.gmra.mxu0 %v9292
      %v9359 = vpop.f32.mrf.mxu0
      %v9360 = vadd.f32 0.0, %v9359
      %v9361 = vpop.f32.mrf.mxu0
      %v9362 = vadd.f32 0.0, %v9361
      %9363 = vmatmul.bf16.gmra.mxu0 %v9295
      %v9364 = vpop.f32.mrf.mxu0
      %v9365 = vadd.f32 0.0, %v9364
      %v9366 = vpop.f32.mrf.mxu0
      %v9367 = vadd.f32 0.0, %v9366
      %9368 = vmatmul.bf16.gmra.mxu0 %v9298
      %v9369 = vpop.f32.mrf.mxu0
      %v9370 = vadd.f32 0.0, %v9369
      %v9371 = vpop.f32.mrf.mxu0
      %v9372 = vadd.f32 0.0, %v9371
      %9373 = vmatmul.bf16.gmra.mxu0 %v9301
      %v9374 = vpop.f32.mrf.mxu0
      %v9375 = vadd.f32 0.0, %v9374
      %v9376 = vpop.f32.mrf.mxu0
      %v9377 = vadd.f32 0.0, %v9376
      %9378 = vmatmul.bf16.gmra.mxu0 %v9304
      %v9379 = vpop.f32.mrf.mxu0
      %v9380 = vadd.f32 0.0, %v9379
      %v9381 = vpop.f32.mrf.mxu0
      %v9382 = vadd.f32 0.0, %v9381
      %9383 = vmatmul.bf16.gmra.mxu0 %v9307
      %v9384 = vpop.f32.mrf.mxu0
      %v9385 = vadd.f32 0.0, %v9384
      %v9386 = vpop.f32.mrf.mxu0
      %v9387 = vadd.f32 0.0, %v9386
      %9388 = vmatmul.bf16.gmra.mxu0 %v9310
      %v9389 = vpop.f32.mrf.mxu0
      %v9390 = vadd.f32 0.0, %v9389
      %v9391 = vpop.f32.mrf.mxu0
      %v9392 = vadd.f32 0.0, %v9391
      %9393 = vmatmul.bf16.gmra.mxu0 %v9313
      %v9394 = vpop.f32.mrf.mxu0
      %v9395 = vadd.f32 0.0, %v9394
      %v9396 = vpop.f32.mrf.mxu0
      %v9397 = vadd.f32 0.0, %v9396
      %9398 = vmatmul.bf16.gmra.mxu0 %v9316
      %v9399 = vpop.f32.mrf.mxu0
      %v9400 = vadd.f32 0.0, %v9399
      %v9401 = vpop.f32.mrf.mxu0
      %v9402 = vadd.f32 0.0, %v9401
      %9403 = vmatmul.bf16.gmra.mxu0 %v9319
      %v9404 = vpop.f32.mrf.mxu0
      %v9405 = vadd.f32 0.0, %v9404
      %v9406 = vpop.f32.mrf.mxu0
      %v9407 = vadd.f32 0.0, %v9406
      %9408 = vmatmul.bf16.gmra.mxu0 %v9322
      %v9409 = vpop.f32.mrf.mxu0
      %v9410 = vadd.f32 0.0, %v9409
      %v9411 = vpop.f32.mrf.mxu0
      %v9412 = vadd.f32 0.0, %v9411
      %9413 = vmatmul.bf16.gmra.mxu0 %v9325
      %v9414 = vpop.f32.mrf.mxu0
      %v9415 = vadd.f32 0.0, %v9414
      %v9416 = vpop.f32.mrf.mxu0
      %9417 = vdwg.mxu0
      %v9418 = vadd.f32 %v9136, %v9340
      %v9419 = vadd.f32 %v9137, %v9342
      %v9420 = vadd.f32 %v9138, %v9345
      %v9421 = vadd.f32 %v9139, %v9347
      %v9422 = vadd.f32 %v9140, %v9350
      %v9423 = vadd.f32 %v9141, %v9352
      %v9424 = vadd.f32 %v9142, %v9355
      %v9425 = vadd.f32 %v9143, %v9357
      %v9426 = vadd.f32 %v9144, %v9360
      %v9427 = vadd.f32 %v9145, %v9362
      %v9428 = vadd.f32 %v9146, %v9365
      %v9429 = vadd.f32 %v9147, %v9367
      %v9430 = vadd.f32 %v9148, %v9370
      %v9431 = vadd.f32 %v9149, %v9372
      %v9432 = vadd.f32 %v9150, %v9375
      %v9433 = vadd.f32 %v9151, %v9377
      %v9434 = vadd.f32 %v9152, %v9380
      %v9435 = vadd.f32 %v9153, %v9382
      %v9436 = vadd.f32 %v9154, %v9385
      %v9437 = vadd.f32 %v9155, %v9387
      %v9438 = vadd.f32 %v9156, %v9390
      %v9439 = vadd.f32 %v9157, %v9392
      %v9440 = vadd.f32 %v9158, %v9395
      %v9441 = vadd.f32 %v9159, %v9397
      %v9442 = vadd.f32 %v9160, %v9400
      %v9443 = vadd.f32 %v9161, %v9402
      %v9444 = vadd.f32 %v9162, %v9405
      %v9445 = vadd.f32 %v9163, %v9407
      %v9446 = vadd.f32 %v9164, %v9410
      %v9447 = vadd.f32 %v9165, %v9412
      %v9448 = vadd.f32 %v9166, %v9415
      %v9449 = vld [vmem:[%s2377] sm:$0xf]
      %v9450 = vrot.slane %v8981, 1
      %v9451 = vrot.slane %v8982, 1
      %v9452 = vsel %vm842, %v9450, %v9451
      %v9453 = vrot.slane %v8983, 1
      %v9454 = vsel %vm842, %v9451, %v9453
      %v9455 = vrot.slane %v8984, 1
      %v9456 = vsel %vm842, %v9453, %v9455
      %v9457 = vrot.slane %v8985, 1
      %v9458 = vsel %vm842, %v9455, %v9457
      %v9459 = vrot.slane %v8986, 1
      %v9460 = vsel %vm842, %v9457, %v9459
      %v9461 = vrot.slane %v8987, 1
      %v9462 = vsel %vm842, %v9459, %v9461
      %v9463 = vrot.slane %v8988, 1
      %v9464 = vsel %vm842, %v9461, %v9463
      %v9465 = vrot.slane %v8989, 1
      %v9466 = vsel %vm842, %v9463, %v9465
      %v9467 = vrot.slane %v8990, 1
      %v9468 = vsel %vm842, %v9465, %v9467
      %v9469 = vrot.slane %v8991, 1
      %v9470 = vsel %vm842, %v9467, %v9469
      %v9471 = vrot.slane %v8992, 1
      %v9472 = vsel %vm842, %v9469, %v9471
      %v9473 = vrot.slane %v8993, 1
      %v9474 = vsel %vm842, %v9471, %v9473
      %v9475 = vrot.slane %v8994, 1
      %v9476 = vsel %vm842, %v9473, %v9475
      %v9477 = vrot.slane %v8995, 1
      %v9478 = vsel %vm842, %v9475, %v9477
      %v9479 = vrot.slane %v8996, 1
      %v9480 = vsel %vm842, %v9477, %v9479
      %v9482 = vsel %vm576, %v9452, 0
      %v9485 = vsel %vm576, %v9454, 0
      %v9488 = vsel %vm576, %v9456, 0
      %v9491 = vsel %vm576, %v9458, 0
      %v9494 = vsel %vm576, %v9460, 0
      %v9497 = vsel %vm576, %v9462, 0
      %v9500 = vsel %vm576, %v9464, 0
      %v9503 = vsel %vm576, %v9466, 0
      %v9506 = vsel %vm576, %v9468, 0
      %v9509 = vsel %vm576, %v9470, 0
      %v9512 = vsel %vm576, %v9472, 0
      %v9515 = vsel %vm576, %v9474, 0
      %v9518 = vsel %vm576, %v9476, 0
      %v9521 = vsel %vm576, %v9478, 0
      %v9524 = vsel %vm576, %v9480, 0
      %v9527 = vsel %vm576, %v9479, 0
      %v9530 = vsel %vm625, %v9449, 0
      %9532 = vmatpush.bf16.msra.mxu0 0
      %9533 = vmatpush.bf16.msra.mxu0 0
      %9534 = vmatpush.bf16.msra.mxu0 0
      %9535 = vmatpush.bf16.msra.mxu0 0
      %9536 = vmatpush.bf16.msra.mxu0 0
      %9537 = vmatpush.bf16.msra.mxu0 0
      %9538 = vmatpush.bf16.msra.mxu0 0
      %9539 = vmatpush.bf16.msra.mxu0 %v9530
      %9540 = vmatmul.bf16.gmra.mxu0 %v9482
      %v9541 = vpop.f32.mrf.mxu0
      %v9542 = vadd.f32 0.0, %v9541
      %v9543 = vpop.f32.mrf.mxu0
      %v9544 = vadd.f32 0.0, %v9543
      %9545 = vmatmul.bf16.gmra.mxu0 %v9485
      %v9546 = vpop.f32.mrf.mxu0
      %v9547 = vadd.f32 0.0, %v9546
      %v9548 = vpop.f32.mrf.mxu0
      %v9549 = vadd.f32 0.0, %v9548
      %9550 = vmatmul.bf16.gmra.mxu0 %v9488
      %v9551 = vpop.f32.mrf.mxu0
      %v9552 = vadd.f32 0.0, %v9551
      %v9553 = vpop.f32.mrf.mxu0
      %v9554 = vadd.f32 0.0, %v9553
      %9555 = vmatmul.bf16.gmra.mxu0 %v9491
      %v9556 = vpop.f32.mrf.mxu0
      %v9557 = vadd.f32 0.0, %v9556
      %v9558 = vpop.f32.mrf.mxu0
      %v9559 = vadd.f32 0.0, %v9558
      %9560 = vmatmul.bf16.gmra.mxu0 %v9494
      %v9561 = vpop.f32.mrf.mxu0
      %v9562 = vadd.f32 0.0, %v9561
      %v9563 = vpop.f32.mrf.mxu0
      %v9564 = vadd.f32 0.0, %v9563
      %9565 = vmatmul.bf16.gmra.mxu0 %v9497
      %v9566 = vpop.f32.mrf.mxu0
      %v9567 = vadd.f32 0.0, %v9566
      %v9568 = vpop.f32.mrf.mxu0
      %v9569 = vadd.f32 0.0, %v9568
      %9570 = vmatmul.bf16.gmra.mxu0 %v9500
      %v9571 = vpop.f32.mrf.mxu0
      %v9572 = vadd.f32 0.0, %v9571
      %v9573 = vpop.f32.mrf.mxu0
      %v9574 = vadd.f32 0.0, %v9573
      %9575 = vmatmul.bf16.gmra.mxu0 %v9503
      %v9576 = vpop.f32.mrf.mxu0
      %v9577 = vadd.f32 0.0, %v9576
      %v9578 = vpop.f32.mrf.mxu0
      %v9579 = vadd.f32 0.0, %v9578
      %9580 = vmatmul.bf16.gmra.mxu0 %v9506
      %v9581 = vpop.f32.mrf.mxu0
      %v9582 = vadd.f32 0.0, %v9581
      %v9583 = vpop.f32.mrf.mxu0
      %v9584 = vadd.f32 0.0, %v9583
      %9585 = vmatmul.bf16.gmra.mxu0 %v9509
      %v9586 = vpop.f32.mrf.mxu0
      %v9587 = vadd.f32 0.0, %v9586
      %v9588 = vpop.f32.mrf.mxu0
      %v9589 = vadd.f32 0.0, %v9588
      %9590 = vmatmul.bf16.gmra.mxu0 %v9512
      %v9591 = vpop.f32.mrf.mxu0
      %v9592 = vadd.f32 0.0, %v9591
      %v9593 = vpop.f32.mrf.mxu0
      %v9594 = vadd.f32 0.0, %v9593
      %9595 = vmatmul.bf16.gmra.mxu0 %v9515
      %v9596 = vpop.f32.mrf.mxu0
      %v9597 = vadd.f32 0.0, %v9596
      %v9598 = vpop.f32.mrf.mxu0
      %v9599 = vadd.f32 0.0, %v9598
      %9600 = vmatmul.bf16.gmra.mxu0 %v9518
      %v9601 = vpop.f32.mrf.mxu0
      %v9602 = vadd.f32 0.0, %v9601
      %v9603 = vpop.f32.mrf.mxu0
      %v9604 = vadd.f32 0.0, %v9603
      %9605 = vmatmul.bf16.gmra.mxu0 %v9521
      %v9606 = vpop.f32.mrf.mxu0
      %v9607 = vadd.f32 0.0, %v9606
      %v9608 = vpop.f32.mrf.mxu0
      %v9609 = vadd.f32 0.0, %v9608
      %9610 = vmatmul.bf16.gmra.mxu0 %v9524
      %v9611 = vpop.f32.mrf.mxu0
      %v9612 = vadd.f32 0.0, %v9611
      %v9613 = vpop.f32.mrf.mxu0
      %v9614 = vadd.f32 0.0, %v9613
      %9615 = vmatmul.bf16.gmra.mxu0 %v9527
      %v9616 = vpop.f32.mrf.mxu0
      %v9617 = vadd.f32 0.0, %v9616
      %v9618 = vpop.f32.mrf.mxu0
      %9619 = vdwg.mxu0
      %v9620 = vadd.f32 %v9418, %v9542
      %v9621 = vadd.f32 %v9419, %v9544
      %v9622 = vadd.f32 %v9420, %v9547
      %v9623 = vadd.f32 %v9421, %v9549
      %v9624 = vadd.f32 %v9422, %v9552
      %v9625 = vadd.f32 %v9423, %v9554
      %v9626 = vadd.f32 %v9424, %v9557
      %v9627 = vadd.f32 %v9425, %v9559
      %v9628 = vadd.f32 %v9426, %v9562
      %v9629 = vadd.f32 %v9427, %v9564
      %v9630 = vadd.f32 %v9428, %v9567
      %v9631 = vadd.f32 %v9429, %v9569
      %v9632 = vadd.f32 %v9430, %v9572
      %v9633 = vadd.f32 %v9431, %v9574
      %v9634 = vadd.f32 %v9432, %v9577
      %v9635 = vadd.f32 %v9433, %v9579
      %v9636 = vadd.f32 %v9434, %v9582
      %v9637 = vadd.f32 %v9435, %v9584
      %v9638 = vadd.f32 %v9436, %v9587
      %v9639 = vadd.f32 %v9437, %v9589
      %v9640 = vadd.f32 %v9438, %v9592
      %v9641 = vadd.f32 %v9439, %v9594
      %v9642 = vadd.f32 %v9440, %v9597
      %v9643 = vadd.f32 %v9441, %v9599
      %v9644 = vadd.f32 %v9442, %v9602
      %v9645 = vadd.f32 %v9443, %v9604
      %v9646 = vadd.f32 %v9444, %v9607
      %v9647 = vadd.f32 %v9445, %v9609
      %v9648 = vadd.f32 %v9446, %v9612
      %v9649 = vadd.f32 %v9447, %v9614
      %v9650 = vadd.f32 %v9448, %v9617
      %v9651 = vadd.f32 %v9620, %v2581
      %v9652 = vadd.f32 %v9621, %v2581
      %v9653 = vadd.f32 %v9622, %v2581
      %v9654 = vadd.f32 %v9623, %v2581
      %v9655 = vadd.f32 %v9624, %v2581
      %v9656 = vadd.f32 %v9625, %v2581
      %v9657 = vadd.f32 %v9626, %v2581
      %v9658 = vadd.f32 %v9627, %v2581
      %v9659 = vadd.f32 %v9628, %v2581
      %v9660 = vadd.f32 %v9629, %v2581
      %v9661 = vadd.f32 %v9630, %v2581
      %v9662 = vadd.f32 %v9631, %v2581
      %v9663 = vadd.f32 %v9632, %v2581
      %v9664 = vadd.f32 %v9633, %v2581
      %v9665 = vadd.f32 %v9634, %v2581
      %v9666 = vadd.f32 %v9635, %v2581
      %v9667 = vadd.f32 %v9636, %v2581
      %v9668 = vadd.f32 %v9637, %v2581
      %v9669 = vadd.f32 %v9638, %v2581
      %v9670 = vadd.f32 %v9639, %v2581
      %v9671 = vadd.f32 %v9640, %v2581
      %v9672 = vadd.f32 %v9641, %v2581
      %v9673 = vadd.f32 %v9642, %v2581
      %v9674 = vadd.f32 %v9643, %v2581
      %v9675 = vadd.f32 %v9644, %v2581
      %v9676 = vadd.f32 %v9645, %v2581
      %v9677 = vadd.f32 %v9646, %v2581
      %v9678 = vadd.f32 %v9647, %v2581
      %v9679 = vadd.f32 %v9648, %v2581
      %v9680 = vadd.f32 %v9649, %v2581
      %v9681 = vadd.f32 %v9650, %v2581
      %v9682 = vmax.f32 %v9651, 0.0
      %v9683 = vmax.f32 %v9652, 0.0
      %v9684 = vmax.f32 %v9653, 0.0
      %v9685 = vmax.f32 %v9654, 0.0
      %v9686 = vmax.f32 %v9655, 0.0
      %v9687 = vmax.f32 %v9656, 0.0
      %v9688 = vmax.f32 %v9657, 0.0
      %v9689 = vmax.f32 %v9658, 0.0
      %v9690 = vmax.f32 %v9659, 0.0
      %v9691 = vmax.f32 %v9660, 0.0
      %v9692 = vmax.f32 %v9661, 0.0
      %v9693 = vmax.f32 %v9662, 0.0
      %v9694 = vmax.f32 %v9663, 0.0
      %v9695 = vmax.f32 %v9664, 0.0
      %v9696 = vmax.f32 %v9665, 0.0
      %v9697 = vmax.f32 %v9666, 0.0
      %v9698 = vmax.f32 %v9667, 0.0
      %v9699 = vmax.f32 %v9668, 0.0
      %v9700 = vmax.f32 %v9669, 0.0
      %v9701 = vmax.f32 %v9670, 0.0
      %v9702 = vmax.f32 %v9671, 0.0
      %v9703 = vmax.f32 %v9672, 0.0
      %v9704 = vmax.f32 %v9673, 0.0
      %v9705 = vmax.f32 %v9674, 0.0
      %v9706 = vmax.f32 %v9675, 0.0
      %v9707 = vmax.f32 %v9676, 0.0
      %v9708 = vmax.f32 %v9677, 0.0
      %v9709 = vmax.f32 %v9678, 0.0
      %v9710 = vmax.f32 %v9679, 0.0
      %v9711 = vmax.f32 %v9680, 0.0
      %v9712 = vmax.f32 %v9681, 0.0
      %v9713 = vpack.c.bf16 %v9682, %v9682
      %v9714 = vpack.c.bf16 %v9683, %v9683
      %v9715 = vpack.c.bf16 %v9684, %v9684
      %v9716 = vpack.c.bf16 %v9685, %v9685
      %v9717 = vpack.c.bf16 %v9686, %v9686
      %v9718 = vpack.c.bf16 %v9687, %v9687
      %v9719 = vpack.c.bf16 %v9688, %v9688
      %v9720 = vpack.c.bf16 %v9689, %v9689
      %v9721 = vpack.c.bf16 %v9690, %v9690
      %v9722 = vpack.c.bf16 %v9691, %v9691
      %v9723 = vpack.c.bf16 %v9692, %v9692
      %v9724 = vpack.c.bf16 %v9693, %v9693
      %v9725 = vpack.c.bf16 %v9694, %v9694
      %v9726 = vpack.c.bf16 %v9695, %v9695
      %v9727 = vpack.c.bf16 %v9696, %v9696
      %v9728 = vpack.c.bf16 %v9697, %v9697
      %v9729 = vpack.c.bf16 %v9698, %v9698
      %v9730 = vpack.c.bf16 %v9699, %v9699
      %v9731 = vpack.c.bf16 %v9700, %v9700
      %v9732 = vpack.c.bf16 %v9701, %v9701
      %v9733 = vpack.c.bf16 %v9702, %v9702
      %v9734 = vpack.c.bf16 %v9703, %v9703
      %v9735 = vpack.c.bf16 %v9704, %v9704
      %v9736 = vpack.c.bf16 %v9705, %v9705
      %v9737 = vpack.c.bf16 %v9706, %v9706
      %v9738 = vpack.c.bf16 %v9707, %v9707
      %v9739 = vpack.c.bf16 %v9708, %v9708
      %v9740 = vpack.c.bf16 %v9709, %v9709
      %v9741 = vpack.c.bf16 %v9710, %v9710
      %v9742 = vpack.c.bf16 %v9711, %v9711
      %v9743 = vpack.c.bf16 %v9712, %v9712
      %s9744 = scalar_lea.vmem %s332, 372
      %9745 = vst.msk [vmem:[%s9744] sm:$0xf] %vm2676, %v9713
      %9746 = vst.msk [vmem:[%s9744 + $0x4] sm:$0xf] %vm2676, %v9714
      %9747 = vst.msk [vmem:[%s9744 + $0x8] sm:$0xf] %vm2676, %v9715
      %9748 = vst.msk [vmem:[%s9744 + $0xc] sm:$0xf] %vm2676, %v9716
      %9749 = vst.msk [vmem:[%s9744 + $0x10] sm:$0xf] %vm2676, %v9717
      %9750 = vst.msk [vmem:[%s9744 + $0x14] sm:$0xf] %vm2676, %v9718
      %9751 = vst.msk [vmem:[%s9744 + $0x18] sm:$0xf] %vm2676, %v9719
      %9752 = vst.msk [vmem:[%s9744 + $0x1c] sm:$0xf] %vm2676, %v9720
      %9753 = vst.msk [vmem:[%s9744 + $0x20] sm:$0xf] %vm2676, %v9721
      %9754 = vst.msk [vmem:[%s9744 + $0x24] sm:$0xf] %vm2676, %v9722
      %9755 = vst.msk [vmem:[%s9744 + $0x28] sm:$0xf] %vm2676, %v9723
      %9756 = vst.msk [vmem:[%s9744 + $0x2c] sm:$0xf] %vm2676, %v9724
      %9757 = vst.msk [vmem:[%s9744 + $0x30] sm:$0xf] %vm2676, %v9725
      %9758 = vst.msk [vmem:[%s9744 + $0x34] sm:$0xf] %vm2676, %v9726
      %9759 = vst.msk [vmem:[%s9744 + $0x38] sm:$0xf] %vm2676, %v9727
      %9760 = vst.msk [vmem:[%s9744 + $0x3c] sm:$0xf] %vm2676, %v9728
      %9761 = vst.msk [vmem:[%s9744 + $0x40] sm:$0xf] %vm2676, %v9729
      %9762 = vst.msk [vmem:[%s9744 + $0x44] sm:$0xf] %vm2676, %v9730
      %9763 = vst.msk [vmem:[%s9744 + $0x48] sm:$0xf] %vm2676, %v9731
      %9764 = vst.msk [vmem:[%s9744 + $0x4c] sm:$0xf] %vm2676, %v9732
      %9765 = vst.msk [vmem:[%s9744 + $0x50] sm:$0xf] %vm2676, %v9733
      %9766 = vst.msk [vmem:[%s9744 + $0x54] sm:$0xf] %vm2676, %v9734
      %9767 = vst.msk [vmem:[%s9744 + $0x58] sm:$0xf] %vm2676, %v9735
      %9768 = vst.msk [vmem:[%s9744 + $0x5c] sm:$0xf] %vm2676, %v9736
      %9769 = vst.msk [vmem:[%s9744 + $0x60] sm:$0xf] %vm2676, %v9737
      %9770 = vst.msk [vmem:[%s9744 + $0x64] sm:$0xf] %vm2676, %v9738
      %9771 = vst.msk [vmem:[%s9744 + $0x68] sm:$0xf] %vm2676, %v9739
      %9772 = vst.msk [vmem:[%s9744 + $0x6c] sm:$0xf] %vm2676, %v9740
      %9773 = vst.msk [vmem:[%s9744 + $0x70] sm:$0xf] %vm2676, %v9741
      %9774 = vst.msk [vmem:[%s9744 + $0x74] sm:$0xf] %vm2676, %v9742
      %9775 = vst.msk [vmem:[%s9744 + $0x78] sm:$0x3] %vm2707, %v9743
      %s9776 = smul.u32 4, %s22
      %p9777 = scmp.lt.s32.totalorder %s20, 0
      %s9778 = scalar_select %p9777, %s20, 0
      %p9779 = scmp.lt.s32.totalorder %s9776, 243
      %s9780 = scalar_select %p9779, %s9776, 243
      %p9781 = scmp.lt.s32.totalorder %s21, 0
      %s9782 = scalar_select %p9781, %s21, 0
      %s9783 = smul.addr %s9780, 31
      %s9784 = sadd.s32 %s9782, %s9783
      %s9785 = smul.addr %s9778, 7564
      %s9786 = sadd.s32 %s9784, %s9785
      %s9787 = smul.addr %s9786, 4
      %s9788 = scalar_lea.vmem %s4, %s9787
      // Predicated region
      $region37: #{tpu_custom_call.1} parent=35 // pred_check
        %p9789 = pneg %p166
      $region38: #{tpu_custom_call.1} parent=35 // pred_check_branch
        %9791 = sbr.rel (%p9789) target = $region40
      $region39: #{tpu_custom_call.1} parent=35 // pred_region
        %s9792 = smul.u32 4, %s22
      $region40: #{tpu_custom_call.1} parent=35 // pred_fallthru
        _
    $region36: #{tpu_custom_call.1} parent=5 // pred_fallthru
      _
    %p9793 = scmp.le.s32.totalorder 2, %s10
    // Predicated region
    $region41: #{tpu_custom_call.1} parent=5 // pred_check
      %p9794 = pneg %p9793
    $region42: #{tpu_custom_call.1} parent=5 // pred_check_branch
      %9796 = sbr.rel (%p9794) target = $region44
    $region43: #{tpu_custom_call.1} parent=5 // pred_region
      %s9797 = ssub.s32 %s10, 2
      // Predicated region
      $region45: #{tpu_custom_call.1} parent=43 // pred_check
        %p9798 = pneg %p172
      $region46: #{tpu_custom_call.1} parent=43 // pred_check_branch
        %9800 = sbr.rel (%p9798) target = $region48
      $region47: #{tpu_custom_call.1} parent=43 // pred_region
        %s9801 = smul.u32 4, %s25
        %p9802 = scmp.lt.s32.totalorder %s23, 0
        %s9803 = scalar_select %p9802, %s23, 0
        %p9804 = scmp.lt.s32.totalorder %s9801, 243
        %s9805 = scalar_select %p9804, %s9801, 243
        %p9806 = scmp.lt.s32.totalorder %s24, 0
        %s9807 = scalar_select %p9806, %s24, 0
        %s9808 = smul.addr %s9805, 31
        %s9809 = sadd.s32 %s9807, %s9808
        %s9810 = smul.addr %s9803, 7564
        %s9811 = sadd.s32 %s9809, %s9810
        %s9812 = smul.addr %s9811, 4
        %s9813 = scalar_lea.vmem %s4, %s9812
      $region48: #{tpu_custom_call.1} parent=43 // pred_fallthru
        _
    $region44: #{tpu_custom_call.1} parent=5 // pred_fallthru
      _
  $region6: #{tpu_custom_call.1} parent=0 // loop_footer
    %s14 = sadd.s32 1, %s10
  $region7: #{tpu_custom_call.1} parent=0 // loop_footer_branch
    %9 = sbr.rel target = $region3
  $region8: #{tpu_custom_call.1} parent=0 // loop_exit
    _

</llo_original>
